<compile_context>
chip_gen: v5e
topology: v5e:2x2
jax: 0.10.0
libtpu: 0.0.40
codegen_flags: <defaults>
</compile_context>

<pallas_src>
from functools import partial

import jax
import jax.numpy as jnp
from jax.experimental import pallas as pl
from jax.experimental.pallas import tpu as pltpu


def _round_up(x, m):
    return (x + m - 1) // m * m


def _hswish(v):
    # nn.Hardswish: x * relu6(x + 3) / 6
    return v * jnp.clip(v + 3.0, 0.0, 6.0) * (1.0 / 6.0)


# ----------------------------------------------------------------------------
# Fused ResCAB kernel (one grid step == one batch element, whole image in VMEM)
# ----------------------------------------------------------------------------
def _rescab_kernel(xp_ref, w1s_ref, w2_ref, wd_ref, bd_ref, wu_ref, bu_ref,
                   o_ref, hp_ref, *, H, W, K, p):
    """
    xp_ref : (1, H+2p, W+2p, Cp) bf16  input, spatially zero-padded by p,
                                       channel-padded to the 128-lane width
    w1s_ref: (K*K, Cp, 2*Cp)     bf16  per-tap [ConvBlock conv#1 | skip convs]
                                       (skip_conv1 folded into skip_conv2's
                                        center tap, 3x3 embedded into K x K)
    w2_ref : (K*K, Cp, Cp)       bf16  ConvBlock conv #2
    wd_ref : (Cp, Mp) f32, bd_ref: (1, Mp) f32   CA squeeze  (C -> C/r)
    wu_ref : (Mp, Cp) f32, bu_ref: (1, Cp) f32   CA excite   (C/r -> C)
    o_ref  : (1, H, W, Cp)       f32   output
    hp_ref : (H+2p, W+2p, Cp)    bf16  VMEM scratch: zero-padded hidden act.
    """
    Cp = o_ref.shape[-1]

    xp = xp_ref[0]                                     # (H+2p, W+2p, Cp) bf16
    # Hoist the kw (sublane-axis) shift out of the tap loop: K relayouts total
    # instead of K*K; inside the loop only leading-axis slices remain.
    x_sh = [xp[:, kw:kw + W, :] for kw in range(K)]

    # ---- Fused conv pass over x: ConvBlock conv #1 || (skip_conv2+skip_conv1)
    #      One (H*W, Cp) @ (Cp, 2*Cp) bf16 MXU matmul per tap, f32 accumulation.
    acc = jnp.zeros((H * W, 2 * Cp), jnp.float32)
    for t in range(K * K):
        kh, kw = t // K, t % K
        sl = x_sh[kw][kh:kh + H].reshape(H * W, Cp)
        acc = acc + jnp.dot(sl, w1s_ref[t], preferred_element_type=jnp.float32)
    c1 = acc[:, :Cp]                                   # ConvBlock conv #1
    res = acc[:, Cp:]                                  # skip_conv1 + skip_conv2

    # ---- Hardswish (f32) -> bf16; build the zero-padded halo for conv #2 via
    #      a per-step zeroed VMEM scratch (no iota mask, no cross-step state).
    hp_ref[...] = jnp.zeros_like(hp_ref)
    hp_ref[p:p + H, p:p + W, :] = (
        _hswish(c1).reshape(H, W, Cp).astype(jnp.bfloat16))
    hp = hp_ref[...]
    h_sh = [hp[:, kw:kw + W, :] for kw in range(K)]

    # ---- ConvBlock conv #2, accumulated on top of the skip sum (f32).
    for t in range(K * K):
        kh, kw = t // K, t % K
        sl = h_sh[kw][kh:kh + H].reshape(H * W, Cp)
        res = res + jnp.dot(sl, w2_ref[t], preferred_element_type=jnp.float32)

    # ---- Channel attention: GAP -> 1x1 -> ReLU -> 1x1 -> sigmoid (all f32).
    y = jnp.sum(res, axis=0, keepdims=True) * (1.0 / (H * W))      # (1, Cp)
    y8 = jnp.broadcast_to(y, (8, Cp))                              # M=8 for MXU
    z8 = jnp.maximum(
        jnp.dot(y8, wd_ref[...], preferred_element_type=jnp.float32)
        + bd_ref[...], 0.0)
    g8 = jax.nn.sigmoid(
        jnp.dot(z8, wu_ref[...], preferred_element_type=jnp.float32)
        + bu_ref[...])
    gate = g8[0:1, :]                                              # (1, Cp)
    # Padded lanes (>= C) see gate = sigmoid(0) = 0.5 but multiply exact zeros;
    # the wrapper slices [..., :C] so they never escape.

    # ---- gate * res + x, Hardswish, lane-dense store (last dim = Cp).
    xc = x_sh[p][p:p + H].reshape(H * W, Cp).astype(jnp.float32)
    out = _hswish(res * gate + xc)
    o_ref[...] = out.reshape(1, H, W, Cp)


# ----------------------------------------------------------------------------
# Wrapper: NCHW in / NCHW out (matches the PyTorch module)
# ----------------------------------------------------------------------------
@partial(jax.jit, static_argnames=("kernel_size",))
def rescab_forward(params, x_nchw, kernel_size=3):
    N, C, H, W = x_nchw.shape
    K = kernel_size
    assert K % 2 == 1 and K >= 3
    p = K // 2
    Cp = params["ca_wu"].shape[1]
    Mp = params["ca_wd"].shape[1]
    assert params["conv_w2"].shape[0] == K * K, "packed weights mismatch K"

    x = jnp.transpose(x_nchw, (0, 2, 3, 1))                         # NHWC
    # Single boundary pad: spatial halo of p, channel pad to 128 lanes, bf16
    # (halves the largest per-step input block in HBM DMA and VMEM).
    xp = jnp.pad(x, ((0, 0), (p, p), (p, p), (0, Cp - C))).astype(jnp.bfloat16)

    kernel = partial(_rescab_kernel, H=H, W=W, K=K, p=p)
    out = pl.pallas_call(
        kernel,
        out_shape=jax.ShapeDtypeStruct((N, H, W, Cp), jnp.float32),
        grid_spec=pltpu.PrefetchScalarGridSpec(
            num_scalar_prefetch=0,
            grid=(N,),
            in_specs=[
                pl.BlockSpec((1, H + 2 * p, W + 2 * p, Cp),
                             lambda n: (n, 0, 0, 0)),
                pl.BlockSpec((K * K, Cp, 2 * Cp), lambda n: (0, 0, 0)),
                pl.BlockSpec((K * K, Cp, Cp), lambda n: (0, 0, 0)),
                pl.BlockSpec((Cp, Mp), lambda n: (0, 0)),
                pl.BlockSpec((1, Mp), lambda n: (0, 0)),
                pl.BlockSpec((Mp, Cp), lambda n: (0, 0)),
                pl.BlockSpec((1, Cp), lambda n: (0, 0)),
            ],
            out_specs=pl.BlockSpec((1, H, W, Cp), lambda n: (n, 0, 0, 0)),
            scratch_shapes=[
                pltpu.VMEM((H + 2 * p, W + 2 * p, Cp), jnp.bfloat16)],
        ),
        compiler_params=pltpu.CompilerParams(
            dimension_semantics=("parallel",)),
    )(xp, params["conv_w1skip"], params["conv_w2"],
      params["ca_wd"], params["ca_bd"], params["ca_wu"], params["ca_bu"])

    return jnp.transpose(out[..., :C], (0, 3, 1, 2))


# ----------------------------------------------------------------------------
# Deterministic synthetic parameters (shapes follow ResCAB.__init__)
# ----------------------------------------------------------------------------
def init_params(key, n_feat, kernel_size=3, reduction=16):
    C, K = n_feat, kernel_size
    assert K % 2 == 1 and K >= 3
    p = K // 2
    Cp = _round_up(C, 128)
    mip = max(C // reduction, 1)
    Mp = _round_up(mip, 128)
    ks = jax.random.split(key, 8)

    def w(k, shape, scale=0.1):
        return scale * jax.random.normal(k, shape, jnp.float32)

    w1 = w(ks[0], (K, K, C, C))        # ConvBlock conv #1 (HWIO, no bias)
    w2 = w(ks[1], (K, K, C, C))        # ConvBlock conv #2 (no bias)
    s1 = w(ks[2], (1, 1, C, C))        # skip_conv1 1x1 (no bias)
    s2 = w(ks[3], (3, 3, C, C))        # skip_conv2 3x3 (no bias)
    wd = w(ks[4], (C, mip))
    bd = w(ks[5], (mip,))
    wu = w(ks[6], (mip, C))
    bu = w(ks[7], (C,))

    # Embed the 3x3 skip conv into the K x K tap grid (offset p-1) so it shares
    # conv #1's shifted input slices, and fold skip_conv1 into its center tap.
    assert s2.shape[:2] == (3, 3) and p >= 1
    skip_kk = jnp.zeros((K, K, C, C), jnp.float32)
    skip_kk = skip_kk.at[p - 1:p + 2, p - 1:p + 2, :, :].set(s2)
    skip_kk = skip_kk.at[p, p, :, :].add(s1[0, 0])

    def pad_io(wk):                    # (Kh,Kw,C,C) -> (Kh,Kw,Cp,Cp)
        return jnp.pad(wk, ((0, 0), (0, 0), (0, Cp - C), (0, Cp - C)))

    # Per-tap combined weights: out-cols [0:Cp]=conv#1, [Cp:2Cp]=skip convs.
    w1skip = jnp.concatenate([pad_io(w1), pad_io(skip_kk)], axis=-1)

    return dict(
        conv_w1skip=w1skip.reshape(K * K, Cp, 2 * Cp).astype(jnp.bfloat16),
        conv_w2=pad_io(w2).reshape(K * K, Cp, Cp).astype(jnp.bfloat16),
        # ChannelAttention 1x1 convs (bias=True per nn.Conv2d default), f32.
        ca_wd=jnp.pad(wd, ((0, Cp - C), (0, Mp - mip))),
        ca_bd=jnp.pad(bd[None, :], ((0, 0), (0, Mp - mip))),
        ca_wu=jnp.pad(wu, ((0, Mp - mip), (0, Cp - C))),
        ca_bu=jnp.pad(bu[None, :], ((0, 0), (0, Cp - C))),
        # Raw f32 copies for the XLA reference.
        ref_w1=w1, ref_w2=w2, ref_s1=s1, ref_s2=s2,
        ref_wd=wd, ref_bd=bd, ref_wu=wu, ref_bu=bu,
    )


# ----------------------------------------------------------------------------
# Pure-JAX (XLA) bf16-matched reference for a numerical sanity check
# ----------------------------------------------------------------------------
def rescab_reference(params, x_nchw, kernel_size=3):
    x_b = jnp.transpose(x_nchw, (0, 2, 3, 1)).astype(jnp.bfloat16)   # NHWC bf16
    x_f = x_b.astype(jnp.float32)

    def conv(v, w_hwio):
        return jax.lax.conv_general_dilated(
            v, w_hwio.astype(jnp.bfloat16), window_strides=(1, 1),
            padding="SAME", dimension_numbers=("NHWC", "HWIO", "NHWC"),
            preferred_element_type=jnp.float32)

    c1 = conv(x_b, params["ref_w1"])
    h = _hswish(c1).astype(jnp.bfloat16)
    cb = conv(h, params["ref_w2"])
    s1 = conv(x_b, params["ref_s1"])
    s2 = conv(x_b, params["ref_s2"])
    res = cb + s1 + s2
    y = jnp.mean(res, axis=(1, 2), keepdims=True)
    z = jnp.maximum(jnp.einsum("nhwc,cm->nhwm", y, params["ref_wd"])
                    + params["ref_bd"], 0.0)
    g = jax.nn.sigmoid(jnp.einsum("nhwm,mc->nhwc", z, params["ref_wu"])
                       + params["ref_bu"])
    out = _hswish(res * g + x_f)
    return jnp.transpose(out, (0, 3, 1, 2))


if __name__ == "__main__":
    key = jax.random.PRNGKey(0)
    k_x, k_p = jax.random.split(key)

    N, C, H, W = 2, 32, 16, 16            # batch=2, n_feat=32, 16x16 spatial
    x = jax.random.normal(k_x, (N, C, H, W), jnp.float32)
    params = init_params(k_p, n_feat=C, kernel_size=3, reduction=16)

    out = rescab_forward(params, x, kernel_size=3)
    out = jax.block_until_ready(out)
    assert out.shape == (N, C, H, W)

    ref = rescab_reference(params, x, kernel_size=3)
    err = float(jnp.max(jnp.abs(out - ref)))
    # bf16-matched reference (same operand precision as the kernel): the only
    # unmatched rounding is the skip_conv1-into-skip_conv2 weight fold.
    assert err < 5e-2, f"mismatch vs bf16-matched reference: max abs err = {err}"

    print("KERNEL_OK")
</pallas_src>

<mosaic_0001>
module attributes {stable_mosaic.version = 11 : i64} {
  func.func @_rescab_kernel(%arg0: i32, %arg1: memref<1x18x18x128xbf16, #tpu.memory_space<vmem>>, %arg2: memref<9x128x256xbf16, #tpu.memory_space<vmem>>, %arg3: memref<9x128x128xbf16, #tpu.memory_space<vmem>>, %arg4: memref<128x128xf32, #tpu.memory_space<vmem>>, %arg5: memref<1x128xf32, #tpu.memory_space<vmem>>, %arg6: memref<128x128xf32, #tpu.memory_space<vmem>>, %arg7: memref<1x128xf32, #tpu.memory_space<vmem>>, %arg8: memref<1x16x16x128xf32, #tpu.memory_space<vmem>>, %arg9: memref<18x18x128xbf16, #tpu.memory_space<vmem>>) attributes {dimension_semantics = [#tpu.dimension_semantics<parallel>], iteration_bounds = array<i64: 2>, scalar_prefetch = 0 : i64, scratch_operands = 1 : i64, tpu.core_type = #tpu.core_type<tc>, window_params = [{transform_indices = @transform_0, window_bounds = array<i64: 1, 18, 18, 128>}, {pipeline_mode = #tpu.pipeline_mode<synchronous>, transform_indices = @transform_1, window_bounds = array<i64: 9, 128, 256>}, {pipeline_mode = #tpu.pipeline_mode<synchronous>, transform_indices = @transform_2, window_bounds = array<i64: 9, 128, 128>}, {pipeline_mode = #tpu.pipeline_mode<synchronous>, transform_indices = @transform_3, window_bounds = array<i64: 128, 128>}, {pipeline_mode = #tpu.pipeline_mode<synchronous>, transform_indices = @transform_4, window_bounds = array<i64: 1, 128>}, {pipeline_mode = #tpu.pipeline_mode<synchronous>, transform_indices = @transform_5, window_bounds = array<i64: 128, 128>}, {pipeline_mode = #tpu.pipeline_mode<synchronous>, transform_indices = @transform_6, window_bounds = array<i64: 1, 128>}, {transform_indices = @transform_7, window_bounds = array<i64: 1, 16, 16, 128>}]} {
    %c0 = arith.constant 0 : index
    %c0_0 = arith.constant 0 : index
    %c0_1 = arith.constant 0 : index
    %c0_2 = arith.constant 0 : index
    %0 = vector.load %arg1[%c0, %c0_0, %c0_1, %c0_2] : memref<1x18x18x128xbf16, #tpu.memory_space<vmem>>, vector<1x18x18x128xbf16>
    %1 = vector.shape_cast %0 : vector<1x18x18x128xbf16> to vector<18x18x128xbf16>
    %2 = vector.extract_strided_slice %1 {offsets = [0, 0, 0], sizes = [18, 16, 128], strides = [1, 1, 1]} : vector<18x18x128xbf16> to vector<18x16x128xbf16>
    %3 = vector.extract_strided_slice %1 {offsets = [0, 1, 0], sizes = [18, 16, 128], strides = [1, 1, 1]} : vector<18x18x128xbf16> to vector<18x16x128xbf16>
    %4 = vector.extract_strided_slice %1 {offsets = [0, 2, 0], sizes = [18, 16, 128], strides = [1, 1, 1]} : vector<18x18x128xbf16> to vector<18x16x128xbf16>
    %cst = arith.constant 0.000000e+00 : f32
    %5 = vector.broadcast %cst : f32 to vector<256x256xf32>
    %6 = vector.extract_strided_slice %2 {offsets = [0, 0, 0], sizes = [16, 16, 128], strides = [1, 1, 1]} : vector<18x16x128xbf16> to vector<16x16x128xbf16>
    %7 = vector.shape_cast %6 : vector<16x16x128xbf16> to vector<256x128xbf16>
    %c0_3 = arith.constant 0 : index
    %c0_4 = arith.constant 0 : index
    %c0_5 = arith.constant 0 : index
    %8 = vector.load %arg2[%c0_3, %c0_4, %c0_5] : memref<9x128x256xbf16, #tpu.memory_space<vmem>>, vector<1x128x256xbf16>
    %9 = vector.shape_cast %8 : vector<1x128x256xbf16> to vector<128x256xbf16>
    %cst_6 = arith.constant dense<0.000000e+00> : vector<256x256xf32>
    %10 = tpu.matmul %7, %9, %cst_6 {dimension_numbers = #tpu.dot_dimension_numbers<[1], [0], [0], [1], [0, 0, 1, 1], [], []>} : vector<256x128xbf16>, vector<128x256xbf16>, vector<256x256xf32> -> vector<256x256xf32>
    %11 = arith.addf %5, %10 : vector<256x256xf32>
    %12 = vector.extract_strided_slice %3 {offsets = [0, 0, 0], sizes = [16, 16, 128], strides = [1, 1, 1]} : vector<18x16x128xbf16> to vector<16x16x128xbf16>
    %13 = vector.shape_cast %12 : vector<16x16x128xbf16> to vector<256x128xbf16>
    %c1 = arith.constant 1 : index
    %c0_7 = arith.constant 0 : index
    %c0_8 = arith.constant 0 : index
    %14 = vector.load %arg2[%c1, %c0_7, %c0_8] : memref<9x128x256xbf16, #tpu.memory_space<vmem>>, vector<1x128x256xbf16>
    %15 = vector.shape_cast %14 : vector<1x128x256xbf16> to vector<128x256xbf16>
    %cst_9 = arith.constant dense<0.000000e+00> : vector<256x256xf32>
    %16 = tpu.matmul %13, %15, %cst_9 {dimension_numbers = #tpu.dot_dimension_numbers<[1], [0], [0], [1], [0, 0, 1, 1], [], []>} : vector<256x128xbf16>, vector<128x256xbf16>, vector<256x256xf32> -> vector<256x256xf32>
    %17 = arith.addf %11, %16 : vector<256x256xf32>
    %18 = vector.extract_strided_slice %4 {offsets = [0, 0, 0], sizes = [16, 16, 128], strides = [1, 1, 1]} : vector<18x16x128xbf16> to vector<16x16x128xbf16>
    %19 = vector.shape_cast %18 : vector<16x16x128xbf16> to vector<256x128xbf16>
    %c2 = arith.constant 2 : index
    %c0_10 = arith.constant 0 : index
    %c0_11 = arith.constant 0 : index
    %20 = vector.load %arg2[%c2, %c0_10, %c0_11] : memref<9x128x256xbf16, #tpu.memory_space<vmem>>, vector<1x128x256xbf16>
    %21 = vector.shape_cast %20 : vector<1x128x256xbf16> to vector<128x256xbf16>
    %cst_12 = arith.constant dense<0.000000e+00> : vector<256x256xf32>
    %22 = tpu.matmul %19, %21, %cst_12 {dimension_numbers = #tpu.dot_dimension_numbers<[1], [0], [0], [1], [0, 0, 1, 1], [], []>} : vector<256x128xbf16>, vector<128x256xbf16>, vector<256x256xf32> -> vector<256x256xf32>
    %23 = arith.addf %17, %22 : vector<256x256xf32>
    %24 = vector.extract_strided_slice %2 {offsets = [1, 0, 0], sizes = [16, 16, 128], strides = [1, 1, 1]} : vector<18x16x128xbf16> to vector<16x16x128xbf16>
    %25 = vector.shape_cast %24 : vector<16x16x128xbf16> to vector<256x128xbf16>
    %c3 = arith.constant 3 : index
    %c0_13 = arith.constant 0 : index
    %c0_14 = arith.constant 0 : index
    %26 = vector.load %arg2[%c3, %c0_13, %c0_14] : memref<9x128x256xbf16, #tpu.memory_space<vmem>>, vector<1x128x256xbf16>
    %27 = vector.shape_cast %26 : vector<1x128x256xbf16> to vector<128x256xbf16>
    %cst_15 = arith.constant dense<0.000000e+00> : vector<256x256xf32>
    %28 = tpu.matmul %25, %27, %cst_15 {dimension_numbers = #tpu.dot_dimension_numbers<[1], [0], [0], [1], [0, 0, 1, 1], [], []>} : vector<256x128xbf16>, vector<128x256xbf16>, vector<256x256xf32> -> vector<256x256xf32>
    %29 = arith.addf %23, %28 : vector<256x256xf32>
    %30 = vector.extract_strided_slice %3 {offsets = [1, 0, 0], sizes = [16, 16, 128], strides = [1, 1, 1]} : vector<18x16x128xbf16> to vector<16x16x128xbf16>
    %31 = vector.shape_cast %30 : vector<16x16x128xbf16> to vector<256x128xbf16>
    %c4 = arith.constant 4 : index
    %c0_16 = arith.constant 0 : index
    %c0_17 = arith.constant 0 : index
    %32 = vector.load %arg2[%c4, %c0_16, %c0_17] : memref<9x128x256xbf16, #tpu.memory_space<vmem>>, vector<1x128x256xbf16>
    %33 = vector.shape_cast %32 : vector<1x128x256xbf16> to vector<128x256xbf16>
    %cst_18 = arith.constant dense<0.000000e+00> : vector<256x256xf32>
    %34 = tpu.matmul %31, %33, %cst_18 {dimension_numbers = #tpu.dot_dimension_numbers<[1], [0], [0], [1], [0, 0, 1, 1], [], []>} : vector<256x128xbf16>, vector<128x256xbf16>, vector<256x256xf32> -> vector<256x256xf32>
    %35 = arith.addf %29, %34 : vector<256x256xf32>
    %36 = vector.extract_strided_slice %4 {offsets = [1, 0, 0], sizes = [16, 16, 128], strides = [1, 1, 1]} : vector<18x16x128xbf16> to vector<16x16x128xbf16>
    %37 = vector.shape_cast %36 : vector<16x16x128xbf16> to vector<256x128xbf16>
    %c5 = arith.constant 5 : index
    %c0_19 = arith.constant 0 : index
    %c0_20 = arith.constant 0 : index
    %38 = vector.load %arg2[%c5, %c0_19, %c0_20] : memref<9x128x256xbf16, #tpu.memory_space<vmem>>, vector<1x128x256xbf16>
    %39 = vector.shape_cast %38 : vector<1x128x256xbf16> to vector<128x256xbf16>
    %cst_21 = arith.constant dense<0.000000e+00> : vector<256x256xf32>
    %40 = tpu.matmul %37, %39, %cst_21 {dimension_numbers = #tpu.dot_dimension_numbers<[1], [0], [0], [1], [0, 0, 1, 1], [], []>} : vector<256x128xbf16>, vector<128x256xbf16>, vector<256x256xf32> -> vector<256x256xf32>
    %41 = arith.addf %35, %40 : vector<256x256xf32>
    %42 = vector.extract_strided_slice %2 {offsets = [2, 0, 0], sizes = [16, 16, 128], strides = [1, 1, 1]} : vector<18x16x128xbf16> to vector<16x16x128xbf16>
    %43 = vector.shape_cast %42 : vector<16x16x128xbf16> to vector<256x128xbf16>
    %c6 = arith.constant 6 : index
    %c0_22 = arith.constant 0 : index
    %c0_23 = arith.constant 0 : index
    %44 = vector.load %arg2[%c6, %c0_22, %c0_23] : memref<9x128x256xbf16, #tpu.memory_space<vmem>>, vector<1x128x256xbf16>
    %45 = vector.shape_cast %44 : vector<1x128x256xbf16> to vector<128x256xbf16>
    %cst_24 = arith.constant dense<0.000000e+00> : vector<256x256xf32>
    %46 = tpu.matmul %43, %45, %cst_24 {dimension_numbers = #tpu.dot_dimension_numbers<[1], [0], [0], [1], [0, 0, 1, 1], [], []>} : vector<256x128xbf16>, vector<128x256xbf16>, vector<256x256xf32> -> vector<256x256xf32>
    %47 = arith.addf %41, %46 : vector<256x256xf32>
    %48 = vector.extract_strided_slice %3 {offsets = [2, 0, 0], sizes = [16, 16, 128], strides = [1, 1, 1]} : vector<18x16x128xbf16> to vector<16x16x128xbf16>
    %49 = vector.shape_cast %48 : vector<16x16x128xbf16> to vector<256x128xbf16>
    %c7 = arith.constant 7 : index
    %c0_25 = arith.constant 0 : index
    %c0_26 = arith.constant 0 : index
    %50 = vector.load %arg2[%c7, %c0_25, %c0_26] : memref<9x128x256xbf16, #tpu.memory_space<vmem>>, vector<1x128x256xbf16>
    %51 = vector.shape_cast %50 : vector<1x128x256xbf16> to vector<128x256xbf16>
    %cst_27 = arith.constant dense<0.000000e+00> : vector<256x256xf32>
    %52 = tpu.matmul %49, %51, %cst_27 {dimension_numbers = #tpu.dot_dimension_numbers<[1], [0], [0], [1], [0, 0, 1, 1], [], []>} : vector<256x128xbf16>, vector<128x256xbf16>, vector<256x256xf32> -> vector<256x256xf32>
    %53 = arith.addf %47, %52 : vector<256x256xf32>
    %54 = vector.extract_strided_slice %4 {offsets = [2, 0, 0], sizes = [16, 16, 128], strides = [1, 1, 1]} : vector<18x16x128xbf16> to vector<16x16x128xbf16>
    %55 = vector.shape_cast %54 : vector<16x16x128xbf16> to vector<256x128xbf16>
    %c8 = arith.constant 8 : index
    %c0_28 = arith.constant 0 : index
    %c0_29 = arith.constant 0 : index
    %56 = vector.load %arg2[%c8, %c0_28, %c0_29] : memref<9x128x256xbf16, #tpu.memory_space<vmem>>, vector<1x128x256xbf16>
    %57 = vector.shape_cast %56 : vector<1x128x256xbf16> to vector<128x256xbf16>
    %cst_30 = arith.constant dense<0.000000e+00> : vector<256x256xf32>
    %58 = tpu.matmul %55, %57, %cst_30 {dimension_numbers = #tpu.dot_dimension_numbers<[1], [0], [0], [1], [0, 0, 1, 1], [], []>} : vector<256x128xbf16>, vector<128x256xbf16>, vector<256x256xf32> -> vector<256x256xf32>
    %59 = arith.addf %53, %58 : vector<256x256xf32>
    %60 = vector.extract_strided_slice %59 {offsets = [0, 0], sizes = [256, 128], strides = [1, 1]} : vector<256x256xf32> to vector<256x128xf32>
    %61 = vector.extract_strided_slice %59 {offsets = [0, 128], sizes = [256, 128], strides = [1, 1]} : vector<256x256xf32> to vector<256x128xf32>
    %cst_31 = arith.constant 0.000000e+00 : bf16
    %62 = vector.broadcast %cst_31 : bf16 to vector<18x18x128xbf16>
    %c0_32 = arith.constant 0 : index
    %c0_33 = arith.constant 0 : index
    %c0_34 = arith.constant 0 : index
    %63 = vector.load %arg9[%c0_32, %c0_33, %c0_34] : memref<18x18x128xbf16, #tpu.memory_space<vmem>>, vector<18x18x128xbf16>
    tpu.vector_store %arg9[%c0_32, %c0_33, %c0_34], %62 {strides = array<i32>} : memref<18x18x128xbf16, #tpu.memory_space<vmem>>, vector<18x18x128xbf16>,
    %cst_35 = arith.constant 3.000000e+00 : f32
    %64 = vector.broadcast %cst_35 : f32 to vector<256x128xf32>
    %65 = arith.addf %60, %64 : vector<256x128xf32>
    %cst_36 = arith.constant 0.000000e+00 : f32
    %cst_37 = arith.constant 6.000000e+00 : f32
    %66 = vector.broadcast %cst_36 : f32 to vector<256x128xf32>
    %67 = arith.maximumf %66, %65 : vector<256x128xf32>
    %68 = vector.broadcast %cst_37 : f32 to vector<256x128xf32>
    %69 = arith.minimumf %68, %67 : vector<256x128xf32>
    %70 = arith.mulf %60, %69 : vector<256x128xf32>
    %cst_38 = arith.constant 0.166666672 : f32
    %71 = vector.broadcast %cst_38 : f32 to vector<256x128xf32>
    %72 = arith.mulf %70, %71 : vector<256x128xf32>
    %73 = vector.shape_cast %72 : vector<256x128xf32> to vector<16x16x128xf32>
    %74 = arith.truncf %73 : vector<16x16x128xf32> to vector<16x16x128xbf16>
    %c1_39 = arith.constant 1 : index
    %c1_40 = arith.constant 1 : index
    %c0_41 = arith.constant 0 : index
    %75 = vector.load %arg9[%c1_39, %c1_40, %c0_41] : memref<18x18x128xbf16, #tpu.memory_space<vmem>>, vector<16x16x128xbf16>
    tpu.vector_store %arg9[%c1_39, %c1_40, %c0_41], %74 {strides = array<i32>} : memref<18x18x128xbf16, #tpu.memory_space<vmem>>, vector<16x16x128xbf16>,
    %c0_42 = arith.constant 0 : index
    %c0_43 = arith.constant 0 : index
    %c0_44 = arith.constant 0 : index
    %76 = vector.load %arg9[%c0_42, %c0_43, %c0_44] : memref<18x18x128xbf16, #tpu.memory_space<vmem>>, vector<18x18x128xbf16>
    %77 = vector.extract_strided_slice %76 {offsets = [0, 0, 0], sizes = [18, 16, 128], strides = [1, 1, 1]} : vector<18x18x128xbf16> to vector<18x16x128xbf16>
    %78 = vector.extract_strided_slice %76 {offsets = [0, 1, 0], sizes = [18, 16, 128], strides = [1, 1, 1]} : vector<18x18x128xbf16> to vector<18x16x128xbf16>
    %79 = vector.extract_strided_slice %76 {offsets = [0, 2, 0], sizes = [18, 16, 128], strides = [1, 1, 1]} : vector<18x18x128xbf16> to vector<18x16x128xbf16>
    %80 = vector.extract_strided_slice %77 {offsets = [0, 0, 0], sizes = [16, 16, 128], strides = [1, 1, 1]} : vector<18x16x128xbf16> to vector<16x16x128xbf16>
    %81 = vector.shape_cast %80 : vector<16x16x128xbf16> to vector<256x128xbf16>
    %c0_45 = arith.constant 0 : index
    %c0_46 = arith.constant 0 : index
    %c0_47 = arith.constant 0 : index
    %82 = vector.load %arg3[%c0_45, %c0_46, %c0_47] : memref<9x128x128xbf16, #tpu.memory_space<vmem>>, vector<1x128x128xbf16>
    %83 = vector.shape_cast %82 : vector<1x128x128xbf16> to vector<128x128xbf16>
    %cst_48 = arith.constant dense<0.000000e+00> : vector<256x128xf32>
    %84 = tpu.matmul %81, %83, %cst_48 {dimension_numbers = #tpu.dot_dimension_numbers<[1], [0], [0], [1], [0, 0, 1, 1], [], []>} : vector<256x128xbf16>, vector<128x128xbf16>, vector<256x128xf32> -> vector<256x128xf32>
    %85 = arith.addf %61, %84 : vector<256x128xf32>
    %86 = vector.extract_strided_slice %78 {offsets = [0, 0, 0], sizes = [16, 16, 128], strides = [1, 1, 1]} : vector<18x16x128xbf16> to vector<16x16x128xbf16>
    %87 = vector.shape_cast %86 : vector<16x16x128xbf16> to vector<256x128xbf16>
    %c1_49 = arith.constant 1 : index
    %c0_50 = arith.constant 0 : index
    %c0_51 = arith.constant 0 : index
    %88 = vector.load %arg3[%c1_49, %c0_50, %c0_51] : memref<9x128x128xbf16, #tpu.memory_space<vmem>>, vector<1x128x128xbf16>
    %89 = vector.shape_cast %88 : vector<1x128x128xbf16> to vector<128x128xbf16>
    %cst_52 = arith.constant dense<0.000000e+00> : vector<256x128xf32>
    %90 = tpu.matmul %87, %89, %cst_52 {dimension_numbers = #tpu.dot_dimension_numbers<[1], [0], [0], [1], [0, 0, 1, 1], [], []>} : vector<256x128xbf16>, vector<128x128xbf16>, vector<256x128xf32> -> vector<256x128xf32>
    %91 = arith.addf %85, %90 : vector<256x128xf32>
    %92 = vector.extract_strided_slice %79 {offsets = [0, 0, 0], sizes = [16, 16, 128], strides = [1, 1, 1]} : vector<18x16x128xbf16> to vector<16x16x128xbf16>
    %93 = vector.shape_cast %92 : vector<16x16x128xbf16> to vector<256x128xbf16>
    %c2_53 = arith.constant 2 : index
    %c0_54 = arith.constant 0 : index
    %c0_55 = arith.constant 0 : index
    %94 = vector.load %arg3[%c2_53, %c0_54, %c0_55] : memref<9x128x128xbf16, #tpu.memory_space<vmem>>, vector<1x128x128xbf16>
    %95 = vector.shape_cast %94 : vector<1x128x128xbf16> to vector<128x128xbf16>
    %cst_56 = arith.constant dense<0.000000e+00> : vector<256x128xf32>
    %96 = tpu.matmul %93, %95, %cst_56 {dimension_numbers = #tpu.dot_dimension_numbers<[1], [0], [0], [1], [0, 0, 1, 1], [], []>} : vector<256x128xbf16>, vector<128x128xbf16>, vector<256x128xf32> -> vector<256x128xf32>
    %97 = arith.addf %91, %96 : vector<256x128xf32>
    %98 = vector.extract_strided_slice %77 {offsets = [1, 0, 0], sizes = [16, 16, 128], strides = [1, 1, 1]} : vector<18x16x128xbf16> to vector<16x16x128xbf16>
    %99 = vector.shape_cast %98 : vector<16x16x128xbf16> to vector<256x128xbf16>
    %c3_57 = arith.constant 3 : index
    %c0_58 = arith.constant 0 : index
    %c0_59 = arith.constant 0 : index
    %100 = vector.load %arg3[%c3_57, %c0_58, %c0_59] : memref<9x128x128xbf16, #tpu.memory_space<vmem>>, vector<1x128x128xbf16>
    %101 = vector.shape_cast %100 : vector<1x128x128xbf16> to vector<128x128xbf16>
    %cst_60 = arith.constant dense<0.000000e+00> : vector<256x128xf32>
    %102 = tpu.matmul %99, %101, %cst_60 {dimension_numbers = #tpu.dot_dimension_numbers<[1], [0], [0], [1], [0, 0, 1, 1], [], []>} : vector<256x128xbf16>, vector<128x128xbf16>, vector<256x128xf32> -> vector<256x128xf32>
    %103 = arith.addf %97, %102 : vector<256x128xf32>
    %104 = vector.extract_strided_slice %78 {offsets = [1, 0, 0], sizes = [16, 16, 128], strides = [1, 1, 1]} : vector<18x16x128xbf16> to vector<16x16x128xbf16>
    %105 = vector.shape_cast %104 : vector<16x16x128xbf16> to vector<256x128xbf16>
    %c4_61 = arith.constant 4 : index
    %c0_62 = arith.constant 0 : index
    %c0_63 = arith.constant 0 : index
    %106 = vector.load %arg3[%c4_61, %c0_62, %c0_63] : memref<9x128x128xbf16, #tpu.memory_space<vmem>>, vector<1x128x128xbf16>
    %107 = vector.shape_cast %106 : vector<1x128x128xbf16> to vector<128x128xbf16>
    %cst_64 = arith.constant dense<0.000000e+00> : vector<256x128xf32>
    %108 = tpu.matmul %105, %107, %cst_64 {dimension_numbers = #tpu.dot_dimension_numbers<[1], [0], [0], [1], [0, 0, 1, 1], [], []>} : vector<256x128xbf16>, vector<128x128xbf16>, vector<256x128xf32> -> vector<256x128xf32>
    %109 = arith.addf %103, %108 : vector<256x128xf32>
    %110 = vector.extract_strided_slice %79 {offsets = [1, 0, 0], sizes = [16, 16, 128], strides = [1, 1, 1]} : vector<18x16x128xbf16> to vector<16x16x128xbf16>
    %111 = vector.shape_cast %110 : vector<16x16x128xbf16> to vector<256x128xbf16>
    %c5_65 = arith.constant 5 : index
    %c0_66 = arith.constant 0 : index
    %c0_67 = arith.constant 0 : index
    %112 = vector.load %arg3[%c5_65, %c0_66, %c0_67] : memref<9x128x128xbf16, #tpu.memory_space<vmem>>, vector<1x128x128xbf16>
    %113 = vector.shape_cast %112 : vector<1x128x128xbf16> to vector<128x128xbf16>
    %cst_68 = arith.constant dense<0.000000e+00> : vector<256x128xf32>
    %114 = tpu.matmul %111, %113, %cst_68 {dimension_numbers = #tpu.dot_dimension_numbers<[1], [0], [0], [1], [0, 0, 1, 1], [], []>} : vector<256x128xbf16>, vector<128x128xbf16>, vector<256x128xf32> -> vector<256x128xf32>
    %115 = arith.addf %109, %114 : vector<256x128xf32>
    %116 = vector.extract_strided_slice %77 {offsets = [2, 0, 0], sizes = [16, 16, 128], strides = [1, 1, 1]} : vector<18x16x128xbf16> to vector<16x16x128xbf16>
    %117 = vector.shape_cast %116 : vector<16x16x128xbf16> to vector<256x128xbf16>
    %c6_69 = arith.constant 6 : index
    %c0_70 = arith.constant 0 : index
    %c0_71 = arith.constant 0 : index
    %118 = vector.load %arg3[%c6_69, %c0_70, %c0_71] : memref<9x128x128xbf16, #tpu.memory_space<vmem>>, vector<1x128x128xbf16>
    %119 = vector.shape_cast %118 : vector<1x128x128xbf16> to vector<128x128xbf16>
    %cst_72 = arith.constant dense<0.000000e+00> : vector<256x128xf32>
    %120 = tpu.matmul %117, %119, %cst_72 {dimension_numbers = #tpu.dot_dimension_numbers<[1], [0], [0], [1], [0, 0, 1, 1], [], []>} : vector<256x128xbf16>, vector<128x128xbf16>, vector<256x128xf32> -> vector<256x128xf32>
    %121 = arith.addf %115, %120 : vector<256x128xf32>
    %122 = vector.extract_strided_slice %78 {offsets = [2, 0, 0], sizes = [16, 16, 128], strides = [1, 1, 1]} : vector<18x16x128xbf16> to vector<16x16x128xbf16>
    %123 = vector.shape_cast %122 : vector<16x16x128xbf16> to vector<256x128xbf16>
    %c7_73 = arith.constant 7 : index
    %c0_74 = arith.constant 0 : index
    %c0_75 = arith.constant 0 : index
    %124 = vector.load %arg3[%c7_73, %c0_74, %c0_75] : memref<9x128x128xbf16, #tpu.memory_space<vmem>>, vector<1x128x128xbf16>
    %125 = vector.shape_cast %124 : vector<1x128x128xbf16> to vector<128x128xbf16>
    %cst_76 = arith.constant dense<0.000000e+00> : vector<256x128xf32>
    %126 = tpu.matmul %123, %125, %cst_76 {dimension_numbers = #tpu.dot_dimension_numbers<[1], [0], [0], [1], [0, 0, 1, 1], [], []>} : vector<256x128xbf16>, vector<128x128xbf16>, vector<256x128xf32> -> vector<256x128xf32>
    %127 = arith.addf %121, %126 : vector<256x128xf32>
    %128 = vector.extract_strided_slice %79 {offsets = [2, 0, 0], sizes = [16, 16, 128], strides = [1, 1, 1]} : vector<18x16x128xbf16> to vector<16x16x128xbf16>
    %129 = vector.shape_cast %128 : vector<16x16x128xbf16> to vector<256x128xbf16>
    %c8_77 = arith.constant 8 : index
    %c0_78 = arith.constant 0 : index
    %c0_79 = arith.constant 0 : index
    %130 = vector.load %arg3[%c8_77, %c0_78, %c0_79] : memref<9x128x128xbf16, #tpu.memory_space<vmem>>, vector<1x128x128xbf16>
    %131 = vector.shape_cast %130 : vector<1x128x128xbf16> to vector<128x128xbf16>
    %cst_80 = arith.constant dense<0.000000e+00> : vector<256x128xf32>
    %132 = tpu.matmul %129, %131, %cst_80 {dimension_numbers = #tpu.dot_dimension_numbers<[1], [0], [0], [1], [0, 0, 1, 1], [], []>} : vector<256x128xbf16>, vector<128x128xbf16>, vector<256x128xf32> -> vector<256x128xf32>
    %133 = arith.addf %127, %132 : vector<256x128xf32>
    %cst_81 = arith.constant dense<0.000000e+00> : vector<128xf32>
    %134 = vector.multi_reduction <add>, %133, %cst_81 [0] : vector<256x128xf32> to vector<128xf32>
    %135 = vector.shape_cast %134 : vector<128xf32> to vector<1x128xf32>
    %cst_82 = arith.constant 3.906250e-03 : f32
    %136 = vector.broadcast %cst_82 : f32 to vector<1x128xf32>
    %137 = arith.mulf %135, %136 : vector<1x128xf32>
    %138 = vector.shape_cast %137 : vector<1x128xf32> to vector<1x128xf32>
    %139 = vector.broadcast %138 : vector<1x128xf32> to vector<8x128xf32>
    %c0_83 = arith.constant 0 : index
    %c0_84 = arith.constant 0 : index
    %140 = vector.load %arg4[%c0_83, %c0_84] : memref<128x128xf32, #tpu.memory_space<vmem>>, vector<128x128xf32>
    %cst_85 = arith.constant dense<0.000000e+00> : vector<8x128xf32>
    %141 = tpu.matmul %139, %140, %cst_85 {dimension_numbers = #tpu.dot_dimension_numbers<[1], [0], [0], [1], [0, 0, 1, 1], [], []>} : vector<8x128xf32>, vector<128x128xf32>, vector<8x128xf32> -> vector<8x128xf32>
    %c0_86 = arith.constant 0 : index
    %c0_87 = arith.constant 0 : index
    %142 = vector.load %arg5[%c0_86, %c0_87] : memref<1x128xf32, #tpu.memory_space<vmem>>, vector<1x128xf32>
    %143 = vector.broadcast %142 : vector<1x128xf32> to vector<8x128xf32>
    %144 = arith.addf %141, %143 : vector<8x128xf32>
    %cst_88 = arith.constant 0.000000e+00 : f32
    %145 = vector.broadcast %cst_88 : f32 to vector<8x128xf32>
    %146 = arith.maximumf %144, %145 : vector<8x128xf32>
    %c0_89 = arith.constant 0 : index
    %c0_90 = arith.constant 0 : index
    %147 = vector.load %arg6[%c0_89, %c0_90] : memref<128x128xf32, #tpu.memory_space<vmem>>, vector<128x128xf32>
    %cst_91 = arith.constant dense<0.000000e+00> : vector<8x128xf32>
    %148 = tpu.matmul %146, %147, %cst_91 {dimension_numbers = #tpu.dot_dimension_numbers<[1], [0], [0], [1], [0, 0, 1, 1], [], []>} : vector<8x128xf32>, vector<128x128xf32>, vector<8x128xf32> -> vector<8x128xf32>
    %c0_92 = arith.constant 0 : index
    %c0_93 = arith.constant 0 : index
    %149 = vector.load %arg7[%c0_92, %c0_93] : memref<1x128xf32, #tpu.memory_space<vmem>>, vector<1x128xf32>
    %150 = vector.broadcast %149 : vector<1x128xf32> to vector<8x128xf32>
    %151 = arith.addf %148, %150 : vector<8x128xf32>
    %152 = arith.negf %151 : vector<8x128xf32>
    %153 = math.exp %152 : vector<8x128xf32>
    %cst_94 = arith.constant 1.000000e+00 : f32
    %154 = vector.broadcast %cst_94 : f32 to vector<8x128xf32>
    %155 = arith.addf %154, %153 : vector<8x128xf32>
    %156 = arith.divf %154, %155 : vector<8x128xf32>
    %157 = vector.extract_strided_slice %156 {offsets = [0, 0], sizes = [1, 128], strides = [1, 1]} : vector<8x128xf32> to vector<1x128xf32>
    %158 = vector.extract_strided_slice %3 {offsets = [1, 0, 0], sizes = [16, 16, 128], strides = [1, 1, 1]} : vector<18x16x128xbf16> to vector<16x16x128xbf16>
    %159 = vector.shape_cast %158 : vector<16x16x128xbf16> to vector<256x128xbf16>
    %160 = arith.extf %159 : vector<256x128xbf16> to vector<256x128xf32>
    %161 = vector.broadcast %157 : vector<1x128xf32> to vector<256x128xf32>
    %162 = arith.mulf %133, %161 : vector<256x128xf32>
    %163 = arith.addf %162, %160 : vector<256x128xf32>
    %cst_95 = arith.constant 3.000000e+00 : f32
    %164 = vector.broadcast %cst_95 : f32 to vector<256x128xf32>
    %165 = arith.addf %163, %164 : vector<256x128xf32>
    %cst_96 = arith.constant 0.000000e+00 : f32
    %cst_97 = arith.constant 6.000000e+00 : f32
    %166 = vector.broadcast %cst_96 : f32 to vector<256x128xf32>
    %167 = arith.maximumf %166, %165 : vector<256x128xf32>
    %168 = vector.broadcast %cst_97 : f32 to vector<256x128xf32>
    %169 = arith.minimumf %168, %167 : vector<256x128xf32>
    %170 = arith.mulf %163, %169 : vector<256x128xf32>
    %cst_98 = arith.constant 0.166666672 : f32
    %171 = vector.broadcast %cst_98 : f32 to vector<256x128xf32>
    %172 = arith.mulf %170, %171 : vector<256x128xf32>
    %173 = vector.shape_cast %172 : vector<256x128xf32> to vector<1x16x16x128xf32>
    %c0_99 = arith.constant 0 : index
    %c0_100 = arith.constant 0 : index
    %c0_101 = arith.constant 0 : index
    %c0_102 = arith.constant 0 : index
    %174 = vector.load %arg8[%c0_99, %c0_100, %c0_101, %c0_102] : memref<1x16x16x128xf32, #tpu.memory_space<vmem>>, vector<1x16x16x128xf32>
    tpu.vector_store %arg8[%c0_99, %c0_100, %c0_101, %c0_102], %173 {strides = array<i32>} : memref<1x16x16x128xf32, #tpu.memory_space<vmem>>, vector<1x16x16x128xf32>,
    return
  }
  func.func @transform_0(%arg0: i32) -> (i32, i32, i32, i32) {
    %c0_i32 = arith.constant 0 : i32
    %c0_i32_0 = arith.constant 0 : i32
    %c0_i32_1 = arith.constant 0 : i32
    %c0_i32_2 = arith.constant 0 : i32
    return %arg0, %c0_i32, %c0_i32_0, %c0_i32_1 : i32, i32, i32, i32
  }
  func.func @transform_1(%arg0: i32) -> (i32, i32, i32) {
    %c0_i32 = arith.constant 0 : i32
    %c0_i32_0 = arith.constant 0 : i32
    %c0_i32_1 = arith.constant 0 : i32
    %c0_i32_2 = arith.constant 0 : i32
    return %c0_i32, %c0_i32_0, %c0_i32_1 : i32, i32, i32
  }
  func.func @transform_2(%arg0: i32) -> (i32, i32, i32) {
    %c0_i32 = arith.constant 0 : i32
    %c0_i32_0 = arith.constant 0 : i32
    %c0_i32_1 = arith.constant 0 : i32
    %c0_i32_2 = arith.constant 0 : i32
    return %c0_i32, %c0_i32_0, %c0_i32_1 : i32, i32, i32
  }
  func.func @transform_3(%arg0: i32) -> (i32, i32) {
    %c0_i32 = arith.constant 0 : i32
    %c0_i32_0 = arith.constant 0 : i32
    %c0_i32_1 = arith.constant 0 : i32
    return %c0_i32, %c0_i32_0 : i32, i32
  }
  func.func @transform_4(%arg0: i32) -> (i32, i32) {
    %c0_i32 = arith.constant 0 : i32
    %c0_i32_0 = arith.constant 0 : i32
    %c0_i32_1 = arith.constant 0 : i32
    return %c0_i32, %c0_i32_0 : i32, i32
  }
  func.func @transform_5(%arg0: i32) -> (i32, i32) {
    %c0_i32 = arith.constant 0 : i32
    %c0_i32_0 = arith.constant 0 : i32
    %c0_i32_1 = arith.constant 0 : i32
    return %c0_i32, %c0_i32_0 : i32, i32
  }
  func.func @transform_6(%arg0: i32) -> (i32, i32) {
    %c0_i32 = arith.constant 0 : i32
    %c0_i32_0 = arith.constant 0 : i32
    %c0_i32_1 = arith.constant 0 : i32
    return %c0_i32, %c0_i32_0 : i32, i32
  }
  func.func @transform_7(%arg0: i32) -> (i32, i32, i32, i32) {
    %c0_i32 = arith.constant 0 : i32
    %c0_i32_0 = arith.constant 0 : i32
    %c0_i32_1 = arith.constant 0 : i32
    %c0_i32_2 = arith.constant 0 : i32
    return %arg0, %c0_i32, %c0_i32_0, %c0_i32_1 : i32, i32, i32, i32
  }
}

</mosaic_0001>

<llo_original>
// kernel: rescab_forward.1
$region0: #{rescab_forward.1}
  #allocation0 [shape = 'u32[]', space=smem, size = 0x4, offset = 0x4, fixed_abs, tag = 'smem constant byte address 0x4 - core index']
  #allocation1 [shape = 'u32[72,128]{1,0:T(1,128)}', space=vmem, size = 0x9000, scoped, tag = 'internal scratch']
  #allocation2 [shape = 'bf16[18,18,128]{2,1,0:T(8,128)(2,1)}', space=vmem, size = 0x1b000, scoped, tag = 'scratch operand']
  %s0 = inlined_call_operand.vmem [shape: bf16[2,18,18,128], index: 0, kind: input, shape index: {}]
  %s1 = inlined_call_operand.vmem [shape: bf16[9,128,256], index: 1, kind: input, shape index: {}]
  %s2 = inlined_call_operand.hbm [shape: bf16[9,128,128], index: 2, kind: input, shape index: {}]
  %s3 = inlined_call_operand.vmem [shape: f32[128,128], index: 3, kind: input, shape index: {}]
  %s4 = inlined_call_operand.vmem [shape: f32[1,128], index: 4, kind: input, shape index: {}]
  %s5 = inlined_call_operand.vmem [shape: f32[128,128], index: 5, kind: input, shape index: {}]
  %s6 = inlined_call_operand.vmem [shape: f32[1,128], index: 6, kind: input, shape index: {}]
  %s7 = inlined_call_operand.vmem [shape: f32[2,16,16,128], index: 7, kind: output, shape index: {}]
  %s8 = sld [smem:[#allocation0]]
  $region65: #{rescab_forward.1} parent=0
    _
  %s10 = ssub.s32 1, %s8
  %s11 = scalar_select 0, %s10, %s8
  $region1: #{rescab_forward.1} parent=0
    #allocation3 [shape = 'u8[294912]{0}', space=vmem, size = 0x48000, scoped, tag = 'input window, operand 2, single buffered']
    #allocation4 [shape = 's32[2]{0}', space=sflag, size = 0x8, scoped, tag = 'scoped memory for rescab_forward.1']
    %12 = vsyncpa [#allocation4], 0
    loop: start=0, step=1, limit=4
    $region2: #{rescab_forward.1} parent=1 // loop_pre_header
      _
    $region3: #{rescab_forward.1} parent=1 // loop_header
      %s14 = sphi 0, %s18
      %p15 = scmp.ge.s32.totalorder %s14, 4
      %s24 = sphi 0, %s26
      %s27 = sphi 0, %s24
      %s28 = sphi 0, %s27
      %s44 = sphi 0, %s28
      %s48 = sphi 0, %s48
      %s50 = sphi 0, %s48
      %s51 = sphi 0, %s50
      %s65 = sphi 0, %s51
      %s69 = sphi 0, %s69
      %s71 = sphi 0, %s69
      %s72 = sphi 0, %s71
      %s86 = sphi 0, %s72
      %s90 = sphi 0, %s90
      %s92 = sphi 0, %s90
      %s93 = sphi 0, %s92
      %s107 = sphi 0, %s93
      %s111 = sphi 0, %s111
      %s113 = sphi 0, %s111
      %s114 = sphi 0, %s113
      %s128 = sphi 0, %s114
      %s132 = sphi 0, %s132
      %s134 = sphi 0, %s132
      %s135 = sphi 0, %s134
      %s149 = sphi 0, %s135
      %s153 = sphi 0, %s153
      %s155 = sphi 0, %s153
      %s156 = sphi 0, %s155
      %s170 = sphi 0, %s156
      %s176 = sphi 0, %s178
      %s179 = sphi 0, %s176
      %s180 = sphi 0, %s179
      %s196 = sphi 0, %s180
    $region4: #{rescab_forward.1} parent=1 // loop_header_branch
      %17 = sbr.rel (%p15) target = $region8
    $region5: #{rescab_forward.1} parent=1 // loop_body
      %s19 = ssub.s32 %s14, 1
      %s20 = ssub.s32 %s14, 2
      %s21 = sadd.s32 %s14, 1
      %s22 = ssub.s32 %s14, %s21
      %p23 = scmp.eq.s32.totalorder %s22, 0
      %s25 = sadd.s32 %s24, 1
      %s26 = scalar_select %p23, %s24, %s25
      %p29 = pneg %p23
      %p30 = scmp.eq.s32.totalorder %s14, 1
      %p31 = por %p29, %p30
      %p32 = scmp.ne.s32.totalorder %s24, %s27
      %p33 = scmp.eq.s32.totalorder %s14, 0
      %p34 = por %p32, %p33
      %p35 = scmp.ne.s32.totalorder %s24, %s27
      %p36 = scmp.eq.s32.totalorder %s19, 1
      %p37 = por %p35, %p36
      %p38 = scmp.ne.s32.totalorder %s27, %s28
      %p39 = scmp.eq.s32.totalorder %s19, 0
      %p40 = por %p38, %p39
      %p41 = scmp.ne.s32.totalorder %s27, %s28
      %p42 = scmp.eq.s32.totalorder %s20, 1
      %p43 = por %p41, %p42
      %p45 = scmp.ne.s32.totalorder %s28, %s44
      %p46 = scmp.eq.s32.totalorder %s20, 0
      %p47 = por %p45, %p46
      %s49 = sadd.s32 %s48, 1
      %p52 = scmp.eq.s32.totalorder %s14, 1
      %p53 = scmp.ne.s32.totalorder %s48, %s50
      %p54 = scmp.eq.s32.totalorder %s14, 0
      %p55 = por %p53, %p54
      %p56 = scmp.ne.s32.totalorder %s48, %s50
      %p57 = scmp.eq.s32.totalorder %s19, 1
      %p58 = por %p56, %p57
      %p59 = scmp.ne.s32.totalorder %s50, %s51
      %p60 = scmp.eq.s32.totalorder %s19, 0
      %p61 = por %p59, %p60
      %p62 = scmp.ne.s32.totalorder %s50, %s51
      %p63 = scmp.eq.s32.totalorder %s20, 1
      %p64 = por %p62, %p63
      %p66 = scmp.ne.s32.totalorder %s51, %s65
      %p67 = scmp.eq.s32.totalorder %s20, 0
      %p68 = por %p66, %p67
      %s70 = sadd.s32 %s69, 1
      %p73 = scmp.eq.s32.totalorder %s14, 1
      %p74 = scmp.ne.s32.totalorder %s69, %s71
      %p75 = scmp.eq.s32.totalorder %s14, 0
      %p76 = por %p74, %p75
      %p77 = scmp.ne.s32.totalorder %s69, %s71
      %p78 = scmp.eq.s32.totalorder %s19, 1
      %p79 = por %p77, %p78
      %p80 = scmp.ne.s32.totalorder %s71, %s72
      %p81 = scmp.eq.s32.totalorder %s19, 0
      %p82 = por %p80, %p81
      %p83 = scmp.ne.s32.totalorder %s71, %s72
      %p84 = scmp.eq.s32.totalorder %s20, 1
      %p85 = por %p83, %p84
      %p87 = scmp.ne.s32.totalorder %s72, %s86
      %p88 = scmp.eq.s32.totalorder %s20, 0
      %p89 = por %p87, %p88
      %s91 = sadd.s32 %s90, 1
      %p94 = scmp.eq.s32.totalorder %s14, 1
      %p95 = scmp.ne.s32.totalorder %s90, %s92
      %p96 = scmp.eq.s32.totalorder %s14, 0
      %p97 = por %p95, %p96
      %p98 = scmp.ne.s32.totalorder %s90, %s92
      %p99 = scmp.eq.s32.totalorder %s19, 1
      %p100 = por %p98, %p99
      %p101 = scmp.ne.s32.totalorder %s92, %s93
      %p102 = scmp.eq.s32.totalorder %s19, 0
      %p103 = por %p101, %p102
      %p104 = scmp.ne.s32.totalorder %s92, %s93
      %p105 = scmp.eq.s32.totalorder %s20, 1
      %p106 = por %p104, %p105
      %p108 = scmp.ne.s32.totalorder %s93, %s107
      %p109 = scmp.eq.s32.totalorder %s20, 0
      %p110 = por %p108, %p109
      %s112 = sadd.s32 %s111, 1
      %p115 = scmp.eq.s32.totalorder %s14, 1
      %p116 = scmp.ne.s32.totalorder %s111, %s113
      %p117 = scmp.eq.s32.totalorder %s14, 0
      %p118 = por %p116, %p117
      %p119 = scmp.ne.s32.totalorder %s111, %s113
      %p120 = scmp.eq.s32.totalorder %s19, 1
      %p121 = por %p119, %p120
      %p122 = scmp.ne.s32.totalorder %s113, %s114
      %p123 = scmp.eq.s32.totalorder %s19, 0
      %p124 = por %p122, %p123
      %p125 = scmp.ne.s32.totalorder %s113, %s114
      %p126 = scmp.eq.s32.totalorder %s20, 1
      %p127 = por %p125, %p126
      %p129 = scmp.ne.s32.totalorder %s114, %s128
      %p130 = scmp.eq.s32.totalorder %s20, 0
      %p131 = por %p129, %p130
      %s133 = sadd.s32 %s132, 1
      %p136 = scmp.eq.s32.totalorder %s14, 1
      %p137 = scmp.ne.s32.totalorder %s132, %s134
      %p138 = scmp.eq.s32.totalorder %s14, 0
      %p139 = por %p137, %p138
      %p140 = scmp.ne.s32.totalorder %s132, %s134
      %p141 = scmp.eq.s32.totalorder %s19, 1
      %p142 = por %p140, %p141
      %p143 = scmp.ne.s32.totalorder %s134, %s135
      %p144 = scmp.eq.s32.totalorder %s19, 0
      %p145 = por %p143, %p144
      %p146 = scmp.ne.s32.totalorder %s134, %s135
      %p147 = scmp.eq.s32.totalorder %s20, 1
      %p148 = por %p146, %p147
      %p150 = scmp.ne.s32.totalorder %s135, %s149
      %p151 = scmp.eq.s32.totalorder %s20, 0
      %p152 = por %p150, %p151
      %s154 = sadd.s32 %s153, 1
      %p157 = scmp.eq.s32.totalorder %s14, 1
      %p158 = scmp.ne.s32.totalorder %s153, %s155
      %p159 = scmp.eq.s32.totalorder %s14, 0
      %p160 = por %p158, %p159
      %p161 = scmp.ne.s32.totalorder %s153, %s155
      %p162 = scmp.eq.s32.totalorder %s19, 1
      %p163 = por %p161, %p162
      %p164 = scmp.ne.s32.totalorder %s155, %s156
      %p165 = scmp.eq.s32.totalorder %s19, 0
      %p166 = por %p164, %p165
      %p167 = scmp.ne.s32.totalorder %s155, %s156
      %p168 = scmp.eq.s32.totalorder %s20, 1
      %p169 = por %p167, %p168
      %p171 = scmp.ne.s32.totalorder %s156, %s170
      %p172 = scmp.eq.s32.totalorder %s20, 0
      %p173 = por %p171, %p172
      %s174 = ssub.s32 %s14, %s21
      %p175 = scmp.eq.s32.totalorder %s174, 0
      %s177 = sadd.s32 %s176, 1
      %s178 = scalar_select %p175, %s176, %s177
      %p181 = pneg %p175
      %p182 = scmp.eq.s32.totalorder %s14, 1
      %p183 = por %p181, %p182
      %p184 = scmp.ne.s32.totalorder %s176, %s179
      %p185 = scmp.eq.s32.totalorder %s14, 0
      %p186 = por %p184, %p185
      %p187 = scmp.ne.s32.totalorder %s176, %s179
      %p188 = scmp.eq.s32.totalorder %s19, 1
      %p189 = por %p187, %p188
      %p190 = scmp.ne.s32.totalorder %s179, %s180
      %p191 = scmp.eq.s32.totalorder %s19, 0
      %p192 = por %p190, %p191
      %p193 = scmp.ne.s32.totalorder %s179, %s180
      %p194 = scmp.eq.s32.totalorder %s20, 1
      %p195 = por %p193, %p194
      %p197 = scmp.ne.s32.totalorder %s180, %s196
      %p198 = scmp.eq.s32.totalorder %s20, 0
      %p199 = por %p197, %p198
      %p200 = scmp.le.s32.totalorder 1, %s14
      %p201 = scmp.lt.s32.totalorder %s14, 3
      %p202 = pnand %p200, %p201
      %p203 = pneg %p202
      // Predicated region
      $region9: #{rescab_forward.1} parent=5 // pred_check
        _
      $region10: #{rescab_forward.1} parent=5 // pred_check_branch
        %205 = sbr.rel (%p202) target = $region12
      $region11: #{rescab_forward.1} parent=5 // pred_region
        %s206 = ssub.s32 %s14, 1
        // Predicated region
        $region13: #{rescab_forward.1} parent=11 // pred_check
          %p207 = pneg %p61
        $region14: #{rescab_forward.1} parent=11 // pred_check_branch
          %209 = sbr.rel (%p207) target = $region16
        $region15: #{rescab_forward.1} parent=11 // pred_region
          _
        $region16: #{rescab_forward.1} parent=11 // pred_fallthru
          _
        // Predicated region
        $region17: #{rescab_forward.1} parent=11 // pred_check
          %p210 = pneg %p82
        $region18: #{rescab_forward.1} parent=11 // pred_check_branch
          %212 = sbr.rel (%p210) target = $region20
        $region19: #{rescab_forward.1} parent=11 // pred_region
          %214 = vsyncadd [#allocation4], 0
          %s215 = sshll.u32 %s2, 4
          %s216 = int_to_ptr.hbm [resolvable:$true] %s215
          %s217 = sshll.u32 [#allocation3], 4
          %s218 = int_to_ptr.vmem [resolvable:$true] %s217
          %223 = dma.hbm_to_vmem [thread:$0]  %s216, 9216, %s218, [#allocation4], 64, 64, 4
        $region20: #{rescab_forward.1} parent=11 // pred_fallthru
          _
        // Predicated region
        $region21: #{rescab_forward.1} parent=11 // pred_check
          %p224 = pneg %p103
        $region22: #{rescab_forward.1} parent=11 // pred_check_branch
          %226 = sbr.rel (%p224) target = $region24
        $region23: #{rescab_forward.1} parent=11 // pred_region
          _
        $region24: #{rescab_forward.1} parent=11 // pred_fallthru
          _
        // Predicated region
        $region25: #{rescab_forward.1} parent=11 // pred_check
          %p227 = pneg %p124
        $region26: #{rescab_forward.1} parent=11 // pred_check_branch
          %229 = sbr.rel (%p227) target = $region28
        $region27: #{rescab_forward.1} parent=11 // pred_region
          _
        $region28: #{rescab_forward.1} parent=11 // pred_fallthru
          _
        // Predicated region
        $region29: #{rescab_forward.1} parent=11 // pred_check
          %p230 = pneg %p145
        $region30: #{rescab_forward.1} parent=11 // pred_check_branch
          %232 = sbr.rel (%p230) target = $region32
        $region31: #{rescab_forward.1} parent=11 // pred_region
          _
        $region32: #{rescab_forward.1} parent=11 // pred_fallthru
          _
        // Predicated region
        $region33: #{rescab_forward.1} parent=11 // pred_check
          %p233 = pneg %p166
        $region34: #{rescab_forward.1} parent=11 // pred_check_branch
          %235 = sbr.rel (%p233) target = $region36
        $region35: #{rescab_forward.1} parent=11 // pred_region
          _
        $region36: #{rescab_forward.1} parent=11 // pred_fallthru
          _
      $region12: #{rescab_forward.1} parent=5 // pred_fallthru
        _
      %p236 = scmp.lt.s32.totalorder %s14, 2
      // Predicated region
      $region37: #{rescab_forward.1} parent=5 // pred_check
        %p237 = pneg %p236
      $region38: #{rescab_forward.1} parent=5 // pred_check_branch
        %239 = sbr.rel (%p237) target = $region40
      $region39: #{rescab_forward.1} parent=5 // pred_region
        // Predicated region
        $region41: #{rescab_forward.1} parent=39 // pred_check
          %p240 = pneg %p34
        $region42: #{rescab_forward.1} parent=39 // pred_check_branch
          %242 = sbr.rel (%p240) target = $region44
        $region43: #{rescab_forward.1} parent=39 // pred_region
          %p243 = scmp.lt.s32.totalorder %s14, 1
          %s244 = scalar_select %p243, %s14, 1
          %s245 = smul.addr %s244, 54
          %s246 = smul.addr %s245, 4
          %s247 = scalar_lea.vmem %s0, %s246
        $region44: #{rescab_forward.1} parent=39 // pred_fallthru
          _
      $region40: #{rescab_forward.1} parent=5 // pred_fallthru
        _
      %p248 = scmp.le.s32.totalorder 1, %s14
      %p249 = scmp.lt.s32.totalorder %s14, 3
      %p250 = pnand %p248, %p249
      %p251 = pneg %p250
      // Predicated region
      $region45: #{rescab_forward.1} parent=5 // pred_check
        _
      $region46: #{rescab_forward.1} parent=5 // pred_check_branch
        %253 = sbr.rel (%p250) target = $region48
      $region47: #{rescab_forward.1} parent=5 // pred_region
        %s254 = ssub.s32 %s14, 1
        // Predicated region
        $region49: #{rescab_forward.1} parent=47 // pred_check
          %p255 = pneg %p82
        $region50: #{rescab_forward.1} parent=47 // pred_check_branch
          %257 = sbr.rel (%p255) target = $region52
        $region51: #{rescab_forward.1} parent=47 // pred_region
          %259 = dma.done [#allocation4], 9216
        $region52: #{rescab_forward.1} parent=47 // pred_fallthru
          _
        %p260 = scmp.lt.s32.totalorder %s19, 1
        %s261 = scalar_select %p260, %s19, 1
        %s262 = smul.addr %s261, 54
        %s263 = smul.addr %s262, 4
        %s264 = scalar_lea.vmem %s0, %s263
        %p265 = pneg %p40
        %p266 = pneg %p37
        %p267 = pneg %p61
        %p268 = pneg %p58
        %p269 = pneg %p82
        %p270 = pneg %p79
        %p271 = pneg %p103
        %p272 = pneg %p100
        %p273 = pneg %p124
        %p274 = pneg %p121
        %p275 = pneg %p145
        %p276 = pneg %p142
        %p277 = pneg %p166
        %p278 = pneg %p163
        %p279 = pneg %p192
        %p280 = pneg %p189
        %p281 = scmp.lt.s32.totalorder %s19, 1
        %s282 = scalar_select %p281, %s19, 1
        %s283 = smul.addr %s282, 32
        %s284 = smul.addr %s283, 8
        %s285 = scalar_lea.vmem %s7, %s284
        %p286 = scmp.lt.s32.totalorder %s19, 1
        %s287 = scalar_select %p286, %s19, 1
        %s288 = smul.addr %s287, 54
        %s289 = smul.addr %s288, 4
        %s290 = scalar_lea.vmem %s0, %s289
        %p291 = scmp.lt.s32.totalorder %s19, 1
        %s292 = scalar_select %p291, %s19, 1
        %s293 = smul.addr %s292, 32
        %s294 = smul.addr %s293, 8
        %s295 = scalar_lea.vmem %s7, %s294
        %v297 = vld [vmem:[%s290] sm:$0xf]
        %v298 = vld [vmem:[%s290 + $0x4] sm:$0xf]
        %v299 = vld [vmem:[%s290 + $0x8] sm:$0x1]
        %v300 = vld [vmem:[%s290 + $0xc] sm:$0xf]
        %v301 = vld [vmem:[%s290 + $0x10] sm:$0xf]
        %v302 = vld [vmem:[%s290 + $0x14] sm:$0x1]
        %v303 = vld [vmem:[%s290 + $0x18] sm:$0xf]
        %v304 = vld [vmem:[%s290 + $0x1c] sm:$0xf]
        %v305 = vld [vmem:[%s290 + $0x20] sm:$0x1]
        %v306 = vld [vmem:[%s290 + $0x24] sm:$0xf]
        %v307 = vld [vmem:[%s290 + $0x28] sm:$0xf]
        %v308 = vld [vmem:[%s290 + $0x2c] sm:$0x1]
        %v309 = vld [vmem:[%s290 + $0x30] sm:$0xf]
        %v310 = vld [vmem:[%s290 + $0x34] sm:$0xf]
        %v311 = vld [vmem:[%s290 + $0x38] sm:$0x1]
        %v312 = vld [vmem:[%s290 + $0x3c] sm:$0xf]
        %v313 = vld [vmem:[%s290 + $0x40] sm:$0xf]
        %v314 = vld [vmem:[%s290 + $0x44] sm:$0x1]
        %v315 = vld [vmem:[%s290 + $0x48] sm:$0xf]
        %v316 = vld [vmem:[%s290 + $0x4c] sm:$0xf]
        %v317 = vld [vmem:[%s290 + $0x50] sm:$0x1]
        %v318 = vld [vmem:[%s290 + $0x54] sm:$0xf]
        %v319 = vld [vmem:[%s290 + $0x58] sm:$0xf]
        %v320 = vld [vmem:[%s290 + $0x5c] sm:$0x1]
        %v321 = vld [vmem:[%s290 + $0x60] sm:$0xf]
        %v322 = vld [vmem:[%s290 + $0x64] sm:$0xf]
        %v323 = vld [vmem:[%s290 + $0x68] sm:$0x1]
        %v324 = vld [vmem:[%s290 + $0x6c] sm:$0xf]
        %v325 = vld [vmem:[%s290 + $0x70] sm:$0xf]
        %v326 = vld [vmem:[%s290 + $0x74] sm:$0x1]
        %v327 = vld [vmem:[%s290 + $0x78] sm:$0xf]
        %v328 = vld [vmem:[%s290 + $0x7c] sm:$0xf]
        %v329 = vld [vmem:[%s290 + $0x80] sm:$0x1]
        %v330 = vld [vmem:[%s290 + $0x84] sm:$0xf]
        %v331 = vld [vmem:[%s290 + $0x88] sm:$0xf]
        %v332 = vld [vmem:[%s290 + $0x8c] sm:$0x1]
        %v333 = vld [vmem:[%s290 + $0x90] sm:$0xf]
        %v334 = vld [vmem:[%s290 + $0x94] sm:$0xf]
        %v335 = vld [vmem:[%s290 + $0x98] sm:$0x1]
        %v336 = vld [vmem:[%s290 + $0x9c] sm:$0xf]
        %v337 = vld [vmem:[%s290 + $0xa0] sm:$0xf]
        %v338 = vld [vmem:[%s290 + $0xa4] sm:$0x1]
        %v339 = vld [vmem:[%s290 + $0xa8] sm:$0xf]
        %v340 = vld [vmem:[%s290 + $0xac] sm:$0xf]
        %v341 = vld [vmem:[%s290 + $0xb0] sm:$0x1]
        %v342 = vld [vmem:[%s290 + $0xb4] sm:$0xf]
        %v343 = vld [vmem:[%s290 + $0xb8] sm:$0xf]
        %v344 = vld [vmem:[%s290 + $0xbc] sm:$0x1]
        %v345 = vld [vmem:[%s290 + $0xc0] sm:$0xf]
        %v346 = vld [vmem:[%s290 + $0xc4] sm:$0xf]
        %v347 = vld [vmem:[%s290 + $0xc8] sm:$0x1]
        %v348 = vld [vmem:[%s290 + $0xcc] sm:$0xf]
        %v349 = vld [vmem:[%s290 + $0xd0] sm:$0xf]
        %v350 = vld [vmem:[%s290 + $0xd4] sm:$0x1]
        %v351 = vld [vmem:[%s1] sm:$0xff]
        %v352 = vld [vmem:[%s1 + $0x8] sm:$0xff]
        %v353 = vld [vmem:[%s1 + $0x10] sm:$0xff]
        %v354 = vld [vmem:[%s1 + $0x18] sm:$0xff]
        %v355 = vld [vmem:[%s1 + $0x20] sm:$0xff]
        %v356 = vld [vmem:[%s1 + $0x28] sm:$0xff]
        %v357 = vld [vmem:[%s1 + $0x30] sm:$0xff]
        %v358 = vld [vmem:[%s1 + $0x38] sm:$0xff]
        %v359 = vld [vmem:[%s1 + $0x40] sm:$0xff]
        %v360 = vld [vmem:[%s1 + $0x48] sm:$0xff]
        %v361 = vld [vmem:[%s1 + $0x50] sm:$0xff]
        %v362 = vld [vmem:[%s1 + $0x58] sm:$0xff]
        %v363 = vld [vmem:[%s1 + $0x60] sm:$0xff]
        %v364 = vld [vmem:[%s1 + $0x68] sm:$0xff]
        %v365 = vld [vmem:[%s1 + $0x70] sm:$0xff]
        %v366 = vld [vmem:[%s1 + $0x78] sm:$0xff]
        %vm367 = vsmask.f32 3328
        %vm368 = vsmask.f32 7440
        %vm369 = vmor %vm367, %vm368
        %v371 = vshrl.u32 %v297, 16
        %v373 = vrot.slane %v371, 4
        %v374 = vshll.u32 %v297, 16
        %v376 = vrot.slane %v374, 5
        %v377 = vor.u32 %v373, %v376
        %v378 = vrot.slane %v377, 4
        %v380 = vshll.u32 %v298, 16
        %v382 = vrot.slane %v380, 5
        %v383 = vsel %vm369, %v378, %v382
        %v384 = vshrl.u32 %v298, 16
        %v386 = vrot.slane %v384, 4
        %v387 = vor.u32 %v386, %v382
        %v388 = vrot.slane %v387, 4
        %v390 = vshll.u32 %v299, 16
        %v392 = vrot.slane %v390, 5
        %v393 = vsel %vm369, %v388, %v392
        %v395 = vshrl.u32 %v300, 16
        %v397 = vrot.slane %v395, 4
        %v398 = vshll.u32 %v300, 16
        %v400 = vrot.slane %v398, 5
        %v401 = vor.u32 %v397, %v400
        %v402 = vrot.slane %v401, 4
        %v404 = vshll.u32 %v301, 16
        %v406 = vrot.slane %v404, 5
        %v407 = vsel %vm369, %v402, %v406
        %v408 = vshrl.u32 %v301, 16
        %v410 = vrot.slane %v408, 4
        %v411 = vor.u32 %v410, %v406
        %v412 = vrot.slane %v411, 4
        %v414 = vshll.u32 %v302, 16
        %v416 = vrot.slane %v414, 5
        %v417 = vsel %vm369, %v412, %v416
        %v419 = vshrl.u32 %v303, 16
        %v421 = vrot.slane %v419, 4
        %v422 = vshll.u32 %v303, 16
        %v424 = vrot.slane %v422, 5
        %v425 = vor.u32 %v421, %v424
        %v426 = vrot.slane %v425, 4
        %v428 = vshll.u32 %v304, 16
        %v430 = vrot.slane %v428, 5
        %v431 = vsel %vm369, %v426, %v430
        %v432 = vshrl.u32 %v304, 16
        %v434 = vrot.slane %v432, 4
        %v435 = vor.u32 %v434, %v430
        %v436 = vrot.slane %v435, 4
        %v438 = vshll.u32 %v305, 16
        %v440 = vrot.slane %v438, 5
        %v441 = vsel %vm369, %v436, %v440
        %v443 = vshrl.u32 %v306, 16
        %v445 = vrot.slane %v443, 4
        %v446 = vshll.u32 %v306, 16
        %v448 = vrot.slane %v446, 5
        %v449 = vor.u32 %v445, %v448
        %v450 = vrot.slane %v449, 4
        %v452 = vshll.u32 %v307, 16
        %v454 = vrot.slane %v452, 5
        %v455 = vsel %vm369, %v450, %v454
        %v456 = vshrl.u32 %v307, 16
        %v458 = vrot.slane %v456, 4
        %v459 = vor.u32 %v458, %v454
        %v460 = vrot.slane %v459, 4
        %v462 = vshll.u32 %v308, 16
        %v464 = vrot.slane %v462, 5
        %v465 = vsel %vm369, %v460, %v464
        %v467 = vshrl.u32 %v309, 16
        %v469 = vrot.slane %v467, 4
        %v470 = vshll.u32 %v309, 16
        %v472 = vrot.slane %v470, 5
        %v473 = vor.u32 %v469, %v472
        %v474 = vrot.slane %v473, 4
        %v476 = vshll.u32 %v310, 16
        %v478 = vrot.slane %v476, 5
        %v479 = vsel %vm369, %v474, %v478
        %v480 = vshrl.u32 %v310, 16
        %v482 = vrot.slane %v480, 4
        %v483 = vor.u32 %v482, %v478
        %v484 = vrot.slane %v483, 4
        %v486 = vshll.u32 %v311, 16
        %v488 = vrot.slane %v486, 5
        %v489 = vsel %vm369, %v484, %v488
        %v491 = vshrl.u32 %v312, 16
        %v493 = vrot.slane %v491, 4
        %v494 = vshll.u32 %v312, 16
        %v496 = vrot.slane %v494, 5
        %v497 = vor.u32 %v493, %v496
        %v498 = vrot.slane %v497, 4
        %v500 = vshll.u32 %v313, 16
        %v502 = vrot.slane %v500, 5
        %v503 = vsel %vm369, %v498, %v502
        %v504 = vshrl.u32 %v313, 16
        %v506 = vrot.slane %v504, 4
        %v507 = vor.u32 %v506, %v502
        %v508 = vrot.slane %v507, 4
        %v510 = vshll.u32 %v314, 16
        %v512 = vrot.slane %v510, 5
        %v513 = vsel %vm369, %v508, %v512
        %v515 = vshrl.u32 %v315, 16
        %v517 = vrot.slane %v515, 4
        %v518 = vshll.u32 %v315, 16
        %v520 = vrot.slane %v518, 5
        %v521 = vor.u32 %v517, %v520
        %v522 = vrot.slane %v521, 4
        %v524 = vshll.u32 %v316, 16
        %v526 = vrot.slane %v524, 5
        %v527 = vsel %vm369, %v522, %v526
        %v528 = vshrl.u32 %v316, 16
        %v530 = vrot.slane %v528, 4
        %v531 = vor.u32 %v530, %v526
        %v532 = vrot.slane %v531, 4
        %v534 = vshll.u32 %v317, 16
        %v536 = vrot.slane %v534, 5
        %v537 = vsel %vm369, %v532, %v536
        %v539 = vshrl.u32 %v318, 16
        %v541 = vrot.slane %v539, 4
        %v542 = vshll.u32 %v318, 16
        %v544 = vrot.slane %v542, 5
        %v545 = vor.u32 %v541, %v544
        %v546 = vrot.slane %v545, 4
        %v548 = vshll.u32 %v319, 16
        %v550 = vrot.slane %v548, 5
        %v551 = vsel %vm369, %v546, %v550
        %v552 = vshrl.u32 %v319, 16
        %v554 = vrot.slane %v552, 4
        %v555 = vor.u32 %v554, %v550
        %v556 = vrot.slane %v555, 4
        %v558 = vshll.u32 %v320, 16
        %v560 = vrot.slane %v558, 5
        %v561 = vsel %vm369, %v556, %v560
        %v563 = vshrl.u32 %v321, 16
        %v565 = vrot.slane %v563, 4
        %v566 = vshll.u32 %v321, 16
        %v568 = vrot.slane %v566, 5
        %v569 = vor.u32 %v565, %v568
        %v570 = vrot.slane %v569, 4
        %v572 = vshll.u32 %v322, 16
        %v574 = vrot.slane %v572, 5
        %v575 = vsel %vm369, %v570, %v574
        %v576 = vshrl.u32 %v322, 16
        %v578 = vrot.slane %v576, 4
        %v579 = vor.u32 %v578, %v574
        %v580 = vrot.slane %v579, 4
        %v582 = vshll.u32 %v323, 16
        %v584 = vrot.slane %v582, 5
        %v585 = vsel %vm369, %v580, %v584
        %v587 = vshrl.u32 %v324, 16
        %v589 = vrot.slane %v587, 4
        %v590 = vshll.u32 %v324, 16
        %v592 = vrot.slane %v590, 5
        %v593 = vor.u32 %v589, %v592
        %v594 = vrot.slane %v593, 4
        %v596 = vshll.u32 %v325, 16
        %v598 = vrot.slane %v596, 5
        %v599 = vsel %vm369, %v594, %v598
        %v600 = vshrl.u32 %v325, 16
        %v602 = vrot.slane %v600, 4
        %v603 = vor.u32 %v602, %v598
        %v604 = vrot.slane %v603, 4
        %v606 = vshll.u32 %v326, 16
        %v608 = vrot.slane %v606, 5
        %v609 = vsel %vm369, %v604, %v608
        %v611 = vshrl.u32 %v327, 16
        %v613 = vrot.slane %v611, 4
        %v614 = vshll.u32 %v327, 16
        %v616 = vrot.slane %v614, 5
        %v617 = vor.u32 %v613, %v616
        %v618 = vrot.slane %v617, 4
        %v620 = vshll.u32 %v328, 16
        %v622 = vrot.slane %v620, 5
        %v623 = vsel %vm369, %v618, %v622
        %v624 = vshrl.u32 %v328, 16
        %v626 = vrot.slane %v624, 4
        %v627 = vor.u32 %v626, %v622
        %v628 = vrot.slane %v627, 4
        %v630 = vshll.u32 %v329, 16
        %v632 = vrot.slane %v630, 5
        %v633 = vsel %vm369, %v628, %v632
        %v635 = vshrl.u32 %v330, 16
        %v637 = vrot.slane %v635, 4
        %v638 = vshll.u32 %v330, 16
        %v640 = vrot.slane %v638, 5
        %v641 = vor.u32 %v637, %v640
        %v642 = vrot.slane %v641, 4
        %v644 = vshll.u32 %v331, 16
        %v646 = vrot.slane %v644, 5
        %v647 = vsel %vm369, %v642, %v646
        %v648 = vshrl.u32 %v331, 16
        %v650 = vrot.slane %v648, 4
        %v651 = vor.u32 %v650, %v646
        %v652 = vrot.slane %v651, 4
        %v654 = vshll.u32 %v332, 16
        %v656 = vrot.slane %v654, 5
        %v657 = vsel %vm369, %v652, %v656
        %v659 = vshrl.u32 %v333, 16
        %v661 = vrot.slane %v659, 4
        %v662 = vshll.u32 %v333, 16
        %v664 = vrot.slane %v662, 5
        %v665 = vor.u32 %v661, %v664
        %v666 = vrot.slane %v665, 4
        %v668 = vshll.u32 %v334, 16
        %v670 = vrot.slane %v668, 5
        %v671 = vsel %vm369, %v666, %v670
        %v672 = vshrl.u32 %v334, 16
        %v674 = vrot.slane %v672, 4
        %v675 = vor.u32 %v674, %v670
        %v676 = vrot.slane %v675, 4
        %v678 = vshll.u32 %v335, 16
        %v680 = vrot.slane %v678, 5
        %v681 = vsel %vm369, %v676, %v680
        %v683 = vshrl.u32 %v336, 16
        %v685 = vrot.slane %v683, 4
        %v686 = vshll.u32 %v336, 16
        %v688 = vrot.slane %v686, 5
        %v689 = vor.u32 %v685, %v688
        %v690 = vrot.slane %v689, 4
        %v692 = vshll.u32 %v337, 16
        %v694 = vrot.slane %v692, 5
        %v695 = vsel %vm369, %v690, %v694
        %v696 = vshrl.u32 %v337, 16
        %v698 = vrot.slane %v696, 4
        %v699 = vor.u32 %v698, %v694
        %v700 = vrot.slane %v699, 4
        %v702 = vshll.u32 %v338, 16
        %v704 = vrot.slane %v702, 5
        %v705 = vsel %vm369, %v700, %v704
        %v707 = vshrl.u32 %v339, 16
        %v709 = vrot.slane %v707, 4
        %v710 = vshll.u32 %v339, 16
        %v712 = vrot.slane %v710, 5
        %v713 = vor.u32 %v709, %v712
        %v714 = vrot.slane %v713, 4
        %v716 = vshll.u32 %v340, 16
        %v718 = vrot.slane %v716, 5
        %v719 = vsel %vm369, %v714, %v718
        %v720 = vshrl.u32 %v340, 16
        %v722 = vrot.slane %v720, 4
        %v723 = vor.u32 %v722, %v718
        %v724 = vrot.slane %v723, 4
        %v726 = vshll.u32 %v341, 16
        %v728 = vrot.slane %v726, 5
        %v729 = vsel %vm369, %v724, %v728
        %v731 = vshrl.u32 %v342, 16
        %v733 = vrot.slane %v731, 4
        %v734 = vshll.u32 %v342, 16
        %v736 = vrot.slane %v734, 5
        %v737 = vor.u32 %v733, %v736
        %v738 = vrot.slane %v737, 4
        %v740 = vshll.u32 %v343, 16
        %v742 = vrot.slane %v740, 5
        %v743 = vsel %vm369, %v738, %v742
        %v744 = vshrl.u32 %v343, 16
        %v746 = vrot.slane %v744, 4
        %v747 = vor.u32 %v746, %v742
        %v748 = vrot.slane %v747, 4
        %v750 = vshll.u32 %v344, 16
        %v752 = vrot.slane %v750, 5
        %v753 = vsel %vm369, %v748, %v752
        %s754 = scalar_lea.vmem %s1, 128
        %v755 = vld [vmem:[%s754] sm:$0xff]
        %v756 = vld [vmem:[%s754 + $0x8] sm:$0xff]
        %v757 = vld [vmem:[%s754 + $0x10] sm:$0xff]
        %v758 = vld [vmem:[%s754 + $0x18] sm:$0xff]
        %v759 = vld [vmem:[%s754 + $0x20] sm:$0xff]
        %v760 = vld [vmem:[%s754 + $0x28] sm:$0xff]
        %v761 = vld [vmem:[%s754 + $0x30] sm:$0xff]
        %v762 = vld [vmem:[%s754 + $0x38] sm:$0xff]
        %v763 = vld [vmem:[%s754 + $0x40] sm:$0xff]
        %v764 = vld [vmem:[%s754 + $0x48] sm:$0xff]
        %v765 = vld [vmem:[%s754 + $0x50] sm:$0xff]
        %v766 = vld [vmem:[%s754 + $0x58] sm:$0xff]
        %v767 = vld [vmem:[%s754 + $0x60] sm:$0xff]
        %v768 = vld [vmem:[%s754 + $0x68] sm:$0xff]
        %v769 = vld [vmem:[%s754 + $0x70] sm:$0xff]
        %v770 = vld [vmem:[%s754 + $0x78] sm:$0xff]
        %v771 = vunpack.c.l.b16 %v383
        %v772 = vunpack.c.l.b16 %v393
        %v773 = vunpack.c.l.b16 %v407
        %v774 = vunpack.c.l.b16 %v417
        %v775 = vunpack.c.l.b16 %v431
        %v776 = vunpack.c.l.b16 %v441
        %v777 = vunpack.c.l.b16 %v455
        %v778 = vunpack.c.l.b16 %v465
        %v779 = vunpack.c.l.b16 %v479
        %v780 = vunpack.c.l.b16 %v489
        %v781 = vunpack.c.l.b16 %v503
        %v782 = vunpack.c.l.b16 %v513
        %v783 = vunpack.c.l.b16 %v527
        %v784 = vunpack.c.l.b16 %v537
        %v785 = vunpack.c.l.b16 %v551
        %v786 = vunpack.c.l.b16 %v561
        %v787 = vunpack.c.l.b16 %v575
        %v788 = vunpack.c.l.b16 %v585
        %v789 = vunpack.c.l.b16 %v599
        %v790 = vunpack.c.l.b16 %v609
        %v791 = vunpack.c.l.b16 %v623
        %v792 = vunpack.c.l.b16 %v633
        %v793 = vunpack.c.l.b16 %v647
        %v794 = vunpack.c.l.b16 %v657
        %v795 = vunpack.c.l.b16 %v671
        %v796 = vunpack.c.l.b16 %v681
        %v797 = vunpack.c.l.b16 %v695
        %v798 = vunpack.c.l.b16 %v705
        %v799 = vunpack.c.l.b16 %v719
        %v800 = vunpack.c.l.b16 %v729
        %v801 = vunpack.c.l.b16 %v743
        %v802 = vunpack.c.l.b16 %v753
        %v803 = vpack.c.b16 %v772, %v771
        %v804 = vpack.c.b16 %v774, %v773
        %v805 = vpack.c.b16 %v776, %v775
        %v806 = vpack.c.b16 %v778, %v777
        %v807 = vpack.c.b16 %v780, %v779
        %v808 = vpack.c.b16 %v782, %v781
        %v809 = vpack.c.b16 %v784, %v783
        %v810 = vpack.c.b16 %v786, %v785
        %v811 = vpack.c.b16 %v788, %v787
        %v812 = vpack.c.b16 %v790, %v789
        %v813 = vpack.c.b16 %v792, %v791
        %v814 = vpack.c.b16 %v794, %v793
        %v815 = vpack.c.b16 %v796, %v795
        %v816 = vpack.c.b16 %v798, %v797
        %v817 = vpack.c.b16 %v800, %v799
        %v818 = vpack.c.b16 %v802, %v801
        %v851 = vunpack.c.l.b16 %v755
        %v852 = vunpack.c.h.b16 %v755
        %v853 = vunpack.c.l.b16 %v756
        %v854 = vunpack.c.h.b16 %v756
        %v855 = vunpack.c.l.b16 %v757
        %v856 = vunpack.c.h.b16 %v757
        %v857 = vunpack.c.l.b16 %v758
        %v858 = vunpack.c.h.b16 %v758
        %v859 = vunpack.c.l.b16 %v759
        %v860 = vunpack.c.h.b16 %v759
        %v861 = vunpack.c.l.b16 %v760
        %v862 = vunpack.c.h.b16 %v760
        %v863 = vunpack.c.l.b16 %v761
        %v864 = vunpack.c.h.b16 %v761
        %v865 = vunpack.c.l.b16 %v762
        %v866 = vunpack.c.h.b16 %v762
        %v867 = vunpack.c.l.b16 %v763
        %v868 = vunpack.c.h.b16 %v763
        %v869 = vunpack.c.l.b16 %v764
        %v870 = vunpack.c.h.b16 %v764
        %v871 = vunpack.c.l.b16 %v765
        %v872 = vunpack.c.h.b16 %v765
        %v873 = vunpack.c.l.b16 %v766
        %v874 = vunpack.c.h.b16 %v766
        %v875 = vunpack.c.l.b16 %v767
        %v876 = vunpack.c.h.b16 %v767
        %v877 = vunpack.c.l.b16 %v768
        %v878 = vunpack.c.h.b16 %v768
        %v879 = vunpack.c.l.b16 %v769
        %v880 = vunpack.c.h.b16 %v769
        %v881 = vunpack.c.l.b16 %v770
        %v882 = vunpack.c.h.b16 %v770
        %v883 = vpack.c.b16 %v853, %v851
        %v884 = vpack.c.b16 %v854, %v852
        %v885 = vpack.c.b16 %v857, %v855
        %v886 = vpack.c.b16 %v858, %v856
        %v887 = vpack.c.b16 %v861, %v859
        %v888 = vpack.c.b16 %v862, %v860
        %v889 = vpack.c.b16 %v865, %v863
        %v890 = vpack.c.b16 %v866, %v864
        %v891 = vpack.c.b16 %v869, %v867
        %v892 = vpack.c.b16 %v870, %v868
        %v893 = vpack.c.b16 %v873, %v871
        %v894 = vpack.c.b16 %v874, %v872
        %v895 = vpack.c.b16 %v877, %v875
        %v896 = vpack.c.b16 %v878, %v876
        %v897 = vpack.c.b16 %v881, %v879
        %v898 = vpack.c.b16 %v882, %v880
        %915 = vmatpush.bf16.msra.mxu0 %v897
        %916 = vmatpush.bf16.msra.mxu0 %v895
        %917 = vmatpush.bf16.msra.mxu0 %v893
        %918 = vmatpush.bf16.msra.mxu0 %v891
        %919 = vmatpush.bf16.msra.mxu0 %v889
        %920 = vmatpush.bf16.msra.mxu0 %v887
        %921 = vmatpush.bf16.msra.mxu0 %v885
        %922 = vmatpush.bf16.msra.mxu0 %v883
        %923 = vmatmul.bf16.gmra.mxu0 %v803
        %v924 = vpop.f32.mrf.mxu0
        %v925 = vadd.f32 0.0, %v924
        %v926 = vpop.f32.mrf.mxu0
        %v927 = vadd.f32 0.0, %v926
        %928 = vmatmul.bf16.gmra.mxu0 %v804
        %v929 = vpop.f32.mrf.mxu0
        %v930 = vadd.f32 0.0, %v929
        %v931 = vpop.f32.mrf.mxu0
        %v932 = vadd.f32 0.0, %v931
        %933 = vmatmul.bf16.gmra.mxu0 %v805
        %v934 = vpop.f32.mrf.mxu0
        %v935 = vadd.f32 0.0, %v934
        %v936 = vpop.f32.mrf.mxu0
        %v937 = vadd.f32 0.0, %v936
        %938 = vmatmul.bf16.gmra.mxu0 %v806
        %v939 = vpop.f32.mrf.mxu0
        %v940 = vadd.f32 0.0, %v939
        %v941 = vpop.f32.mrf.mxu0
        %v942 = vadd.f32 0.0, %v941
        %943 = vmatmul.bf16.gmra.mxu0 %v807
        %v944 = vpop.f32.mrf.mxu0
        %v945 = vadd.f32 0.0, %v944
        %v946 = vpop.f32.mrf.mxu0
        %v947 = vadd.f32 0.0, %v946
        %948 = vmatmul.bf16.gmra.mxu0 %v808
        %v949 = vpop.f32.mrf.mxu0
        %v950 = vadd.f32 0.0, %v949
        %v951 = vpop.f32.mrf.mxu0
        %v952 = vadd.f32 0.0, %v951
        %953 = vmatmul.bf16.gmra.mxu0 %v809
        %v954 = vpop.f32.mrf.mxu0
        %v955 = vadd.f32 0.0, %v954
        %v956 = vpop.f32.mrf.mxu0
        %v957 = vadd.f32 0.0, %v956
        %958 = vmatmul.bf16.gmra.mxu0 %v810
        %v959 = vpop.f32.mrf.mxu0
        %v960 = vadd.f32 0.0, %v959
        %v961 = vpop.f32.mrf.mxu0
        %v962 = vadd.f32 0.0, %v961
        %963 = vmatmul.bf16.gmra.mxu0 %v811
        %v964 = vpop.f32.mrf.mxu0
        %v965 = vadd.f32 0.0, %v964
        %v966 = vpop.f32.mrf.mxu0
        %v967 = vadd.f32 0.0, %v966
        %968 = vmatmul.bf16.gmra.mxu0 %v812
        %v969 = vpop.f32.mrf.mxu0
        %v970 = vadd.f32 0.0, %v969
        %v971 = vpop.f32.mrf.mxu0
        %v972 = vadd.f32 0.0, %v971
        %973 = vmatmul.bf16.gmra.mxu0 %v813
        %v974 = vpop.f32.mrf.mxu0
        %v975 = vadd.f32 0.0, %v974
        %v976 = vpop.f32.mrf.mxu0
        %v977 = vadd.f32 0.0, %v976
        %978 = vmatmul.bf16.gmra.mxu0 %v814
        %v979 = vpop.f32.mrf.mxu0
        %v980 = vadd.f32 0.0, %v979
        %v981 = vpop.f32.mrf.mxu0
        %v982 = vadd.f32 0.0, %v981
        %983 = vmatmul.bf16.gmra.mxu0 %v815
        %v984 = vpop.f32.mrf.mxu0
        %v985 = vadd.f32 0.0, %v984
        %v986 = vpop.f32.mrf.mxu0
        %v987 = vadd.f32 0.0, %v986
        %988 = vmatmul.bf16.gmra.mxu0 %v816
        %v989 = vpop.f32.mrf.mxu0
        %v990 = vadd.f32 0.0, %v989
        %v991 = vpop.f32.mrf.mxu0
        %v992 = vadd.f32 0.0, %v991
        %993 = vmatmul.bf16.gmra.mxu0 %v817
        %v994 = vpop.f32.mrf.mxu0
        %v995 = vadd.f32 0.0, %v994
        %v996 = vpop.f32.mrf.mxu0
        %v997 = vadd.f32 0.0, %v996
        %998 = vmatmul.bf16.gmra.mxu0 %v818
        %v999 = vpop.f32.mrf.mxu0
        %v1000 = vadd.f32 0.0, %v999
        %v1001 = vpop.f32.mrf.mxu0
        %v1002 = vadd.f32 0.0, %v1001
        %1003 = vdwg.mxu0
        %1004 = vmatpush.bf16.msra.mxu0 %v898
        %1005 = vmatpush.bf16.msra.mxu0 %v896
        %1006 = vmatpush.bf16.msra.mxu0 %v894
        %1007 = vmatpush.bf16.msra.mxu0 %v892
        %1008 = vmatpush.bf16.msra.mxu0 %v890
        %1009 = vmatpush.bf16.msra.mxu0 %v888
        %1010 = vmatpush.bf16.msra.mxu0 %v886
        %1011 = vmatpush.bf16.msra.mxu0 %v884
        %1012 = vmatmul.bf16.gmra.mxu0 %v803
        %v1013 = vpop.f32.mrf.mxu0
        %v1014 = vadd.f32 0.0, %v1013
        %v1015 = vpop.f32.mrf.mxu0
        %v1016 = vadd.f32 0.0, %v1015
        %1017 = vmatmul.bf16.gmra.mxu0 %v804
        %v1018 = vpop.f32.mrf.mxu0
        %v1019 = vadd.f32 0.0, %v1018
        %v1020 = vpop.f32.mrf.mxu0
        %v1021 = vadd.f32 0.0, %v1020
        %1022 = vmatmul.bf16.gmra.mxu0 %v805
        %v1023 = vpop.f32.mrf.mxu0
        %v1024 = vadd.f32 0.0, %v1023
        %v1025 = vpop.f32.mrf.mxu0
        %v1026 = vadd.f32 0.0, %v1025
        %1027 = vmatmul.bf16.gmra.mxu0 %v806
        %v1028 = vpop.f32.mrf.mxu0
        %v1029 = vadd.f32 0.0, %v1028
        %v1030 = vpop.f32.mrf.mxu0
        %v1031 = vadd.f32 0.0, %v1030
        %1032 = vmatmul.bf16.gmra.mxu0 %v807
        %v1033 = vpop.f32.mrf.mxu0
        %v1034 = vadd.f32 0.0, %v1033
        %v1035 = vpop.f32.mrf.mxu0
        %v1036 = vadd.f32 0.0, %v1035
        %1037 = vmatmul.bf16.gmra.mxu0 %v808
        %v1038 = vpop.f32.mrf.mxu0
        %v1039 = vadd.f32 0.0, %v1038
        %v1040 = vpop.f32.mrf.mxu0
        %v1041 = vadd.f32 0.0, %v1040
        %1042 = vmatmul.bf16.gmra.mxu0 %v809
        %v1043 = vpop.f32.mrf.mxu0
        %v1044 = vadd.f32 0.0, %v1043
        %v1045 = vpop.f32.mrf.mxu0
        %v1046 = vadd.f32 0.0, %v1045
        %1047 = vmatmul.bf16.gmra.mxu0 %v810
        %v1048 = vpop.f32.mrf.mxu0
        %v1049 = vadd.f32 0.0, %v1048
        %v1050 = vpop.f32.mrf.mxu0
        %v1051 = vadd.f32 0.0, %v1050
        %1052 = vmatmul.bf16.gmra.mxu0 %v811
        %v1053 = vpop.f32.mrf.mxu0
        %v1054 = vadd.f32 0.0, %v1053
        %v1055 = vpop.f32.mrf.mxu0
        %v1056 = vadd.f32 0.0, %v1055
        %1057 = vmatmul.bf16.gmra.mxu0 %v812
        %v1058 = vpop.f32.mrf.mxu0
        %v1059 = vadd.f32 0.0, %v1058
        %v1060 = vpop.f32.mrf.mxu0
        %v1061 = vadd.f32 0.0, %v1060
        %1062 = vmatmul.bf16.gmra.mxu0 %v813
        %v1063 = vpop.f32.mrf.mxu0
        %v1064 = vadd.f32 0.0, %v1063
        %v1065 = vpop.f32.mrf.mxu0
        %v1066 = vadd.f32 0.0, %v1065
        %1067 = vmatmul.bf16.gmra.mxu0 %v814
        %v1068 = vpop.f32.mrf.mxu0
        %v1069 = vadd.f32 0.0, %v1068
        %v1070 = vpop.f32.mrf.mxu0
        %v1071 = vadd.f32 0.0, %v1070
        %1072 = vmatmul.bf16.gmra.mxu0 %v815
        %v1073 = vpop.f32.mrf.mxu0
        %v1074 = vadd.f32 0.0, %v1073
        %v1075 = vpop.f32.mrf.mxu0
        %v1076 = vadd.f32 0.0, %v1075
        %1077 = vmatmul.bf16.gmra.mxu0 %v816
        %v1078 = vpop.f32.mrf.mxu0
        %v1079 = vadd.f32 0.0, %v1078
        %v1080 = vpop.f32.mrf.mxu0
        %v1081 = vadd.f32 0.0, %v1080
        %1082 = vmatmul.bf16.gmra.mxu0 %v817
        %v1083 = vpop.f32.mrf.mxu0
        %v1084 = vadd.f32 0.0, %v1083
        %v1085 = vpop.f32.mrf.mxu0
        %v1086 = vadd.f32 0.0, %v1085
        %1087 = vmatmul.bf16.gmra.mxu0 %v818
        %v1088 = vpop.f32.mrf.mxu0
        %v1089 = vadd.f32 0.0, %v1088
        %v1090 = vpop.f32.mrf.mxu0
        %v1091 = vadd.f32 0.0, %v1090
        %1092 = vdwg.mxu0
        %v1125 = vunpack.c.l.b16 %v297
        %v1126 = vunpack.c.l.b16 %v298
        %v1127 = vunpack.c.l.b16 %v300
        %v1128 = vunpack.c.l.b16 %v301
        %v1129 = vunpack.c.l.b16 %v303
        %v1130 = vunpack.c.l.b16 %v304
        %v1131 = vunpack.c.l.b16 %v306
        %v1132 = vunpack.c.l.b16 %v307
        %v1133 = vunpack.c.l.b16 %v309
        %v1134 = vunpack.c.l.b16 %v310
        %v1135 = vunpack.c.l.b16 %v312
        %v1136 = vunpack.c.l.b16 %v313
        %v1137 = vunpack.c.l.b16 %v315
        %v1138 = vunpack.c.l.b16 %v316
        %v1139 = vunpack.c.l.b16 %v318
        %v1140 = vunpack.c.l.b16 %v319
        %v1141 = vunpack.c.l.b16 %v321
        %v1142 = vunpack.c.l.b16 %v322
        %v1143 = vunpack.c.l.b16 %v324
        %v1144 = vunpack.c.l.b16 %v325
        %v1145 = vunpack.c.l.b16 %v327
        %v1146 = vunpack.c.l.b16 %v328
        %v1147 = vunpack.c.l.b16 %v330
        %v1148 = vunpack.c.l.b16 %v331
        %v1149 = vunpack.c.l.b16 %v333
        %v1150 = vunpack.c.l.b16 %v334
        %v1151 = vunpack.c.l.b16 %v336
        %v1152 = vunpack.c.l.b16 %v337
        %v1153 = vunpack.c.l.b16 %v339
        %v1154 = vunpack.c.l.b16 %v340
        %v1155 = vunpack.c.l.b16 %v342
        %v1156 = vunpack.c.l.b16 %v343
        %v1157 = vpack.c.b16 %v1126, %v1125
        %v1158 = vpack.c.b16 %v1128, %v1127
        %v1159 = vpack.c.b16 %v1130, %v1129
        %v1160 = vpack.c.b16 %v1132, %v1131
        %v1161 = vpack.c.b16 %v1134, %v1133
        %v1162 = vpack.c.b16 %v1136, %v1135
        %v1163 = vpack.c.b16 %v1138, %v1137
        %v1164 = vpack.c.b16 %v1140, %v1139
        %v1165 = vpack.c.b16 %v1142, %v1141
        %v1166 = vpack.c.b16 %v1144, %v1143
        %v1167 = vpack.c.b16 %v1146, %v1145
        %v1168 = vpack.c.b16 %v1148, %v1147
        %v1169 = vpack.c.b16 %v1150, %v1149
        %v1170 = vpack.c.b16 %v1152, %v1151
        %v1171 = vpack.c.b16 %v1154, %v1153
        %v1172 = vpack.c.b16 %v1156, %v1155
        %v1205 = vunpack.c.l.b16 %v351
        %v1206 = vunpack.c.h.b16 %v351
        %v1207 = vunpack.c.l.b16 %v352
        %v1208 = vunpack.c.h.b16 %v352
        %v1209 = vunpack.c.l.b16 %v353
        %v1210 = vunpack.c.h.b16 %v353
        %v1211 = vunpack.c.l.b16 %v354
        %v1212 = vunpack.c.h.b16 %v354
        %v1213 = vunpack.c.l.b16 %v355
        %v1214 = vunpack.c.h.b16 %v355
        %v1215 = vunpack.c.l.b16 %v356
        %v1216 = vunpack.c.h.b16 %v356
        %v1217 = vunpack.c.l.b16 %v357
        %v1218 = vunpack.c.h.b16 %v357
        %v1219 = vunpack.c.l.b16 %v358
        %v1220 = vunpack.c.h.b16 %v358
        %v1221 = vunpack.c.l.b16 %v359
        %v1222 = vunpack.c.h.b16 %v359
        %v1223 = vunpack.c.l.b16 %v360
        %v1224 = vunpack.c.h.b16 %v360
        %v1225 = vunpack.c.l.b16 %v361
        %v1226 = vunpack.c.h.b16 %v361
        %v1227 = vunpack.c.l.b16 %v362
        %v1228 = vunpack.c.h.b16 %v362
        %v1229 = vunpack.c.l.b16 %v363
        %v1230 = vunpack.c.h.b16 %v363
        %v1231 = vunpack.c.l.b16 %v364
        %v1232 = vunpack.c.h.b16 %v364
        %v1233 = vunpack.c.l.b16 %v365
        %v1234 = vunpack.c.h.b16 %v365
        %v1235 = vunpack.c.l.b16 %v366
        %v1236 = vunpack.c.h.b16 %v366
        %v1237 = vpack.c.b16 %v1207, %v1205
        %v1238 = vpack.c.b16 %v1208, %v1206
        %v1239 = vpack.c.b16 %v1211, %v1209
        %v1240 = vpack.c.b16 %v1212, %v1210
        %v1241 = vpack.c.b16 %v1215, %v1213
        %v1242 = vpack.c.b16 %v1216, %v1214
        %v1243 = vpack.c.b16 %v1219, %v1217
        %v1244 = vpack.c.b16 %v1220, %v1218
        %v1245 = vpack.c.b16 %v1223, %v1221
        %v1246 = vpack.c.b16 %v1224, %v1222
        %v1247 = vpack.c.b16 %v1227, %v1225
        %v1248 = vpack.c.b16 %v1228, %v1226
        %v1249 = vpack.c.b16 %v1231, %v1229
        %v1250 = vpack.c.b16 %v1232, %v1230
        %v1251 = vpack.c.b16 %v1235, %v1233
        %v1252 = vpack.c.b16 %v1236, %v1234
        %1269 = vmatpush.bf16.msra.mxu0 %v1251
        %1270 = vmatpush.bf16.msra.mxu0 %v1249
        %1271 = vmatpush.bf16.msra.mxu0 %v1247
        %1272 = vmatpush.bf16.msra.mxu0 %v1245
        %1273 = vmatpush.bf16.msra.mxu0 %v1243
        %1274 = vmatpush.bf16.msra.mxu0 %v1241
        %1275 = vmatpush.bf16.msra.mxu0 %v1239
        %1276 = vmatpush.bf16.msra.mxu0 %v1237
        %1277 = vmatmul.bf16.gmra.mxu0 %v1157
        %v1278 = vpop.f32.mrf.mxu0
        %v1279 = vadd.f32 %v925, %v1278
        %v1280 = vpop.f32.mrf.mxu0
        %v1281 = vadd.f32 %v927, %v1280
        %1282 = vmatmul.bf16.gmra.mxu0 %v1158
        %v1283 = vpop.f32.mrf.mxu0
        %v1284 = vadd.f32 %v930, %v1283
        %v1285 = vpop.f32.mrf.mxu0
        %v1286 = vadd.f32 %v932, %v1285
        %1287 = vmatmul.bf16.gmra.mxu0 %v1159
        %v1288 = vpop.f32.mrf.mxu0
        %v1289 = vadd.f32 %v935, %v1288
        %v1290 = vpop.f32.mrf.mxu0
        %v1291 = vadd.f32 %v937, %v1290
        %1292 = vmatmul.bf16.gmra.mxu0 %v1160
        %v1293 = vpop.f32.mrf.mxu0
        %v1294 = vadd.f32 %v940, %v1293
        %v1295 = vpop.f32.mrf.mxu0
        %v1296 = vadd.f32 %v942, %v1295
        %1297 = vmatmul.bf16.gmra.mxu0 %v1161
        %v1298 = vpop.f32.mrf.mxu0
        %v1299 = vadd.f32 %v945, %v1298
        %v1300 = vpop.f32.mrf.mxu0
        %v1301 = vadd.f32 %v947, %v1300
        %1302 = vmatmul.bf16.gmra.mxu0 %v1162
        %v1303 = vpop.f32.mrf.mxu0
        %v1304 = vadd.f32 %v950, %v1303
        %v1305 = vpop.f32.mrf.mxu0
        %v1306 = vadd.f32 %v952, %v1305
        %1307 = vmatmul.bf16.gmra.mxu0 %v1163
        %v1308 = vpop.f32.mrf.mxu0
        %v1309 = vadd.f32 %v955, %v1308
        %v1310 = vpop.f32.mrf.mxu0
        %v1311 = vadd.f32 %v957, %v1310
        %1312 = vmatmul.bf16.gmra.mxu0 %v1164
        %v1313 = vpop.f32.mrf.mxu0
        %v1314 = vadd.f32 %v960, %v1313
        %v1315 = vpop.f32.mrf.mxu0
        %v1316 = vadd.f32 %v962, %v1315
        %1317 = vmatmul.bf16.gmra.mxu0 %v1165
        %v1318 = vpop.f32.mrf.mxu0
        %v1319 = vadd.f32 %v965, %v1318
        %v1320 = vpop.f32.mrf.mxu0
        %v1321 = vadd.f32 %v967, %v1320
        %1322 = vmatmul.bf16.gmra.mxu0 %v1166
        %v1323 = vpop.f32.mrf.mxu0
        %v1324 = vadd.f32 %v970, %v1323
        %v1325 = vpop.f32.mrf.mxu0
        %v1326 = vadd.f32 %v972, %v1325
        %1327 = vmatmul.bf16.gmra.mxu0 %v1167
        %v1328 = vpop.f32.mrf.mxu0
        %v1329 = vadd.f32 %v975, %v1328
        %v1330 = vpop.f32.mrf.mxu0
        %v1331 = vadd.f32 %v977, %v1330
        %1332 = vmatmul.bf16.gmra.mxu0 %v1168
        %v1333 = vpop.f32.mrf.mxu0
        %v1334 = vadd.f32 %v980, %v1333
        %v1335 = vpop.f32.mrf.mxu0
        %v1336 = vadd.f32 %v982, %v1335
        %1337 = vmatmul.bf16.gmra.mxu0 %v1169
        %v1338 = vpop.f32.mrf.mxu0
        %v1339 = vadd.f32 %v985, %v1338
        %v1340 = vpop.f32.mrf.mxu0
        %v1341 = vadd.f32 %v987, %v1340
        %1342 = vmatmul.bf16.gmra.mxu0 %v1170
        %v1343 = vpop.f32.mrf.mxu0
        %v1344 = vadd.f32 %v990, %v1343
        %v1345 = vpop.f32.mrf.mxu0
        %v1346 = vadd.f32 %v992, %v1345
        %1347 = vmatmul.bf16.gmra.mxu0 %v1171
        %v1348 = vpop.f32.mrf.mxu0
        %v1349 = vadd.f32 %v995, %v1348
        %v1350 = vpop.f32.mrf.mxu0
        %v1351 = vadd.f32 %v997, %v1350
        %1352 = vmatmul.bf16.gmra.mxu0 %v1172
        %v1353 = vpop.f32.mrf.mxu0
        %v1354 = vadd.f32 %v1000, %v1353
        %v1355 = vpop.f32.mrf.mxu0
        %v1356 = vadd.f32 %v1002, %v1355
        %1357 = vdwg.mxu0
        %1358 = vmatpush.bf16.msra.mxu0 %v1252
        %1359 = vmatpush.bf16.msra.mxu0 %v1250
        %1360 = vmatpush.bf16.msra.mxu0 %v1248
        %1361 = vmatpush.bf16.msra.mxu0 %v1246
        %1362 = vmatpush.bf16.msra.mxu0 %v1244
        %1363 = vmatpush.bf16.msra.mxu0 %v1242
        %1364 = vmatpush.bf16.msra.mxu0 %v1240
        %1365 = vmatpush.bf16.msra.mxu0 %v1238
        %1366 = vmatmul.bf16.gmra.mxu0 %v1157
        %v1367 = vpop.f32.mrf.mxu0
        %v1368 = vadd.f32 %v1014, %v1367
        %v1369 = vpop.f32.mrf.mxu0
        %v1370 = vadd.f32 %v1016, %v1369
        %1371 = vmatmul.bf16.gmra.mxu0 %v1158
        %v1372 = vpop.f32.mrf.mxu0
        %v1373 = vadd.f32 %v1019, %v1372
        %v1374 = vpop.f32.mrf.mxu0
        %v1375 = vadd.f32 %v1021, %v1374
        %1376 = vmatmul.bf16.gmra.mxu0 %v1159
        %v1377 = vpop.f32.mrf.mxu0
        %v1378 = vadd.f32 %v1024, %v1377
        %v1379 = vpop.f32.mrf.mxu0
        %v1380 = vadd.f32 %v1026, %v1379
        %1381 = vmatmul.bf16.gmra.mxu0 %v1160
        %v1382 = vpop.f32.mrf.mxu0
        %v1383 = vadd.f32 %v1029, %v1382
        %v1384 = vpop.f32.mrf.mxu0
        %v1385 = vadd.f32 %v1031, %v1384
        %1386 = vmatmul.bf16.gmra.mxu0 %v1161
        %v1387 = vpop.f32.mrf.mxu0
        %v1388 = vadd.f32 %v1034, %v1387
        %v1389 = vpop.f32.mrf.mxu0
        %v1390 = vadd.f32 %v1036, %v1389
        %1391 = vmatmul.bf16.gmra.mxu0 %v1162
        %v1392 = vpop.f32.mrf.mxu0
        %v1393 = vadd.f32 %v1039, %v1392
        %v1394 = vpop.f32.mrf.mxu0
        %v1395 = vadd.f32 %v1041, %v1394
        %1396 = vmatmul.bf16.gmra.mxu0 %v1163
        %v1397 = vpop.f32.mrf.mxu0
        %v1398 = vadd.f32 %v1044, %v1397
        %v1399 = vpop.f32.mrf.mxu0
        %v1400 = vadd.f32 %v1046, %v1399
        %1401 = vmatmul.bf16.gmra.mxu0 %v1164
        %v1402 = vpop.f32.mrf.mxu0
        %v1403 = vadd.f32 %v1049, %v1402
        %v1404 = vpop.f32.mrf.mxu0
        %v1405 = vadd.f32 %v1051, %v1404
        %1406 = vmatmul.bf16.gmra.mxu0 %v1165
        %v1407 = vpop.f32.mrf.mxu0
        %v1408 = vadd.f32 %v1054, %v1407
        %v1409 = vpop.f32.mrf.mxu0
        %v1410 = vadd.f32 %v1056, %v1409
        %1411 = vmatmul.bf16.gmra.mxu0 %v1166
        %v1412 = vpop.f32.mrf.mxu0
        %v1413 = vadd.f32 %v1059, %v1412
        %v1414 = vpop.f32.mrf.mxu0
        %v1415 = vadd.f32 %v1061, %v1414
        %1416 = vmatmul.bf16.gmra.mxu0 %v1167
        %v1417 = vpop.f32.mrf.mxu0
        %v1418 = vadd.f32 %v1064, %v1417
        %v1419 = vpop.f32.mrf.mxu0
        %v1420 = vadd.f32 %v1066, %v1419
        %1421 = vmatmul.bf16.gmra.mxu0 %v1168
        %v1422 = vpop.f32.mrf.mxu0
        %v1423 = vadd.f32 %v1069, %v1422
        %v1424 = vpop.f32.mrf.mxu0
        %v1425 = vadd.f32 %v1071, %v1424
        %1426 = vmatmul.bf16.gmra.mxu0 %v1169
        %v1427 = vpop.f32.mrf.mxu0
        %v1428 = vadd.f32 %v1074, %v1427
        %v1429 = vpop.f32.mrf.mxu0
        %v1430 = vadd.f32 %v1076, %v1429
        %1431 = vmatmul.bf16.gmra.mxu0 %v1170
        %v1432 = vpop.f32.mrf.mxu0
        %v1433 = vadd.f32 %v1079, %v1432
        %v1434 = vpop.f32.mrf.mxu0
        %v1435 = vadd.f32 %v1081, %v1434
        %1436 = vmatmul.bf16.gmra.mxu0 %v1171
        %v1437 = vpop.f32.mrf.mxu0
        %v1438 = vadd.f32 %v1084, %v1437
        %v1439 = vpop.f32.mrf.mxu0
        %v1440 = vadd.f32 %v1086, %v1439
        %1441 = vmatmul.bf16.gmra.mxu0 %v1172
        %v1442 = vpop.f32.mrf.mxu0
        %v1443 = vadd.f32 %v1089, %v1442
        %v1444 = vpop.f32.mrf.mxu0
        %v1445 = vadd.f32 %v1091, %v1444
        %1446 = vdwg.mxu0
        %vm1463 = vcmask 1042432
        %vm1464 = vcmask 1046532
        %vm1465 = vmor %vm1463, %vm1464
        %v1466 = vrot.slane %v297, 5
        %v1467 = vrot.slane %v1466, 4
        %v1468 = vrot.slane %v298, 5
        %v1469 = vsel %vm1465, %v1467, %v1468
        %v1470 = vrot.slane %v1468, 4
        %v1471 = vrot.slane %v299, 5
        %v1472 = vsel %vm1465, %v1470, %v1471
        %v1473 = vrot.slane %v300, 5
        %v1474 = vrot.slane %v1473, 4
        %v1475 = vrot.slane %v301, 5
        %v1476 = vsel %vm1465, %v1474, %v1475
        %v1477 = vrot.slane %v1475, 4
        %v1478 = vrot.slane %v302, 5
        %v1479 = vsel %vm1465, %v1477, %v1478
        %v1480 = vrot.slane %v303, 5
        %v1481 = vrot.slane %v1480, 4
        %v1482 = vrot.slane %v304, 5
        %v1483 = vsel %vm1465, %v1481, %v1482
        %v1484 = vrot.slane %v1482, 4
        %v1485 = vrot.slane %v305, 5
        %v1486 = vsel %vm1465, %v1484, %v1485
        %v1487 = vrot.slane %v306, 5
        %v1488 = vrot.slane %v1487, 4
        %v1489 = vrot.slane %v307, 5
        %v1490 = vsel %vm1465, %v1488, %v1489
        %v1491 = vrot.slane %v1489, 4
        %v1492 = vrot.slane %v308, 5
        %v1493 = vsel %vm1465, %v1491, %v1492
        %v1494 = vrot.slane %v309, 5
        %v1495 = vrot.slane %v1494, 4
        %v1496 = vrot.slane %v310, 5
        %v1497 = vsel %vm1465, %v1495, %v1496
        %v1498 = vrot.slane %v1496, 4
        %v1499 = vrot.slane %v311, 5
        %v1500 = vsel %vm1465, %v1498, %v1499
        %v1501 = vrot.slane %v312, 5
        %v1502 = vrot.slane %v1501, 4
        %v1503 = vrot.slane %v313, 5
        %v1504 = vsel %vm1465, %v1502, %v1503
        %v1505 = vrot.slane %v1503, 4
        %v1506 = vrot.slane %v314, 5
        %v1507 = vsel %vm1465, %v1505, %v1506
        %v1508 = vrot.slane %v315, 5
        %v1509 = vrot.slane %v1508, 4
        %v1510 = vrot.slane %v316, 5
        %v1511 = vsel %vm1465, %v1509, %v1510
        %v1512 = vrot.slane %v1510, 4
        %v1513 = vrot.slane %v317, 5
        %v1514 = vsel %vm1465, %v1512, %v1513
        %v1515 = vrot.slane %v318, 5
        %v1516 = vrot.slane %v1515, 4
        %v1517 = vrot.slane %v319, 5
        %v1518 = vsel %vm1465, %v1516, %v1517
        %v1519 = vrot.slane %v1517, 4
        %v1520 = vrot.slane %v320, 5
        %v1521 = vsel %vm1465, %v1519, %v1520
        %v1522 = vrot.slane %v321, 5
        %v1523 = vrot.slane %v1522, 4
        %v1524 = vrot.slane %v322, 5
        %v1525 = vsel %vm1465, %v1523, %v1524
        %v1526 = vrot.slane %v1524, 4
        %v1527 = vrot.slane %v323, 5
        %v1528 = vsel %vm1465, %v1526, %v1527
        %v1529 = vrot.slane %v324, 5
        %v1530 = vrot.slane %v1529, 4
        %v1531 = vrot.slane %v325, 5
        %v1532 = vsel %vm1465, %v1530, %v1531
        %v1533 = vrot.slane %v1531, 4
        %v1534 = vrot.slane %v326, 5
        %v1535 = vsel %vm1465, %v1533, %v1534
        %v1536 = vrot.slane %v327, 5
        %v1537 = vrot.slane %v1536, 4
        %v1538 = vrot.slane %v328, 5
        %v1539 = vsel %vm1465, %v1537, %v1538
        %v1540 = vrot.slane %v1538, 4
        %v1541 = vrot.slane %v329, 5
        %v1542 = vsel %vm1465, %v1540, %v1541
        %v1543 = vrot.slane %v330, 5
        %v1544 = vrot.slane %v1543, 4
        %v1545 = vrot.slane %v331, 5
        %v1546 = vsel %vm1465, %v1544, %v1545
        %v1547 = vrot.slane %v1545, 4
        %v1548 = vrot.slane %v332, 5
        %v1549 = vsel %vm1465, %v1547, %v1548
        %v1550 = vrot.slane %v333, 5
        %v1551 = vrot.slane %v1550, 4
        %v1552 = vrot.slane %v334, 5
        %v1553 = vsel %vm1465, %v1551, %v1552
        %v1554 = vrot.slane %v1552, 4
        %v1555 = vrot.slane %v335, 5
        %v1556 = vsel %vm1465, %v1554, %v1555
        %v1557 = vrot.slane %v336, 5
        %v1558 = vrot.slane %v1557, 4
        %v1559 = vrot.slane %v337, 5
        %v1560 = vsel %vm1465, %v1558, %v1559
        %v1561 = vrot.slane %v1559, 4
        %v1562 = vrot.slane %v338, 5
        %v1563 = vsel %vm1465, %v1561, %v1562
        %v1564 = vrot.slane %v339, 5
        %v1565 = vrot.slane %v1564, 4
        %v1566 = vrot.slane %v340, 5
        %v1567 = vsel %vm1465, %v1565, %v1566
        %v1568 = vrot.slane %v1566, 4
        %v1569 = vrot.slane %v341, 5
        %v1570 = vsel %vm1465, %v1568, %v1569
        %v1571 = vrot.slane %v342, 5
        %v1572 = vrot.slane %v1571, 4
        %v1573 = vrot.slane %v343, 5
        %v1574 = vsel %vm1465, %v1572, %v1573
        %v1575 = vrot.slane %v1573, 4
        %v1576 = vrot.slane %v344, 5
        %v1577 = vsel %vm1465, %v1575, %v1576
        %s1578 = scalar_lea.vmem %s1, 256
        %v1579 = vld [vmem:[%s1578] sm:$0xff]
        %v1580 = vld [vmem:[%s1578 + $0x8] sm:$0xff]
        %v1581 = vld [vmem:[%s1578 + $0x10] sm:$0xff]
        %v1582 = vld [vmem:[%s1578 + $0x18] sm:$0xff]
        %v1583 = vld [vmem:[%s1578 + $0x20] sm:$0xff]
        %v1584 = vld [vmem:[%s1578 + $0x28] sm:$0xff]
        %v1585 = vld [vmem:[%s1578 + $0x30] sm:$0xff]
        %v1586 = vld [vmem:[%s1578 + $0x38] sm:$0xff]
        %v1587 = vld [vmem:[%s1578 + $0x40] sm:$0xff]
        %v1588 = vld [vmem:[%s1578 + $0x48] sm:$0xff]
        %v1589 = vld [vmem:[%s1578 + $0x50] sm:$0xff]
        %v1590 = vld [vmem:[%s1578 + $0x58] sm:$0xff]
        %v1591 = vld [vmem:[%s1578 + $0x60] sm:$0xff]
        %v1592 = vld [vmem:[%s1578 + $0x68] sm:$0xff]
        %v1593 = vld [vmem:[%s1578 + $0x70] sm:$0xff]
        %v1594 = vld [vmem:[%s1578 + $0x78] sm:$0xff]
        %v1595 = vunpack.c.l.b16 %v1469
        %v1596 = vunpack.c.l.b16 %v1472
        %v1597 = vunpack.c.l.b16 %v1476
        %v1598 = vunpack.c.l.b16 %v1479
        %v1599 = vunpack.c.l.b16 %v1483
        %v1600 = vunpack.c.l.b16 %v1486
        %v1601 = vunpack.c.l.b16 %v1490
        %v1602 = vunpack.c.l.b16 %v1493
        %v1603 = vunpack.c.l.b16 %v1497
        %v1604 = vunpack.c.l.b16 %v1500
        %v1605 = vunpack.c.l.b16 %v1504
        %v1606 = vunpack.c.l.b16 %v1507
        %v1607 = vunpack.c.l.b16 %v1511
        %v1608 = vunpack.c.l.b16 %v1514
        %v1609 = vunpack.c.l.b16 %v1518
        %v1610 = vunpack.c.l.b16 %v1521
        %v1611 = vunpack.c.l.b16 %v1525
        %v1612 = vunpack.c.l.b16 %v1528
        %v1613 = vunpack.c.l.b16 %v1532
        %v1614 = vunpack.c.l.b16 %v1535
        %v1615 = vunpack.c.l.b16 %v1539
        %v1616 = vunpack.c.l.b16 %v1542
        %v1617 = vunpack.c.l.b16 %v1546
        %v1618 = vunpack.c.l.b16 %v1549
        %v1619 = vunpack.c.l.b16 %v1553
        %v1620 = vunpack.c.l.b16 %v1556
        %v1621 = vunpack.c.l.b16 %v1560
        %v1622 = vunpack.c.l.b16 %v1563
        %v1623 = vunpack.c.l.b16 %v1567
        %v1624 = vunpack.c.l.b16 %v1570
        %v1625 = vunpack.c.l.b16 %v1574
        %v1626 = vunpack.c.l.b16 %v1577
        %v1627 = vpack.c.b16 %v1596, %v1595
        %v1628 = vpack.c.b16 %v1598, %v1597
        %v1629 = vpack.c.b16 %v1600, %v1599
        %v1630 = vpack.c.b16 %v1602, %v1601
        %v1631 = vpack.c.b16 %v1604, %v1603
        %v1632 = vpack.c.b16 %v1606, %v1605
        %v1633 = vpack.c.b16 %v1608, %v1607
        %v1634 = vpack.c.b16 %v1610, %v1609
        %v1635 = vpack.c.b16 %v1612, %v1611
        %v1636 = vpack.c.b16 %v1614, %v1613
        %v1637 = vpack.c.b16 %v1616, %v1615
        %v1638 = vpack.c.b16 %v1618, %v1617
        %v1639 = vpack.c.b16 %v1620, %v1619
        %v1640 = vpack.c.b16 %v1622, %v1621
        %v1641 = vpack.c.b16 %v1624, %v1623
        %v1642 = vpack.c.b16 %v1626, %v1625
        %v1675 = vunpack.c.l.b16 %v1579
        %v1676 = vunpack.c.h.b16 %v1579
        %v1677 = vunpack.c.l.b16 %v1580
        %v1678 = vunpack.c.h.b16 %v1580
        %v1679 = vunpack.c.l.b16 %v1581
        %v1680 = vunpack.c.h.b16 %v1581
        %v1681 = vunpack.c.l.b16 %v1582
        %v1682 = vunpack.c.h.b16 %v1582
        %v1683 = vunpack.c.l.b16 %v1583
        %v1684 = vunpack.c.h.b16 %v1583
        %v1685 = vunpack.c.l.b16 %v1584
        %v1686 = vunpack.c.h.b16 %v1584
        %v1687 = vunpack.c.l.b16 %v1585
        %v1688 = vunpack.c.h.b16 %v1585
        %v1689 = vunpack.c.l.b16 %v1586
        %v1690 = vunpack.c.h.b16 %v1586
        %v1691 = vunpack.c.l.b16 %v1587
        %v1692 = vunpack.c.h.b16 %v1587
        %v1693 = vunpack.c.l.b16 %v1588
        %v1694 = vunpack.c.h.b16 %v1588
        %v1695 = vunpack.c.l.b16 %v1589
        %v1696 = vunpack.c.h.b16 %v1589
        %v1697 = vunpack.c.l.b16 %v1590
        %v1698 = vunpack.c.h.b16 %v1590
        %v1699 = vunpack.c.l.b16 %v1591
        %v1700 = vunpack.c.h.b16 %v1591
        %v1701 = vunpack.c.l.b16 %v1592
        %v1702 = vunpack.c.h.b16 %v1592
        %v1703 = vunpack.c.l.b16 %v1593
        %v1704 = vunpack.c.h.b16 %v1593
        %v1705 = vunpack.c.l.b16 %v1594
        %v1706 = vunpack.c.h.b16 %v1594
        %v1707 = vpack.c.b16 %v1677, %v1675
        %v1708 = vpack.c.b16 %v1678, %v1676
        %v1709 = vpack.c.b16 %v1681, %v1679
        %v1710 = vpack.c.b16 %v1682, %v1680
        %v1711 = vpack.c.b16 %v1685, %v1683
        %v1712 = vpack.c.b16 %v1686, %v1684
        %v1713 = vpack.c.b16 %v1689, %v1687
        %v1714 = vpack.c.b16 %v1690, %v1688
        %v1715 = vpack.c.b16 %v1693, %v1691
        %v1716 = vpack.c.b16 %v1694, %v1692
        %v1717 = vpack.c.b16 %v1697, %v1695
        %v1718 = vpack.c.b16 %v1698, %v1696
        %v1719 = vpack.c.b16 %v1701, %v1699
        %v1720 = vpack.c.b16 %v1702, %v1700
        %v1721 = vpack.c.b16 %v1705, %v1703
        %v1722 = vpack.c.b16 %v1706, %v1704
        %1739 = vmatpush.bf16.msra.mxu0 %v1721
        %1740 = vmatpush.bf16.msra.mxu0 %v1719
        %1741 = vmatpush.bf16.msra.mxu0 %v1717
        %1742 = vmatpush.bf16.msra.mxu0 %v1715
        %1743 = vmatpush.bf16.msra.mxu0 %v1713
        %1744 = vmatpush.bf16.msra.mxu0 %v1711
        %1745 = vmatpush.bf16.msra.mxu0 %v1709
        %1746 = vmatpush.bf16.msra.mxu0 %v1707
        %1747 = vmatmul.bf16.gmra.mxu0 %v1627
        %v1748 = vpop.f32.mrf.mxu0
        %v1749 = vadd.f32 0.0, %v1748
        %v1750 = vpop.f32.mrf.mxu0
        %v1751 = vadd.f32 0.0, %v1750
        %1752 = vmatmul.bf16.gmra.mxu0 %v1628
        %v1753 = vpop.f32.mrf.mxu0
        %v1754 = vadd.f32 0.0, %v1753
        %v1755 = vpop.f32.mrf.mxu0
        %v1756 = vadd.f32 0.0, %v1755
        %1757 = vmatmul.bf16.gmra.mxu0 %v1629
        %v1758 = vpop.f32.mrf.mxu0
        %v1759 = vadd.f32 0.0, %v1758
        %v1760 = vpop.f32.mrf.mxu0
        %v1761 = vadd.f32 0.0, %v1760
        %1762 = vmatmul.bf16.gmra.mxu0 %v1630
        %v1763 = vpop.f32.mrf.mxu0
        %v1764 = vadd.f32 0.0, %v1763
        %v1765 = vpop.f32.mrf.mxu0
        %v1766 = vadd.f32 0.0, %v1765
        %1767 = vmatmul.bf16.gmra.mxu0 %v1631
        %v1768 = vpop.f32.mrf.mxu0
        %v1769 = vadd.f32 0.0, %v1768
        %v1770 = vpop.f32.mrf.mxu0
        %v1771 = vadd.f32 0.0, %v1770
        %1772 = vmatmul.bf16.gmra.mxu0 %v1632
        %v1773 = vpop.f32.mrf.mxu0
        %v1774 = vadd.f32 0.0, %v1773
        %v1775 = vpop.f32.mrf.mxu0
        %v1776 = vadd.f32 0.0, %v1775
        %1777 = vmatmul.bf16.gmra.mxu0 %v1633
        %v1778 = vpop.f32.mrf.mxu0
        %v1779 = vadd.f32 0.0, %v1778
        %v1780 = vpop.f32.mrf.mxu0
        %v1781 = vadd.f32 0.0, %v1780
        %1782 = vmatmul.bf16.gmra.mxu0 %v1634
        %v1783 = vpop.f32.mrf.mxu0
        %v1784 = vadd.f32 0.0, %v1783
        %v1785 = vpop.f32.mrf.mxu0
        %v1786 = vadd.f32 0.0, %v1785
        %1787 = vmatmul.bf16.gmra.mxu0 %v1635
        %v1788 = vpop.f32.mrf.mxu0
        %v1789 = vadd.f32 0.0, %v1788
        %v1790 = vpop.f32.mrf.mxu0
        %v1791 = vadd.f32 0.0, %v1790
        %1792 = vmatmul.bf16.gmra.mxu0 %v1636
        %v1793 = vpop.f32.mrf.mxu0
        %v1794 = vadd.f32 0.0, %v1793
        %v1795 = vpop.f32.mrf.mxu0
        %v1796 = vadd.f32 0.0, %v1795
        %1797 = vmatmul.bf16.gmra.mxu0 %v1637
        %v1798 = vpop.f32.mrf.mxu0
        %v1799 = vadd.f32 0.0, %v1798
        %v1800 = vpop.f32.mrf.mxu0
        %v1801 = vadd.f32 0.0, %v1800
        %1802 = vmatmul.bf16.gmra.mxu0 %v1638
        %v1803 = vpop.f32.mrf.mxu0
        %v1804 = vadd.f32 0.0, %v1803
        %v1805 = vpop.f32.mrf.mxu0
        %v1806 = vadd.f32 0.0, %v1805
        %1807 = vmatmul.bf16.gmra.mxu0 %v1639
        %v1808 = vpop.f32.mrf.mxu0
        %v1809 = vadd.f32 0.0, %v1808
        %v1810 = vpop.f32.mrf.mxu0
        %v1811 = vadd.f32 0.0, %v1810
        %1812 = vmatmul.bf16.gmra.mxu0 %v1640
        %v1813 = vpop.f32.mrf.mxu0
        %v1814 = vadd.f32 0.0, %v1813
        %v1815 = vpop.f32.mrf.mxu0
        %v1816 = vadd.f32 0.0, %v1815
        %1817 = vmatmul.bf16.gmra.mxu0 %v1641
        %v1818 = vpop.f32.mrf.mxu0
        %v1819 = vadd.f32 0.0, %v1818
        %v1820 = vpop.f32.mrf.mxu0
        %v1821 = vadd.f32 0.0, %v1820
        %1822 = vmatmul.bf16.gmra.mxu0 %v1642
        %v1823 = vpop.f32.mrf.mxu0
        %v1824 = vadd.f32 0.0, %v1823
        %v1825 = vpop.f32.mrf.mxu0
        %v1826 = vadd.f32 0.0, %v1825
        %1827 = vdwg.mxu0
        %1828 = vmatpush.bf16.msra.mxu0 %v1722
        %1829 = vmatpush.bf16.msra.mxu0 %v1720
        %1830 = vmatpush.bf16.msra.mxu0 %v1718
        %1831 = vmatpush.bf16.msra.mxu0 %v1716
        %1832 = vmatpush.bf16.msra.mxu0 %v1714
        %1833 = vmatpush.bf16.msra.mxu0 %v1712
        %1834 = vmatpush.bf16.msra.mxu0 %v1710
        %1835 = vmatpush.bf16.msra.mxu0 %v1708
        %1836 = vmatmul.bf16.gmra.mxu0 %v1627
        %v1837 = vpop.f32.mrf.mxu0
        %v1838 = vadd.f32 0.0, %v1837
        %v1839 = vpop.f32.mrf.mxu0
        %v1840 = vadd.f32 0.0, %v1839
        %1841 = vmatmul.bf16.gmra.mxu0 %v1628
        %v1842 = vpop.f32.mrf.mxu0
        %v1843 = vadd.f32 0.0, %v1842
        %v1844 = vpop.f32.mrf.mxu0
        %v1845 = vadd.f32 0.0, %v1844
        %1846 = vmatmul.bf16.gmra.mxu0 %v1629
        %v1847 = vpop.f32.mrf.mxu0
        %v1848 = vadd.f32 0.0, %v1847
        %v1849 = vpop.f32.mrf.mxu0
        %v1850 = vadd.f32 0.0, %v1849
        %1851 = vmatmul.bf16.gmra.mxu0 %v1630
        %v1852 = vpop.f32.mrf.mxu0
        %v1853 = vadd.f32 0.0, %v1852
        %v1854 = vpop.f32.mrf.mxu0
        %v1855 = vadd.f32 0.0, %v1854
        %1856 = vmatmul.bf16.gmra.mxu0 %v1631
        %v1857 = vpop.f32.mrf.mxu0
        %v1858 = vadd.f32 0.0, %v1857
        %v1859 = vpop.f32.mrf.mxu0
        %v1860 = vadd.f32 0.0, %v1859
        %1861 = vmatmul.bf16.gmra.mxu0 %v1632
        %v1862 = vpop.f32.mrf.mxu0
        %v1863 = vadd.f32 0.0, %v1862
        %v1864 = vpop.f32.mrf.mxu0
        %v1865 = vadd.f32 0.0, %v1864
        %1866 = vmatmul.bf16.gmra.mxu0 %v1633
        %v1867 = vpop.f32.mrf.mxu0
        %v1868 = vadd.f32 0.0, %v1867
        %v1869 = vpop.f32.mrf.mxu0
        %v1870 = vadd.f32 0.0, %v1869
        %1871 = vmatmul.bf16.gmra.mxu0 %v1634
        %v1872 = vpop.f32.mrf.mxu0
        %v1873 = vadd.f32 0.0, %v1872
        %v1874 = vpop.f32.mrf.mxu0
        %v1875 = vadd.f32 0.0, %v1874
        %1876 = vmatmul.bf16.gmra.mxu0 %v1635
        %v1877 = vpop.f32.mrf.mxu0
        %v1878 = vadd.f32 0.0, %v1877
        %v1879 = vpop.f32.mrf.mxu0
        %v1880 = vadd.f32 0.0, %v1879
        %1881 = vmatmul.bf16.gmra.mxu0 %v1636
        %v1882 = vpop.f32.mrf.mxu0
        %v1883 = vadd.f32 0.0, %v1882
        %v1884 = vpop.f32.mrf.mxu0
        %v1885 = vadd.f32 0.0, %v1884
        %1886 = vmatmul.bf16.gmra.mxu0 %v1637
        %v1887 = vpop.f32.mrf.mxu0
        %v1888 = vadd.f32 0.0, %v1887
        %v1889 = vpop.f32.mrf.mxu0
        %v1890 = vadd.f32 0.0, %v1889
        %1891 = vmatmul.bf16.gmra.mxu0 %v1638
        %v1892 = vpop.f32.mrf.mxu0
        %v1893 = vadd.f32 0.0, %v1892
        %v1894 = vpop.f32.mrf.mxu0
        %v1895 = vadd.f32 0.0, %v1894
        %1896 = vmatmul.bf16.gmra.mxu0 %v1639
        %v1897 = vpop.f32.mrf.mxu0
        %v1898 = vadd.f32 0.0, %v1897
        %v1899 = vpop.f32.mrf.mxu0
        %v1900 = vadd.f32 0.0, %v1899
        %1901 = vmatmul.bf16.gmra.mxu0 %v1640
        %v1902 = vpop.f32.mrf.mxu0
        %v1903 = vadd.f32 0.0, %v1902
        %v1904 = vpop.f32.mrf.mxu0
        %v1905 = vadd.f32 0.0, %v1904
        %1906 = vmatmul.bf16.gmra.mxu0 %v1641
        %v1907 = vpop.f32.mrf.mxu0
        %v1908 = vadd.f32 0.0, %v1907
        %v1909 = vpop.f32.mrf.mxu0
        %v1910 = vadd.f32 0.0, %v1909
        %1911 = vmatmul.bf16.gmra.mxu0 %v1642
        %v1912 = vpop.f32.mrf.mxu0
        %v1913 = vadd.f32 0.0, %v1912
        %v1914 = vpop.f32.mrf.mxu0
        %v1915 = vadd.f32 0.0, %v1914
        %1916 = vdwg.mxu0
        %v1917 = vadd.f32 %v1279, %v1749
        %v1918 = vadd.f32 %v1368, %v1838
        %v1919 = vadd.f32 %v1281, %v1751
        %v1920 = vadd.f32 %v1370, %v1840
        %v1921 = vadd.f32 %v1284, %v1754
        %v1922 = vadd.f32 %v1373, %v1843
        %v1923 = vadd.f32 %v1286, %v1756
        %v1924 = vadd.f32 %v1375, %v1845
        %v1925 = vadd.f32 %v1289, %v1759
        %v1926 = vadd.f32 %v1378, %v1848
        %v1927 = vadd.f32 %v1291, %v1761
        %v1928 = vadd.f32 %v1380, %v1850
        %v1929 = vadd.f32 %v1294, %v1764
        %v1930 = vadd.f32 %v1383, %v1853
        %v1931 = vadd.f32 %v1296, %v1766
        %v1932 = vadd.f32 %v1385, %v1855
        %v1933 = vadd.f32 %v1299, %v1769
        %v1934 = vadd.f32 %v1388, %v1858
        %v1935 = vadd.f32 %v1301, %v1771
        %v1936 = vadd.f32 %v1390, %v1860
        %v1937 = vadd.f32 %v1304, %v1774
        %v1938 = vadd.f32 %v1393, %v1863
        %v1939 = vadd.f32 %v1306, %v1776
        %v1940 = vadd.f32 %v1395, %v1865
        %v1941 = vadd.f32 %v1309, %v1779
        %v1942 = vadd.f32 %v1398, %v1868
        %v1943 = vadd.f32 %v1311, %v1781
        %v1944 = vadd.f32 %v1400, %v1870
        %v1945 = vadd.f32 %v1314, %v1784
        %v1946 = vadd.f32 %v1403, %v1873
        %v1947 = vadd.f32 %v1316, %v1786
        %v1948 = vadd.f32 %v1405, %v1875
        %v1949 = vadd.f32 %v1319, %v1789
        %v1950 = vadd.f32 %v1408, %v1878
        %v1951 = vadd.f32 %v1321, %v1791
        %v1952 = vadd.f32 %v1410, %v1880
        %v1953 = vadd.f32 %v1324, %v1794
        %v1954 = vadd.f32 %v1413, %v1883
        %v1955 = vadd.f32 %v1326, %v1796
        %v1956 = vadd.f32 %v1415, %v1885
        %v1957 = vadd.f32 %v1329, %v1799
        %v1958 = vadd.f32 %v1418, %v1888
        %v1959 = vadd.f32 %v1331, %v1801
        %v1960 = vadd.f32 %v1420, %v1890
        %v1961 = vadd.f32 %v1334, %v1804
        %v1962 = vadd.f32 %v1423, %v1893
        %v1963 = vadd.f32 %v1336, %v1806
        %v1964 = vadd.f32 %v1425, %v1895
        %v1965 = vadd.f32 %v1339, %v1809
        %v1966 = vadd.f32 %v1428, %v1898
        %v1967 = vadd.f32 %v1341, %v1811
        %v1968 = vadd.f32 %v1430, %v1900
        %v1969 = vadd.f32 %v1344, %v1814
        %v1970 = vadd.f32 %v1433, %v1903
        %v1971 = vadd.f32 %v1346, %v1816
        %v1972 = vadd.f32 %v1435, %v1905
        %v1973 = vadd.f32 %v1349, %v1819
        %v1974 = vadd.f32 %v1438, %v1908
        %v1975 = vadd.f32 %v1351, %v1821
        %v1976 = vadd.f32 %v1440, %v1910
        %v1977 = vadd.f32 %v1354, %v1824
        %v1978 = vadd.f32 %v1443, %v1913
        %v1979 = vadd.f32 %v1356, %v1826
        %v1980 = vadd.f32 %v1445, %v1915
        %s1981 = scalar_lea.vmem %s1, 384
        %v1982 = vld [vmem:[%s1981] sm:$0xff]
        %v1983 = vld [vmem:[%s1981 + $0x8] sm:$0xff]
        %v1984 = vld [vmem:[%s1981 + $0x10] sm:$0xff]
        %v1985 = vld [vmem:[%s1981 + $0x18] sm:$0xff]
        %v1986 = vld [vmem:[%s1981 + $0x20] sm:$0xff]
        %v1987 = vld [vmem:[%s1981 + $0x28] sm:$0xff]
        %v1988 = vld [vmem:[%s1981 + $0x30] sm:$0xff]
        %v1989 = vld [vmem:[%s1981 + $0x38] sm:$0xff]
        %v1990 = vld [vmem:[%s1981 + $0x40] sm:$0xff]
        %v1991 = vld [vmem:[%s1981 + $0x48] sm:$0xff]
        %v1992 = vld [vmem:[%s1981 + $0x50] sm:$0xff]
        %v1993 = vld [vmem:[%s1981 + $0x58] sm:$0xff]
        %v1994 = vld [vmem:[%s1981 + $0x60] sm:$0xff]
        %v1995 = vld [vmem:[%s1981 + $0x68] sm:$0xff]
        %v1996 = vld [vmem:[%s1981 + $0x70] sm:$0xff]
        %v1997 = vld [vmem:[%s1981 + $0x78] sm:$0xff]
        %v2000 = vunpack.c.l.b16 %v345
        %v2001 = vunpack.c.l.b16 %v346
        %v2002 = vpack.c.b16 %v2001, %v2000
        %v2020 = vunpack.c.l.b16 %v1982
        %v2021 = vunpack.c.h.b16 %v1982
        %v2022 = vunpack.c.l.b16 %v1983
        %v2023 = vunpack.c.h.b16 %v1983
        %v2024 = vunpack.c.l.b16 %v1984
        %v2025 = vunpack.c.h.b16 %v1984
        %v2026 = vunpack.c.l.b16 %v1985
        %v2027 = vunpack.c.h.b16 %v1985
        %v2028 = vunpack.c.l.b16 %v1986
        %v2029 = vunpack.c.h.b16 %v1986
        %v2030 = vunpack.c.l.b16 %v1987
        %v2031 = vunpack.c.h.b16 %v1987
        %v2032 = vunpack.c.l.b16 %v1988
        %v2033 = vunpack.c.h.b16 %v1988
        %v2034 = vunpack.c.l.b16 %v1989
        %v2035 = vunpack.c.h.b16 %v1989
        %v2036 = vunpack.c.l.b16 %v1990
        %v2037 = vunpack.c.h.b16 %v1990
        %v2038 = vunpack.c.l.b16 %v1991
        %v2039 = vunpack.c.h.b16 %v1991
        %v2040 = vunpack.c.l.b16 %v1992
        %v2041 = vunpack.c.h.b16 %v1992
        %v2042 = vunpack.c.l.b16 %v1993
        %v2043 = vunpack.c.h.b16 %v1993
        %v2044 = vunpack.c.l.b16 %v1994
        %v2045 = vunpack.c.h.b16 %v1994
        %v2046 = vunpack.c.l.b16 %v1995
        %v2047 = vunpack.c.h.b16 %v1995
        %v2048 = vunpack.c.l.b16 %v1996
        %v2049 = vunpack.c.h.b16 %v1996
        %v2050 = vunpack.c.l.b16 %v1997
        %v2051 = vunpack.c.h.b16 %v1997
        %v2052 = vpack.c.b16 %v2022, %v2020
        %v2053 = vpack.c.b16 %v2023, %v2021
        %v2054 = vpack.c.b16 %v2026, %v2024
        %v2055 = vpack.c.b16 %v2027, %v2025
        %v2056 = vpack.c.b16 %v2030, %v2028
        %v2057 = vpack.c.b16 %v2031, %v2029
        %v2058 = vpack.c.b16 %v2034, %v2032
        %v2059 = vpack.c.b16 %v2035, %v2033
        %v2060 = vpack.c.b16 %v2038, %v2036
        %v2061 = vpack.c.b16 %v2039, %v2037
        %v2062 = vpack.c.b16 %v2042, %v2040
        %v2063 = vpack.c.b16 %v2043, %v2041
        %v2064 = vpack.c.b16 %v2046, %v2044
        %v2065 = vpack.c.b16 %v2047, %v2045
        %v2066 = vpack.c.b16 %v2050, %v2048
        %v2067 = vpack.c.b16 %v2051, %v2049
        %2084 = vmatpush.bf16.msra.mxu0 %v2066
        %2085 = vmatpush.bf16.msra.mxu0 %v2064
        %2086 = vmatpush.bf16.msra.mxu0 %v2062
        %2087 = vmatpush.bf16.msra.mxu0 %v2060
        %2088 = vmatpush.bf16.msra.mxu0 %v2058
        %2089 = vmatpush.bf16.msra.mxu0 %v2056
        %2090 = vmatpush.bf16.msra.mxu0 %v2054
        %2091 = vmatpush.bf16.msra.mxu0 %v2052
        %2092 = vmatmul.bf16.gmra.mxu0 %v1158
        %v2093 = vpop.f32.mrf.mxu0
        %v2094 = vadd.f32 0.0, %v2093
        %v2095 = vpop.f32.mrf.mxu0
        %v2096 = vadd.f32 0.0, %v2095
        %2097 = vmatmul.bf16.gmra.mxu0 %v1159
        %v2098 = vpop.f32.mrf.mxu0
        %v2099 = vadd.f32 0.0, %v2098
        %v2100 = vpop.f32.mrf.mxu0
        %v2101 = vadd.f32 0.0, %v2100
        %2102 = vmatmul.bf16.gmra.mxu0 %v1160
        %v2103 = vpop.f32.mrf.mxu0
        %v2104 = vadd.f32 0.0, %v2103
        %v2105 = vpop.f32.mrf.mxu0
        %v2106 = vadd.f32 0.0, %v2105
        %2107 = vmatmul.bf16.gmra.mxu0 %v1161
        %v2108 = vpop.f32.mrf.mxu0
        %v2109 = vadd.f32 0.0, %v2108
        %v2110 = vpop.f32.mrf.mxu0
        %v2111 = vadd.f32 0.0, %v2110
        %2112 = vmatmul.bf16.gmra.mxu0 %v1162
        %v2113 = vpop.f32.mrf.mxu0
        %v2114 = vadd.f32 0.0, %v2113
        %v2115 = vpop.f32.mrf.mxu0
        %v2116 = vadd.f32 0.0, %v2115
        %2117 = vmatmul.bf16.gmra.mxu0 %v1163
        %v2118 = vpop.f32.mrf.mxu0
        %v2119 = vadd.f32 0.0, %v2118
        %v2120 = vpop.f32.mrf.mxu0
        %v2121 = vadd.f32 0.0, %v2120
        %2122 = vmatmul.bf16.gmra.mxu0 %v1164
        %v2123 = vpop.f32.mrf.mxu0
        %v2124 = vadd.f32 0.0, %v2123
        %v2125 = vpop.f32.mrf.mxu0
        %v2126 = vadd.f32 0.0, %v2125
        %2127 = vmatmul.bf16.gmra.mxu0 %v1165
        %v2128 = vpop.f32.mrf.mxu0
        %v2129 = vadd.f32 0.0, %v2128
        %v2130 = vpop.f32.mrf.mxu0
        %v2131 = vadd.f32 0.0, %v2130
        %2132 = vmatmul.bf16.gmra.mxu0 %v1166
        %v2133 = vpop.f32.mrf.mxu0
        %v2134 = vadd.f32 0.0, %v2133
        %v2135 = vpop.f32.mrf.mxu0
        %v2136 = vadd.f32 0.0, %v2135
        %2137 = vmatmul.bf16.gmra.mxu0 %v1167
        %v2138 = vpop.f32.mrf.mxu0
        %v2139 = vadd.f32 0.0, %v2138
        %v2140 = vpop.f32.mrf.mxu0
        %v2141 = vadd.f32 0.0, %v2140
        %2142 = vmatmul.bf16.gmra.mxu0 %v1168
        %v2143 = vpop.f32.mrf.mxu0
        %v2144 = vadd.f32 0.0, %v2143
        %v2145 = vpop.f32.mrf.mxu0
        %v2146 = vadd.f32 0.0, %v2145
        %2147 = vmatmul.bf16.gmra.mxu0 %v1169
        %v2148 = vpop.f32.mrf.mxu0
        %v2149 = vadd.f32 0.0, %v2148
        %v2150 = vpop.f32.mrf.mxu0
        %v2151 = vadd.f32 0.0, %v2150
        %2152 = vmatmul.bf16.gmra.mxu0 %v1170
        %v2153 = vpop.f32.mrf.mxu0
        %v2154 = vadd.f32 0.0, %v2153
        %v2155 = vpop.f32.mrf.mxu0
        %v2156 = vadd.f32 0.0, %v2155
        %2157 = vmatmul.bf16.gmra.mxu0 %v1171
        %v2158 = vpop.f32.mrf.mxu0
        %v2159 = vadd.f32 0.0, %v2158
        %v2160 = vpop.f32.mrf.mxu0
        %v2161 = vadd.f32 0.0, %v2160
        %2162 = vmatmul.bf16.gmra.mxu0 %v1172
        %v2163 = vpop.f32.mrf.mxu0
        %v2164 = vadd.f32 0.0, %v2163
        %v2165 = vpop.f32.mrf.mxu0
        %v2166 = vadd.f32 0.0, %v2165
        %2167 = vmatmul.bf16.gmra.mxu0 %v2002
        %v2168 = vpop.f32.mrf.mxu0
        %v2169 = vadd.f32 0.0, %v2168
        %v2170 = vpop.f32.mrf.mxu0
        %v2171 = vadd.f32 0.0, %v2170
        %2172 = vdwg.mxu0
        %2173 = vmatpush.bf16.msra.mxu0 %v2067
        %2174 = vmatpush.bf16.msra.mxu0 %v2065
        %2175 = vmatpush.bf16.msra.mxu0 %v2063
        %2176 = vmatpush.bf16.msra.mxu0 %v2061
        %2177 = vmatpush.bf16.msra.mxu0 %v2059
        %2178 = vmatpush.bf16.msra.mxu0 %v2057
        %2179 = vmatpush.bf16.msra.mxu0 %v2055
        %2180 = vmatpush.bf16.msra.mxu0 %v2053
        %2181 = vmatmul.bf16.gmra.mxu0 %v1158
        %v2182 = vpop.f32.mrf.mxu0
        %v2183 = vadd.f32 0.0, %v2182
        %v2184 = vpop.f32.mrf.mxu0
        %v2185 = vadd.f32 0.0, %v2184
        %2186 = vmatmul.bf16.gmra.mxu0 %v1159
        %v2187 = vpop.f32.mrf.mxu0
        %v2188 = vadd.f32 0.0, %v2187
        %v2189 = vpop.f32.mrf.mxu0
        %v2190 = vadd.f32 0.0, %v2189
        %2191 = vmatmul.bf16.gmra.mxu0 %v1160
        %v2192 = vpop.f32.mrf.mxu0
        %v2193 = vadd.f32 0.0, %v2192
        %v2194 = vpop.f32.mrf.mxu0
        %v2195 = vadd.f32 0.0, %v2194
        %2196 = vmatmul.bf16.gmra.mxu0 %v1161
        %v2197 = vpop.f32.mrf.mxu0
        %v2198 = vadd.f32 0.0, %v2197
        %v2199 = vpop.f32.mrf.mxu0
        %v2200 = vadd.f32 0.0, %v2199
        %2201 = vmatmul.bf16.gmra.mxu0 %v1162
        %v2202 = vpop.f32.mrf.mxu0
        %v2203 = vadd.f32 0.0, %v2202
        %v2204 = vpop.f32.mrf.mxu0
        %v2205 = vadd.f32 0.0, %v2204
        %2206 = vmatmul.bf16.gmra.mxu0 %v1163
        %v2207 = vpop.f32.mrf.mxu0
        %v2208 = vadd.f32 0.0, %v2207
        %v2209 = vpop.f32.mrf.mxu0
        %v2210 = vadd.f32 0.0, %v2209
        %2211 = vmatmul.bf16.gmra.mxu0 %v1164
        %v2212 = vpop.f32.mrf.mxu0
        %v2213 = vadd.f32 0.0, %v2212
        %v2214 = vpop.f32.mrf.mxu0
        %v2215 = vadd.f32 0.0, %v2214
        %2216 = vmatmul.bf16.gmra.mxu0 %v1165
        %v2217 = vpop.f32.mrf.mxu0
        %v2218 = vadd.f32 0.0, %v2217
        %v2219 = vpop.f32.mrf.mxu0
        %v2220 = vadd.f32 0.0, %v2219
        %2221 = vmatmul.bf16.gmra.mxu0 %v1166
        %v2222 = vpop.f32.mrf.mxu0
        %v2223 = vadd.f32 0.0, %v2222
        %v2224 = vpop.f32.mrf.mxu0
        %v2225 = vadd.f32 0.0, %v2224
        %2226 = vmatmul.bf16.gmra.mxu0 %v1167
        %v2227 = vpop.f32.mrf.mxu0
        %v2228 = vadd.f32 0.0, %v2227
        %v2229 = vpop.f32.mrf.mxu0
        %v2230 = vadd.f32 0.0, %v2229
        %2231 = vmatmul.bf16.gmra.mxu0 %v1168
        %v2232 = vpop.f32.mrf.mxu0
        %v2233 = vadd.f32 0.0, %v2232
        %v2234 = vpop.f32.mrf.mxu0
        %v2235 = vadd.f32 0.0, %v2234
        %2236 = vmatmul.bf16.gmra.mxu0 %v1169
        %v2237 = vpop.f32.mrf.mxu0
        %v2238 = vadd.f32 0.0, %v2237
        %v2239 = vpop.f32.mrf.mxu0
        %v2240 = vadd.f32 0.0, %v2239
        %2241 = vmatmul.bf16.gmra.mxu0 %v1170
        %v2242 = vpop.f32.mrf.mxu0
        %v2243 = vadd.f32 0.0, %v2242
        %v2244 = vpop.f32.mrf.mxu0
        %v2245 = vadd.f32 0.0, %v2244
        %2246 = vmatmul.bf16.gmra.mxu0 %v1171
        %v2247 = vpop.f32.mrf.mxu0
        %v2248 = vadd.f32 0.0, %v2247
        %v2249 = vpop.f32.mrf.mxu0
        %v2250 = vadd.f32 0.0, %v2249
        %2251 = vmatmul.bf16.gmra.mxu0 %v1172
        %v2252 = vpop.f32.mrf.mxu0
        %v2253 = vadd.f32 0.0, %v2252
        %v2254 = vpop.f32.mrf.mxu0
        %v2255 = vadd.f32 0.0, %v2254
        %2256 = vmatmul.bf16.gmra.mxu0 %v2002
        %v2257 = vpop.f32.mrf.mxu0
        %v2258 = vadd.f32 0.0, %v2257
        %v2259 = vpop.f32.mrf.mxu0
        %v2260 = vadd.f32 0.0, %v2259
        %2261 = vdwg.mxu0
        %v2262 = vadd.f32 %v1917, %v2094
        %v2263 = vadd.f32 %v1918, %v2183
        %v2264 = vadd.f32 %v1919, %v2096
        %v2265 = vadd.f32 %v1920, %v2185
        %v2266 = vadd.f32 %v1921, %v2099
        %v2267 = vadd.f32 %v1922, %v2188
        %v2268 = vadd.f32 %v1923, %v2101
        %v2269 = vadd.f32 %v1924, %v2190
        %v2270 = vadd.f32 %v1925, %v2104
        %v2271 = vadd.f32 %v1926, %v2193
        %v2272 = vadd.f32 %v1927, %v2106
        %v2273 = vadd.f32 %v1928, %v2195
        %v2274 = vadd.f32 %v1929, %v2109
        %v2275 = vadd.f32 %v1930, %v2198
        %v2276 = vadd.f32 %v1931, %v2111
        %v2277 = vadd.f32 %v1932, %v2200
        %v2278 = vadd.f32 %v1933, %v2114
        %v2279 = vadd.f32 %v1934, %v2203
        %v2280 = vadd.f32 %v1935, %v2116
        %v2281 = vadd.f32 %v1936, %v2205
        %v2282 = vadd.f32 %v1937, %v2119
        %v2283 = vadd.f32 %v1938, %v2208
        %v2284 = vadd.f32 %v1939, %v2121
        %v2285 = vadd.f32 %v1940, %v2210
        %v2286 = vadd.f32 %v1941, %v2124
        %v2287 = vadd.f32 %v1942, %v2213
        %v2288 = vadd.f32 %v1943, %v2126
        %v2289 = vadd.f32 %v1944, %v2215
        %v2290 = vadd.f32 %v1945, %v2129
        %v2291 = vadd.f32 %v1946, %v2218
        %v2292 = vadd.f32 %v1947, %v2131
        %v2293 = vadd.f32 %v1948, %v2220
        %v2294 = vadd.f32 %v1949, %v2134
        %v2295 = vadd.f32 %v1950, %v2223
        %v2296 = vadd.f32 %v1951, %v2136
        %v2297 = vadd.f32 %v1952, %v2225
        %v2298 = vadd.f32 %v1953, %v2139
        %v2299 = vadd.f32 %v1954, %v2228
        %v2300 = vadd.f32 %v1955, %v2141
        %v2301 = vadd.f32 %v1956, %v2230
        %v2302 = vadd.f32 %v1957, %v2144
        %v2303 = vadd.f32 %v1958, %v2233
        %v2304 = vadd.f32 %v1959, %v2146
        %v2305 = vadd.f32 %v1960, %v2235
        %v2306 = vadd.f32 %v1961, %v2149
        %v2307 = vadd.f32 %v1962, %v2238
        %v2308 = vadd.f32 %v1963, %v2151
        %v2309 = vadd.f32 %v1964, %v2240
        %v2310 = vadd.f32 %v1965, %v2154
        %v2311 = vadd.f32 %v1966, %v2243
        %v2312 = vadd.f32 %v1967, %v2156
        %v2313 = vadd.f32 %v1968, %v2245
        %v2314 = vadd.f32 %v1969, %v2159
        %v2315 = vadd.f32 %v1970, %v2248
        %v2316 = vadd.f32 %v1971, %v2161
        %v2317 = vadd.f32 %v1972, %v2250
        %v2318 = vadd.f32 %v1973, %v2164
        %v2319 = vadd.f32 %v1974, %v2253
        %v2320 = vadd.f32 %v1975, %v2166
        %v2321 = vadd.f32 %v1976, %v2255
        %v2322 = vadd.f32 %v1977, %v2169
        %v2323 = vadd.f32 %v1978, %v2258
        %v2324 = vadd.f32 %v1979, %v2171
        %v2325 = vadd.f32 %v1980, %v2260
        %v2327 = vshrl.u32 %v345, 16
        %v2329 = vrot.slane %v2327, 4
        %v2330 = vshll.u32 %v345, 16
        %v2332 = vrot.slane %v2330, 5
        %v2333 = vor.u32 %v2329, %v2332
        %v2334 = vrot.slane %v2333, 4
        %v2336 = vshll.u32 %v346, 16
        %v2338 = vrot.slane %v2336, 5
        %v2339 = vsel %vm369, %v2334, %v2338
        %v2340 = vshrl.u32 %v346, 16
        %v2342 = vrot.slane %v2340, 4
        %v2343 = vor.u32 %v2342, %v2338
        %v2344 = vrot.slane %v2343, 4
        %v2346 = vshll.u32 %v347, 16
        %v2348 = vrot.slane %v2346, 5
        %v2349 = vsel %vm369, %v2344, %v2348
        %s2382 = scalar_lea.vmem %s1, 512
        %v2383 = vld [vmem:[%s2382] sm:$0xff]
        %v2384 = vld [vmem:[%s2382 + $0x8] sm:$0xff]
        %v2385 = vld [vmem:[%s2382 + $0x10] sm:$0xff]
        %v2386 = vld [vmem:[%s2382 + $0x18] sm:$0xff]
        %v2387 = vld [vmem:[%s2382 + $0x20] sm:$0xff]
        %v2388 = vld [vmem:[%s2382 + $0x28] sm:$0xff]
        %v2389 = vld [vmem:[%s2382 + $0x30] sm:$0xff]
        %v2390 = vld [vmem:[%s2382 + $0x38] sm:$0xff]
        %v2391 = vld [vmem:[%s2382 + $0x40] sm:$0xff]
        %v2392 = vld [vmem:[%s2382 + $0x48] sm:$0xff]
        %v2393 = vld [vmem:[%s2382 + $0x50] sm:$0xff]
        %v2394 = vld [vmem:[%s2382 + $0x58] sm:$0xff]
        %v2395 = vld [vmem:[%s2382 + $0x60] sm:$0xff]
        %v2396 = vld [vmem:[%s2382 + $0x68] sm:$0xff]
        %v2397 = vld [vmem:[%s2382 + $0x70] sm:$0xff]
        %v2398 = vld [vmem:[%s2382 + $0x78] sm:$0xff]
        %v2399 = vunpack.c.l.b16 %v2339
        %v2400 = vunpack.c.l.b16 %v2349
        %v2401 = vpack.c.b16 %v2400, %v2399
        %v2419 = vunpack.c.l.b16 %v2383
        %v2420 = vunpack.c.h.b16 %v2383
        %v2421 = vunpack.c.l.b16 %v2384
        %v2422 = vunpack.c.h.b16 %v2384
        %v2423 = vunpack.c.l.b16 %v2385
        %v2424 = vunpack.c.h.b16 %v2385
        %v2425 = vunpack.c.l.b16 %v2386
        %v2426 = vunpack.c.h.b16 %v2386
        %v2427 = vunpack.c.l.b16 %v2387
        %v2428 = vunpack.c.h.b16 %v2387
        %v2429 = vunpack.c.l.b16 %v2388
        %v2430 = vunpack.c.h.b16 %v2388
        %v2431 = vunpack.c.l.b16 %v2389
        %v2432 = vunpack.c.h.b16 %v2389
        %v2433 = vunpack.c.l.b16 %v2390
        %v2434 = vunpack.c.h.b16 %v2390
        %v2435 = vunpack.c.l.b16 %v2391
        %v2436 = vunpack.c.h.b16 %v2391
        %v2437 = vunpack.c.l.b16 %v2392
        %v2438 = vunpack.c.h.b16 %v2392
        %v2439 = vunpack.c.l.b16 %v2393
        %v2440 = vunpack.c.h.b16 %v2393
        %v2441 = vunpack.c.l.b16 %v2394
        %v2442 = vunpack.c.h.b16 %v2394
        %v2443 = vunpack.c.l.b16 %v2395
        %v2444 = vunpack.c.h.b16 %v2395
        %v2445 = vunpack.c.l.b16 %v2396
        %v2446 = vunpack.c.h.b16 %v2396
        %v2447 = vunpack.c.l.b16 %v2397
        %v2448 = vunpack.c.h.b16 %v2397
        %v2449 = vunpack.c.l.b16 %v2398
        %v2450 = vunpack.c.h.b16 %v2398
        %v2451 = vpack.c.b16 %v2421, %v2419
        %v2452 = vpack.c.b16 %v2422, %v2420
        %v2453 = vpack.c.b16 %v2425, %v2423
        %v2454 = vpack.c.b16 %v2426, %v2424
        %v2455 = vpack.c.b16 %v2429, %v2427
        %v2456 = vpack.c.b16 %v2430, %v2428
        %v2457 = vpack.c.b16 %v2433, %v2431
        %v2458 = vpack.c.b16 %v2434, %v2432
        %v2459 = vpack.c.b16 %v2437, %v2435
        %v2460 = vpack.c.b16 %v2438, %v2436
        %v2461 = vpack.c.b16 %v2441, %v2439
        %v2462 = vpack.c.b16 %v2442, %v2440
        %v2463 = vpack.c.b16 %v2445, %v2443
        %v2464 = vpack.c.b16 %v2446, %v2444
        %v2465 = vpack.c.b16 %v2449, %v2447
        %v2466 = vpack.c.b16 %v2450, %v2448
        %2483 = vmatpush.bf16.msra.mxu0 %v2465
        %2484 = vmatpush.bf16.msra.mxu0 %v2463
        %2485 = vmatpush.bf16.msra.mxu0 %v2461
        %2486 = vmatpush.bf16.msra.mxu0 %v2459
        %2487 = vmatpush.bf16.msra.mxu0 %v2457
        %2488 = vmatpush.bf16.msra.mxu0 %v2455
        %2489 = vmatpush.bf16.msra.mxu0 %v2453
        %2490 = vmatpush.bf16.msra.mxu0 %v2451
        %2491 = vmatmul.bf16.gmra.mxu0 %v804
        %v2492 = vpop.f32.mrf.mxu0
        %v2493 = vadd.f32 0.0, %v2492
        %v2494 = vpop.f32.mrf.mxu0
        %v2495 = vadd.f32 0.0, %v2494
        %2496 = vmatmul.bf16.gmra.mxu0 %v805
        %v2497 = vpop.f32.mrf.mxu0
        %v2498 = vadd.f32 0.0, %v2497
        %v2499 = vpop.f32.mrf.mxu0
        %v2500 = vadd.f32 0.0, %v2499
        %2501 = vmatmul.bf16.gmra.mxu0 %v806
        %v2502 = vpop.f32.mrf.mxu0
        %v2503 = vadd.f32 0.0, %v2502
        %v2504 = vpop.f32.mrf.mxu0
        %v2505 = vadd.f32 0.0, %v2504
        %2506 = vmatmul.bf16.gmra.mxu0 %v807
        %v2507 = vpop.f32.mrf.mxu0
        %v2508 = vadd.f32 0.0, %v2507
        %v2509 = vpop.f32.mrf.mxu0
        %v2510 = vadd.f32 0.0, %v2509
        %2511 = vmatmul.bf16.gmra.mxu0 %v808
        %v2512 = vpop.f32.mrf.mxu0
        %v2513 = vadd.f32 0.0, %v2512
        %v2514 = vpop.f32.mrf.mxu0
        %v2515 = vadd.f32 0.0, %v2514
        %2516 = vmatmul.bf16.gmra.mxu0 %v809
        %v2517 = vpop.f32.mrf.mxu0
        %v2518 = vadd.f32 0.0, %v2517
        %v2519 = vpop.f32.mrf.mxu0
        %v2520 = vadd.f32 0.0, %v2519
        %2521 = vmatmul.bf16.gmra.mxu0 %v810
        %v2522 = vpop.f32.mrf.mxu0
        %v2523 = vadd.f32 0.0, %v2522
        %v2524 = vpop.f32.mrf.mxu0
        %v2525 = vadd.f32 0.0, %v2524
        %2526 = vmatmul.bf16.gmra.mxu0 %v811
        %v2527 = vpop.f32.mrf.mxu0
        %v2528 = vadd.f32 0.0, %v2527
        %v2529 = vpop.f32.mrf.mxu0
        %v2530 = vadd.f32 0.0, %v2529
        %2531 = vmatmul.bf16.gmra.mxu0 %v812
        %v2532 = vpop.f32.mrf.mxu0
        %v2533 = vadd.f32 0.0, %v2532
        %v2534 = vpop.f32.mrf.mxu0
        %v2535 = vadd.f32 0.0, %v2534
        %2536 = vmatmul.bf16.gmra.mxu0 %v813
        %v2537 = vpop.f32.mrf.mxu0
        %v2538 = vadd.f32 0.0, %v2537
        %v2539 = vpop.f32.mrf.mxu0
        %v2540 = vadd.f32 0.0, %v2539
        %2541 = vmatmul.bf16.gmra.mxu0 %v814
        %v2542 = vpop.f32.mrf.mxu0
        %v2543 = vadd.f32 0.0, %v2542
        %v2544 = vpop.f32.mrf.mxu0
        %v2545 = vadd.f32 0.0, %v2544
        %2546 = vmatmul.bf16.gmra.mxu0 %v815
        %v2547 = vpop.f32.mrf.mxu0
        %v2548 = vadd.f32 0.0, %v2547
        %v2549 = vpop.f32.mrf.mxu0
        %v2550 = vadd.f32 0.0, %v2549
        %2551 = vmatmul.bf16.gmra.mxu0 %v816
        %v2552 = vpop.f32.mrf.mxu0
        %v2553 = vadd.f32 0.0, %v2552
        %v2554 = vpop.f32.mrf.mxu0
        %v2555 = vadd.f32 0.0, %v2554
        %2556 = vmatmul.bf16.gmra.mxu0 %v817
        %v2557 = vpop.f32.mrf.mxu0
        %v2558 = vadd.f32 0.0, %v2557
        %v2559 = vpop.f32.mrf.mxu0
        %v2560 = vadd.f32 0.0, %v2559
        %2561 = vmatmul.bf16.gmra.mxu0 %v818
        %v2562 = vpop.f32.mrf.mxu0
        %v2563 = vadd.f32 0.0, %v2562
        %v2564 = vpop.f32.mrf.mxu0
        %v2565 = vadd.f32 0.0, %v2564
        %2566 = vmatmul.bf16.gmra.mxu0 %v2401
        %v2567 = vpop.f32.mrf.mxu0
        %v2568 = vadd.f32 0.0, %v2567
        %v2569 = vpop.f32.mrf.mxu0
        %v2570 = vadd.f32 0.0, %v2569
        %2571 = vdwg.mxu0
        %2572 = vmatpush.bf16.msra.mxu0 %v2466
        %2573 = vmatpush.bf16.msra.mxu0 %v2464
        %2574 = vmatpush.bf16.msra.mxu0 %v2462
        %2575 = vmatpush.bf16.msra.mxu0 %v2460
        %2576 = vmatpush.bf16.msra.mxu0 %v2458
        %2577 = vmatpush.bf16.msra.mxu0 %v2456
        %2578 = vmatpush.bf16.msra.mxu0 %v2454
        %2579 = vmatpush.bf16.msra.mxu0 %v2452
        %2580 = vmatmul.bf16.gmra.mxu0 %v804
        %v2581 = vpop.f32.mrf.mxu0
        %v2582 = vadd.f32 0.0, %v2581
        %v2583 = vpop.f32.mrf.mxu0
        %v2584 = vadd.f32 0.0, %v2583
        %2585 = vmatmul.bf16.gmra.mxu0 %v805
        %v2586 = vpop.f32.mrf.mxu0
        %v2587 = vadd.f32 0.0, %v2586
        %v2588 = vpop.f32.mrf.mxu0
        %v2589 = vadd.f32 0.0, %v2588
        %2590 = vmatmul.bf16.gmra.mxu0 %v806
        %v2591 = vpop.f32.mrf.mxu0
        %v2592 = vadd.f32 0.0, %v2591
        %v2593 = vpop.f32.mrf.mxu0
        %v2594 = vadd.f32 0.0, %v2593
        %2595 = vmatmul.bf16.gmra.mxu0 %v807
        %v2596 = vpop.f32.mrf.mxu0
        %v2597 = vadd.f32 0.0, %v2596
        %v2598 = vpop.f32.mrf.mxu0
        %v2599 = vadd.f32 0.0, %v2598
        %2600 = vmatmul.bf16.gmra.mxu0 %v808
        %v2601 = vpop.f32.mrf.mxu0
        %v2602 = vadd.f32 0.0, %v2601
        %v2603 = vpop.f32.mrf.mxu0
        %v2604 = vadd.f32 0.0, %v2603
        %2605 = vmatmul.bf16.gmra.mxu0 %v809
        %v2606 = vpop.f32.mrf.mxu0
        %v2607 = vadd.f32 0.0, %v2606
        %v2608 = vpop.f32.mrf.mxu0
        %v2609 = vadd.f32 0.0, %v2608
        %2610 = vmatmul.bf16.gmra.mxu0 %v810
        %v2611 = vpop.f32.mrf.mxu0
        %v2612 = vadd.f32 0.0, %v2611
        %v2613 = vpop.f32.mrf.mxu0
        %v2614 = vadd.f32 0.0, %v2613
        %2615 = vmatmul.bf16.gmra.mxu0 %v811
        %v2616 = vpop.f32.mrf.mxu0
        %v2617 = vadd.f32 0.0, %v2616
        %v2618 = vpop.f32.mrf.mxu0
        %v2619 = vadd.f32 0.0, %v2618
        %2620 = vmatmul.bf16.gmra.mxu0 %v812
        %v2621 = vpop.f32.mrf.mxu0
        %v2622 = vadd.f32 0.0, %v2621
        %v2623 = vpop.f32.mrf.mxu0
        %v2624 = vadd.f32 0.0, %v2623
        %2625 = vmatmul.bf16.gmra.mxu0 %v813
        %v2626 = vpop.f32.mrf.mxu0
        %v2627 = vadd.f32 0.0, %v2626
        %v2628 = vpop.f32.mrf.mxu0
        %v2629 = vadd.f32 0.0, %v2628
        %2630 = vmatmul.bf16.gmra.mxu0 %v814
        %v2631 = vpop.f32.mrf.mxu0
        %v2632 = vadd.f32 0.0, %v2631
        %v2633 = vpop.f32.mrf.mxu0
        %v2634 = vadd.f32 0.0, %v2633
        %2635 = vmatmul.bf16.gmra.mxu0 %v815
        %v2636 = vpop.f32.mrf.mxu0
        %v2637 = vadd.f32 0.0, %v2636
        %v2638 = vpop.f32.mrf.mxu0
        %v2639 = vadd.f32 0.0, %v2638
        %2640 = vmatmul.bf16.gmra.mxu0 %v816
        %v2641 = vpop.f32.mrf.mxu0
        %v2642 = vadd.f32 0.0, %v2641
        %v2643 = vpop.f32.mrf.mxu0
        %v2644 = vadd.f32 0.0, %v2643
        %2645 = vmatmul.bf16.gmra.mxu0 %v817
        %v2646 = vpop.f32.mrf.mxu0
        %v2647 = vadd.f32 0.0, %v2646
        %v2648 = vpop.f32.mrf.mxu0
        %v2649 = vadd.f32 0.0, %v2648
        %2650 = vmatmul.bf16.gmra.mxu0 %v818
        %v2651 = vpop.f32.mrf.mxu0
        %v2652 = vadd.f32 0.0, %v2651
        %v2653 = vpop.f32.mrf.mxu0
        %v2654 = vadd.f32 0.0, %v2653
        %2655 = vmatmul.bf16.gmra.mxu0 %v2401
        %v2656 = vpop.f32.mrf.mxu0
        %v2657 = vadd.f32 0.0, %v2656
        %v2658 = vpop.f32.mrf.mxu0
        %v2659 = vadd.f32 0.0, %v2658
        %2660 = vdwg.mxu0
        %v2661 = vadd.f32 %v2262, %v2493
        %v2662 = vadd.f32 %v2263, %v2582
        %v2663 = vadd.f32 %v2264, %v2495
        %v2664 = vadd.f32 %v2265, %v2584
        %v2665 = vadd.f32 %v2266, %v2498
        %v2666 = vadd.f32 %v2267, %v2587
        %v2667 = vadd.f32 %v2268, %v2500
        %v2668 = vadd.f32 %v2269, %v2589
        %v2669 = vadd.f32 %v2270, %v2503
        %v2670 = vadd.f32 %v2271, %v2592
        %v2671 = vadd.f32 %v2272, %v2505
        %v2672 = vadd.f32 %v2273, %v2594
        %v2673 = vadd.f32 %v2274, %v2508
        %v2674 = vadd.f32 %v2275, %v2597
        %v2675 = vadd.f32 %v2276, %v2510
        %v2676 = vadd.f32 %v2277, %v2599
        %v2677 = vadd.f32 %v2278, %v2513
        %v2678 = vadd.f32 %v2279, %v2602
        %v2679 = vadd.f32 %v2280, %v2515
        %v2680 = vadd.f32 %v2281, %v2604
        %v2681 = vadd.f32 %v2282, %v2518
        %v2682 = vadd.f32 %v2283, %v2607
        %v2683 = vadd.f32 %v2284, %v2520
        %v2684 = vadd.f32 %v2285, %v2609
        %v2685 = vadd.f32 %v2286, %v2523
        %v2686 = vadd.f32 %v2287, %v2612
        %v2687 = vadd.f32 %v2288, %v2525
        %v2688 = vadd.f32 %v2289, %v2614
        %v2689 = vadd.f32 %v2290, %v2528
        %v2690 = vadd.f32 %v2291, %v2617
        %v2691 = vadd.f32 %v2292, %v2530
        %v2692 = vadd.f32 %v2293, %v2619
        %v2693 = vadd.f32 %v2294, %v2533
        %v2694 = vadd.f32 %v2295, %v2622
        %v2695 = vadd.f32 %v2296, %v2535
        %v2696 = vadd.f32 %v2297, %v2624
        %v2697 = vadd.f32 %v2298, %v2538
        %v2698 = vadd.f32 %v2299, %v2627
        %v2699 = vadd.f32 %v2300, %v2540
        %v2700 = vadd.f32 %v2301, %v2629
        %v2701 = vadd.f32 %v2302, %v2543
        %v2702 = vadd.f32 %v2303, %v2632
        %v2703 = vadd.f32 %v2304, %v2545
        %v2704 = vadd.f32 %v2305, %v2634
        %v2705 = vadd.f32 %v2306, %v2548
        %v2706 = vadd.f32 %v2307, %v2637
        %v2707 = vadd.f32 %v2308, %v2550
        %v2708 = vadd.f32 %v2309, %v2639
        %v2709 = vadd.f32 %v2310, %v2553
        %v2710 = vadd.f32 %v2311, %v2642
        %v2711 = vadd.f32 %v2312, %v2555
        %v2712 = vadd.f32 %v2313, %v2644
        %v2713 = vadd.f32 %v2314, %v2558
        %v2714 = vadd.f32 %v2315, %v2647
        %v2715 = vadd.f32 %v2316, %v2560
        %v2716 = vadd.f32 %v2317, %v2649
        %v2717 = vadd.f32 %v2318, %v2563
        %v2718 = vadd.f32 %v2319, %v2652
        %v2719 = vadd.f32 %v2320, %v2565
        %v2720 = vadd.f32 %v2321, %v2654
        %v2721 = vadd.f32 %v2322, %v2568
        %v2722 = vadd.f32 %v2323, %v2657
        %v2723 = vadd.f32 %v2324, %v2570
        %v2724 = vadd.f32 %v2325, %v2659
        %v2726 = vrot.slane %v345, 5
        %v2727 = vrot.slane %v2726, 4
        %v2728 = vrot.slane %v346, 5
        %v2729 = vsel %vm1465, %v2727, %v2728
        %v2730 = vrot.slane %v2728, 4
        %v2731 = vrot.slane %v347, 5
        %v2732 = vsel %vm1465, %v2730, %v2731
        %s2733 = scalar_lea.vmem %s1, 640
        %v2734 = vld [vmem:[%s2733] sm:$0xff]
        %v2735 = vld [vmem:[%s2733 + $0x8] sm:$0xff]
        %v2736 = vld [vmem:[%s2733 + $0x10] sm:$0xff]
        %v2737 = vld [vmem:[%s2733 + $0x18] sm:$0xff]
        %v2738 = vld [vmem:[%s2733 + $0x20] sm:$0xff]
        %v2739 = vld [vmem:[%s2733 + $0x28] sm:$0xff]
        %v2740 = vld [vmem:[%s2733 + $0x30] sm:$0xff]
        %v2741 = vld [vmem:[%s2733 + $0x38] sm:$0xff]
        %v2742 = vld [vmem:[%s2733 + $0x40] sm:$0xff]
        %v2743 = vld [vmem:[%s2733 + $0x48] sm:$0xff]
        %v2744 = vld [vmem:[%s2733 + $0x50] sm:$0xff]
        %v2745 = vld [vmem:[%s2733 + $0x58] sm:$0xff]
        %v2746 = vld [vmem:[%s2733 + $0x60] sm:$0xff]
        %v2747 = vld [vmem:[%s2733 + $0x68] sm:$0xff]
        %v2748 = vld [vmem:[%s2733 + $0x70] sm:$0xff]
        %v2749 = vld [vmem:[%s2733 + $0x78] sm:$0xff]
        %v2750 = vunpack.c.l.b16 %v2729
        %v2751 = vunpack.c.l.b16 %v2732
        %v2752 = vpack.c.b16 %v2751, %v2750
        %v2770 = vunpack.c.l.b16 %v2734
        %v2771 = vunpack.c.h.b16 %v2734
        %v2772 = vunpack.c.l.b16 %v2735
        %v2773 = vunpack.c.h.b16 %v2735
        %v2774 = vunpack.c.l.b16 %v2736
        %v2775 = vunpack.c.h.b16 %v2736
        %v2776 = vunpack.c.l.b16 %v2737
        %v2777 = vunpack.c.h.b16 %v2737
        %v2778 = vunpack.c.l.b16 %v2738
        %v2779 = vunpack.c.h.b16 %v2738
        %v2780 = vunpack.c.l.b16 %v2739
        %v2781 = vunpack.c.h.b16 %v2739
        %v2782 = vunpack.c.l.b16 %v2740
        %v2783 = vunpack.c.h.b16 %v2740
        %v2784 = vunpack.c.l.b16 %v2741
        %v2785 = vunpack.c.h.b16 %v2741
        %v2786 = vunpack.c.l.b16 %v2742
        %v2787 = vunpack.c.h.b16 %v2742
        %v2788 = vunpack.c.l.b16 %v2743
        %v2789 = vunpack.c.h.b16 %v2743
        %v2790 = vunpack.c.l.b16 %v2744
        %v2791 = vunpack.c.h.b16 %v2744
        %v2792 = vunpack.c.l.b16 %v2745
        %v2793 = vunpack.c.h.b16 %v2745
        %v2794 = vunpack.c.l.b16 %v2746
        %v2795 = vunpack.c.h.b16 %v2746
        %v2796 = vunpack.c.l.b16 %v2747
        %v2797 = vunpack.c.h.b16 %v2747
        %v2798 = vunpack.c.l.b16 %v2748
        %v2799 = vunpack.c.h.b16 %v2748
        %v2800 = vunpack.c.l.b16 %v2749
        %v2801 = vunpack.c.h.b16 %v2749
        %v2802 = vpack.c.b16 %v2772, %v2770
        %v2803 = vpack.c.b16 %v2773, %v2771
        %v2804 = vpack.c.b16 %v2776, %v2774
        %v2805 = vpack.c.b16 %v2777, %v2775
        %v2806 = vpack.c.b16 %v2780, %v2778
        %v2807 = vpack.c.b16 %v2781, %v2779
        %v2808 = vpack.c.b16 %v2784, %v2782
        %v2809 = vpack.c.b16 %v2785, %v2783
        %v2810 = vpack.c.b16 %v2788, %v2786
        %v2811 = vpack.c.b16 %v2789, %v2787
        %v2812 = vpack.c.b16 %v2792, %v2790
        %v2813 = vpack.c.b16 %v2793, %v2791
        %v2814 = vpack.c.b16 %v2796, %v2794
        %v2815 = vpack.c.b16 %v2797, %v2795
        %v2816 = vpack.c.b16 %v2800, %v2798
        %v2817 = vpack.c.b16 %v2801, %v2799
        %2834 = vmatpush.bf16.msra.mxu0 %v2816
        %2835 = vmatpush.bf16.msra.mxu0 %v2814
        %2836 = vmatpush.bf16.msra.mxu0 %v2812
        %2837 = vmatpush.bf16.msra.mxu0 %v2810
        %2838 = vmatpush.bf16.msra.mxu0 %v2808
        %2839 = vmatpush.bf16.msra.mxu0 %v2806
        %2840 = vmatpush.bf16.msra.mxu0 %v2804
        %2841 = vmatpush.bf16.msra.mxu0 %v2802
        %2842 = vmatmul.bf16.gmra.mxu0 %v1628
        %v2843 = vpop.f32.mrf.mxu0
        %v2844 = vadd.f32 0.0, %v2843
        %v2845 = vpop.f32.mrf.mxu0
        %v2846 = vadd.f32 0.0, %v2845
        %2847 = vmatmul.bf16.gmra.mxu0 %v1629
        %v2848 = vpop.f32.mrf.mxu0
        %v2849 = vadd.f32 0.0, %v2848
        %v2850 = vpop.f32.mrf.mxu0
        %v2851 = vadd.f32 0.0, %v2850
        %2852 = vmatmul.bf16.gmra.mxu0 %v1630
        %v2853 = vpop.f32.mrf.mxu0
        %v2854 = vadd.f32 0.0, %v2853
        %v2855 = vpop.f32.mrf.mxu0
        %v2856 = vadd.f32 0.0, %v2855
        %2857 = vmatmul.bf16.gmra.mxu0 %v1631
        %v2858 = vpop.f32.mrf.mxu0
        %v2859 = vadd.f32 0.0, %v2858
        %v2860 = vpop.f32.mrf.mxu0
        %v2861 = vadd.f32 0.0, %v2860
        %2862 = vmatmul.bf16.gmra.mxu0 %v1632
        %v2863 = vpop.f32.mrf.mxu0
        %v2864 = vadd.f32 0.0, %v2863
        %v2865 = vpop.f32.mrf.mxu0
        %v2866 = vadd.f32 0.0, %v2865
        %2867 = vmatmul.bf16.gmra.mxu0 %v1633
        %v2868 = vpop.f32.mrf.mxu0
        %v2869 = vadd.f32 0.0, %v2868
        %v2870 = vpop.f32.mrf.mxu0
        %v2871 = vadd.f32 0.0, %v2870
        %2872 = vmatmul.bf16.gmra.mxu0 %v1634
        %v2873 = vpop.f32.mrf.mxu0
        %v2874 = vadd.f32 0.0, %v2873
        %v2875 = vpop.f32.mrf.mxu0
        %v2876 = vadd.f32 0.0, %v2875
        %2877 = vmatmul.bf16.gmra.mxu0 %v1635
        %v2878 = vpop.f32.mrf.mxu0
        %v2879 = vadd.f32 0.0, %v2878
        %v2880 = vpop.f32.mrf.mxu0
        %v2881 = vadd.f32 0.0, %v2880
        %2882 = vmatmul.bf16.gmra.mxu0 %v1636
        %v2883 = vpop.f32.mrf.mxu0
        %v2884 = vadd.f32 0.0, %v2883
        %v2885 = vpop.f32.mrf.mxu0
        %v2886 = vadd.f32 0.0, %v2885
        %2887 = vmatmul.bf16.gmra.mxu0 %v1637
        %v2888 = vpop.f32.mrf.mxu0
        %v2889 = vadd.f32 0.0, %v2888
        %v2890 = vpop.f32.mrf.mxu0
        %v2891 = vadd.f32 0.0, %v2890
        %2892 = vmatmul.bf16.gmra.mxu0 %v1638
        %v2893 = vpop.f32.mrf.mxu0
        %v2894 = vadd.f32 0.0, %v2893
        %v2895 = vpop.f32.mrf.mxu0
        %v2896 = vadd.f32 0.0, %v2895
        %2897 = vmatmul.bf16.gmra.mxu0 %v1639
        %v2898 = vpop.f32.mrf.mxu0
        %v2899 = vadd.f32 0.0, %v2898
        %v2900 = vpop.f32.mrf.mxu0
        %v2901 = vadd.f32 0.0, %v2900
        %2902 = vmatmul.bf16.gmra.mxu0 %v1640
        %v2903 = vpop.f32.mrf.mxu0
        %v2904 = vadd.f32 0.0, %v2903
        %v2905 = vpop.f32.mrf.mxu0
        %v2906 = vadd.f32 0.0, %v2905
        %2907 = vmatmul.bf16.gmra.mxu0 %v1641
        %v2908 = vpop.f32.mrf.mxu0
        %v2909 = vadd.f32 0.0, %v2908
        %v2910 = vpop.f32.mrf.mxu0
        %v2911 = vadd.f32 0.0, %v2910
        %2912 = vmatmul.bf16.gmra.mxu0 %v1642
        %v2913 = vpop.f32.mrf.mxu0
        %v2914 = vadd.f32 0.0, %v2913
        %v2915 = vpop.f32.mrf.mxu0
        %v2916 = vadd.f32 0.0, %v2915
        %2917 = vmatmul.bf16.gmra.mxu0 %v2752
        %v2918 = vpop.f32.mrf.mxu0
        %v2919 = vadd.f32 0.0, %v2918
        %v2920 = vpop.f32.mrf.mxu0
        %v2921 = vadd.f32 0.0, %v2920
        %2922 = vdwg.mxu0
        %2923 = vmatpush.bf16.msra.mxu0 %v2817
        %2924 = vmatpush.bf16.msra.mxu0 %v2815
        %2925 = vmatpush.bf16.msra.mxu0 %v2813
        %2926 = vmatpush.bf16.msra.mxu0 %v2811
        %2927 = vmatpush.bf16.msra.mxu0 %v2809
        %2928 = vmatpush.bf16.msra.mxu0 %v2807
        %2929 = vmatpush.bf16.msra.mxu0 %v2805
        %2930 = vmatpush.bf16.msra.mxu0 %v2803
        %2931 = vmatmul.bf16.gmra.mxu0 %v1628
        %v2932 = vpop.f32.mrf.mxu0
        %v2933 = vadd.f32 0.0, %v2932
        %v2934 = vpop.f32.mrf.mxu0
        %v2935 = vadd.f32 0.0, %v2934
        %2936 = vmatmul.bf16.gmra.mxu0 %v1629
        %v2937 = vpop.f32.mrf.mxu0
        %v2938 = vadd.f32 0.0, %v2937
        %v2939 = vpop.f32.mrf.mxu0
        %v2940 = vadd.f32 0.0, %v2939
        %2941 = vmatmul.bf16.gmra.mxu0 %v1630
        %v2942 = vpop.f32.mrf.mxu0
        %v2943 = vadd.f32 0.0, %v2942
        %v2944 = vpop.f32.mrf.mxu0
        %v2945 = vadd.f32 0.0, %v2944
        %2946 = vmatmul.bf16.gmra.mxu0 %v1631
        %v2947 = vpop.f32.mrf.mxu0
        %v2948 = vadd.f32 0.0, %v2947
        %v2949 = vpop.f32.mrf.mxu0
        %v2950 = vadd.f32 0.0, %v2949
        %2951 = vmatmul.bf16.gmra.mxu0 %v1632
        %v2952 = vpop.f32.mrf.mxu0
        %v2953 = vadd.f32 0.0, %v2952
        %v2954 = vpop.f32.mrf.mxu0
        %v2955 = vadd.f32 0.0, %v2954
        %2956 = vmatmul.bf16.gmra.mxu0 %v1633
        %v2957 = vpop.f32.mrf.mxu0
        %v2958 = vadd.f32 0.0, %v2957
        %v2959 = vpop.f32.mrf.mxu0
        %v2960 = vadd.f32 0.0, %v2959
        %2961 = vmatmul.bf16.gmra.mxu0 %v1634
        %v2962 = vpop.f32.mrf.mxu0
        %v2963 = vadd.f32 0.0, %v2962
        %v2964 = vpop.f32.mrf.mxu0
        %v2965 = vadd.f32 0.0, %v2964
        %2966 = vmatmul.bf16.gmra.mxu0 %v1635
        %v2967 = vpop.f32.mrf.mxu0
        %v2968 = vadd.f32 0.0, %v2967
        %v2969 = vpop.f32.mrf.mxu0
        %v2970 = vadd.f32 0.0, %v2969
        %2971 = vmatmul.bf16.gmra.mxu0 %v1636
        %v2972 = vpop.f32.mrf.mxu0
        %v2973 = vadd.f32 0.0, %v2972
        %v2974 = vpop.f32.mrf.mxu0
        %v2975 = vadd.f32 0.0, %v2974
        %2976 = vmatmul.bf16.gmra.mxu0 %v1637
        %v2977 = vpop.f32.mrf.mxu0
        %v2978 = vadd.f32 0.0, %v2977
        %v2979 = vpop.f32.mrf.mxu0
        %v2980 = vadd.f32 0.0, %v2979
        %2981 = vmatmul.bf16.gmra.mxu0 %v1638
        %v2982 = vpop.f32.mrf.mxu0
        %v2983 = vadd.f32 0.0, %v2982
        %v2984 = vpop.f32.mrf.mxu0
        %v2985 = vadd.f32 0.0, %v2984
        %2986 = vmatmul.bf16.gmra.mxu0 %v1639
        %v2987 = vpop.f32.mrf.mxu0
        %v2988 = vadd.f32 0.0, %v2987
        %v2989 = vpop.f32.mrf.mxu0
        %v2990 = vadd.f32 0.0, %v2989
        %2991 = vmatmul.bf16.gmra.mxu0 %v1640
        %v2992 = vpop.f32.mrf.mxu0
        %v2993 = vadd.f32 0.0, %v2992
        %v2994 = vpop.f32.mrf.mxu0
        %v2995 = vadd.f32 0.0, %v2994
        %2996 = vmatmul.bf16.gmra.mxu0 %v1641
        %v2997 = vpop.f32.mrf.mxu0
        %v2998 = vadd.f32 0.0, %v2997
        %v2999 = vpop.f32.mrf.mxu0
        %v3000 = vadd.f32 0.0, %v2999
        %3001 = vmatmul.bf16.gmra.mxu0 %v1642
        %v3002 = vpop.f32.mrf.mxu0
        %v3003 = vadd.f32 0.0, %v3002
        %v3004 = vpop.f32.mrf.mxu0
        %v3005 = vadd.f32 0.0, %v3004
        %3006 = vmatmul.bf16.gmra.mxu0 %v2752
        %v3007 = vpop.f32.mrf.mxu0
        %v3008 = vadd.f32 0.0, %v3007
        %v3009 = vpop.f32.mrf.mxu0
        %v3010 = vadd.f32 0.0, %v3009
        %3011 = vdwg.mxu0
        %v3012 = vadd.f32 %v2661, %v2844
        %v3013 = vadd.f32 %v2662, %v2933
        %v3014 = vadd.f32 %v2663, %v2846
        %v3015 = vadd.f32 %v2664, %v2935
        %v3016 = vadd.f32 %v2665, %v2849
        %v3017 = vadd.f32 %v2666, %v2938
        %v3018 = vadd.f32 %v2667, %v2851
        %v3019 = vadd.f32 %v2668, %v2940
        %v3020 = vadd.f32 %v2669, %v2854
        %v3021 = vadd.f32 %v2670, %v2943
        %v3022 = vadd.f32 %v2671, %v2856
        %v3023 = vadd.f32 %v2672, %v2945
        %v3024 = vadd.f32 %v2673, %v2859
        %v3025 = vadd.f32 %v2674, %v2948
        %v3026 = vadd.f32 %v2675, %v2861
        %v3027 = vadd.f32 %v2676, %v2950
        %v3028 = vadd.f32 %v2677, %v2864
        %v3029 = vadd.f32 %v2678, %v2953
        %v3030 = vadd.f32 %v2679, %v2866
        %v3031 = vadd.f32 %v2680, %v2955
        %v3032 = vadd.f32 %v2681, %v2869
        %v3033 = vadd.f32 %v2682, %v2958
        %v3034 = vadd.f32 %v2683, %v2871
        %v3035 = vadd.f32 %v2684, %v2960
        %v3036 = vadd.f32 %v2685, %v2874
        %v3037 = vadd.f32 %v2686, %v2963
        %v3038 = vadd.f32 %v2687, %v2876
        %v3039 = vadd.f32 %v2688, %v2965
        %v3040 = vadd.f32 %v2689, %v2879
        %v3041 = vadd.f32 %v2690, %v2968
        %v3042 = vadd.f32 %v2691, %v2881
        %v3043 = vadd.f32 %v2692, %v2970
        %v3044 = vadd.f32 %v2693, %v2884
        %v3045 = vadd.f32 %v2694, %v2973
        %v3046 = vadd.f32 %v2695, %v2886
        %v3047 = vadd.f32 %v2696, %v2975
        %v3048 = vadd.f32 %v2697, %v2889
        %v3049 = vadd.f32 %v2698, %v2978
        %v3050 = vadd.f32 %v2699, %v2891
        %v3051 = vadd.f32 %v2700, %v2980
        %v3052 = vadd.f32 %v2701, %v2894
        %v3053 = vadd.f32 %v2702, %v2983
        %v3054 = vadd.f32 %v2703, %v2896
        %v3055 = vadd.f32 %v2704, %v2985
        %v3056 = vadd.f32 %v2705, %v2899
        %v3057 = vadd.f32 %v2706, %v2988
        %v3058 = vadd.f32 %v2707, %v2901
        %v3059 = vadd.f32 %v2708, %v2990
        %v3060 = vadd.f32 %v2709, %v2904
        %v3061 = vadd.f32 %v2710, %v2993
        %v3062 = vadd.f32 %v2711, %v2906
        %v3063 = vadd.f32 %v2712, %v2995
        %v3064 = vadd.f32 %v2713, %v2909
        %v3065 = vadd.f32 %v2714, %v2998
        %v3066 = vadd.f32 %v2715, %v2911
        %v3067 = vadd.f32 %v2716, %v3000
        %v3068 = vadd.f32 %v2717, %v2914
        %v3069 = vadd.f32 %v2718, %v3003
        %v3070 = vadd.f32 %v2719, %v2916
        %v3071 = vadd.f32 %v2720, %v3005
        %v3072 = vadd.f32 %v2721, %v2919
        %v3073 = vadd.f32 %v2722, %v3008
        %v3074 = vadd.f32 %v2723, %v2921
        %v3075 = vadd.f32 %v2724, %v3010
        %s3076 = scalar_lea.vmem %s1, 768
        %v3077 = vld [vmem:[%s3076] sm:$0xff]
        %v3078 = vld [vmem:[%s3076 + $0x8] sm:$0xff]
        %v3079 = vld [vmem:[%s3076 + $0x10] sm:$0xff]
        %v3080 = vld [vmem:[%s3076 + $0x18] sm:$0xff]
        %v3081 = vld [vmem:[%s3076 + $0x20] sm:$0xff]
        %v3082 = vld [vmem:[%s3076 + $0x28] sm:$0xff]
        %v3083 = vld [vmem:[%s3076 + $0x30] sm:$0xff]
        %v3084 = vld [vmem:[%s3076 + $0x38] sm:$0xff]
        %v3085 = vld [vmem:[%s3076 + $0x40] sm:$0xff]
        %v3086 = vld [vmem:[%s3076 + $0x48] sm:$0xff]
        %v3087 = vld [vmem:[%s3076 + $0x50] sm:$0xff]
        %v3088 = vld [vmem:[%s3076 + $0x58] sm:$0xff]
        %v3089 = vld [vmem:[%s3076 + $0x60] sm:$0xff]
        %v3090 = vld [vmem:[%s3076 + $0x68] sm:$0xff]
        %v3091 = vld [vmem:[%s3076 + $0x70] sm:$0xff]
        %v3092 = vld [vmem:[%s3076 + $0x78] sm:$0xff]
        %v3095 = vunpack.c.l.b16 %v348
        %v3096 = vunpack.c.l.b16 %v349
        %v3097 = vpack.c.b16 %v3096, %v3095
        %v3115 = vunpack.c.l.b16 %v3077
        %v3116 = vunpack.c.h.b16 %v3077
        %v3117 = vunpack.c.l.b16 %v3078
        %v3118 = vunpack.c.h.b16 %v3078
        %v3119 = vunpack.c.l.b16 %v3079
        %v3120 = vunpack.c.h.b16 %v3079
        %v3121 = vunpack.c.l.b16 %v3080
        %v3122 = vunpack.c.h.b16 %v3080
        %v3123 = vunpack.c.l.b16 %v3081
        %v3124 = vunpack.c.h.b16 %v3081
        %v3125 = vunpack.c.l.b16 %v3082
        %v3126 = vunpack.c.h.b16 %v3082
        %v3127 = vunpack.c.l.b16 %v3083
        %v3128 = vunpack.c.h.b16 %v3083
        %v3129 = vunpack.c.l.b16 %v3084
        %v3130 = vunpack.c.h.b16 %v3084
        %v3131 = vunpack.c.l.b16 %v3085
        %v3132 = vunpack.c.h.b16 %v3085
        %v3133 = vunpack.c.l.b16 %v3086
        %v3134 = vunpack.c.h.b16 %v3086
        %v3135 = vunpack.c.l.b16 %v3087
        %v3136 = vunpack.c.h.b16 %v3087
        %v3137 = vunpack.c.l.b16 %v3088
        %v3138 = vunpack.c.h.b16 %v3088
        %v3139 = vunpack.c.l.b16 %v3089
        %v3140 = vunpack.c.h.b16 %v3089
        %v3141 = vunpack.c.l.b16 %v3090
        %v3142 = vunpack.c.h.b16 %v3090
        %v3143 = vunpack.c.l.b16 %v3091
        %v3144 = vunpack.c.h.b16 %v3091
        %v3145 = vunpack.c.l.b16 %v3092
        %v3146 = vunpack.c.h.b16 %v3092
        %v3147 = vpack.c.b16 %v3117, %v3115
        %v3148 = vpack.c.b16 %v3118, %v3116
        %v3149 = vpack.c.b16 %v3121, %v3119
        %v3150 = vpack.c.b16 %v3122, %v3120
        %v3151 = vpack.c.b16 %v3125, %v3123
        %v3152 = vpack.c.b16 %v3126, %v3124
        %v3153 = vpack.c.b16 %v3129, %v3127
        %v3154 = vpack.c.b16 %v3130, %v3128
        %v3155 = vpack.c.b16 %v3133, %v3131
        %v3156 = vpack.c.b16 %v3134, %v3132
        %v3157 = vpack.c.b16 %v3137, %v3135
        %v3158 = vpack.c.b16 %v3138, %v3136
        %v3159 = vpack.c.b16 %v3141, %v3139
        %v3160 = vpack.c.b16 %v3142, %v3140
        %v3161 = vpack.c.b16 %v3145, %v3143
        %v3162 = vpack.c.b16 %v3146, %v3144
        %3179 = vmatpush.bf16.msra.mxu0 %v3161
        %3180 = vmatpush.bf16.msra.mxu0 %v3159
        %3181 = vmatpush.bf16.msra.mxu0 %v3157
        %3182 = vmatpush.bf16.msra.mxu0 %v3155
        %3183 = vmatpush.bf16.msra.mxu0 %v3153
        %3184 = vmatpush.bf16.msra.mxu0 %v3151
        %3185 = vmatpush.bf16.msra.mxu0 %v3149
        %3186 = vmatpush.bf16.msra.mxu0 %v3147
        %3187 = vmatmul.bf16.gmra.mxu0 %v1159
        %v3188 = vpop.f32.mrf.mxu0
        %v3189 = vadd.f32 0.0, %v3188
        %v3190 = vpop.f32.mrf.mxu0
        %v3191 = vadd.f32 0.0, %v3190
        %3192 = vmatmul.bf16.gmra.mxu0 %v1160
        %v3193 = vpop.f32.mrf.mxu0
        %v3194 = vadd.f32 0.0, %v3193
        %v3195 = vpop.f32.mrf.mxu0
        %v3196 = vadd.f32 0.0, %v3195
        %3197 = vmatmul.bf16.gmra.mxu0 %v1161
        %v3198 = vpop.f32.mrf.mxu0
        %v3199 = vadd.f32 0.0, %v3198
        %v3200 = vpop.f32.mrf.mxu0
        %v3201 = vadd.f32 0.0, %v3200
        %3202 = vmatmul.bf16.gmra.mxu0 %v1162
        %v3203 = vpop.f32.mrf.mxu0
        %v3204 = vadd.f32 0.0, %v3203
        %v3205 = vpop.f32.mrf.mxu0
        %v3206 = vadd.f32 0.0, %v3205
        %3207 = vmatmul.bf16.gmra.mxu0 %v1163
        %v3208 = vpop.f32.mrf.mxu0
        %v3209 = vadd.f32 0.0, %v3208
        %v3210 = vpop.f32.mrf.mxu0
        %v3211 = vadd.f32 0.0, %v3210
        %3212 = vmatmul.bf16.gmra.mxu0 %v1164
        %v3213 = vpop.f32.mrf.mxu0
        %v3214 = vadd.f32 0.0, %v3213
        %v3215 = vpop.f32.mrf.mxu0
        %v3216 = vadd.f32 0.0, %v3215
        %3217 = vmatmul.bf16.gmra.mxu0 %v1165
        %v3218 = vpop.f32.mrf.mxu0
        %v3219 = vadd.f32 0.0, %v3218
        %v3220 = vpop.f32.mrf.mxu0
        %v3221 = vadd.f32 0.0, %v3220
        %3222 = vmatmul.bf16.gmra.mxu0 %v1166
        %v3223 = vpop.f32.mrf.mxu0
        %v3224 = vadd.f32 0.0, %v3223
        %v3225 = vpop.f32.mrf.mxu0
        %v3226 = vadd.f32 0.0, %v3225
        %3227 = vmatmul.bf16.gmra.mxu0 %v1167
        %v3228 = vpop.f32.mrf.mxu0
        %v3229 = vadd.f32 0.0, %v3228
        %v3230 = vpop.f32.mrf.mxu0
        %v3231 = vadd.f32 0.0, %v3230
        %3232 = vmatmul.bf16.gmra.mxu0 %v1168
        %v3233 = vpop.f32.mrf.mxu0
        %v3234 = vadd.f32 0.0, %v3233
        %v3235 = vpop.f32.mrf.mxu0
        %v3236 = vadd.f32 0.0, %v3235
        %3237 = vmatmul.bf16.gmra.mxu0 %v1169
        %v3238 = vpop.f32.mrf.mxu0
        %v3239 = vadd.f32 0.0, %v3238
        %v3240 = vpop.f32.mrf.mxu0
        %v3241 = vadd.f32 0.0, %v3240
        %3242 = vmatmul.bf16.gmra.mxu0 %v1170
        %v3243 = vpop.f32.mrf.mxu0
        %v3244 = vadd.f32 0.0, %v3243
        %v3245 = vpop.f32.mrf.mxu0
        %v3246 = vadd.f32 0.0, %v3245
        %3247 = vmatmul.bf16.gmra.mxu0 %v1171
        %v3248 = vpop.f32.mrf.mxu0
        %v3249 = vadd.f32 0.0, %v3248
        %v3250 = vpop.f32.mrf.mxu0
        %v3251 = vadd.f32 0.0, %v3250
        %3252 = vmatmul.bf16.gmra.mxu0 %v1172
        %v3253 = vpop.f32.mrf.mxu0
        %v3254 = vadd.f32 0.0, %v3253
        %v3255 = vpop.f32.mrf.mxu0
        %v3256 = vadd.f32 0.0, %v3255
        %3257 = vmatmul.bf16.gmra.mxu0 %v2002
        %v3258 = vpop.f32.mrf.mxu0
        %v3259 = vadd.f32 0.0, %v3258
        %v3260 = vpop.f32.mrf.mxu0
        %v3261 = vadd.f32 0.0, %v3260
        %3262 = vmatmul.bf16.gmra.mxu0 %v3097
        %v3263 = vpop.f32.mrf.mxu0
        %v3264 = vadd.f32 0.0, %v3263
        %v3265 = vpop.f32.mrf.mxu0
        %v3266 = vadd.f32 0.0, %v3265
        %3267 = vdwg.mxu0
        %3268 = vmatpush.bf16.msra.mxu0 %v3162
        %3269 = vmatpush.bf16.msra.mxu0 %v3160
        %3270 = vmatpush.bf16.msra.mxu0 %v3158
        %3271 = vmatpush.bf16.msra.mxu0 %v3156
        %3272 = vmatpush.bf16.msra.mxu0 %v3154
        %3273 = vmatpush.bf16.msra.mxu0 %v3152
        %3274 = vmatpush.bf16.msra.mxu0 %v3150
        %3275 = vmatpush.bf16.msra.mxu0 %v3148
        %3276 = vmatmul.bf16.gmra.mxu0 %v1159
        %v3277 = vpop.f32.mrf.mxu0
        %v3278 = vadd.f32 0.0, %v3277
        %v3279 = vpop.f32.mrf.mxu0
        %v3280 = vadd.f32 0.0, %v3279
        %3281 = vmatmul.bf16.gmra.mxu0 %v1160
        %v3282 = vpop.f32.mrf.mxu0
        %v3283 = vadd.f32 0.0, %v3282
        %v3284 = vpop.f32.mrf.mxu0
        %v3285 = vadd.f32 0.0, %v3284
        %3286 = vmatmul.bf16.gmra.mxu0 %v1161
        %v3287 = vpop.f32.mrf.mxu0
        %v3288 = vadd.f32 0.0, %v3287
        %v3289 = vpop.f32.mrf.mxu0
        %v3290 = vadd.f32 0.0, %v3289
        %3291 = vmatmul.bf16.gmra.mxu0 %v1162
        %v3292 = vpop.f32.mrf.mxu0
        %v3293 = vadd.f32 0.0, %v3292
        %v3294 = vpop.f32.mrf.mxu0
        %v3295 = vadd.f32 0.0, %v3294
        %3296 = vmatmul.bf16.gmra.mxu0 %v1163
        %v3297 = vpop.f32.mrf.mxu0
        %v3298 = vadd.f32 0.0, %v3297
        %v3299 = vpop.f32.mrf.mxu0
        %v3300 = vadd.f32 0.0, %v3299
        %3301 = vmatmul.bf16.gmra.mxu0 %v1164
        %v3302 = vpop.f32.mrf.mxu0
        %v3303 = vadd.f32 0.0, %v3302
        %v3304 = vpop.f32.mrf.mxu0
        %v3305 = vadd.f32 0.0, %v3304
        %3306 = vmatmul.bf16.gmra.mxu0 %v1165
        %v3307 = vpop.f32.mrf.mxu0
        %v3308 = vadd.f32 0.0, %v3307
        %v3309 = vpop.f32.mrf.mxu0
        %v3310 = vadd.f32 0.0, %v3309
        %3311 = vmatmul.bf16.gmra.mxu0 %v1166
        %v3312 = vpop.f32.mrf.mxu0
        %v3313 = vadd.f32 0.0, %v3312
        %v3314 = vpop.f32.mrf.mxu0
        %v3315 = vadd.f32 0.0, %v3314
        %3316 = vmatmul.bf16.gmra.mxu0 %v1167
        %v3317 = vpop.f32.mrf.mxu0
        %v3318 = vadd.f32 0.0, %v3317
        %v3319 = vpop.f32.mrf.mxu0
        %v3320 = vadd.f32 0.0, %v3319
        %3321 = vmatmul.bf16.gmra.mxu0 %v1168
        %v3322 = vpop.f32.mrf.mxu0
        %v3323 = vadd.f32 0.0, %v3322
        %v3324 = vpop.f32.mrf.mxu0
        %v3325 = vadd.f32 0.0, %v3324
        %3326 = vmatmul.bf16.gmra.mxu0 %v1169
        %v3327 = vpop.f32.mrf.mxu0
        %v3328 = vadd.f32 0.0, %v3327
        %v3329 = vpop.f32.mrf.mxu0
        %v3330 = vadd.f32 0.0, %v3329
        %3331 = vmatmul.bf16.gmra.mxu0 %v1170
        %v3332 = vpop.f32.mrf.mxu0
        %v3333 = vadd.f32 0.0, %v3332
        %v3334 = vpop.f32.mrf.mxu0
        %v3335 = vadd.f32 0.0, %v3334
        %3336 = vmatmul.bf16.gmra.mxu0 %v1171
        %v3337 = vpop.f32.mrf.mxu0
        %v3338 = vadd.f32 0.0, %v3337
        %v3339 = vpop.f32.mrf.mxu0
        %v3340 = vadd.f32 0.0, %v3339
        %3341 = vmatmul.bf16.gmra.mxu0 %v1172
        %v3342 = vpop.f32.mrf.mxu0
        %v3343 = vadd.f32 0.0, %v3342
        %v3344 = vpop.f32.mrf.mxu0
        %v3345 = vadd.f32 0.0, %v3344
        %3346 = vmatmul.bf16.gmra.mxu0 %v2002
        %v3347 = vpop.f32.mrf.mxu0
        %v3348 = vadd.f32 0.0, %v3347
        %v3349 = vpop.f32.mrf.mxu0
        %v3350 = vadd.f32 0.0, %v3349
        %3351 = vmatmul.bf16.gmra.mxu0 %v3097
        %v3352 = vpop.f32.mrf.mxu0
        %v3353 = vadd.f32 0.0, %v3352
        %v3354 = vpop.f32.mrf.mxu0
        %v3355 = vadd.f32 0.0, %v3354
        %3356 = vdwg.mxu0
        %v3357 = vadd.f32 %v3012, %v3189
        %v3358 = vadd.f32 %v3013, %v3278
        %v3359 = vadd.f32 %v3014, %v3191
        %v3360 = vadd.f32 %v3015, %v3280
        %v3361 = vadd.f32 %v3016, %v3194
        %v3362 = vadd.f32 %v3017, %v3283
        %v3363 = vadd.f32 %v3018, %v3196
        %v3364 = vadd.f32 %v3019, %v3285
        %v3365 = vadd.f32 %v3020, %v3199
        %v3366 = vadd.f32 %v3021, %v3288
        %v3367 = vadd.f32 %v3022, %v3201
        %v3368 = vadd.f32 %v3023, %v3290
        %v3369 = vadd.f32 %v3024, %v3204
        %v3370 = vadd.f32 %v3025, %v3293
        %v3371 = vadd.f32 %v3026, %v3206
        %v3372 = vadd.f32 %v3027, %v3295
        %v3373 = vadd.f32 %v3028, %v3209
        %v3374 = vadd.f32 %v3029, %v3298
        %v3375 = vadd.f32 %v3030, %v3211
        %v3376 = vadd.f32 %v3031, %v3300
        %v3377 = vadd.f32 %v3032, %v3214
        %v3378 = vadd.f32 %v3033, %v3303
        %v3379 = vadd.f32 %v3034, %v3216
        %v3380 = vadd.f32 %v3035, %v3305
        %v3381 = vadd.f32 %v3036, %v3219
        %v3382 = vadd.f32 %v3037, %v3308
        %v3383 = vadd.f32 %v3038, %v3221
        %v3384 = vadd.f32 %v3039, %v3310
        %v3385 = vadd.f32 %v3040, %v3224
        %v3386 = vadd.f32 %v3041, %v3313
        %v3387 = vadd.f32 %v3042, %v3226
        %v3388 = vadd.f32 %v3043, %v3315
        %v3389 = vadd.f32 %v3044, %v3229
        %v3390 = vadd.f32 %v3045, %v3318
        %v3391 = vadd.f32 %v3046, %v3231
        %v3392 = vadd.f32 %v3047, %v3320
        %v3393 = vadd.f32 %v3048, %v3234
        %v3394 = vadd.f32 %v3049, %v3323
        %v3395 = vadd.f32 %v3050, %v3236
        %v3396 = vadd.f32 %v3051, %v3325
        %v3397 = vadd.f32 %v3052, %v3239
        %v3398 = vadd.f32 %v3053, %v3328
        %v3399 = vadd.f32 %v3054, %v3241
        %v3400 = vadd.f32 %v3055, %v3330
        %v3401 = vadd.f32 %v3056, %v3244
        %v3402 = vadd.f32 %v3057, %v3333
        %v3403 = vadd.f32 %v3058, %v3246
        %v3404 = vadd.f32 %v3059, %v3335
        %v3405 = vadd.f32 %v3060, %v3249
        %v3406 = vadd.f32 %v3061, %v3338
        %v3407 = vadd.f32 %v3062, %v3251
        %v3408 = vadd.f32 %v3063, %v3340
        %v3409 = vadd.f32 %v3064, %v3254
        %v3410 = vadd.f32 %v3065, %v3343
        %v3411 = vadd.f32 %v3066, %v3256
        %v3412 = vadd.f32 %v3067, %v3345
        %v3413 = vadd.f32 %v3068, %v3259
        %v3414 = vadd.f32 %v3069, %v3348
        %v3415 = vadd.f32 %v3070, %v3261
        %v3416 = vadd.f32 %v3071, %v3350
        %v3417 = vadd.f32 %v3072, %v3264
        %v3418 = vadd.f32 %v3073, %v3353
        %v3419 = vadd.f32 %v3074, %v3266
        %v3420 = vadd.f32 %v3075, %v3355
        %v3422 = vshrl.u32 %v348, 16
        %v3424 = vrot.slane %v3422, 4
        %v3425 = vshll.u32 %v348, 16
        %v3427 = vrot.slane %v3425, 5
        %v3428 = vor.u32 %v3424, %v3427
        %v3429 = vrot.slane %v3428, 4
        %v3431 = vshll.u32 %v349, 16
        %v3433 = vrot.slane %v3431, 5
        %v3434 = vsel %vm369, %v3429, %v3433
        %v3435 = vshrl.u32 %v349, 16
        %v3437 = vrot.slane %v3435, 4
        %v3438 = vor.u32 %v3437, %v3433
        %v3439 = vrot.slane %v3438, 4
        %v3441 = vshll.u32 %v350, 16
        %v3443 = vrot.slane %v3441, 5
        %v3444 = vsel %vm369, %v3439, %v3443
        %s3445 = scalar_lea.vmem %s1, 896
        %v3446 = vld [vmem:[%s3445] sm:$0xff]
        %v3447 = vld [vmem:[%s3445 + $0x8] sm:$0xff]
        %v3448 = vld [vmem:[%s3445 + $0x10] sm:$0xff]
        %v3449 = vld [vmem:[%s3445 + $0x18] sm:$0xff]
        %v3450 = vld [vmem:[%s3445 + $0x20] sm:$0xff]
        %v3451 = vld [vmem:[%s3445 + $0x28] sm:$0xff]
        %v3452 = vld [vmem:[%s3445 + $0x30] sm:$0xff]
        %v3453 = vld [vmem:[%s3445 + $0x38] sm:$0xff]
        %v3454 = vld [vmem:[%s3445 + $0x40] sm:$0xff]
        %v3455 = vld [vmem:[%s3445 + $0x48] sm:$0xff]
        %v3456 = vld [vmem:[%s3445 + $0x50] sm:$0xff]
        %v3457 = vld [vmem:[%s3445 + $0x58] sm:$0xff]
        %v3458 = vld [vmem:[%s3445 + $0x60] sm:$0xff]
        %v3459 = vld [vmem:[%s3445 + $0x68] sm:$0xff]
        %v3460 = vld [vmem:[%s3445 + $0x70] sm:$0xff]
        %v3461 = vld [vmem:[%s3445 + $0x78] sm:$0xff]
        %v3462 = vunpack.c.l.b16 %v3434
        %v3463 = vunpack.c.l.b16 %v3444
        %v3464 = vpack.c.b16 %v3463, %v3462
        %v3482 = vunpack.c.l.b16 %v3446
        %v3483 = vunpack.c.h.b16 %v3446
        %v3484 = vunpack.c.l.b16 %v3447
        %v3485 = vunpack.c.h.b16 %v3447
        %v3486 = vunpack.c.l.b16 %v3448
        %v3487 = vunpack.c.h.b16 %v3448
        %v3488 = vunpack.c.l.b16 %v3449
        %v3489 = vunpack.c.h.b16 %v3449
        %v3490 = vunpack.c.l.b16 %v3450
        %v3491 = vunpack.c.h.b16 %v3450
        %v3492 = vunpack.c.l.b16 %v3451
        %v3493 = vunpack.c.h.b16 %v3451
        %v3494 = vunpack.c.l.b16 %v3452
        %v3495 = vunpack.c.h.b16 %v3452
        %v3496 = vunpack.c.l.b16 %v3453
        %v3497 = vunpack.c.h.b16 %v3453
        %v3498 = vunpack.c.l.b16 %v3454
        %v3499 = vunpack.c.h.b16 %v3454
        %v3500 = vunpack.c.l.b16 %v3455
        %v3501 = vunpack.c.h.b16 %v3455
        %v3502 = vunpack.c.l.b16 %v3456
        %v3503 = vunpack.c.h.b16 %v3456
        %v3504 = vunpack.c.l.b16 %v3457
        %v3505 = vunpack.c.h.b16 %v3457
        %v3506 = vunpack.c.l.b16 %v3458
        %v3507 = vunpack.c.h.b16 %v3458
        %v3508 = vunpack.c.l.b16 %v3459
        %v3509 = vunpack.c.h.b16 %v3459
        %v3510 = vunpack.c.l.b16 %v3460
        %v3511 = vunpack.c.h.b16 %v3460
        %v3512 = vunpack.c.l.b16 %v3461
        %v3513 = vunpack.c.h.b16 %v3461
        %v3514 = vpack.c.b16 %v3484, %v3482
        %v3515 = vpack.c.b16 %v3485, %v3483
        %v3516 = vpack.c.b16 %v3488, %v3486
        %v3517 = vpack.c.b16 %v3489, %v3487
        %v3518 = vpack.c.b16 %v3492, %v3490
        %v3519 = vpack.c.b16 %v3493, %v3491
        %v3520 = vpack.c.b16 %v3496, %v3494
        %v3521 = vpack.c.b16 %v3497, %v3495
        %v3522 = vpack.c.b16 %v3500, %v3498
        %v3523 = vpack.c.b16 %v3501, %v3499
        %v3524 = vpack.c.b16 %v3504, %v3502
        %v3525 = vpack.c.b16 %v3505, %v3503
        %v3526 = vpack.c.b16 %v3508, %v3506
        %v3527 = vpack.c.b16 %v3509, %v3507
        %v3528 = vpack.c.b16 %v3512, %v3510
        %v3529 = vpack.c.b16 %v3513, %v3511
        %3546 = vmatpush.bf16.msra.mxu0 %v3528
        %3547 = vmatpush.bf16.msra.mxu0 %v3526
        %3548 = vmatpush.bf16.msra.mxu0 %v3524
        %3549 = vmatpush.bf16.msra.mxu0 %v3522
        %3550 = vmatpush.bf16.msra.mxu0 %v3520
        %3551 = vmatpush.bf16.msra.mxu0 %v3518
        %3552 = vmatpush.bf16.msra.mxu0 %v3516
        %3553 = vmatpush.bf16.msra.mxu0 %v3514
        %3554 = vmatmul.bf16.gmra.mxu0 %v805
        %v3555 = vpop.f32.mrf.mxu0
        %v3556 = vadd.f32 0.0, %v3555
        %v3557 = vpop.f32.mrf.mxu0
        %v3558 = vadd.f32 0.0, %v3557
        %3559 = vmatmul.bf16.gmra.mxu0 %v806
        %v3560 = vpop.f32.mrf.mxu0
        %v3561 = vadd.f32 0.0, %v3560
        %v3562 = vpop.f32.mrf.mxu0
        %v3563 = vadd.f32 0.0, %v3562
        %3564 = vmatmul.bf16.gmra.mxu0 %v807
        %v3565 = vpop.f32.mrf.mxu0
        %v3566 = vadd.f32 0.0, %v3565
        %v3567 = vpop.f32.mrf.mxu0
        %v3568 = vadd.f32 0.0, %v3567
        %3569 = vmatmul.bf16.gmra.mxu0 %v808
        %v3570 = vpop.f32.mrf.mxu0
        %v3571 = vadd.f32 0.0, %v3570
        %v3572 = vpop.f32.mrf.mxu0
        %v3573 = vadd.f32 0.0, %v3572
        %3574 = vmatmul.bf16.gmra.mxu0 %v809
        %v3575 = vpop.f32.mrf.mxu0
        %v3576 = vadd.f32 0.0, %v3575
        %v3577 = vpop.f32.mrf.mxu0
        %v3578 = vadd.f32 0.0, %v3577
        %3579 = vmatmul.bf16.gmra.mxu0 %v810
        %v3580 = vpop.f32.mrf.mxu0
        %v3581 = vadd.f32 0.0, %v3580
        %v3582 = vpop.f32.mrf.mxu0
        %v3583 = vadd.f32 0.0, %v3582
        %3584 = vmatmul.bf16.gmra.mxu0 %v811
        %v3585 = vpop.f32.mrf.mxu0
        %v3586 = vadd.f32 0.0, %v3585
        %v3587 = vpop.f32.mrf.mxu0
        %v3588 = vadd.f32 0.0, %v3587
        %3589 = vmatmul.bf16.gmra.mxu0 %v812
        %v3590 = vpop.f32.mrf.mxu0
        %v3591 = vadd.f32 0.0, %v3590
        %v3592 = vpop.f32.mrf.mxu0
        %v3593 = vadd.f32 0.0, %v3592
        %3594 = vmatmul.bf16.gmra.mxu0 %v813
        %v3595 = vpop.f32.mrf.mxu0
        %v3596 = vadd.f32 0.0, %v3595
        %v3597 = vpop.f32.mrf.mxu0
        %v3598 = vadd.f32 0.0, %v3597
        %3599 = vmatmul.bf16.gmra.mxu0 %v814
        %v3600 = vpop.f32.mrf.mxu0
        %v3601 = vadd.f32 0.0, %v3600
        %v3602 = vpop.f32.mrf.mxu0
        %v3603 = vadd.f32 0.0, %v3602
        %3604 = vmatmul.bf16.gmra.mxu0 %v815
        %v3605 = vpop.f32.mrf.mxu0
        %v3606 = vadd.f32 0.0, %v3605
        %v3607 = vpop.f32.mrf.mxu0
        %v3608 = vadd.f32 0.0, %v3607
        %3609 = vmatmul.bf16.gmra.mxu0 %v816
        %v3610 = vpop.f32.mrf.mxu0
        %v3611 = vadd.f32 0.0, %v3610
        %v3612 = vpop.f32.mrf.mxu0
        %v3613 = vadd.f32 0.0, %v3612
        %3614 = vmatmul.bf16.gmra.mxu0 %v817
        %v3615 = vpop.f32.mrf.mxu0
        %v3616 = vadd.f32 0.0, %v3615
        %v3617 = vpop.f32.mrf.mxu0
        %v3618 = vadd.f32 0.0, %v3617
        %3619 = vmatmul.bf16.gmra.mxu0 %v818
        %v3620 = vpop.f32.mrf.mxu0
        %v3621 = vadd.f32 0.0, %v3620
        %v3622 = vpop.f32.mrf.mxu0
        %v3623 = vadd.f32 0.0, %v3622
        %3624 = vmatmul.bf16.gmra.mxu0 %v2401
        %v3625 = vpop.f32.mrf.mxu0
        %v3626 = vadd.f32 0.0, %v3625
        %v3627 = vpop.f32.mrf.mxu0
        %v3628 = vadd.f32 0.0, %v3627
        %3629 = vmatmul.bf16.gmra.mxu0 %v3464
        %v3630 = vpop.f32.mrf.mxu0
        %v3631 = vadd.f32 0.0, %v3630
        %v3632 = vpop.f32.mrf.mxu0
        %v3633 = vadd.f32 0.0, %v3632
        %3634 = vdwg.mxu0
        %3635 = vmatpush.bf16.msra.mxu0 %v3529
        %3636 = vmatpush.bf16.msra.mxu0 %v3527
        %3637 = vmatpush.bf16.msra.mxu0 %v3525
        %3638 = vmatpush.bf16.msra.mxu0 %v3523
        %3639 = vmatpush.bf16.msra.mxu0 %v3521
        %3640 = vmatpush.bf16.msra.mxu0 %v3519
        %3641 = vmatpush.bf16.msra.mxu0 %v3517
        %3642 = vmatpush.bf16.msra.mxu0 %v3515
        %3643 = vmatmul.bf16.gmra.mxu0 %v805
        %v3644 = vpop.f32.mrf.mxu0
        %v3645 = vadd.f32 0.0, %v3644
        %v3646 = vpop.f32.mrf.mxu0
        %v3647 = vadd.f32 0.0, %v3646
        %3648 = vmatmul.bf16.gmra.mxu0 %v806
        %v3649 = vpop.f32.mrf.mxu0
        %v3650 = vadd.f32 0.0, %v3649
        %v3651 = vpop.f32.mrf.mxu0
        %v3652 = vadd.f32 0.0, %v3651
        %3653 = vmatmul.bf16.gmra.mxu0 %v807
        %v3654 = vpop.f32.mrf.mxu0
        %v3655 = vadd.f32 0.0, %v3654
        %v3656 = vpop.f32.mrf.mxu0
        %v3657 = vadd.f32 0.0, %v3656
        %3658 = vmatmul.bf16.gmra.mxu0 %v808
        %v3659 = vpop.f32.mrf.mxu0
        %v3660 = vadd.f32 0.0, %v3659
        %v3661 = vpop.f32.mrf.mxu0
        %v3662 = vadd.f32 0.0, %v3661
        %3663 = vmatmul.bf16.gmra.mxu0 %v809
        %v3664 = vpop.f32.mrf.mxu0
        %v3665 = vadd.f32 0.0, %v3664
        %v3666 = vpop.f32.mrf.mxu0
        %v3667 = vadd.f32 0.0, %v3666
        %3668 = vmatmul.bf16.gmra.mxu0 %v810
        %v3669 = vpop.f32.mrf.mxu0
        %v3670 = vadd.f32 0.0, %v3669
        %v3671 = vpop.f32.mrf.mxu0
        %v3672 = vadd.f32 0.0, %v3671
        %3673 = vmatmul.bf16.gmra.mxu0 %v811
        %v3674 = vpop.f32.mrf.mxu0
        %v3675 = vadd.f32 0.0, %v3674
        %v3676 = vpop.f32.mrf.mxu0
        %v3677 = vadd.f32 0.0, %v3676
        %3678 = vmatmul.bf16.gmra.mxu0 %v812
        %v3679 = vpop.f32.mrf.mxu0
        %v3680 = vadd.f32 0.0, %v3679
        %v3681 = vpop.f32.mrf.mxu0
        %v3682 = vadd.f32 0.0, %v3681
        %3683 = vmatmul.bf16.gmra.mxu0 %v813
        %v3684 = vpop.f32.mrf.mxu0
        %v3685 = vadd.f32 0.0, %v3684
        %v3686 = vpop.f32.mrf.mxu0
        %v3687 = vadd.f32 0.0, %v3686
        %3688 = vmatmul.bf16.gmra.mxu0 %v814
        %v3689 = vpop.f32.mrf.mxu0
        %v3690 = vadd.f32 0.0, %v3689
        %v3691 = vpop.f32.mrf.mxu0
        %v3692 = vadd.f32 0.0, %v3691
        %3693 = vmatmul.bf16.gmra.mxu0 %v815
        %v3694 = vpop.f32.mrf.mxu0
        %v3695 = vadd.f32 0.0, %v3694
        %v3696 = vpop.f32.mrf.mxu0
        %v3697 = vadd.f32 0.0, %v3696
        %3698 = vmatmul.bf16.gmra.mxu0 %v816
        %v3699 = vpop.f32.mrf.mxu0
        %v3700 = vadd.f32 0.0, %v3699
        %v3701 = vpop.f32.mrf.mxu0
        %v3702 = vadd.f32 0.0, %v3701
        %3703 = vmatmul.bf16.gmra.mxu0 %v817
        %v3704 = vpop.f32.mrf.mxu0
        %v3705 = vadd.f32 0.0, %v3704
        %v3706 = vpop.f32.mrf.mxu0
        %v3707 = vadd.f32 0.0, %v3706
        %3708 = vmatmul.bf16.gmra.mxu0 %v818
        %v3709 = vpop.f32.mrf.mxu0
        %v3710 = vadd.f32 0.0, %v3709
        %v3711 = vpop.f32.mrf.mxu0
        %v3712 = vadd.f32 0.0, %v3711
        %3713 = vmatmul.bf16.gmra.mxu0 %v2401
        %v3714 = vpop.f32.mrf.mxu0
        %v3715 = vadd.f32 0.0, %v3714
        %v3716 = vpop.f32.mrf.mxu0
        %v3717 = vadd.f32 0.0, %v3716
        %3718 = vmatmul.bf16.gmra.mxu0 %v3464
        %v3719 = vpop.f32.mrf.mxu0
        %v3720 = vadd.f32 0.0, %v3719
        %v3721 = vpop.f32.mrf.mxu0
        %v3722 = vadd.f32 0.0, %v3721
        %3723 = vdwg.mxu0
        %v3724 = vadd.f32 %v3357, %v3556
        %v3725 = vadd.f32 %v3358, %v3645
        %v3726 = vadd.f32 %v3359, %v3558
        %v3727 = vadd.f32 %v3360, %v3647
        %v3728 = vadd.f32 %v3361, %v3561
        %v3729 = vadd.f32 %v3362, %v3650
        %v3730 = vadd.f32 %v3363, %v3563
        %v3731 = vadd.f32 %v3364, %v3652
        %v3732 = vadd.f32 %v3365, %v3566
        %v3733 = vadd.f32 %v3366, %v3655
        %v3734 = vadd.f32 %v3367, %v3568
        %v3735 = vadd.f32 %v3368, %v3657
        %v3736 = vadd.f32 %v3369, %v3571
        %v3737 = vadd.f32 %v3370, %v3660
        %v3738 = vadd.f32 %v3371, %v3573
        %v3739 = vadd.f32 %v3372, %v3662
        %v3740 = vadd.f32 %v3373, %v3576
        %v3741 = vadd.f32 %v3374, %v3665
        %v3742 = vadd.f32 %v3375, %v3578
        %v3743 = vadd.f32 %v3376, %v3667
        %v3744 = vadd.f32 %v3377, %v3581
        %v3745 = vadd.f32 %v3378, %v3670
        %v3746 = vadd.f32 %v3379, %v3583
        %v3747 = vadd.f32 %v3380, %v3672
        %v3748 = vadd.f32 %v3381, %v3586
        %v3749 = vadd.f32 %v3382, %v3675
        %v3750 = vadd.f32 %v3383, %v3588
        %v3751 = vadd.f32 %v3384, %v3677
        %v3752 = vadd.f32 %v3385, %v3591
        %v3753 = vadd.f32 %v3386, %v3680
        %v3754 = vadd.f32 %v3387, %v3593
        %v3755 = vadd.f32 %v3388, %v3682
        %v3756 = vadd.f32 %v3389, %v3596
        %v3757 = vadd.f32 %v3390, %v3685
        %v3758 = vadd.f32 %v3391, %v3598
        %v3759 = vadd.f32 %v3392, %v3687
        %v3760 = vadd.f32 %v3393, %v3601
        %v3761 = vadd.f32 %v3394, %v3690
        %v3762 = vadd.f32 %v3395, %v3603
        %v3763 = vadd.f32 %v3396, %v3692
        %v3764 = vadd.f32 %v3397, %v3606
        %v3765 = vadd.f32 %v3398, %v3695
        %v3766 = vadd.f32 %v3399, %v3608
        %v3767 = vadd.f32 %v3400, %v3697
        %v3768 = vadd.f32 %v3401, %v3611
        %v3769 = vadd.f32 %v3402, %v3700
        %v3770 = vadd.f32 %v3403, %v3613
        %v3771 = vadd.f32 %v3404, %v3702
        %v3772 = vadd.f32 %v3405, %v3616
        %v3773 = vadd.f32 %v3406, %v3705
        %v3774 = vadd.f32 %v3407, %v3618
        %v3775 = vadd.f32 %v3408, %v3707
        %v3776 = vadd.f32 %v3409, %v3621
        %v3777 = vadd.f32 %v3410, %v3710
        %v3778 = vadd.f32 %v3411, %v3623
        %v3779 = vadd.f32 %v3412, %v3712
        %v3780 = vadd.f32 %v3413, %v3626
        %v3781 = vadd.f32 %v3414, %v3715
        %v3782 = vadd.f32 %v3415, %v3628
        %v3783 = vadd.f32 %v3416, %v3717
        %v3784 = vadd.f32 %v3417, %v3631
        %v3785 = vadd.f32 %v3418, %v3720
        %v3786 = vadd.f32 %v3419, %v3633
        %v3787 = vadd.f32 %v3420, %v3722
        %v3789 = vrot.slane %v348, 5
        %v3790 = vrot.slane %v3789, 4
        %v3791 = vrot.slane %v349, 5
        %v3792 = vsel %vm1465, %v3790, %v3791
        %v3793 = vrot.slane %v3791, 4
        %v3794 = vrot.slane %v350, 5
        %v3795 = vsel %vm1465, %v3793, %v3794
        %s3796 = scalar_lea.vmem %s1, 1024
        %v3797 = vld [vmem:[%s3796] sm:$0xff]
        %v3798 = vld [vmem:[%s3796 + $0x8] sm:$0xff]
        %v3799 = vld [vmem:[%s3796 + $0x10] sm:$0xff]
        %v3800 = vld [vmem:[%s3796 + $0x18] sm:$0xff]
        %v3801 = vld [vmem:[%s3796 + $0x20] sm:$0xff]
        %v3802 = vld [vmem:[%s3796 + $0x28] sm:$0xff]
        %v3803 = vld [vmem:[%s3796 + $0x30] sm:$0xff]
        %v3804 = vld [vmem:[%s3796 + $0x38] sm:$0xff]
        %v3805 = vld [vmem:[%s3796 + $0x40] sm:$0xff]
        %v3806 = vld [vmem:[%s3796 + $0x48] sm:$0xff]
        %v3807 = vld [vmem:[%s3796 + $0x50] sm:$0xff]
        %v3808 = vld [vmem:[%s3796 + $0x58] sm:$0xff]
        %v3809 = vld [vmem:[%s3796 + $0x60] sm:$0xff]
        %v3810 = vld [vmem:[%s3796 + $0x68] sm:$0xff]
        %v3811 = vld [vmem:[%s3796 + $0x70] sm:$0xff]
        %v3812 = vld [vmem:[%s3796 + $0x78] sm:$0xff]
        %v3813 = vunpack.c.l.b16 %v3792
        %v3814 = vunpack.c.l.b16 %v3795
        %v3815 = vpack.c.b16 %v3814, %v3813
        %v3833 = vunpack.c.l.b16 %v3797
        %v3834 = vunpack.c.h.b16 %v3797
        %v3835 = vunpack.c.l.b16 %v3798
        %v3836 = vunpack.c.h.b16 %v3798
        %v3837 = vunpack.c.l.b16 %v3799
        %v3838 = vunpack.c.h.b16 %v3799
        %v3839 = vunpack.c.l.b16 %v3800
        %v3840 = vunpack.c.h.b16 %v3800
        %v3841 = vunpack.c.l.b16 %v3801
        %v3842 = vunpack.c.h.b16 %v3801
        %v3843 = vunpack.c.l.b16 %v3802
        %v3844 = vunpack.c.h.b16 %v3802
        %v3845 = vunpack.c.l.b16 %v3803
        %v3846 = vunpack.c.h.b16 %v3803
        %v3847 = vunpack.c.l.b16 %v3804
        %v3848 = vunpack.c.h.b16 %v3804
        %v3849 = vunpack.c.l.b16 %v3805
        %v3850 = vunpack.c.h.b16 %v3805
        %v3851 = vunpack.c.l.b16 %v3806
        %v3852 = vunpack.c.h.b16 %v3806
        %v3853 = vunpack.c.l.b16 %v3807
        %v3854 = vunpack.c.h.b16 %v3807
        %v3855 = vunpack.c.l.b16 %v3808
        %v3856 = vunpack.c.h.b16 %v3808
        %v3857 = vunpack.c.l.b16 %v3809
        %v3858 = vunpack.c.h.b16 %v3809
        %v3859 = vunpack.c.l.b16 %v3810
        %v3860 = vunpack.c.h.b16 %v3810
        %v3861 = vunpack.c.l.b16 %v3811
        %v3862 = vunpack.c.h.b16 %v3811
        %v3863 = vunpack.c.l.b16 %v3812
        %v3864 = vunpack.c.h.b16 %v3812
        %v3865 = vpack.c.b16 %v3835, %v3833
        %v3866 = vpack.c.b16 %v3836, %v3834
        %v3867 = vpack.c.b16 %v3839, %v3837
        %v3868 = vpack.c.b16 %v3840, %v3838
        %v3869 = vpack.c.b16 %v3843, %v3841
        %v3870 = vpack.c.b16 %v3844, %v3842
        %v3871 = vpack.c.b16 %v3847, %v3845
        %v3872 = vpack.c.b16 %v3848, %v3846
        %v3873 = vpack.c.b16 %v3851, %v3849
        %v3874 = vpack.c.b16 %v3852, %v3850
        %v3875 = vpack.c.b16 %v3855, %v3853
        %v3876 = vpack.c.b16 %v3856, %v3854
        %v3877 = vpack.c.b16 %v3859, %v3857
        %v3878 = vpack.c.b16 %v3860, %v3858
        %v3879 = vpack.c.b16 %v3863, %v3861
        %v3880 = vpack.c.b16 %v3864, %v3862
        %3897 = vmatpush.bf16.msra.mxu0 %v3879
        %3898 = vmatpush.bf16.msra.mxu0 %v3877
        %3899 = vmatpush.bf16.msra.mxu0 %v3875
        %3900 = vmatpush.bf16.msra.mxu0 %v3873
        %3901 = vmatpush.bf16.msra.mxu0 %v3871
        %3902 = vmatpush.bf16.msra.mxu0 %v3869
        %3903 = vmatpush.bf16.msra.mxu0 %v3867
        %3904 = vmatpush.bf16.msra.mxu0 %v3865
        %3905 = vmatmul.bf16.gmra.mxu0 %v1629
        %v3906 = vpop.f32.mrf.mxu0
        %v3907 = vadd.f32 0.0, %v3906
        %v3908 = vpop.f32.mrf.mxu0
        %v3909 = vadd.f32 0.0, %v3908
        %3910 = vmatmul.bf16.gmra.mxu0 %v1630
        %v3911 = vpop.f32.mrf.mxu0
        %v3912 = vadd.f32 0.0, %v3911
        %v3913 = vpop.f32.mrf.mxu0
        %v3914 = vadd.f32 0.0, %v3913
        %3915 = vmatmul.bf16.gmra.mxu0 %v1631
        %v3916 = vpop.f32.mrf.mxu0
        %v3917 = vadd.f32 0.0, %v3916
        %v3918 = vpop.f32.mrf.mxu0
        %v3919 = vadd.f32 0.0, %v3918
        %3920 = vmatmul.bf16.gmra.mxu0 %v1632
        %v3921 = vpop.f32.mrf.mxu0
        %v3922 = vadd.f32 0.0, %v3921
        %v3923 = vpop.f32.mrf.mxu0
        %v3924 = vadd.f32 0.0, %v3923
        %3925 = vmatmul.bf16.gmra.mxu0 %v1633
        %v3926 = vpop.f32.mrf.mxu0
        %v3927 = vadd.f32 0.0, %v3926
        %v3928 = vpop.f32.mrf.mxu0
        %v3929 = vadd.f32 0.0, %v3928
        %3930 = vmatmul.bf16.gmra.mxu0 %v1634
        %v3931 = vpop.f32.mrf.mxu0
        %v3932 = vadd.f32 0.0, %v3931
        %v3933 = vpop.f32.mrf.mxu0
        %v3934 = vadd.f32 0.0, %v3933
        %3935 = vmatmul.bf16.gmra.mxu0 %v1635
        %v3936 = vpop.f32.mrf.mxu0
        %v3937 = vadd.f32 0.0, %v3936
        %v3938 = vpop.f32.mrf.mxu0
        %v3939 = vadd.f32 0.0, %v3938
        %3940 = vmatmul.bf16.gmra.mxu0 %v1636
        %v3941 = vpop.f32.mrf.mxu0
        %v3942 = vadd.f32 0.0, %v3941
        %v3943 = vpop.f32.mrf.mxu0
        %v3944 = vadd.f32 0.0, %v3943
        %3945 = vmatmul.bf16.gmra.mxu0 %v1637
        %v3946 = vpop.f32.mrf.mxu0
        %v3947 = vadd.f32 0.0, %v3946
        %v3948 = vpop.f32.mrf.mxu0
        %v3949 = vadd.f32 0.0, %v3948
        %3950 = vmatmul.bf16.gmra.mxu0 %v1638
        %v3951 = vpop.f32.mrf.mxu0
        %v3952 = vadd.f32 0.0, %v3951
        %v3953 = vpop.f32.mrf.mxu0
        %v3954 = vadd.f32 0.0, %v3953
        %3955 = vmatmul.bf16.gmra.mxu0 %v1639
        %v3956 = vpop.f32.mrf.mxu0
        %v3957 = vadd.f32 0.0, %v3956
        %v3958 = vpop.f32.mrf.mxu0
        %v3959 = vadd.f32 0.0, %v3958
        %3960 = vmatmul.bf16.gmra.mxu0 %v1640
        %v3961 = vpop.f32.mrf.mxu0
        %v3962 = vadd.f32 0.0, %v3961
        %v3963 = vpop.f32.mrf.mxu0
        %v3964 = vadd.f32 0.0, %v3963
        %3965 = vmatmul.bf16.gmra.mxu0 %v1641
        %v3966 = vpop.f32.mrf.mxu0
        %v3967 = vadd.f32 0.0, %v3966
        %v3968 = vpop.f32.mrf.mxu0
        %v3969 = vadd.f32 0.0, %v3968
        %3970 = vmatmul.bf16.gmra.mxu0 %v1642
        %v3971 = vpop.f32.mrf.mxu0
        %v3972 = vadd.f32 0.0, %v3971
        %v3973 = vpop.f32.mrf.mxu0
        %v3974 = vadd.f32 0.0, %v3973
        %3975 = vmatmul.bf16.gmra.mxu0 %v2752
        %v3976 = vpop.f32.mrf.mxu0
        %v3977 = vadd.f32 0.0, %v3976
        %v3978 = vpop.f32.mrf.mxu0
        %v3979 = vadd.f32 0.0, %v3978
        %3980 = vmatmul.bf16.gmra.mxu0 %v3815
        %v3981 = vpop.f32.mrf.mxu0
        %v3982 = vadd.f32 0.0, %v3981
        %v3983 = vpop.f32.mrf.mxu0
        %v3984 = vadd.f32 0.0, %v3983
        %3985 = vdwg.mxu0
        %3986 = vmatpush.bf16.msra.mxu0 %v3880
        %3987 = vmatpush.bf16.msra.mxu0 %v3878
        %3988 = vmatpush.bf16.msra.mxu0 %v3876
        %3989 = vmatpush.bf16.msra.mxu0 %v3874
        %3990 = vmatpush.bf16.msra.mxu0 %v3872
        %3991 = vmatpush.bf16.msra.mxu0 %v3870
        %3992 = vmatpush.bf16.msra.mxu0 %v3868
        %3993 = vmatpush.bf16.msra.mxu0 %v3866
        %3994 = vmatmul.bf16.gmra.mxu0 %v1629
        %v3995 = vpop.f32.mrf.mxu0
        %v3996 = vadd.f32 0.0, %v3995
        %v3997 = vpop.f32.mrf.mxu0
        %v3998 = vadd.f32 0.0, %v3997
        %3999 = vmatmul.bf16.gmra.mxu0 %v1630
        %v4000 = vpop.f32.mrf.mxu0
        %v4001 = vadd.f32 0.0, %v4000
        %v4002 = vpop.f32.mrf.mxu0
        %v4003 = vadd.f32 0.0, %v4002
        %4004 = vmatmul.bf16.gmra.mxu0 %v1631
        %v4005 = vpop.f32.mrf.mxu0
        %v4006 = vadd.f32 0.0, %v4005
        %v4007 = vpop.f32.mrf.mxu0
        %v4008 = vadd.f32 0.0, %v4007
        %4009 = vmatmul.bf16.gmra.mxu0 %v1632
        %v4010 = vpop.f32.mrf.mxu0
        %v4011 = vadd.f32 0.0, %v4010
        %v4012 = vpop.f32.mrf.mxu0
        %v4013 = vadd.f32 0.0, %v4012
        %4014 = vmatmul.bf16.gmra.mxu0 %v1633
        %v4015 = vpop.f32.mrf.mxu0
        %v4016 = vadd.f32 0.0, %v4015
        %v4017 = vpop.f32.mrf.mxu0
        %v4018 = vadd.f32 0.0, %v4017
        %4019 = vmatmul.bf16.gmra.mxu0 %v1634
        %v4020 = vpop.f32.mrf.mxu0
        %v4021 = vadd.f32 0.0, %v4020
        %v4022 = vpop.f32.mrf.mxu0
        %v4023 = vadd.f32 0.0, %v4022
        %4024 = vmatmul.bf16.gmra.mxu0 %v1635
        %v4025 = vpop.f32.mrf.mxu0
        %v4026 = vadd.f32 0.0, %v4025
        %v4027 = vpop.f32.mrf.mxu0
        %v4028 = vadd.f32 0.0, %v4027
        %4029 = vmatmul.bf16.gmra.mxu0 %v1636
        %v4030 = vpop.f32.mrf.mxu0
        %v4031 = vadd.f32 0.0, %v4030
        %v4032 = vpop.f32.mrf.mxu0
        %v4033 = vadd.f32 0.0, %v4032
        %4034 = vmatmul.bf16.gmra.mxu0 %v1637
        %v4035 = vpop.f32.mrf.mxu0
        %v4036 = vadd.f32 0.0, %v4035
        %v4037 = vpop.f32.mrf.mxu0
        %v4038 = vadd.f32 0.0, %v4037
        %4039 = vmatmul.bf16.gmra.mxu0 %v1638
        %v4040 = vpop.f32.mrf.mxu0
        %v4041 = vadd.f32 0.0, %v4040
        %v4042 = vpop.f32.mrf.mxu0
        %v4043 = vadd.f32 0.0, %v4042
        %4044 = vmatmul.bf16.gmra.mxu0 %v1639
        %v4045 = vpop.f32.mrf.mxu0
        %v4046 = vadd.f32 0.0, %v4045
        %v4047 = vpop.f32.mrf.mxu0
        %v4048 = vadd.f32 0.0, %v4047
        %4049 = vmatmul.bf16.gmra.mxu0 %v1640
        %v4050 = vpop.f32.mrf.mxu0
        %v4051 = vadd.f32 0.0, %v4050
        %v4052 = vpop.f32.mrf.mxu0
        %v4053 = vadd.f32 0.0, %v4052
        %4054 = vmatmul.bf16.gmra.mxu0 %v1641
        %v4055 = vpop.f32.mrf.mxu0
        %v4056 = vadd.f32 0.0, %v4055
        %v4057 = vpop.f32.mrf.mxu0
        %v4058 = vadd.f32 0.0, %v4057
        %4059 = vmatmul.bf16.gmra.mxu0 %v1642
        %v4060 = vpop.f32.mrf.mxu0
        %v4061 = vadd.f32 0.0, %v4060
        %v4062 = vpop.f32.mrf.mxu0
        %v4063 = vadd.f32 0.0, %v4062
        %4064 = vmatmul.bf16.gmra.mxu0 %v2752
        %v4065 = vpop.f32.mrf.mxu0
        %v4066 = vadd.f32 0.0, %v4065
        %v4067 = vpop.f32.mrf.mxu0
        %v4068 = vadd.f32 0.0, %v4067
        %4069 = vmatmul.bf16.gmra.mxu0 %v3815
        %v4070 = vpop.f32.mrf.mxu0
        %v4071 = vadd.f32 0.0, %v4070
        %v4072 = vpop.f32.mrf.mxu0
        %v4073 = vadd.f32 0.0, %v4072
        %4074 = vdwg.mxu0
        %v4075 = vadd.f32 %v3724, %v3907
        %v4076 = vadd.f32 %v3725, %v3996
        %v4077 = vadd.f32 %v3726, %v3909
        %v4078 = vadd.f32 %v3727, %v3998
        %v4079 = vadd.f32 %v3728, %v3912
        %v4080 = vadd.f32 %v3729, %v4001
        %v4081 = vadd.f32 %v3730, %v3914
        %v4082 = vadd.f32 %v3731, %v4003
        %v4083 = vadd.f32 %v3732, %v3917
        %v4084 = vadd.f32 %v3733, %v4006
        %v4085 = vadd.f32 %v3734, %v3919
        %v4086 = vadd.f32 %v3735, %v4008
        %v4087 = vadd.f32 %v3736, %v3922
        %v4088 = vadd.f32 %v3737, %v4011
        %v4089 = vadd.f32 %v3738, %v3924
        %v4090 = vadd.f32 %v3739, %v4013
        %v4091 = vadd.f32 %v3740, %v3927
        %v4092 = vadd.f32 %v3741, %v4016
        %v4093 = vadd.f32 %v3742, %v3929
        %v4094 = vadd.f32 %v3743, %v4018
        %v4095 = vadd.f32 %v3744, %v3932
        %v4096 = vadd.f32 %v3745, %v4021
        %v4097 = vadd.f32 %v3746, %v3934
        %v4098 = vadd.f32 %v3747, %v4023
        %v4099 = vadd.f32 %v3748, %v3937
        %v4100 = vadd.f32 %v3749, %v4026
        %v4101 = vadd.f32 %v3750, %v3939
        %v4102 = vadd.f32 %v3751, %v4028
        %v4103 = vadd.f32 %v3752, %v3942
        %v4104 = vadd.f32 %v3753, %v4031
        %v4105 = vadd.f32 %v3754, %v3944
        %v4106 = vadd.f32 %v3755, %v4033
        %v4107 = vadd.f32 %v3756, %v3947
        %v4108 = vadd.f32 %v3757, %v4036
        %v4109 = vadd.f32 %v3758, %v3949
        %v4110 = vadd.f32 %v3759, %v4038
        %v4111 = vadd.f32 %v3760, %v3952
        %v4112 = vadd.f32 %v3761, %v4041
        %v4113 = vadd.f32 %v3762, %v3954
        %v4114 = vadd.f32 %v3763, %v4043
        %v4115 = vadd.f32 %v3764, %v3957
        %v4116 = vadd.f32 %v3765, %v4046
        %v4117 = vadd.f32 %v3766, %v3959
        %v4118 = vadd.f32 %v3767, %v4048
        %v4119 = vadd.f32 %v3768, %v3962
        %v4120 = vadd.f32 %v3769, %v4051
        %v4121 = vadd.f32 %v3770, %v3964
        %v4122 = vadd.f32 %v3771, %v4053
        %v4123 = vadd.f32 %v3772, %v3967
        %v4124 = vadd.f32 %v3773, %v4056
        %v4125 = vadd.f32 %v3774, %v3969
        %v4126 = vadd.f32 %v3775, %v4058
        %v4127 = vadd.f32 %v3776, %v3972
        %v4128 = vadd.f32 %v3777, %v4061
        %v4129 = vadd.f32 %v3778, %v3974
        %v4130 = vadd.f32 %v3779, %v4063
        %v4131 = vadd.f32 %v3780, %v3977
        %v4132 = vadd.f32 %v3781, %v4066
        %v4133 = vadd.f32 %v3782, %v3979
        %v4134 = vadd.f32 %v3783, %v4068
        %v4135 = vadd.f32 %v3784, %v3982
        %v4136 = vadd.f32 %v3785, %v4071
        %v4137 = vadd.f32 %v3786, %v3984
        %v4138 = vadd.f32 %v3787, %v4073
        %4139 = vst [vmem:[#allocation2] sm:$0xf] 0
        %4140 = vst [vmem:[#allocation2 + $0x4] sm:$0xf] 0
        %4141 = vst [vmem:[#allocation2 + $0x8] sm:$0x1] 0
        %4142 = vst [vmem:[#allocation2 + $0xc] sm:$0xf] 0
        %4143 = vst [vmem:[#allocation2 + $0x10] sm:$0xf] 0
        %4144 = vst [vmem:[#allocation2 + $0x14] sm:$0x1] 0
        %4145 = vst [vmem:[#allocation2 + $0x18] sm:$0xf] 0
        %4146 = vst [vmem:[#allocation2 + $0x1c] sm:$0xf] 0
        %4147 = vst [vmem:[#allocation2 + $0x20] sm:$0x1] 0
        %4148 = vst [vmem:[#allocation2 + $0x24] sm:$0xf] 0
        %4149 = vst [vmem:[#allocation2 + $0x28] sm:$0xf] 0
        %4150 = vst [vmem:[#allocation2 + $0x2c] sm:$0x1] 0
        %4151 = vst [vmem:[#allocation2 + $0x30] sm:$0xf] 0
        %4152 = vst [vmem:[#allocation2 + $0x34] sm:$0xf] 0
        %4153 = vst [vmem:[#allocation2 + $0x38] sm:$0x1] 0
        %4154 = vst [vmem:[#allocation2 + $0x3c] sm:$0xf] 0
        %4155 = vst [vmem:[#allocation2 + $0x40] sm:$0xf] 0
        %4156 = vst [vmem:[#allocation2 + $0x44] sm:$0x1] 0
        %4157 = vst [vmem:[#allocation2 + $0x48] sm:$0xf] 0
        %4158 = vst [vmem:[#allocation2 + $0x4c] sm:$0xf] 0
        %4159 = vst [vmem:[#allocation2 + $0x50] sm:$0x1] 0
        %4160 = vst [vmem:[#allocation2 + $0x54] sm:$0xf] 0
        %4161 = vst [vmem:[#allocation2 + $0x58] sm:$0xf] 0
        %4162 = vst [vmem:[#allocation2 + $0x5c] sm:$0x1] 0
        %4163 = vst [vmem:[#allocation2 + $0x60] sm:$0xf] 0
        %4164 = vst [vmem:[#allocation2 + $0x64] sm:$0xf] 0
        %4165 = vst [vmem:[#allocation2 + $0x68] sm:$0x1] 0
        %4166 = vst [vmem:[#allocation2 + $0x6c] sm:$0xf] 0
        %4167 = vst [vmem:[#allocation2 + $0x70] sm:$0xf] 0
        %4168 = vst [vmem:[#allocation2 + $0x74] sm:$0x1] 0
        %4169 = vst [vmem:[#allocation2 + $0x78] sm:$0xf] 0
        %4170 = vst [vmem:[#allocation2 + $0x7c] sm:$0xf] 0
        %4171 = vst [vmem:[#allocation2 + $0x80] sm:$0x1] 0
        %4172 = vst [vmem:[#allocation2 + $0x84] sm:$0xf] 0
        %4173 = vst [vmem:[#allocation2 + $0x88] sm:$0xf] 0
        %4174 = vst [vmem:[#allocation2 + $0x8c] sm:$0x1] 0
        %4175 = vst [vmem:[#allocation2 + $0x90] sm:$0xf] 0
        %4176 = vst [vmem:[#allocation2 + $0x94] sm:$0xf] 0
        %4177 = vst [vmem:[#allocation2 + $0x98] sm:$0x1] 0
        %4178 = vst [vmem:[#allocation2 + $0x9c] sm:$0xf] 0
        %4179 = vst [vmem:[#allocation2 + $0xa0] sm:$0xf] 0
        %4180 = vst [vmem:[#allocation2 + $0xa4] sm:$0x1] 0
        %4181 = vst [vmem:[#allocation2 + $0xa8] sm:$0xf] 0
        %4182 = vst [vmem:[#allocation2 + $0xac] sm:$0xf] 0
        %4183 = vst [vmem:[#allocation2 + $0xb0] sm:$0x1] 0
        %4184 = vst [vmem:[#allocation2 + $0xb4] sm:$0xf] 0
        %4185 = vst [vmem:[#allocation2 + $0xb8] sm:$0xf] 0
        %4186 = vst [vmem:[#allocation2 + $0xbc] sm:$0x1] 0
        %4187 = vst [vmem:[#allocation2 + $0xc0] sm:$0xf] 0
        %4188 = vst [vmem:[#allocation2 + $0xc4] sm:$0xf] 0
        %4189 = vst [vmem:[#allocation2 + $0xc8] sm:$0x1] 0
        %4190 = vst [vmem:[#allocation2 + $0xcc] sm:$0xf] 0
        %4191 = vst [vmem:[#allocation2 + $0xd0] sm:$0xf] 0
        %4192 = vst [vmem:[#allocation2 + $0xd4] sm:$0x1] 0
        %v4193 = vadd.f32 %v4075, 3.0
        %v4194 = vadd.f32 %v4077, 3.0
        %v4195 = vadd.f32 %v4079, 3.0
        %v4196 = vadd.f32 %v4081, 3.0
        %v4197 = vadd.f32 %v4083, 3.0
        %v4198 = vadd.f32 %v4085, 3.0
        %v4199 = vadd.f32 %v4087, 3.0
        %v4200 = vadd.f32 %v4089, 3.0
        %v4201 = vadd.f32 %v4091, 3.0
        %v4202 = vadd.f32 %v4093, 3.0
        %v4203 = vadd.f32 %v4095, 3.0
        %v4204 = vadd.f32 %v4097, 3.0
        %v4205 = vadd.f32 %v4099, 3.0
        %v4206 = vadd.f32 %v4101, 3.0
        %v4207 = vadd.f32 %v4103, 3.0
        %v4208 = vadd.f32 %v4105, 3.0
        %v4209 = vadd.f32 %v4107, 3.0
        %v4210 = vadd.f32 %v4109, 3.0
        %v4211 = vadd.f32 %v4111, 3.0
        %v4212 = vadd.f32 %v4113, 3.0
        %v4213 = vadd.f32 %v4115, 3.0
        %v4214 = vadd.f32 %v4117, 3.0
        %v4215 = vadd.f32 %v4119, 3.0
        %v4216 = vadd.f32 %v4121, 3.0
        %v4217 = vadd.f32 %v4123, 3.0
        %v4218 = vadd.f32 %v4125, 3.0
        %v4219 = vadd.f32 %v4127, 3.0
        %v4220 = vadd.f32 %v4129, 3.0
        %v4221 = vadd.f32 %v4131, 3.0
        %v4222 = vadd.f32 %v4133, 3.0
        %v4223 = vadd.f32 %v4135, 3.0
        %v4224 = vadd.f32 %v4137, 3.0
        %v4225 = vmax.f32 %v4193, 0.0
        %v4226 = vmax.f32 %v4194, 0.0
        %v4227 = vmax.f32 %v4195, 0.0
        %v4228 = vmax.f32 %v4196, 0.0
        %v4229 = vmax.f32 %v4197, 0.0
        %v4230 = vmax.f32 %v4198, 0.0
        %v4231 = vmax.f32 %v4199, 0.0
        %v4232 = vmax.f32 %v4200, 0.0
        %v4233 = vmax.f32 %v4201, 0.0
        %v4234 = vmax.f32 %v4202, 0.0
        %v4235 = vmax.f32 %v4203, 0.0
        %v4236 = vmax.f32 %v4204, 0.0
        %v4237 = vmax.f32 %v4205, 0.0
        %v4238 = vmax.f32 %v4206, 0.0
        %v4239 = vmax.f32 %v4207, 0.0
        %v4240 = vmax.f32 %v4208, 0.0
        %v4241 = vmax.f32 %v4209, 0.0
        %v4242 = vmax.f32 %v4210, 0.0
        %v4243 = vmax.f32 %v4211, 0.0
        %v4244 = vmax.f32 %v4212, 0.0
        %v4245 = vmax.f32 %v4213, 0.0
        %v4246 = vmax.f32 %v4214, 0.0
        %v4247 = vmax.f32 %v4215, 0.0
        %v4248 = vmax.f32 %v4216, 0.0
        %v4249 = vmax.f32 %v4217, 0.0
        %v4250 = vmax.f32 %v4218, 0.0
        %v4251 = vmax.f32 %v4219, 0.0
        %v4252 = vmax.f32 %v4220, 0.0
        %v4253 = vmax.f32 %v4221, 0.0
        %v4254 = vmax.f32 %v4222, 0.0
        %v4255 = vmax.f32 %v4223, 0.0
        %v4256 = vmax.f32 %v4224, 0.0
        %v4257 = vmin.f32 %v4225, 6.0
        %v4258 = vmin.f32 %v4226, 6.0
        %v4259 = vmin.f32 %v4227, 6.0
        %v4260 = vmin.f32 %v4228, 6.0
        %v4261 = vmin.f32 %v4229, 6.0
        %v4262 = vmin.f32 %v4230, 6.0
        %v4263 = vmin.f32 %v4231, 6.0
        %v4264 = vmin.f32 %v4232, 6.0
        %v4265 = vmin.f32 %v4233, 6.0
        %v4266 = vmin.f32 %v4234, 6.0
        %v4267 = vmin.f32 %v4235, 6.0
        %v4268 = vmin.f32 %v4236, 6.0
        %v4269 = vmin.f32 %v4237, 6.0
        %v4270 = vmin.f32 %v4238, 6.0
        %v4271 = vmin.f32 %v4239, 6.0
        %v4272 = vmin.f32 %v4240, 6.0
        %v4273 = vmin.f32 %v4241, 6.0
        %v4274 = vmin.f32 %v4242, 6.0
        %v4275 = vmin.f32 %v4243, 6.0
        %v4276 = vmin.f32 %v4244, 6.0
        %v4277 = vmin.f32 %v4245, 6.0
        %v4278 = vmin.f32 %v4246, 6.0
        %v4279 = vmin.f32 %v4247, 6.0
        %v4280 = vmin.f32 %v4248, 6.0
        %v4281 = vmin.f32 %v4249, 6.0
        %v4282 = vmin.f32 %v4250, 6.0
        %v4283 = vmin.f32 %v4251, 6.0
        %v4284 = vmin.f32 %v4252, 6.0
        %v4285 = vmin.f32 %v4253, 6.0
        %v4286 = vmin.f32 %v4254, 6.0
        %v4287 = vmin.f32 %v4255, 6.0
        %v4288 = vmin.f32 %v4256, 6.0
        %v4289 = vmul.f32 %v4075, %v4257
        %v4290 = vmul.f32 %v4077, %v4258
        %v4291 = vmul.f32 %v4079, %v4259
        %v4292 = vmul.f32 %v4081, %v4260
        %v4293 = vmul.f32 %v4083, %v4261
        %v4294 = vmul.f32 %v4085, %v4262
        %v4295 = vmul.f32 %v4087, %v4263
        %v4296 = vmul.f32 %v4089, %v4264
        %v4297 = vmul.f32 %v4091, %v4265
        %v4298 = vmul.f32 %v4093, %v4266
        %v4299 = vmul.f32 %v4095, %v4267
        %v4300 = vmul.f32 %v4097, %v4268
        %v4301 = vmul.f32 %v4099, %v4269
        %v4302 = vmul.f32 %v4101, %v4270
        %v4303 = vmul.f32 %v4103, %v4271
        %v4304 = vmul.f32 %v4105, %v4272
        %v4305 = vmul.f32 %v4107, %v4273
        %v4306 = vmul.f32 %v4109, %v4274
        %v4307 = vmul.f32 %v4111, %v4275
        %v4308 = vmul.f32 %v4113, %v4276
        %v4309 = vmul.f32 %v4115, %v4277
        %v4310 = vmul.f32 %v4117, %v4278
        %v4311 = vmul.f32 %v4119, %v4279
        %v4312 = vmul.f32 %v4121, %v4280
        %v4313 = vmul.f32 %v4123, %v4281
        %v4314 = vmul.f32 %v4125, %v4282
        %v4315 = vmul.f32 %v4127, %v4283
        %v4316 = vmul.f32 %v4129, %v4284
        %v4317 = vmul.f32 %v4131, %v4285
        %v4318 = vmul.f32 %v4133, %v4286
        %v4319 = vmul.f32 %v4135, %v4287
        %v4320 = vmul.f32 %v4137, %v4288
        %v4321 = vmul.f32 %v4289, 0.16666667
        %v4322 = vmul.f32 %v4290, 0.16666667
        %v4323 = vmul.f32 %v4291, 0.16666667
        %v4324 = vmul.f32 %v4292, 0.16666667
        %v4325 = vmul.f32 %v4293, 0.16666667
        %v4326 = vmul.f32 %v4294, 0.16666667
        %v4327 = vmul.f32 %v4295, 0.16666667
        %v4328 = vmul.f32 %v4296, 0.16666667
        %v4329 = vmul.f32 %v4297, 0.16666667
        %v4330 = vmul.f32 %v4298, 0.16666667
        %v4331 = vmul.f32 %v4299, 0.16666667
        %v4332 = vmul.f32 %v4300, 0.16666667
        %v4333 = vmul.f32 %v4301, 0.16666667
        %v4334 = vmul.f32 %v4302, 0.16666667
        %v4335 = vmul.f32 %v4303, 0.16666667
        %v4336 = vmul.f32 %v4304, 0.16666667
        %v4337 = vmul.f32 %v4305, 0.16666667
        %v4338 = vmul.f32 %v4306, 0.16666667
        %v4339 = vmul.f32 %v4307, 0.16666667
        %v4340 = vmul.f32 %v4308, 0.16666667
        %v4341 = vmul.f32 %v4309, 0.16666667
        %v4342 = vmul.f32 %v4310, 0.16666667
        %v4343 = vmul.f32 %v4311, 0.16666667
        %v4344 = vmul.f32 %v4312, 0.16666667
        %v4345 = vmul.f32 %v4313, 0.16666667
        %v4346 = vmul.f32 %v4314, 0.16666667
        %v4347 = vmul.f32 %v4315, 0.16666667
        %v4348 = vmul.f32 %v4316, 0.16666667
        %v4349 = vmul.f32 %v4317, 0.16666667
        %v4350 = vmul.f32 %v4318, 0.16666667
        %v4351 = vmul.f32 %v4319, 0.16666667
        %v4352 = vmul.f32 %v4320, 0.16666667
        %v4353 = vpack.c.bf16 %v4321, %v4321
        %v4354 = vpack.c.bf16 %v4322, %v4322
        %v4355 = vpack.c.bf16 %v4323, %v4323
        %v4356 = vpack.c.bf16 %v4324, %v4324
        %v4357 = vpack.c.bf16 %v4325, %v4325
        %v4358 = vpack.c.bf16 %v4326, %v4326
        %v4359 = vpack.c.bf16 %v4327, %v4327
        %v4360 = vpack.c.bf16 %v4328, %v4328
        %v4361 = vpack.c.bf16 %v4329, %v4329
        %v4362 = vpack.c.bf16 %v4330, %v4330
        %v4363 = vpack.c.bf16 %v4331, %v4331
        %v4364 = vpack.c.bf16 %v4332, %v4332
        %v4365 = vpack.c.bf16 %v4333, %v4333
        %v4366 = vpack.c.bf16 %v4334, %v4334
        %v4367 = vpack.c.bf16 %v4335, %v4335
        %v4368 = vpack.c.bf16 %v4336, %v4336
        %v4369 = vpack.c.bf16 %v4337, %v4337
        %v4370 = vpack.c.bf16 %v4338, %v4338
        %v4371 = vpack.c.bf16 %v4339, %v4339
        %v4372 = vpack.c.bf16 %v4340, %v4340
        %v4373 = vpack.c.bf16 %v4341, %v4341
        %v4374 = vpack.c.bf16 %v4342, %v4342
        %v4375 = vpack.c.bf16 %v4343, %v4343
        %v4376 = vpack.c.bf16 %v4344, %v4344
        %v4377 = vpack.c.bf16 %v4345, %v4345
        %v4378 = vpack.c.bf16 %v4346, %v4346
        %v4379 = vpack.c.bf16 %v4347, %v4347
        %v4380 = vpack.c.bf16 %v4348, %v4348
        %v4381 = vpack.c.bf16 %v4349, %v4349
        %v4382 = vpack.c.bf16 %v4350, %v4350
        %v4383 = vpack.c.bf16 %v4351, %v4351
        %v4384 = vpack.c.bf16 %v4352, %v4352
        %vm4385 = vsmask.f32 256
        %vm4386 = vsmask.f32 4368
        %vm4387 = vmor %vm4385, %vm4386
        %v4389 = vshrl.u32 %v4353, 16
        %v4391 = vrot.slane %v4389, 7
        %v4392 = vshll.u32 %v4353, 16
        %v4394 = vor.u32 %v4391, %v4392
        %v4395 = vrot.slane %v4391, 4
        %v4397 = vshrl.u32 %v4354, 16
        %v4399 = vrot.slane %v4397, 7
        %v4400 = vshll.u32 %v4354, 16
        %v4402 = vor.u32 %v4399, %v4400
        %v4403 = vsel %vm4387, %v4395, %v4402
        %v4404 = vrot.slane %v4399, 4
        %v4406 = vshrl.u32 %v4355, 16
        %v4408 = vrot.slane %v4406, 7
        %v4409 = vshll.u32 %v4355, 16
        %v4411 = vor.u32 %v4408, %v4409
        %v4412 = vrot.slane %v4408, 4
        %v4414 = vshrl.u32 %v4356, 16
        %v4416 = vrot.slane %v4414, 7
        %v4417 = vshll.u32 %v4356, 16
        %v4419 = vor.u32 %v4416, %v4417
        %v4420 = vsel %vm4387, %v4412, %v4419
        %v4421 = vrot.slane %v4416, 4
        %v4423 = vshrl.u32 %v4357, 16
        %v4425 = vrot.slane %v4423, 7
        %v4426 = vshll.u32 %v4357, 16
        %v4428 = vor.u32 %v4425, %v4426
        %v4429 = vrot.slane %v4425, 4
        %v4431 = vshrl.u32 %v4358, 16
        %v4433 = vrot.slane %v4431, 7
        %v4434 = vshll.u32 %v4358, 16
        %v4436 = vor.u32 %v4433, %v4434
        %v4437 = vsel %vm4387, %v4429, %v4436
        %v4438 = vrot.slane %v4433, 4
        %v4440 = vshrl.u32 %v4359, 16
        %v4442 = vrot.slane %v4440, 7
        %v4443 = vshll.u32 %v4359, 16
        %v4445 = vor.u32 %v4442, %v4443
        %v4446 = vrot.slane %v4442, 4
        %v4448 = vshrl.u32 %v4360, 16
        %v4450 = vrot.slane %v4448, 7
        %v4451 = vshll.u32 %v4360, 16
        %v4453 = vor.u32 %v4450, %v4451
        %v4454 = vsel %vm4387, %v4446, %v4453
        %v4455 = vrot.slane %v4450, 4
        %v4457 = vshrl.u32 %v4361, 16
        %v4459 = vrot.slane %v4457, 7
        %v4460 = vshll.u32 %v4361, 16
        %v4462 = vor.u32 %v4459, %v4460
        %v4463 = vrot.slane %v4459, 4
        %v4465 = vshrl.u32 %v4362, 16
        %v4467 = vrot.slane %v4465, 7
        %v4468 = vshll.u32 %v4362, 16
        %v4470 = vor.u32 %v4467, %v4468
        %v4471 = vsel %vm4387, %v4463, %v4470
        %v4472 = vrot.slane %v4467, 4
        %v4474 = vshrl.u32 %v4363, 16
        %v4476 = vrot.slane %v4474, 7
        %v4477 = vshll.u32 %v4363, 16
        %v4479 = vor.u32 %v4476, %v4477
        %v4480 = vrot.slane %v4476, 4
        %v4482 = vshrl.u32 %v4364, 16
        %v4484 = vrot.slane %v4482, 7
        %v4485 = vshll.u32 %v4364, 16
        %v4487 = vor.u32 %v4484, %v4485
        %v4488 = vsel %vm4387, %v4480, %v4487
        %v4489 = vrot.slane %v4484, 4
        %v4491 = vshrl.u32 %v4365, 16
        %v4493 = vrot.slane %v4491, 7
        %v4494 = vshll.u32 %v4365, 16
        %v4496 = vor.u32 %v4493, %v4494
        %v4497 = vrot.slane %v4493, 4
        %v4499 = vshrl.u32 %v4366, 16
        %v4501 = vrot.slane %v4499, 7
        %v4502 = vshll.u32 %v4366, 16
        %v4504 = vor.u32 %v4501, %v4502
        %v4505 = vsel %vm4387, %v4497, %v4504
        %v4506 = vrot.slane %v4501, 4
        %v4508 = vshrl.u32 %v4367, 16
        %v4510 = vrot.slane %v4508, 7
        %v4511 = vshll.u32 %v4367, 16
        %v4513 = vor.u32 %v4510, %v4511
        %v4514 = vrot.slane %v4510, 4
        %v4516 = vshrl.u32 %v4368, 16
        %v4518 = vrot.slane %v4516, 7
        %v4519 = vshll.u32 %v4368, 16
        %v4521 = vor.u32 %v4518, %v4519
        %v4522 = vsel %vm4387, %v4514, %v4521
        %v4523 = vrot.slane %v4518, 4
        %v4525 = vshrl.u32 %v4369, 16
        %v4527 = vrot.slane %v4525, 7
        %v4528 = vshll.u32 %v4369, 16
        %v4530 = vor.u32 %v4527, %v4528
        %v4531 = vrot.slane %v4527, 4
        %v4533 = vshrl.u32 %v4370, 16
        %v4535 = vrot.slane %v4533, 7
        %v4536 = vshll.u32 %v4370, 16
        %v4538 = vor.u32 %v4535, %v4536
        %v4539 = vsel %vm4387, %v4531, %v4538
        %v4540 = vrot.slane %v4535, 4
        %v4542 = vshrl.u32 %v4371, 16
        %v4544 = vrot.slane %v4542, 7
        %v4545 = vshll.u32 %v4371, 16
        %v4547 = vor.u32 %v4544, %v4545
        %v4548 = vrot.slane %v4544, 4
        %v4550 = vshrl.u32 %v4372, 16
        %v4552 = vrot.slane %v4550, 7
        %v4553 = vshll.u32 %v4372, 16
        %v4555 = vor.u32 %v4552, %v4553
        %v4556 = vsel %vm4387, %v4548, %v4555
        %v4557 = vrot.slane %v4552, 4
        %v4559 = vshrl.u32 %v4373, 16
        %v4561 = vrot.slane %v4559, 7
        %v4562 = vshll.u32 %v4373, 16
        %v4564 = vor.u32 %v4561, %v4562
        %v4565 = vrot.slane %v4561, 4
        %v4567 = vshrl.u32 %v4374, 16
        %v4569 = vrot.slane %v4567, 7
        %v4570 = vshll.u32 %v4374, 16
        %v4572 = vor.u32 %v4569, %v4570
        %v4573 = vsel %vm4387, %v4565, %v4572
        %v4574 = vrot.slane %v4569, 4
        %v4576 = vshrl.u32 %v4375, 16
        %v4578 = vrot.slane %v4576, 7
        %v4579 = vshll.u32 %v4375, 16
        %v4581 = vor.u32 %v4578, %v4579
        %v4582 = vrot.slane %v4578, 4
        %v4584 = vshrl.u32 %v4376, 16
        %v4586 = vrot.slane %v4584, 7
        %v4587 = vshll.u32 %v4376, 16
        %v4589 = vor.u32 %v4586, %v4587
        %v4590 = vsel %vm4387, %v4582, %v4589
        %v4591 = vrot.slane %v4586, 4
        %v4593 = vshrl.u32 %v4377, 16
        %v4595 = vrot.slane %v4593, 7
        %v4596 = vshll.u32 %v4377, 16
        %v4598 = vor.u32 %v4595, %v4596
        %v4599 = vrot.slane %v4595, 4
        %v4601 = vshrl.u32 %v4378, 16
        %v4603 = vrot.slane %v4601, 7
        %v4604 = vshll.u32 %v4378, 16
        %v4606 = vor.u32 %v4603, %v4604
        %v4607 = vsel %vm4387, %v4599, %v4606
        %v4608 = vrot.slane %v4603, 4
        %v4610 = vshrl.u32 %v4379, 16
        %v4612 = vrot.slane %v4610, 7
        %v4613 = vshll.u32 %v4379, 16
        %v4615 = vor.u32 %v4612, %v4613
        %v4616 = vrot.slane %v4612, 4
        %v4618 = vshrl.u32 %v4380, 16
        %v4620 = vrot.slane %v4618, 7
        %v4621 = vshll.u32 %v4380, 16
        %v4623 = vor.u32 %v4620, %v4621
        %v4624 = vsel %vm4387, %v4616, %v4623
        %v4625 = vrot.slane %v4620, 4
        %v4627 = vshrl.u32 %v4381, 16
        %v4629 = vrot.slane %v4627, 7
        %v4630 = vshll.u32 %v4381, 16
        %v4632 = vor.u32 %v4629, %v4630
        %v4633 = vrot.slane %v4629, 4
        %v4635 = vshrl.u32 %v4382, 16
        %v4637 = vrot.slane %v4635, 7
        %v4638 = vshll.u32 %v4382, 16
        %v4640 = vor.u32 %v4637, %v4638
        %v4641 = vsel %vm4387, %v4633, %v4640
        %v4642 = vrot.slane %v4637, 4
        %v4644 = vshrl.u32 %v4383, 16
        %v4646 = vrot.slane %v4644, 7
        %v4647 = vshll.u32 %v4383, 16
        %v4649 = vor.u32 %v4646, %v4647
        %v4650 = vrot.slane %v4646, 4
        %v4652 = vshrl.u32 %v4384, 16
        %v4654 = vrot.slane %v4652, 7
        %v4655 = vshll.u32 %v4384, 16
        %v4657 = vor.u32 %v4654, %v4655
        %v4658 = vsel %vm4387, %v4650, %v4657
        %v4659 = vrot.slane %v4654, 4
        %s4708 = scalar_lea.vmem [#allocation2], 12
        %vm4709 = vcmask 1043456
        %vm4710 = vsmask.f32 7938
        %vm4711 = vmand %vm4709, %vm4710
        %v4712 = vld [vmem:[%s4708] sm:$0xf]
        %v4713 = vsel %vm4711, %v4394, %v4712
        %4714 = vst [vmem:[%s4708] sm:$0xf] %v4713
        %4715 = vst [vmem:[%s4708 + $0x4] sm:$0xf] %v4403
        %vm4716 = vcmask 1040384
        %vm4717 = vmand %vm4716, %vm4385
        %v4718 = vld [vmem:[%s4708 + $0x8] sm:$0x1]
        %v4719 = vsel %vm4717, %v4404, %v4718
        %4720 = vst [vmem:[%s4708 + $0x8] sm:$0x1] %v4719
        %v4721 = vld [vmem:[%s4708 + $0xc] sm:$0xf]
        %v4722 = vsel %vm4711, %v4411, %v4721
        %4723 = vst [vmem:[%s4708 + $0xc] sm:$0xf] %v4722
        %4724 = vst [vmem:[%s4708 + $0x10] sm:$0xf] %v4420
        %v4725 = vld [vmem:[%s4708 + $0x14] sm:$0x1]
        %v4726 = vsel %vm4717, %v4421, %v4725
        %4727 = vst [vmem:[%s4708 + $0x14] sm:$0x1] %v4726
        %v4728 = vld [vmem:[%s4708 + $0x18] sm:$0xf]
        %v4729 = vsel %vm4711, %v4428, %v4728
        %4730 = vst [vmem:[%s4708 + $0x18] sm:$0xf] %v4729
        %4731 = vst [vmem:[%s4708 + $0x1c] sm:$0xf] %v4437
        %v4732 = vld [vmem:[%s4708 + $0x20] sm:$0x1]
        %v4733 = vsel %vm4717, %v4438, %v4732
        %4734 = vst [vmem:[%s4708 + $0x20] sm:$0x1] %v4733
        %v4735 = vld [vmem:[%s4708 + $0x24] sm:$0xf]
        %v4736 = vsel %vm4711, %v4445, %v4735
        %4737 = vst [vmem:[%s4708 + $0x24] sm:$0xf] %v4736
        %4738 = vst [vmem:[%s4708 + $0x28] sm:$0xf] %v4454
        %v4739 = vld [vmem:[%s4708 + $0x2c] sm:$0x1]
        %v4740 = vsel %vm4717, %v4455, %v4739
        %4741 = vst [vmem:[%s4708 + $0x2c] sm:$0x1] %v4740
        %v4742 = vld [vmem:[%s4708 + $0x30] sm:$0xf]
        %v4743 = vsel %vm4711, %v4462, %v4742
        %4744 = vst [vmem:[%s4708 + $0x30] sm:$0xf] %v4743
        %4745 = vst [vmem:[%s4708 + $0x34] sm:$0xf] %v4471
        %v4746 = vld [vmem:[%s4708 + $0x38] sm:$0x1]
        %v4747 = vsel %vm4717, %v4472, %v4746
        %4748 = vst [vmem:[%s4708 + $0x38] sm:$0x1] %v4747
        %v4749 = vld [vmem:[%s4708 + $0x3c] sm:$0xf]
        %v4750 = vsel %vm4711, %v4479, %v4749
        %4751 = vst [vmem:[%s4708 + $0x3c] sm:$0xf] %v4750
        %4752 = vst [vmem:[%s4708 + $0x40] sm:$0xf] %v4488
        %v4753 = vld [vmem:[%s4708 + $0x44] sm:$0x1]
        %v4754 = vsel %vm4717, %v4489, %v4753
        %4755 = vst [vmem:[%s4708 + $0x44] sm:$0x1] %v4754
        %v4756 = vld [vmem:[%s4708 + $0x48] sm:$0xf]
        %v4757 = vsel %vm4711, %v4496, %v4756
        %4758 = vst [vmem:[%s4708 + $0x48] sm:$0xf] %v4757
        %4759 = vst [vmem:[%s4708 + $0x4c] sm:$0xf] %v4505
        %v4760 = vld [vmem:[%s4708 + $0x50] sm:$0x1]
        %v4761 = vsel %vm4717, %v4506, %v4760
        %4762 = vst [vmem:[%s4708 + $0x50] sm:$0x1] %v4761
        %v4763 = vld [vmem:[%s4708 + $0x54] sm:$0xf]
        %v4764 = vsel %vm4711, %v4513, %v4763
        %4765 = vst [vmem:[%s4708 + $0x54] sm:$0xf] %v4764
        %4766 = vst [vmem:[%s4708 + $0x58] sm:$0xf] %v4522
        %v4767 = vld [vmem:[%s4708 + $0x5c] sm:$0x1]
        %v4768 = vsel %vm4717, %v4523, %v4767
        %4769 = vst [vmem:[%s4708 + $0x5c] sm:$0x1] %v4768
        %v4770 = vld [vmem:[%s4708 + $0x60] sm:$0xf]
        %v4771 = vsel %vm4711, %v4530, %v4770
        %4772 = vst [vmem:[%s4708 + $0x60] sm:$0xf] %v4771
        %4773 = vst [vmem:[%s4708 + $0x64] sm:$0xf] %v4539
        %v4774 = vld [vmem:[%s4708 + $0x68] sm:$0x1]
        %v4775 = vsel %vm4717, %v4540, %v4774
        %4776 = vst [vmem:[%s4708 + $0x68] sm:$0x1] %v4775
        %v4777 = vld [vmem:[%s4708 + $0x6c] sm:$0xf]
        %v4778 = vsel %vm4711, %v4547, %v4777
        %4779 = vst [vmem:[%s4708 + $0x6c] sm:$0xf] %v4778
        %4780 = vst [vmem:[%s4708 + $0x70] sm:$0xf] %v4556
        %v4781 = vld [vmem:[%s4708 + $0x74] sm:$0x1]
        %v4782 = vsel %vm4717, %v4557, %v4781
        %4783 = vst [vmem:[%s4708 + $0x74] sm:$0x1] %v4782
        %v4784 = vld [vmem:[%s4708 + $0x78] sm:$0xf]
        %v4785 = vsel %vm4711, %v4564, %v4784
        %4786 = vst [vmem:[%s4708 + $0x78] sm:$0xf] %v4785
        %4787 = vst [vmem:[%s4708 + $0x7c] sm:$0xf] %v4573
        %v4788 = vld [vmem:[%s4708 + $0x80] sm:$0x1]
        %v4789 = vsel %vm4717, %v4574, %v4788
        %4790 = vst [vmem:[%s4708 + $0x80] sm:$0x1] %v4789
        %v4791 = vld [vmem:[%s4708 + $0x84] sm:$0xf]
        %v4792 = vsel %vm4711, %v4581, %v4791
        %4793 = vst [vmem:[%s4708 + $0x84] sm:$0xf] %v4792
        %4794 = vst [vmem:[%s4708 + $0x88] sm:$0xf] %v4590
        %v4795 = vld [vmem:[%s4708 + $0x8c] sm:$0x1]
        %v4796 = vsel %vm4717, %v4591, %v4795
        %4797 = vst [vmem:[%s4708 + $0x8c] sm:$0x1] %v4796
        %v4798 = vld [vmem:[%s4708 + $0x90] sm:$0xf]
        %v4799 = vsel %vm4711, %v4598, %v4798
        %4800 = vst [vmem:[%s4708 + $0x90] sm:$0xf] %v4799
        %4801 = vst [vmem:[%s4708 + $0x94] sm:$0xf] %v4607
        %v4802 = vld [vmem:[%s4708 + $0x98] sm:$0x1]
        %v4803 = vsel %vm4717, %v4608, %v4802
        %4804 = vst [vmem:[%s4708 + $0x98] sm:$0x1] %v4803
        %v4805 = vld [vmem:[%s4708 + $0x9c] sm:$0xf]
        %v4806 = vsel %vm4711, %v4615, %v4805
        %4807 = vst [vmem:[%s4708 + $0x9c] sm:$0xf] %v4806
        %4808 = vst [vmem:[%s4708 + $0xa0] sm:$0xf] %v4624
        %v4809 = vld [vmem:[%s4708 + $0xa4] sm:$0x1]
        %v4810 = vsel %vm4717, %v4625, %v4809
        %4811 = vst [vmem:[%s4708 + $0xa4] sm:$0x1] %v4810
        %v4812 = vld [vmem:[%s4708 + $0xa8] sm:$0xf]
        %v4813 = vsel %vm4711, %v4632, %v4812
        %4814 = vst [vmem:[%s4708 + $0xa8] sm:$0xf] %v4813
        %4815 = vst [vmem:[%s4708 + $0xac] sm:$0xf] %v4641
        %v4816 = vld [vmem:[%s4708 + $0xb0] sm:$0x1]
        %v4817 = vsel %vm4717, %v4642, %v4816
        %4818 = vst [vmem:[%s4708 + $0xb0] sm:$0x1] %v4817
        %v4819 = vld [vmem:[%s4708 + $0xb4] sm:$0xf]
        %v4820 = vsel %vm4711, %v4649, %v4819
        %4821 = vst [vmem:[%s4708 + $0xb4] sm:$0xf] %v4820
        %4822 = vst [vmem:[%s4708 + $0xb8] sm:$0xf] %v4658
        %v4823 = vld [vmem:[%s4708 + $0xbc] sm:$0x1]
        %v4824 = vsel %vm4717, %v4659, %v4823
        %4825 = vst [vmem:[%s4708 + $0xbc] sm:$0x1] %v4824
        %v4826 = vld [vmem:[#allocation2] sm:$0xf]
        %v4827 = vld [vmem:[#allocation2 + $0x4] sm:$0xf]
        %v4828 = vld [vmem:[#allocation2 + $0x8] sm:$0x1]
        %v4829 = vld [vmem:[#allocation2 + $0xc] sm:$0xf]
        %v4830 = vld [vmem:[#allocation2 + $0x10] sm:$0xf]
        %v4831 = vld [vmem:[#allocation2 + $0x14] sm:$0x1]
        %v4832 = vld [vmem:[#allocation2 + $0x18] sm:$0xf]
        %v4833 = vld [vmem:[#allocation2 + $0x1c] sm:$0xf]
        %v4834 = vld [vmem:[#allocation2 + $0x20] sm:$0x1]
        %v4835 = vld [vmem:[#allocation2 + $0x24] sm:$0xf]
        %v4836 = vld [vmem:[#allocation2 + $0x28] sm:$0xf]
        %v4837 = vld [vmem:[#allocation2 + $0x2c] sm:$0x1]
        %v4838 = vld [vmem:[#allocation2 + $0x30] sm:$0xf]
        %v4839 = vld [vmem:[#allocation2 + $0x34] sm:$0xf]
        %v4840 = vld [vmem:[#allocation2 + $0x38] sm:$0x1]
        %v4841 = vld [vmem:[#allocation2 + $0x3c] sm:$0xf]
        %v4842 = vld [vmem:[#allocation2 + $0x40] sm:$0xf]
        %v4843 = vld [vmem:[#allocation2 + $0x44] sm:$0x1]
        %v4844 = vld [vmem:[#allocation2 + $0x48] sm:$0xf]
        %v4845 = vld [vmem:[#allocation2 + $0x4c] sm:$0xf]
        %v4846 = vld [vmem:[#allocation2 + $0x50] sm:$0x1]
        %v4847 = vld [vmem:[#allocation2 + $0x54] sm:$0xf]
        %v4848 = vld [vmem:[#allocation2 + $0x58] sm:$0xf]
        %v4849 = vld [vmem:[#allocation2 + $0x5c] sm:$0x1]
        %v4850 = vld [vmem:[#allocation2 + $0x60] sm:$0xf]
        %v4851 = vld [vmem:[#allocation2 + $0x64] sm:$0xf]
        %v4852 = vld [vmem:[#allocation2 + $0x68] sm:$0x1]
        %v4853 = vld [vmem:[#allocation2 + $0x6c] sm:$0xf]
        %v4854 = vld [vmem:[#allocation2 + $0x70] sm:$0xf]
        %v4855 = vld [vmem:[#allocation2 + $0x74] sm:$0x1]
        %v4856 = vld [vmem:[#allocation2 + $0x78] sm:$0xf]
        %v4857 = vld [vmem:[#allocation2 + $0x7c] sm:$0xf]
        %v4858 = vld [vmem:[#allocation2 + $0x80] sm:$0x1]
        %v4859 = vld [vmem:[#allocation2 + $0x84] sm:$0xf]
        %v4860 = vld [vmem:[#allocation2 + $0x88] sm:$0xf]
        %v4861 = vld [vmem:[#allocation2 + $0x8c] sm:$0x1]
        %v4862 = vld [vmem:[#allocation2 + $0x90] sm:$0xf]
        %v4863 = vld [vmem:[#allocation2 + $0x94] sm:$0xf]
        %v4864 = vld [vmem:[#allocation2 + $0x98] sm:$0x1]
        %v4865 = vld [vmem:[#allocation2 + $0x9c] sm:$0xf]
        %v4866 = vld [vmem:[#allocation2 + $0xa0] sm:$0xf]
        %v4867 = vld [vmem:[#allocation2 + $0xa4] sm:$0x1]
        %v4868 = vld [vmem:[#allocation2 + $0xa8] sm:$0xf]
        %v4869 = vld [vmem:[#allocation2 + $0xac] sm:$0xf]
        %v4870 = vld [vmem:[#allocation2 + $0xb0] sm:$0x1]
        %v4871 = vld [vmem:[#allocation2 + $0xb4] sm:$0xf]
        %v4872 = vld [vmem:[#allocation2 + $0xb8] sm:$0xf]
        %v4873 = vld [vmem:[#allocation2 + $0xbc] sm:$0x1]
        %v4874 = vld [vmem:[#allocation2 + $0xc0] sm:$0xf]
        %v4875 = vld [vmem:[#allocation2 + $0xc4] sm:$0xf]
        %v4876 = vld [vmem:[#allocation2 + $0xc8] sm:$0x1]
        %v4877 = vld [vmem:[#allocation2 + $0xcc] sm:$0xf]
        %v4878 = vld [vmem:[#allocation2 + $0xd0] sm:$0xf]
        %v4879 = vld [vmem:[#allocation2 + $0xd4] sm:$0x1]
        %v4880 = vld [vmem:[#allocation3] sm:$0xf]
        %v4881 = vld [vmem:[#allocation3 + $0x4] sm:$0xf]
        %v4882 = vld [vmem:[#allocation3 + $0x8] sm:$0xf]
        %v4883 = vld [vmem:[#allocation3 + $0xc] sm:$0xf]
        %v4884 = vld [vmem:[#allocation3 + $0x10] sm:$0xf]
        %v4885 = vld [vmem:[#allocation3 + $0x14] sm:$0xf]
        %v4886 = vld [vmem:[#allocation3 + $0x18] sm:$0xf]
        %v4887 = vld [vmem:[#allocation3 + $0x1c] sm:$0xf]
        %v4888 = vld [vmem:[#allocation3 + $0x20] sm:$0xf]
        %v4889 = vld [vmem:[#allocation3 + $0x24] sm:$0xf]
        %v4890 = vld [vmem:[#allocation3 + $0x28] sm:$0xf]
        %v4891 = vld [vmem:[#allocation3 + $0x2c] sm:$0xf]
        %v4892 = vld [vmem:[#allocation3 + $0x30] sm:$0xf]
        %v4893 = vld [vmem:[#allocation3 + $0x34] sm:$0xf]
        %v4894 = vld [vmem:[#allocation3 + $0x38] sm:$0xf]
        %v4895 = vld [vmem:[#allocation3 + $0x3c] sm:$0xf]
        %v4928 = vunpack.c.l.b16 %v4826
        %v4929 = vunpack.c.l.b16 %v4827
        %v4930 = vunpack.c.l.b16 %v4829
        %v4931 = vunpack.c.l.b16 %v4830
        %v4932 = vunpack.c.l.b16 %v4832
        %v4933 = vunpack.c.l.b16 %v4833
        %v4934 = vunpack.c.l.b16 %v4835
        %v4935 = vunpack.c.l.b16 %v4836
        %v4936 = vunpack.c.l.b16 %v4838
        %v4937 = vunpack.c.l.b16 %v4839
        %v4938 = vunpack.c.l.b16 %v4841
        %v4939 = vunpack.c.l.b16 %v4842
        %v4940 = vunpack.c.l.b16 %v4844
        %v4941 = vunpack.c.l.b16 %v4845
        %v4942 = vunpack.c.l.b16 %v4847
        %v4943 = vunpack.c.l.b16 %v4848
        %v4944 = vunpack.c.l.b16 %v4850
        %v4945 = vunpack.c.l.b16 %v4851
        %v4946 = vunpack.c.l.b16 %v4853
        %v4947 = vunpack.c.l.b16 %v4854
        %v4948 = vunpack.c.l.b16 %v4856
        %v4949 = vunpack.c.l.b16 %v4857
        %v4950 = vunpack.c.l.b16 %v4859
        %v4951 = vunpack.c.l.b16 %v4860
        %v4952 = vunpack.c.l.b16 %v4862
        %v4953 = vunpack.c.l.b16 %v4863
        %v4954 = vunpack.c.l.b16 %v4865
        %v4955 = vunpack.c.l.b16 %v4866
        %v4956 = vunpack.c.l.b16 %v4868
        %v4957 = vunpack.c.l.b16 %v4869
        %v4958 = vunpack.c.l.b16 %v4871
        %v4959 = vunpack.c.l.b16 %v4872
        %v4960 = vpack.c.b16 %v4929, %v4928
        %v4961 = vpack.c.b16 %v4931, %v4930
        %v4962 = vpack.c.b16 %v4933, %v4932
        %v4963 = vpack.c.b16 %v4935, %v4934
        %v4964 = vpack.c.b16 %v4937, %v4936
        %v4965 = vpack.c.b16 %v4939, %v4938
        %v4966 = vpack.c.b16 %v4941, %v4940
        %v4967 = vpack.c.b16 %v4943, %v4942
        %v4968 = vpack.c.b16 %v4945, %v4944
        %v4969 = vpack.c.b16 %v4947, %v4946
        %v4970 = vpack.c.b16 %v4949, %v4948
        %v4971 = vpack.c.b16 %v4951, %v4950
        %v4972 = vpack.c.b16 %v4953, %v4952
        %v4973 = vpack.c.b16 %v4955, %v4954
        %v4974 = vpack.c.b16 %v4957, %v4956
        %v4975 = vpack.c.b16 %v4959, %v4958
        %v5008 = vunpack.c.l.b16 %v4880
        %v5009 = vunpack.c.l.b16 %v4881
        %v5010 = vunpack.c.l.b16 %v4882
        %v5011 = vunpack.c.l.b16 %v4883
        %v5012 = vunpack.c.l.b16 %v4884
        %v5013 = vunpack.c.l.b16 %v4885
        %v5014 = vunpack.c.l.b16 %v4886
        %v5015 = vunpack.c.l.b16 %v4887
        %v5016 = vunpack.c.l.b16 %v4888
        %v5017 = vunpack.c.l.b16 %v4889
        %v5018 = vunpack.c.l.b16 %v4890
        %v5019 = vunpack.c.l.b16 %v4891
        %v5020 = vunpack.c.l.b16 %v4892
        %v5021 = vunpack.c.l.b16 %v4893
        %v5022 = vunpack.c.l.b16 %v4894
        %v5023 = vunpack.c.l.b16 %v4895
        %v5024 = vpack.c.b16 %v5009, %v5008
        %v5025 = vpack.c.b16 %v5011, %v5010
        %v5026 = vpack.c.b16 %v5013, %v5012
        %v5027 = vpack.c.b16 %v5015, %v5014
        %v5028 = vpack.c.b16 %v5017, %v5016
        %v5029 = vpack.c.b16 %v5019, %v5018
        %v5030 = vpack.c.b16 %v5021, %v5020
        %v5031 = vpack.c.b16 %v5023, %v5022
        %5040 = vmatpush.bf16.msra.mxu0 %v5031
        %5041 = vmatpush.bf16.msra.mxu0 %v5030
        %5042 = vmatpush.bf16.msra.mxu0 %v5029
        %5043 = vmatpush.bf16.msra.mxu0 %v5028
        %5044 = vmatpush.bf16.msra.mxu0 %v5027
        %5045 = vmatpush.bf16.msra.mxu0 %v5026
        %5046 = vmatpush.bf16.msra.mxu0 %v5025
        %5047 = vmatpush.bf16.msra.mxu0 %v5024
        %5048 = vmatmul.bf16.gmra.mxu0 %v4960
        %v5049 = vpop.f32.mrf.mxu0
        %v5050 = vadd.f32 0.0, %v5049
        %v5051 = vpop.f32.mrf.mxu0
        %v5052 = vadd.f32 0.0, %v5051
        %5053 = vmatmul.bf16.gmra.mxu0 %v4961
        %v5054 = vpop.f32.mrf.mxu0
        %v5055 = vadd.f32 0.0, %v5054
        %v5056 = vpop.f32.mrf.mxu0
        %v5057 = vadd.f32 0.0, %v5056
        %5058 = vmatmul.bf16.gmra.mxu0 %v4962
        %v5059 = vpop.f32.mrf.mxu0
        %v5060 = vadd.f32 0.0, %v5059
        %v5061 = vpop.f32.mrf.mxu0
        %v5062 = vadd.f32 0.0, %v5061
        %5063 = vmatmul.bf16.gmra.mxu0 %v4963
        %v5064 = vpop.f32.mrf.mxu0
        %v5065 = vadd.f32 0.0, %v5064
        %v5066 = vpop.f32.mrf.mxu0
        %v5067 = vadd.f32 0.0, %v5066
        %5068 = vmatmul.bf16.gmra.mxu0 %v4964
        %v5069 = vpop.f32.mrf.mxu0
        %v5070 = vadd.f32 0.0, %v5069
        %v5071 = vpop.f32.mrf.mxu0
        %v5072 = vadd.f32 0.0, %v5071
        %5073 = vmatmul.bf16.gmra.mxu0 %v4965
        %v5074 = vpop.f32.mrf.mxu0
        %v5075 = vadd.f32 0.0, %v5074
        %v5076 = vpop.f32.mrf.mxu0
        %v5077 = vadd.f32 0.0, %v5076
        %5078 = vmatmul.bf16.gmra.mxu0 %v4966
        %v5079 = vpop.f32.mrf.mxu0
        %v5080 = vadd.f32 0.0, %v5079
        %v5081 = vpop.f32.mrf.mxu0
        %v5082 = vadd.f32 0.0, %v5081
        %5083 = vmatmul.bf16.gmra.mxu0 %v4967
        %v5084 = vpop.f32.mrf.mxu0
        %v5085 = vadd.f32 0.0, %v5084
        %v5086 = vpop.f32.mrf.mxu0
        %v5087 = vadd.f32 0.0, %v5086
        %5088 = vmatmul.bf16.gmra.mxu0 %v4968
        %v5089 = vpop.f32.mrf.mxu0
        %v5090 = vadd.f32 0.0, %v5089
        %v5091 = vpop.f32.mrf.mxu0
        %v5092 = vadd.f32 0.0, %v5091
        %5093 = vmatmul.bf16.gmra.mxu0 %v4969
        %v5094 = vpop.f32.mrf.mxu0
        %v5095 = vadd.f32 0.0, %v5094
        %v5096 = vpop.f32.mrf.mxu0
        %v5097 = vadd.f32 0.0, %v5096
        %5098 = vmatmul.bf16.gmra.mxu0 %v4970
        %v5099 = vpop.f32.mrf.mxu0
        %v5100 = vadd.f32 0.0, %v5099
        %v5101 = vpop.f32.mrf.mxu0
        %v5102 = vadd.f32 0.0, %v5101
        %5103 = vmatmul.bf16.gmra.mxu0 %v4971
        %v5104 = vpop.f32.mrf.mxu0
        %v5105 = vadd.f32 0.0, %v5104
        %v5106 = vpop.f32.mrf.mxu0
        %v5107 = vadd.f32 0.0, %v5106
        %5108 = vmatmul.bf16.gmra.mxu0 %v4972
        %v5109 = vpop.f32.mrf.mxu0
        %v5110 = vadd.f32 0.0, %v5109
        %v5111 = vpop.f32.mrf.mxu0
        %v5112 = vadd.f32 0.0, %v5111
        %5113 = vmatmul.bf16.gmra.mxu0 %v4973
        %v5114 = vpop.f32.mrf.mxu0
        %v5115 = vadd.f32 0.0, %v5114
        %v5116 = vpop.f32.mrf.mxu0
        %v5117 = vadd.f32 0.0, %v5116
        %5118 = vmatmul.bf16.gmra.mxu0 %v4974
        %v5119 = vpop.f32.mrf.mxu0
        %v5120 = vadd.f32 0.0, %v5119
        %v5121 = vpop.f32.mrf.mxu0
        %v5122 = vadd.f32 0.0, %v5121
        %5123 = vmatmul.bf16.gmra.mxu0 %v4975
        %v5124 = vpop.f32.mrf.mxu0
        %v5125 = vadd.f32 0.0, %v5124
        %v5126 = vpop.f32.mrf.mxu0
        %v5127 = vadd.f32 0.0, %v5126
        %5128 = vdwg.mxu0
        %v5129 = vadd.f32 %v4076, %v5050
        %v5130 = vadd.f32 %v4078, %v5052
        %v5131 = vadd.f32 %v4080, %v5055
        %v5132 = vadd.f32 %v4082, %v5057
        %v5133 = vadd.f32 %v4084, %v5060
        %v5134 = vadd.f32 %v4086, %v5062
        %v5135 = vadd.f32 %v4088, %v5065
        %v5136 = vadd.f32 %v4090, %v5067
        %v5137 = vadd.f32 %v4092, %v5070
        %v5138 = vadd.f32 %v4094, %v5072
        %v5139 = vadd.f32 %v4096, %v5075
        %v5140 = vadd.f32 %v4098, %v5077
        %v5141 = vadd.f32 %v4100, %v5080
        %v5142 = vadd.f32 %v4102, %v5082
        %v5143 = vadd.f32 %v4104, %v5085
        %v5144 = vadd.f32 %v4106, %v5087
        %v5145 = vadd.f32 %v4108, %v5090
        %v5146 = vadd.f32 %v4110, %v5092
        %v5147 = vadd.f32 %v4112, %v5095
        %v5148 = vadd.f32 %v4114, %v5097
        %v5149 = vadd.f32 %v4116, %v5100
        %v5150 = vadd.f32 %v4118, %v5102
        %v5151 = vadd.f32 %v4120, %v5105
        %v5152 = vadd.f32 %v4122, %v5107
        %v5153 = vadd.f32 %v4124, %v5110
        %v5154 = vadd.f32 %v4126, %v5112
        %v5155 = vadd.f32 %v4128, %v5115
        %v5156 = vadd.f32 %v4130, %v5117
        %v5157 = vadd.f32 %v4132, %v5120
        %v5158 = vadd.f32 %v4134, %v5122
        %v5159 = vadd.f32 %v4136, %v5125
        %v5160 = vadd.f32 %v4138, %v5127
        %v5162 = vshrl.u32 %v4826, 16
        %v5164 = vrot.slane %v5162, 4
        %v5165 = vshll.u32 %v4826, 16
        %v5167 = vrot.slane %v5165, 5
        %v5168 = vor.u32 %v5164, %v5167
        %v5169 = vrot.slane %v5168, 4
        %v5171 = vshll.u32 %v4827, 16
        %v5173 = vrot.slane %v5171, 5
        %v5174 = vsel %vm369, %v5169, %v5173
        %v5175 = vshrl.u32 %v4827, 16
        %v5177 = vrot.slane %v5175, 4
        %v5178 = vor.u32 %v5177, %v5173
        %v5179 = vrot.slane %v5178, 4
        %v5181 = vshll.u32 %v4828, 16
        %v5183 = vrot.slane %v5181, 5
        %v5184 = vsel %vm369, %v5179, %v5183
        %v5186 = vshrl.u32 %v4829, 16
        %v5188 = vrot.slane %v5186, 4
        %v5189 = vshll.u32 %v4829, 16
        %v5191 = vrot.slane %v5189, 5
        %v5192 = vor.u32 %v5188, %v5191
        %v5193 = vrot.slane %v5192, 4
        %v5195 = vshll.u32 %v4830, 16
        %v5197 = vrot.slane %v5195, 5
        %v5198 = vsel %vm369, %v5193, %v5197
        %v5199 = vshrl.u32 %v4830, 16
        %v5201 = vrot.slane %v5199, 4
        %v5202 = vor.u32 %v5201, %v5197
        %v5203 = vrot.slane %v5202, 4
        %v5205 = vshll.u32 %v4831, 16
        %v5207 = vrot.slane %v5205, 5
        %v5208 = vsel %vm369, %v5203, %v5207
        %v5210 = vshrl.u32 %v4832, 16
        %v5212 = vrot.slane %v5210, 4
        %v5213 = vshll.u32 %v4832, 16
        %v5215 = vrot.slane %v5213, 5
        %v5216 = vor.u32 %v5212, %v5215
        %v5217 = vrot.slane %v5216, 4
        %v5219 = vshll.u32 %v4833, 16
        %v5221 = vrot.slane %v5219, 5
        %v5222 = vsel %vm369, %v5217, %v5221
        %v5223 = vshrl.u32 %v4833, 16
        %v5225 = vrot.slane %v5223, 4
        %v5226 = vor.u32 %v5225, %v5221
        %v5227 = vrot.slane %v5226, 4
        %v5229 = vshll.u32 %v4834, 16
        %v5231 = vrot.slane %v5229, 5
        %v5232 = vsel %vm369, %v5227, %v5231
        %v5234 = vshrl.u32 %v4835, 16
        %v5236 = vrot.slane %v5234, 4
        %v5237 = vshll.u32 %v4835, 16
        %v5239 = vrot.slane %v5237, 5
        %v5240 = vor.u32 %v5236, %v5239
        %v5241 = vrot.slane %v5240, 4
        %v5243 = vshll.u32 %v4836, 16
        %v5245 = vrot.slane %v5243, 5
        %v5246 = vsel %vm369, %v5241, %v5245
        %v5247 = vshrl.u32 %v4836, 16
        %v5249 = vrot.slane %v5247, 4
        %v5250 = vor.u32 %v5249, %v5245
        %v5251 = vrot.slane %v5250, 4
        %v5253 = vshll.u32 %v4837, 16
        %v5255 = vrot.slane %v5253, 5
        %v5256 = vsel %vm369, %v5251, %v5255
        %v5258 = vshrl.u32 %v4838, 16
        %v5260 = vrot.slane %v5258, 4
        %v5261 = vshll.u32 %v4838, 16
        %v5263 = vrot.slane %v5261, 5
        %v5264 = vor.u32 %v5260, %v5263
        %v5265 = vrot.slane %v5264, 4
        %v5267 = vshll.u32 %v4839, 16
        %v5269 = vrot.slane %v5267, 5
        %v5270 = vsel %vm369, %v5265, %v5269
        %v5271 = vshrl.u32 %v4839, 16
        %v5273 = vrot.slane %v5271, 4
        %v5274 = vor.u32 %v5273, %v5269
        %v5275 = vrot.slane %v5274, 4
        %v5277 = vshll.u32 %v4840, 16
        %v5279 = vrot.slane %v5277, 5
        %v5280 = vsel %vm369, %v5275, %v5279
        %v5282 = vshrl.u32 %v4841, 16
        %v5284 = vrot.slane %v5282, 4
        %v5285 = vshll.u32 %v4841, 16
        %v5287 = vrot.slane %v5285, 5
        %v5288 = vor.u32 %v5284, %v5287
        %v5289 = vrot.slane %v5288, 4
        %v5291 = vshll.u32 %v4842, 16
        %v5293 = vrot.slane %v5291, 5
        %v5294 = vsel %vm369, %v5289, %v5293
        %v5295 = vshrl.u32 %v4842, 16
        %v5297 = vrot.slane %v5295, 4
        %v5298 = vor.u32 %v5297, %v5293
        %v5299 = vrot.slane %v5298, 4
        %v5301 = vshll.u32 %v4843, 16
        %v5303 = vrot.slane %v5301, 5
        %v5304 = vsel %vm369, %v5299, %v5303
        %v5306 = vshrl.u32 %v4844, 16
        %v5308 = vrot.slane %v5306, 4
        %v5309 = vshll.u32 %v4844, 16
        %v5311 = vrot.slane %v5309, 5
        %v5312 = vor.u32 %v5308, %v5311
        %v5313 = vrot.slane %v5312, 4
        %v5315 = vshll.u32 %v4845, 16
        %v5317 = vrot.slane %v5315, 5
        %v5318 = vsel %vm369, %v5313, %v5317
        %v5319 = vshrl.u32 %v4845, 16
        %v5321 = vrot.slane %v5319, 4
        %v5322 = vor.u32 %v5321, %v5317
        %v5323 = vrot.slane %v5322, 4
        %v5325 = vshll.u32 %v4846, 16
        %v5327 = vrot.slane %v5325, 5
        %v5328 = vsel %vm369, %v5323, %v5327
        %v5330 = vshrl.u32 %v4847, 16
        %v5332 = vrot.slane %v5330, 4
        %v5333 = vshll.u32 %v4847, 16
        %v5335 = vrot.slane %v5333, 5
        %v5336 = vor.u32 %v5332, %v5335
        %v5337 = vrot.slane %v5336, 4
        %v5339 = vshll.u32 %v4848, 16
        %v5341 = vrot.slane %v5339, 5
        %v5342 = vsel %vm369, %v5337, %v5341
        %v5343 = vshrl.u32 %v4848, 16
        %v5345 = vrot.slane %v5343, 4
        %v5346 = vor.u32 %v5345, %v5341
        %v5347 = vrot.slane %v5346, 4
        %v5349 = vshll.u32 %v4849, 16
        %v5351 = vrot.slane %v5349, 5
        %v5352 = vsel %vm369, %v5347, %v5351
        %v5354 = vshrl.u32 %v4850, 16
        %v5356 = vrot.slane %v5354, 4
        %v5357 = vshll.u32 %v4850, 16
        %v5359 = vrot.slane %v5357, 5
        %v5360 = vor.u32 %v5356, %v5359
        %v5361 = vrot.slane %v5360, 4
        %v5363 = vshll.u32 %v4851, 16
        %v5365 = vrot.slane %v5363, 5
        %v5366 = vsel %vm369, %v5361, %v5365
        %v5367 = vshrl.u32 %v4851, 16
        %v5369 = vrot.slane %v5367, 4
        %v5370 = vor.u32 %v5369, %v5365
        %v5371 = vrot.slane %v5370, 4
        %v5373 = vshll.u32 %v4852, 16
        %v5375 = vrot.slane %v5373, 5
        %v5376 = vsel %vm369, %v5371, %v5375
        %v5378 = vshrl.u32 %v4853, 16
        %v5380 = vrot.slane %v5378, 4
        %v5381 = vshll.u32 %v4853, 16
        %v5383 = vrot.slane %v5381, 5
        %v5384 = vor.u32 %v5380, %v5383
        %v5385 = vrot.slane %v5384, 4
        %v5387 = vshll.u32 %v4854, 16
        %v5389 = vrot.slane %v5387, 5
        %v5390 = vsel %vm369, %v5385, %v5389
        %v5391 = vshrl.u32 %v4854, 16
        %v5393 = vrot.slane %v5391, 4
        %v5394 = vor.u32 %v5393, %v5389
        %v5395 = vrot.slane %v5394, 4
        %v5397 = vshll.u32 %v4855, 16
        %v5399 = vrot.slane %v5397, 5
        %v5400 = vsel %vm369, %v5395, %v5399
        %v5402 = vshrl.u32 %v4856, 16
        %v5404 = vrot.slane %v5402, 4
        %v5405 = vshll.u32 %v4856, 16
        %v5407 = vrot.slane %v5405, 5
        %v5408 = vor.u32 %v5404, %v5407
        %v5409 = vrot.slane %v5408, 4
        %v5411 = vshll.u32 %v4857, 16
        %v5413 = vrot.slane %v5411, 5
        %v5414 = vsel %vm369, %v5409, %v5413
        %v5415 = vshrl.u32 %v4857, 16
        %v5417 = vrot.slane %v5415, 4
        %v5418 = vor.u32 %v5417, %v5413
        %v5419 = vrot.slane %v5418, 4
        %v5421 = vshll.u32 %v4858, 16
        %v5423 = vrot.slane %v5421, 5
        %v5424 = vsel %vm369, %v5419, %v5423
        %v5426 = vshrl.u32 %v4859, 16
        %v5428 = vrot.slane %v5426, 4
        %v5429 = vshll.u32 %v4859, 16
        %v5431 = vrot.slane %v5429, 5
        %v5432 = vor.u32 %v5428, %v5431
        %v5433 = vrot.slane %v5432, 4
        %v5435 = vshll.u32 %v4860, 16
        %v5437 = vrot.slane %v5435, 5
        %v5438 = vsel %vm369, %v5433, %v5437
        %v5439 = vshrl.u32 %v4860, 16
        %v5441 = vrot.slane %v5439, 4
        %v5442 = vor.u32 %v5441, %v5437
        %v5443 = vrot.slane %v5442, 4
        %v5445 = vshll.u32 %v4861, 16
        %v5447 = vrot.slane %v5445, 5
        %v5448 = vsel %vm369, %v5443, %v5447
        %v5450 = vshrl.u32 %v4862, 16
        %v5452 = vrot.slane %v5450, 4
        %v5453 = vshll.u32 %v4862, 16
        %v5455 = vrot.slane %v5453, 5
        %v5456 = vor.u32 %v5452, %v5455
        %v5457 = vrot.slane %v5456, 4
        %v5459 = vshll.u32 %v4863, 16
        %v5461 = vrot.slane %v5459, 5
        %v5462 = vsel %vm369, %v5457, %v5461
        %v5463 = vshrl.u32 %v4863, 16
        %v5465 = vrot.slane %v5463, 4
        %v5466 = vor.u32 %v5465, %v5461
        %v5467 = vrot.slane %v5466, 4
        %v5469 = vshll.u32 %v4864, 16
        %v5471 = vrot.slane %v5469, 5
        %v5472 = vsel %vm369, %v5467, %v5471
        %v5474 = vshrl.u32 %v4865, 16
        %v5476 = vrot.slane %v5474, 4
        %v5477 = vshll.u32 %v4865, 16
        %v5479 = vrot.slane %v5477, 5
        %v5480 = vor.u32 %v5476, %v5479
        %v5481 = vrot.slane %v5480, 4
        %v5483 = vshll.u32 %v4866, 16
        %v5485 = vrot.slane %v5483, 5
        %v5486 = vsel %vm369, %v5481, %v5485
        %v5487 = vshrl.u32 %v4866, 16
        %v5489 = vrot.slane %v5487, 4
        %v5490 = vor.u32 %v5489, %v5485
        %v5491 = vrot.slane %v5490, 4
        %v5493 = vshll.u32 %v4867, 16
        %v5495 = vrot.slane %v5493, 5
        %v5496 = vsel %vm369, %v5491, %v5495
        %v5498 = vshrl.u32 %v4868, 16
        %v5500 = vrot.slane %v5498, 4
        %v5501 = vshll.u32 %v4868, 16
        %v5503 = vrot.slane %v5501, 5
        %v5504 = vor.u32 %v5500, %v5503
        %v5505 = vrot.slane %v5504, 4
        %v5507 = vshll.u32 %v4869, 16
        %v5509 = vrot.slane %v5507, 5
        %v5510 = vsel %vm369, %v5505, %v5509
        %v5511 = vshrl.u32 %v4869, 16
        %v5513 = vrot.slane %v5511, 4
        %v5514 = vor.u32 %v5513, %v5509
        %v5515 = vrot.slane %v5514, 4
        %v5517 = vshll.u32 %v4870, 16
        %v5519 = vrot.slane %v5517, 5
        %v5520 = vsel %vm369, %v5515, %v5519
        %v5522 = vshrl.u32 %v4871, 16
        %v5524 = vrot.slane %v5522, 4
        %v5525 = vshll.u32 %v4871, 16
        %v5527 = vrot.slane %v5525, 5
        %v5528 = vor.u32 %v5524, %v5527
        %v5529 = vrot.slane %v5528, 4
        %v5531 = vshll.u32 %v4872, 16
        %v5533 = vrot.slane %v5531, 5
        %v5534 = vsel %vm369, %v5529, %v5533
        %v5535 = vshrl.u32 %v4872, 16
        %v5537 = vrot.slane %v5535, 4
        %v5538 = vor.u32 %v5537, %v5533
        %v5539 = vrot.slane %v5538, 4
        %v5541 = vshll.u32 %v4873, 16
        %v5543 = vrot.slane %v5541, 5
        %v5544 = vsel %vm369, %v5539, %v5543
        %s5545 = scalar_lea.vmem [#allocation3], 64
        %v5546 = vld [vmem:[%s5545] sm:$0xf]
        %v5547 = vld [vmem:[%s5545 + $0x4] sm:$0xf]
        %v5548 = vld [vmem:[%s5545 + $0x8] sm:$0xf]
        %v5549 = vld [vmem:[%s5545 + $0xc] sm:$0xf]
        %v5550 = vld [vmem:[%s5545 + $0x10] sm:$0xf]
        %v5551 = vld [vmem:[%s5545 + $0x14] sm:$0xf]
        %v5552 = vld [vmem:[%s5545 + $0x18] sm:$0xf]
        %v5553 = vld [vmem:[%s5545 + $0x1c] sm:$0xf]
        %v5554 = vld [vmem:[%s5545 + $0x20] sm:$0xf]
        %v5555 = vld [vmem:[%s5545 + $0x24] sm:$0xf]
        %v5556 = vld [vmem:[%s5545 + $0x28] sm:$0xf]
        %v5557 = vld [vmem:[%s5545 + $0x2c] sm:$0xf]
        %v5558 = vld [vmem:[%s5545 + $0x30] sm:$0xf]
        %v5559 = vld [vmem:[%s5545 + $0x34] sm:$0xf]
        %v5560 = vld [vmem:[%s5545 + $0x38] sm:$0xf]
        %v5561 = vld [vmem:[%s5545 + $0x3c] sm:$0xf]
        %v5562 = vunpack.c.l.b16 %v5174
        %v5563 = vunpack.c.l.b16 %v5184
        %v5564 = vunpack.c.l.b16 %v5198
        %v5565 = vunpack.c.l.b16 %v5208
        %v5566 = vunpack.c.l.b16 %v5222
        %v5567 = vunpack.c.l.b16 %v5232
        %v5568 = vunpack.c.l.b16 %v5246
        %v5569 = vunpack.c.l.b16 %v5256
        %v5570 = vunpack.c.l.b16 %v5270
        %v5571 = vunpack.c.l.b16 %v5280
        %v5572 = vunpack.c.l.b16 %v5294
        %v5573 = vunpack.c.l.b16 %v5304
        %v5574 = vunpack.c.l.b16 %v5318
        %v5575 = vunpack.c.l.b16 %v5328
        %v5576 = vunpack.c.l.b16 %v5342
        %v5577 = vunpack.c.l.b16 %v5352
        %v5578 = vunpack.c.l.b16 %v5366
        %v5579 = vunpack.c.l.b16 %v5376
        %v5580 = vunpack.c.l.b16 %v5390
        %v5581 = vunpack.c.l.b16 %v5400
        %v5582 = vunpack.c.l.b16 %v5414
        %v5583 = vunpack.c.l.b16 %v5424
        %v5584 = vunpack.c.l.b16 %v5438
        %v5585 = vunpack.c.l.b16 %v5448
        %v5586 = vunpack.c.l.b16 %v5462
        %v5587 = vunpack.c.l.b16 %v5472
        %v5588 = vunpack.c.l.b16 %v5486
        %v5589 = vunpack.c.l.b16 %v5496
        %v5590 = vunpack.c.l.b16 %v5510
        %v5591 = vunpack.c.l.b16 %v5520
        %v5592 = vunpack.c.l.b16 %v5534
        %v5593 = vunpack.c.l.b16 %v5544
        %v5594 = vpack.c.b16 %v5563, %v5562
        %v5595 = vpack.c.b16 %v5565, %v5564
        %v5596 = vpack.c.b16 %v5567, %v5566
        %v5597 = vpack.c.b16 %v5569, %v5568
        %v5598 = vpack.c.b16 %v5571, %v5570
        %v5599 = vpack.c.b16 %v5573, %v5572
        %v5600 = vpack.c.b16 %v5575, %v5574
        %v5601 = vpack.c.b16 %v5577, %v5576
        %v5602 = vpack.c.b16 %v5579, %v5578
        %v5603 = vpack.c.b16 %v5581, %v5580
        %v5604 = vpack.c.b16 %v5583, %v5582
        %v5605 = vpack.c.b16 %v5585, %v5584
        %v5606 = vpack.c.b16 %v5587, %v5586
        %v5607 = vpack.c.b16 %v5589, %v5588
        %v5608 = vpack.c.b16 %v5591, %v5590
        %v5609 = vpack.c.b16 %v5593, %v5592
        %v5642 = vunpack.c.l.b16 %v5546
        %v5643 = vunpack.c.l.b16 %v5547
        %v5644 = vunpack.c.l.b16 %v5548
        %v5645 = vunpack.c.l.b16 %v5549
        %v5646 = vunpack.c.l.b16 %v5550
        %v5647 = vunpack.c.l.b16 %v5551
        %v5648 = vunpack.c.l.b16 %v5552
        %v5649 = vunpack.c.l.b16 %v5553
        %v5650 = vunpack.c.l.b16 %v5554
        %v5651 = vunpack.c.l.b16 %v5555
        %v5652 = vunpack.c.l.b16 %v5556
        %v5653 = vunpack.c.l.b16 %v5557
        %v5654 = vunpack.c.l.b16 %v5558
        %v5655 = vunpack.c.l.b16 %v5559
        %v5656 = vunpack.c.l.b16 %v5560
        %v5657 = vunpack.c.l.b16 %v5561
        %v5658 = vpack.c.b16 %v5643, %v5642
        %v5659 = vpack.c.b16 %v5645, %v5644
        %v5660 = vpack.c.b16 %v5647, %v5646
        %v5661 = vpack.c.b16 %v5649, %v5648
        %v5662 = vpack.c.b16 %v5651, %v5650
        %v5663 = vpack.c.b16 %v5653, %v5652
        %v5664 = vpack.c.b16 %v5655, %v5654
        %v5665 = vpack.c.b16 %v5657, %v5656
        %5674 = vmatpush.bf16.msra.mxu0 %v5665
        %5675 = vmatpush.bf16.msra.mxu0 %v5664
        %5676 = vmatpush.bf16.msra.mxu0 %v5663
        %5677 = vmatpush.bf16.msra.mxu0 %v5662
        %5678 = vmatpush.bf16.msra.mxu0 %v5661
        %5679 = vmatpush.bf16.msra.mxu0 %v5660
        %5680 = vmatpush.bf16.msra.mxu0 %v5659
        %5681 = vmatpush.bf16.msra.mxu0 %v5658
        %5682 = vmatmul.bf16.gmra.mxu0 %v5594
        %v5683 = vpop.f32.mrf.mxu0
        %v5684 = vadd.f32 0.0, %v5683
        %v5685 = vpop.f32.mrf.mxu0
        %v5686 = vadd.f32 0.0, %v5685
        %5687 = vmatmul.bf16.gmra.mxu0 %v5595
        %v5688 = vpop.f32.mrf.mxu0
        %v5689 = vadd.f32 0.0, %v5688
        %v5690 = vpop.f32.mrf.mxu0
        %v5691 = vadd.f32 0.0, %v5690
        %5692 = vmatmul.bf16.gmra.mxu0 %v5596
        %v5693 = vpop.f32.mrf.mxu0
        %v5694 = vadd.f32 0.0, %v5693
        %v5695 = vpop.f32.mrf.mxu0
        %v5696 = vadd.f32 0.0, %v5695
        %5697 = vmatmul.bf16.gmra.mxu0 %v5597
        %v5698 = vpop.f32.mrf.mxu0
        %v5699 = vadd.f32 0.0, %v5698
        %v5700 = vpop.f32.mrf.mxu0
        %v5701 = vadd.f32 0.0, %v5700
        %5702 = vmatmul.bf16.gmra.mxu0 %v5598
        %v5703 = vpop.f32.mrf.mxu0
        %v5704 = vadd.f32 0.0, %v5703
        %v5705 = vpop.f32.mrf.mxu0
        %v5706 = vadd.f32 0.0, %v5705
        %5707 = vmatmul.bf16.gmra.mxu0 %v5599
        %v5708 = vpop.f32.mrf.mxu0
        %v5709 = vadd.f32 0.0, %v5708
        %v5710 = vpop.f32.mrf.mxu0
        %v5711 = vadd.f32 0.0, %v5710
        %5712 = vmatmul.bf16.gmra.mxu0 %v5600
        %v5713 = vpop.f32.mrf.mxu0
        %v5714 = vadd.f32 0.0, %v5713
        %v5715 = vpop.f32.mrf.mxu0
        %v5716 = vadd.f32 0.0, %v5715
        %5717 = vmatmul.bf16.gmra.mxu0 %v5601
        %v5718 = vpop.f32.mrf.mxu0
        %v5719 = vadd.f32 0.0, %v5718
        %v5720 = vpop.f32.mrf.mxu0
        %v5721 = vadd.f32 0.0, %v5720
        %5722 = vmatmul.bf16.gmra.mxu0 %v5602
        %v5723 = vpop.f32.mrf.mxu0
        %v5724 = vadd.f32 0.0, %v5723
        %v5725 = vpop.f32.mrf.mxu0
        %v5726 = vadd.f32 0.0, %v5725
        %5727 = vmatmul.bf16.gmra.mxu0 %v5603
        %v5728 = vpop.f32.mrf.mxu0
        %v5729 = vadd.f32 0.0, %v5728
        %v5730 = vpop.f32.mrf.mxu0
        %v5731 = vadd.f32 0.0, %v5730
        %5732 = vmatmul.bf16.gmra.mxu0 %v5604
        %v5733 = vpop.f32.mrf.mxu0
        %v5734 = vadd.f32 0.0, %v5733
        %v5735 = vpop.f32.mrf.mxu0
        %v5736 = vadd.f32 0.0, %v5735
        %5737 = vmatmul.bf16.gmra.mxu0 %v5605
        %v5738 = vpop.f32.mrf.mxu0
        %v5739 = vadd.f32 0.0, %v5738
        %v5740 = vpop.f32.mrf.mxu0
        %v5741 = vadd.f32 0.0, %v5740
        %5742 = vmatmul.bf16.gmra.mxu0 %v5606
        %v5743 = vpop.f32.mrf.mxu0
        %v5744 = vadd.f32 0.0, %v5743
        %v5745 = vpop.f32.mrf.mxu0
        %v5746 = vadd.f32 0.0, %v5745
        %5747 = vmatmul.bf16.gmra.mxu0 %v5607
        %v5748 = vpop.f32.mrf.mxu0
        %v5749 = vadd.f32 0.0, %v5748
        %v5750 = vpop.f32.mrf.mxu0
        %v5751 = vadd.f32 0.0, %v5750
        %5752 = vmatmul.bf16.gmra.mxu0 %v5608
        %v5753 = vpop.f32.mrf.mxu0
        %v5754 = vadd.f32 0.0, %v5753
        %v5755 = vpop.f32.mrf.mxu0
        %v5756 = vadd.f32 0.0, %v5755
        %5757 = vmatmul.bf16.gmra.mxu0 %v5609
        %v5758 = vpop.f32.mrf.mxu0
        %v5759 = vadd.f32 0.0, %v5758
        %v5760 = vpop.f32.mrf.mxu0
        %v5761 = vadd.f32 0.0, %v5760
        %5762 = vdwg.mxu0
        %v5763 = vadd.f32 %v5129, %v5684
        %v5764 = vadd.f32 %v5130, %v5686
        %v5765 = vadd.f32 %v5131, %v5689
        %v5766 = vadd.f32 %v5132, %v5691
        %v5767 = vadd.f32 %v5133, %v5694
        %v5768 = vadd.f32 %v5134, %v5696
        %v5769 = vadd.f32 %v5135, %v5699
        %v5770 = vadd.f32 %v5136, %v5701
        %v5771 = vadd.f32 %v5137, %v5704
        %v5772 = vadd.f32 %v5138, %v5706
        %v5773 = vadd.f32 %v5139, %v5709
        %v5774 = vadd.f32 %v5140, %v5711
        %v5775 = vadd.f32 %v5141, %v5714
        %v5776 = vadd.f32 %v5142, %v5716
        %v5777 = vadd.f32 %v5143, %v5719
        %v5778 = vadd.f32 %v5144, %v5721
        %v5779 = vadd.f32 %v5145, %v5724
        %v5780 = vadd.f32 %v5146, %v5726
        %v5781 = vadd.f32 %v5147, %v5729
        %v5782 = vadd.f32 %v5148, %v5731
        %v5783 = vadd.f32 %v5149, %v5734
        %v5784 = vadd.f32 %v5150, %v5736
        %v5785 = vadd.f32 %v5151, %v5739
        %v5786 = vadd.f32 %v5152, %v5741
        %v5787 = vadd.f32 %v5153, %v5744
        %v5788 = vadd.f32 %v5154, %v5746
        %v5789 = vadd.f32 %v5155, %v5749
        %v5790 = vadd.f32 %v5156, %v5751
        %v5791 = vadd.f32 %v5157, %v5754
        %v5792 = vadd.f32 %v5158, %v5756
        %v5793 = vadd.f32 %v5159, %v5759
        %v5794 = vadd.f32 %v5160, %v5761
        %v5811 = vrot.slane %v4826, 5
        %v5812 = vrot.slane %v5811, 4
        %v5813 = vrot.slane %v4827, 5
        %v5814 = vsel %vm1465, %v5812, %v5813
        %v5815 = vrot.slane %v5813, 4
        %v5816 = vrot.slane %v4828, 5
        %v5817 = vsel %vm1465, %v5815, %v5816
        %v5818 = vrot.slane %v4829, 5
        %v5819 = vrot.slane %v5818, 4
        %v5820 = vrot.slane %v4830, 5
        %v5821 = vsel %vm1465, %v5819, %v5820
        %v5822 = vrot.slane %v5820, 4
        %v5823 = vrot.slane %v4831, 5
        %v5824 = vsel %vm1465, %v5822, %v5823
        %v5825 = vrot.slane %v4832, 5
        %v5826 = vrot.slane %v5825, 4
        %v5827 = vrot.slane %v4833, 5
        %v5828 = vsel %vm1465, %v5826, %v5827
        %v5829 = vrot.slane %v5827, 4
        %v5830 = vrot.slane %v4834, 5
        %v5831 = vsel %vm1465, %v5829, %v5830
        %v5832 = vrot.slane %v4835, 5
        %v5833 = vrot.slane %v5832, 4
        %v5834 = vrot.slane %v4836, 5
        %v5835 = vsel %vm1465, %v5833, %v5834
        %v5836 = vrot.slane %v5834, 4
        %v5837 = vrot.slane %v4837, 5
        %v5838 = vsel %vm1465, %v5836, %v5837
        %v5839 = vrot.slane %v4838, 5
        %v5840 = vrot.slane %v5839, 4
        %v5841 = vrot.slane %v4839, 5
        %v5842 = vsel %vm1465, %v5840, %v5841
        %v5843 = vrot.slane %v5841, 4
        %v5844 = vrot.slane %v4840, 5
        %v5845 = vsel %vm1465, %v5843, %v5844
        %v5846 = vrot.slane %v4841, 5
        %v5847 = vrot.slane %v5846, 4
        %v5848 = vrot.slane %v4842, 5
        %v5849 = vsel %vm1465, %v5847, %v5848
        %v5850 = vrot.slane %v5848, 4
        %v5851 = vrot.slane %v4843, 5
        %v5852 = vsel %vm1465, %v5850, %v5851
        %v5853 = vrot.slane %v4844, 5
        %v5854 = vrot.slane %v5853, 4
        %v5855 = vrot.slane %v4845, 5
        %v5856 = vsel %vm1465, %v5854, %v5855
        %v5857 = vrot.slane %v5855, 4
        %v5858 = vrot.slane %v4846, 5
        %v5859 = vsel %vm1465, %v5857, %v5858
        %v5860 = vrot.slane %v4847, 5
        %v5861 = vrot.slane %v5860, 4
        %v5862 = vrot.slane %v4848, 5
        %v5863 = vsel %vm1465, %v5861, %v5862
        %v5864 = vrot.slane %v5862, 4
        %v5865 = vrot.slane %v4849, 5
        %v5866 = vsel %vm1465, %v5864, %v5865
        %v5867 = vrot.slane %v4850, 5
        %v5868 = vrot.slane %v5867, 4
        %v5869 = vrot.slane %v4851, 5
        %v5870 = vsel %vm1465, %v5868, %v5869
        %v5871 = vrot.slane %v5869, 4
        %v5872 = vrot.slane %v4852, 5
        %v5873 = vsel %vm1465, %v5871, %v5872
        %v5874 = vrot.slane %v4853, 5
        %v5875 = vrot.slane %v5874, 4
        %v5876 = vrot.slane %v4854, 5
        %v5877 = vsel %vm1465, %v5875, %v5876
        %v5878 = vrot.slane %v5876, 4
        %v5879 = vrot.slane %v4855, 5
        %v5880 = vsel %vm1465, %v5878, %v5879
        %v5881 = vrot.slane %v4856, 5
        %v5882 = vrot.slane %v5881, 4
        %v5883 = vrot.slane %v4857, 5
        %v5884 = vsel %vm1465, %v5882, %v5883
        %v5885 = vrot.slane %v5883, 4
        %v5886 = vrot.slane %v4858, 5
        %v5887 = vsel %vm1465, %v5885, %v5886
        %v5888 = vrot.slane %v4859, 5
        %v5889 = vrot.slane %v5888, 4
        %v5890 = vrot.slane %v4860, 5
        %v5891 = vsel %vm1465, %v5889, %v5890
        %v5892 = vrot.slane %v5890, 4
        %v5893 = vrot.slane %v4861, 5
        %v5894 = vsel %vm1465, %v5892, %v5893
        %v5895 = vrot.slane %v4862, 5
        %v5896 = vrot.slane %v5895, 4
        %v5897 = vrot.slane %v4863, 5
        %v5898 = vsel %vm1465, %v5896, %v5897
        %v5899 = vrot.slane %v5897, 4
        %v5900 = vrot.slane %v4864, 5
        %v5901 = vsel %vm1465, %v5899, %v5900
        %v5902 = vrot.slane %v4865, 5
        %v5903 = vrot.slane %v5902, 4
        %v5904 = vrot.slane %v4866, 5
        %v5905 = vsel %vm1465, %v5903, %v5904
        %v5906 = vrot.slane %v5904, 4
        %v5907 = vrot.slane %v4867, 5
        %v5908 = vsel %vm1465, %v5906, %v5907
        %v5909 = vrot.slane %v4868, 5
        %v5910 = vrot.slane %v5909, 4
        %v5911 = vrot.slane %v4869, 5
        %v5912 = vsel %vm1465, %v5910, %v5911
        %v5913 = vrot.slane %v5911, 4
        %v5914 = vrot.slane %v4870, 5
        %v5915 = vsel %vm1465, %v5913, %v5914
        %v5916 = vrot.slane %v4871, 5
        %v5917 = vrot.slane %v5916, 4
        %v5918 = vrot.slane %v4872, 5
        %v5919 = vsel %vm1465, %v5917, %v5918
        %v5920 = vrot.slane %v5918, 4
        %v5921 = vrot.slane %v4873, 5
        %v5922 = vsel %vm1465, %v5920, %v5921
        %s5923 = scalar_lea.vmem [#allocation3], 128
        %v5924 = vld [vmem:[%s5923] sm:$0xf]
        %v5925 = vld [vmem:[%s5923 + $0x4] sm:$0xf]
        %v5926 = vld [vmem:[%s5923 + $0x8] sm:$0xf]
        %v5927 = vld [vmem:[%s5923 + $0xc] sm:$0xf]
        %v5928 = vld [vmem:[%s5923 + $0x10] sm:$0xf]
        %v5929 = vld [vmem:[%s5923 + $0x14] sm:$0xf]
        %v5930 = vld [vmem:[%s5923 + $0x18] sm:$0xf]
        %v5931 = vld [vmem:[%s5923 + $0x1c] sm:$0xf]
        %v5932 = vld [vmem:[%s5923 + $0x20] sm:$0xf]
        %v5933 = vld [vmem:[%s5923 + $0x24] sm:$0xf]
        %v5934 = vld [vmem:[%s5923 + $0x28] sm:$0xf]
        %v5935 = vld [vmem:[%s5923 + $0x2c] sm:$0xf]
        %v5936 = vld [vmem:[%s5923 + $0x30] sm:$0xf]
        %v5937 = vld [vmem:[%s5923 + $0x34] sm:$0xf]
        %v5938 = vld [vmem:[%s5923 + $0x38] sm:$0xf]
        %v5939 = vld [vmem:[%s5923 + $0x3c] sm:$0xf]
        %v5940 = vunpack.c.l.b16 %v5814
        %v5941 = vunpack.c.l.b16 %v5817
        %v5942 = vunpack.c.l.b16 %v5821
        %v5943 = vunpack.c.l.b16 %v5824
        %v5944 = vunpack.c.l.b16 %v5828
        %v5945 = vunpack.c.l.b16 %v5831
        %v5946 = vunpack.c.l.b16 %v5835
        %v5947 = vunpack.c.l.b16 %v5838
        %v5948 = vunpack.c.l.b16 %v5842
        %v5949 = vunpack.c.l.b16 %v5845
        %v5950 = vunpack.c.l.b16 %v5849
        %v5951 = vunpack.c.l.b16 %v5852
        %v5952 = vunpack.c.l.b16 %v5856
        %v5953 = vunpack.c.l.b16 %v5859
        %v5954 = vunpack.c.l.b16 %v5863
        %v5955 = vunpack.c.l.b16 %v5866
        %v5956 = vunpack.c.l.b16 %v5870
        %v5957 = vunpack.c.l.b16 %v5873
        %v5958 = vunpack.c.l.b16 %v5877
        %v5959 = vunpack.c.l.b16 %v5880
        %v5960 = vunpack.c.l.b16 %v5884
        %v5961 = vunpack.c.l.b16 %v5887
        %v5962 = vunpack.c.l.b16 %v5891
        %v5963 = vunpack.c.l.b16 %v5894
        %v5964 = vunpack.c.l.b16 %v5898
        %v5965 = vunpack.c.l.b16 %v5901
        %v5966 = vunpack.c.l.b16 %v5905
        %v5967 = vunpack.c.l.b16 %v5908
        %v5968 = vunpack.c.l.b16 %v5912
        %v5969 = vunpack.c.l.b16 %v5915
        %v5970 = vunpack.c.l.b16 %v5919
        %v5971 = vunpack.c.l.b16 %v5922
        %v5972 = vpack.c.b16 %v5941, %v5940
        %v5973 = vpack.c.b16 %v5943, %v5942
        %v5974 = vpack.c.b16 %v5945, %v5944
        %v5975 = vpack.c.b16 %v5947, %v5946
        %v5976 = vpack.c.b16 %v5949, %v5948
        %v5977 = vpack.c.b16 %v5951, %v5950
        %v5978 = vpack.c.b16 %v5953, %v5952
        %v5979 = vpack.c.b16 %v5955, %v5954
        %v5980 = vpack.c.b16 %v5957, %v5956
        %v5981 = vpack.c.b16 %v5959, %v5958
        %v5982 = vpack.c.b16 %v5961, %v5960
        %v5983 = vpack.c.b16 %v5963, %v5962
        %v5984 = vpack.c.b16 %v5965, %v5964
        %v5985 = vpack.c.b16 %v5967, %v5966
        %v5986 = vpack.c.b16 %v5969, %v5968
        %v5987 = vpack.c.b16 %v5971, %v5970
        %v6020 = vunpack.c.l.b16 %v5924
        %v6021 = vunpack.c.l.b16 %v5925
        %v6022 = vunpack.c.l.b16 %v5926
        %v6023 = vunpack.c.l.b16 %v5927
        %v6024 = vunpack.c.l.b16 %v5928
        %v6025 = vunpack.c.l.b16 %v5929
        %v6026 = vunpack.c.l.b16 %v5930
        %v6027 = vunpack.c.l.b16 %v5931
        %v6028 = vunpack.c.l.b16 %v5932
        %v6029 = vunpack.c.l.b16 %v5933
        %v6030 = vunpack.c.l.b16 %v5934
        %v6031 = vunpack.c.l.b16 %v5935
        %v6032 = vunpack.c.l.b16 %v5936
        %v6033 = vunpack.c.l.b16 %v5937
        %v6034 = vunpack.c.l.b16 %v5938
        %v6035 = vunpack.c.l.b16 %v5939
        %v6036 = vpack.c.b16 %v6021, %v6020
        %v6037 = vpack.c.b16 %v6023, %v6022
        %v6038 = vpack.c.b16 %v6025, %v6024
        %v6039 = vpack.c.b16 %v6027, %v6026
        %v6040 = vpack.c.b16 %v6029, %v6028
        %v6041 = vpack.c.b16 %v6031, %v6030
        %v6042 = vpack.c.b16 %v6033, %v6032
        %v6043 = vpack.c.b16 %v6035, %v6034
        %6052 = vmatpush.bf16.msra.mxu0 %v6043
        %6053 = vmatpush.bf16.msra.mxu0 %v6042
        %6054 = vmatpush.bf16.msra.mxu0 %v6041
        %6055 = vmatpush.bf16.msra.mxu0 %v6040
        %6056 = vmatpush.bf16.msra.mxu0 %v6039
        %6057 = vmatpush.bf16.msra.mxu0 %v6038
        %6058 = vmatpush.bf16.msra.mxu0 %v6037
        %6059 = vmatpush.bf16.msra.mxu0 %v6036
        %6060 = vmatmul.bf16.gmra.mxu0 %v5972
        %v6061 = vpop.f32.mrf.mxu0
        %v6062 = vadd.f32 0.0, %v6061
        %v6063 = vpop.f32.mrf.mxu0
        %v6064 = vadd.f32 0.0, %v6063
        %6065 = vmatmul.bf16.gmra.mxu0 %v5973
        %v6066 = vpop.f32.mrf.mxu0
        %v6067 = vadd.f32 0.0, %v6066
        %v6068 = vpop.f32.mrf.mxu0
        %v6069 = vadd.f32 0.0, %v6068
        %6070 = vmatmul.bf16.gmra.mxu0 %v5974
        %v6071 = vpop.f32.mrf.mxu0
        %v6072 = vadd.f32 0.0, %v6071
        %v6073 = vpop.f32.mrf.mxu0
        %v6074 = vadd.f32 0.0, %v6073
        %6075 = vmatmul.bf16.gmra.mxu0 %v5975
        %v6076 = vpop.f32.mrf.mxu0
        %v6077 = vadd.f32 0.0, %v6076
        %v6078 = vpop.f32.mrf.mxu0
        %v6079 = vadd.f32 0.0, %v6078
        %6080 = vmatmul.bf16.gmra.mxu0 %v5976
        %v6081 = vpop.f32.mrf.mxu0
        %v6082 = vadd.f32 0.0, %v6081
        %v6083 = vpop.f32.mrf.mxu0
        %v6084 = vadd.f32 0.0, %v6083
        %6085 = vmatmul.bf16.gmra.mxu0 %v5977
        %v6086 = vpop.f32.mrf.mxu0
        %v6087 = vadd.f32 0.0, %v6086
        %v6088 = vpop.f32.mrf.mxu0
        %v6089 = vadd.f32 0.0, %v6088
        %6090 = vmatmul.bf16.gmra.mxu0 %v5978
        %v6091 = vpop.f32.mrf.mxu0
        %v6092 = vadd.f32 0.0, %v6091
        %v6093 = vpop.f32.mrf.mxu0
        %v6094 = vadd.f32 0.0, %v6093
        %6095 = vmatmul.bf16.gmra.mxu0 %v5979
        %v6096 = vpop.f32.mrf.mxu0
        %v6097 = vadd.f32 0.0, %v6096
        %v6098 = vpop.f32.mrf.mxu0
        %v6099 = vadd.f32 0.0, %v6098
        %6100 = vmatmul.bf16.gmra.mxu0 %v5980
        %v6101 = vpop.f32.mrf.mxu0
        %v6102 = vadd.f32 0.0, %v6101
        %v6103 = vpop.f32.mrf.mxu0
        %v6104 = vadd.f32 0.0, %v6103
        %6105 = vmatmul.bf16.gmra.mxu0 %v5981
        %v6106 = vpop.f32.mrf.mxu0
        %v6107 = vadd.f32 0.0, %v6106
        %v6108 = vpop.f32.mrf.mxu0
        %v6109 = vadd.f32 0.0, %v6108
        %6110 = vmatmul.bf16.gmra.mxu0 %v5982
        %v6111 = vpop.f32.mrf.mxu0
        %v6112 = vadd.f32 0.0, %v6111
        %v6113 = vpop.f32.mrf.mxu0
        %v6114 = vadd.f32 0.0, %v6113
        %6115 = vmatmul.bf16.gmra.mxu0 %v5983
        %v6116 = vpop.f32.mrf.mxu0
        %v6117 = vadd.f32 0.0, %v6116
        %v6118 = vpop.f32.mrf.mxu0
        %v6119 = vadd.f32 0.0, %v6118
        %6120 = vmatmul.bf16.gmra.mxu0 %v5984
        %v6121 = vpop.f32.mrf.mxu0
        %v6122 = vadd.f32 0.0, %v6121
        %v6123 = vpop.f32.mrf.mxu0
        %v6124 = vadd.f32 0.0, %v6123
        %6125 = vmatmul.bf16.gmra.mxu0 %v5985
        %v6126 = vpop.f32.mrf.mxu0
        %v6127 = vadd.f32 0.0, %v6126
        %v6128 = vpop.f32.mrf.mxu0
        %v6129 = vadd.f32 0.0, %v6128
        %6130 = vmatmul.bf16.gmra.mxu0 %v5986
        %v6131 = vpop.f32.mrf.mxu0
        %v6132 = vadd.f32 0.0, %v6131
        %v6133 = vpop.f32.mrf.mxu0
        %v6134 = vadd.f32 0.0, %v6133
        %6135 = vmatmul.bf16.gmra.mxu0 %v5987
        %v6136 = vpop.f32.mrf.mxu0
        %v6137 = vadd.f32 0.0, %v6136
        %v6138 = vpop.f32.mrf.mxu0
        %v6139 = vadd.f32 0.0, %v6138
        %6140 = vdwg.mxu0
        %v6141 = vadd.f32 %v5763, %v6062
        %v6142 = vadd.f32 %v5764, %v6064
        %v6143 = vadd.f32 %v5765, %v6067
        %v6144 = vadd.f32 %v5766, %v6069
        %v6145 = vadd.f32 %v5767, %v6072
        %v6146 = vadd.f32 %v5768, %v6074
        %v6147 = vadd.f32 %v5769, %v6077
        %v6148 = vadd.f32 %v5770, %v6079
        %v6149 = vadd.f32 %v5771, %v6082
        %v6150 = vadd.f32 %v5772, %v6084
        %v6151 = vadd.f32 %v5773, %v6087
        %v6152 = vadd.f32 %v5774, %v6089
        %v6153 = vadd.f32 %v5775, %v6092
        %v6154 = vadd.f32 %v5776, %v6094
        %v6155 = vadd.f32 %v5777, %v6097
        %v6156 = vadd.f32 %v5778, %v6099
        %v6157 = vadd.f32 %v5779, %v6102
        %v6158 = vadd.f32 %v5780, %v6104
        %v6159 = vadd.f32 %v5781, %v6107
        %v6160 = vadd.f32 %v5782, %v6109
        %v6161 = vadd.f32 %v5783, %v6112
        %v6162 = vadd.f32 %v5784, %v6114
        %v6163 = vadd.f32 %v5785, %v6117
        %v6164 = vadd.f32 %v5786, %v6119
        %v6165 = vadd.f32 %v5787, %v6122
        %v6166 = vadd.f32 %v5788, %v6124
        %v6167 = vadd.f32 %v5789, %v6127
        %v6168 = vadd.f32 %v5790, %v6129
        %v6169 = vadd.f32 %v5791, %v6132
        %v6170 = vadd.f32 %v5792, %v6134
        %v6171 = vadd.f32 %v5793, %v6137
        %v6172 = vadd.f32 %v5794, %v6139
        %s6173 = scalar_lea.vmem [#allocation3], 192
        %v6174 = vld [vmem:[%s6173] sm:$0xf]
        %v6175 = vld [vmem:[%s6173 + $0x4] sm:$0xf]
        %v6176 = vld [vmem:[%s6173 + $0x8] sm:$0xf]
        %v6177 = vld [vmem:[%s6173 + $0xc] sm:$0xf]
        %v6178 = vld [vmem:[%s6173 + $0x10] sm:$0xf]
        %v6179 = vld [vmem:[%s6173 + $0x14] sm:$0xf]
        %v6180 = vld [vmem:[%s6173 + $0x18] sm:$0xf]
        %v6181 = vld [vmem:[%s6173 + $0x1c] sm:$0xf]
        %v6182 = vld [vmem:[%s6173 + $0x20] sm:$0xf]
        %v6183 = vld [vmem:[%s6173 + $0x24] sm:$0xf]
        %v6184 = vld [vmem:[%s6173 + $0x28] sm:$0xf]
        %v6185 = vld [vmem:[%s6173 + $0x2c] sm:$0xf]
        %v6186 = vld [vmem:[%s6173 + $0x30] sm:$0xf]
        %v6187 = vld [vmem:[%s6173 + $0x34] sm:$0xf]
        %v6188 = vld [vmem:[%s6173 + $0x38] sm:$0xf]
        %v6189 = vld [vmem:[%s6173 + $0x3c] sm:$0xf]
        %v6192 = vunpack.c.l.b16 %v4874
        %v6193 = vunpack.c.l.b16 %v4875
        %v6194 = vpack.c.b16 %v6193, %v6192
        %v6212 = vunpack.c.l.b16 %v6174
        %v6213 = vunpack.c.l.b16 %v6175
        %v6214 = vunpack.c.l.b16 %v6176
        %v6215 = vunpack.c.l.b16 %v6177
        %v6216 = vunpack.c.l.b16 %v6178
        %v6217 = vunpack.c.l.b16 %v6179
        %v6218 = vunpack.c.l.b16 %v6180
        %v6219 = vunpack.c.l.b16 %v6181
        %v6220 = vunpack.c.l.b16 %v6182
        %v6221 = vunpack.c.l.b16 %v6183
        %v6222 = vunpack.c.l.b16 %v6184
        %v6223 = vunpack.c.l.b16 %v6185
        %v6224 = vunpack.c.l.b16 %v6186
        %v6225 = vunpack.c.l.b16 %v6187
        %v6226 = vunpack.c.l.b16 %v6188
        %v6227 = vunpack.c.l.b16 %v6189
        %v6228 = vpack.c.b16 %v6213, %v6212
        %v6229 = vpack.c.b16 %v6215, %v6214
        %v6230 = vpack.c.b16 %v6217, %v6216
        %v6231 = vpack.c.b16 %v6219, %v6218
        %v6232 = vpack.c.b16 %v6221, %v6220
        %v6233 = vpack.c.b16 %v6223, %v6222
        %v6234 = vpack.c.b16 %v6225, %v6224
        %v6235 = vpack.c.b16 %v6227, %v6226
        %6244 = vmatpush.bf16.msra.mxu0 %v6235
        %6245 = vmatpush.bf16.msra.mxu0 %v6234
        %6246 = vmatpush.bf16.msra.mxu0 %v6233
        %6247 = vmatpush.bf16.msra.mxu0 %v6232
        %6248 = vmatpush.bf16.msra.mxu0 %v6231
        %6249 = vmatpush.bf16.msra.mxu0 %v6230
        %6250 = vmatpush.bf16.msra.mxu0 %v6229
        %6251 = vmatpush.bf16.msra.mxu0 %v6228
        %6252 = vmatmul.bf16.gmra.mxu0 %v4961
        %v6253 = vpop.f32.mrf.mxu0
        %v6254 = vadd.f32 0.0, %v6253
        %v6255 = vpop.f32.mrf.mxu0
        %v6256 = vadd.f32 0.0, %v6255
        %6257 = vmatmul.bf16.gmra.mxu0 %v4962
        %v6258 = vpop.f32.mrf.mxu0
        %v6259 = vadd.f32 0.0, %v6258
        %v6260 = vpop.f32.mrf.mxu0
        %v6261 = vadd.f32 0.0, %v6260
        %6262 = vmatmul.bf16.gmra.mxu0 %v4963
        %v6263 = vpop.f32.mrf.mxu0
        %v6264 = vadd.f32 0.0, %v6263
        %v6265 = vpop.f32.mrf.mxu0
        %v6266 = vadd.f32 0.0, %v6265
        %6267 = vmatmul.bf16.gmra.mxu0 %v4964
        %v6268 = vpop.f32.mrf.mxu0
        %v6269 = vadd.f32 0.0, %v6268
        %v6270 = vpop.f32.mrf.mxu0
        %v6271 = vadd.f32 0.0, %v6270
        %6272 = vmatmul.bf16.gmra.mxu0 %v4965
        %v6273 = vpop.f32.mrf.mxu0
        %v6274 = vadd.f32 0.0, %v6273
        %v6275 = vpop.f32.mrf.mxu0
        %v6276 = vadd.f32 0.0, %v6275
        %6277 = vmatmul.bf16.gmra.mxu0 %v4966
        %v6278 = vpop.f32.mrf.mxu0
        %v6279 = vadd.f32 0.0, %v6278
        %v6280 = vpop.f32.mrf.mxu0
        %v6281 = vadd.f32 0.0, %v6280
        %6282 = vmatmul.bf16.gmra.mxu0 %v4967
        %v6283 = vpop.f32.mrf.mxu0
        %v6284 = vadd.f32 0.0, %v6283
        %v6285 = vpop.f32.mrf.mxu0
        %v6286 = vadd.f32 0.0, %v6285
        %6287 = vmatmul.bf16.gmra.mxu0 %v4968
        %v6288 = vpop.f32.mrf.mxu0
        %v6289 = vadd.f32 0.0, %v6288
        %v6290 = vpop.f32.mrf.mxu0
        %v6291 = vadd.f32 0.0, %v6290
        %6292 = vmatmul.bf16.gmra.mxu0 %v4969
        %v6293 = vpop.f32.mrf.mxu0
        %v6294 = vadd.f32 0.0, %v6293
        %v6295 = vpop.f32.mrf.mxu0
        %v6296 = vadd.f32 0.0, %v6295
        %6297 = vmatmul.bf16.gmra.mxu0 %v4970
        %v6298 = vpop.f32.mrf.mxu0
        %v6299 = vadd.f32 0.0, %v6298
        %v6300 = vpop.f32.mrf.mxu0
        %v6301 = vadd.f32 0.0, %v6300
        %6302 = vmatmul.bf16.gmra.mxu0 %v4971
        %v6303 = vpop.f32.mrf.mxu0
        %v6304 = vadd.f32 0.0, %v6303
        %v6305 = vpop.f32.mrf.mxu0
        %v6306 = vadd.f32 0.0, %v6305
        %6307 = vmatmul.bf16.gmra.mxu0 %v4972
        %v6308 = vpop.f32.mrf.mxu0
        %v6309 = vadd.f32 0.0, %v6308
        %v6310 = vpop.f32.mrf.mxu0
        %v6311 = vadd.f32 0.0, %v6310
        %6312 = vmatmul.bf16.gmra.mxu0 %v4973
        %v6313 = vpop.f32.mrf.mxu0
        %v6314 = vadd.f32 0.0, %v6313
        %v6315 = vpop.f32.mrf.mxu0
        %v6316 = vadd.f32 0.0, %v6315
        %6317 = vmatmul.bf16.gmra.mxu0 %v4974
        %v6318 = vpop.f32.mrf.mxu0
        %v6319 = vadd.f32 0.0, %v6318
        %v6320 = vpop.f32.mrf.mxu0
        %v6321 = vadd.f32 0.0, %v6320
        %6322 = vmatmul.bf16.gmra.mxu0 %v4975
        %v6323 = vpop.f32.mrf.mxu0
        %v6324 = vadd.f32 0.0, %v6323
        %v6325 = vpop.f32.mrf.mxu0
        %v6326 = vadd.f32 0.0, %v6325
        %6327 = vmatmul.bf16.gmra.mxu0 %v6194
        %v6328 = vpop.f32.mrf.mxu0
        %v6329 = vadd.f32 0.0, %v6328
        %v6330 = vpop.f32.mrf.mxu0
        %v6331 = vadd.f32 0.0, %v6330
        %6332 = vdwg.mxu0
        %v6333 = vadd.f32 %v6141, %v6254
        %v6334 = vadd.f32 %v6142, %v6256
        %v6335 = vadd.f32 %v6143, %v6259
        %v6336 = vadd.f32 %v6144, %v6261
        %v6337 = vadd.f32 %v6145, %v6264
        %v6338 = vadd.f32 %v6146, %v6266
        %v6339 = vadd.f32 %v6147, %v6269
        %v6340 = vadd.f32 %v6148, %v6271
        %v6341 = vadd.f32 %v6149, %v6274
        %v6342 = vadd.f32 %v6150, %v6276
        %v6343 = vadd.f32 %v6151, %v6279
        %v6344 = vadd.f32 %v6152, %v6281
        %v6345 = vadd.f32 %v6153, %v6284
        %v6346 = vadd.f32 %v6154, %v6286
        %v6347 = vadd.f32 %v6155, %v6289
        %v6348 = vadd.f32 %v6156, %v6291
        %v6349 = vadd.f32 %v6157, %v6294
        %v6350 = vadd.f32 %v6158, %v6296
        %v6351 = vadd.f32 %v6159, %v6299
        %v6352 = vadd.f32 %v6160, %v6301
        %v6353 = vadd.f32 %v6161, %v6304
        %v6354 = vadd.f32 %v6162, %v6306
        %v6355 = vadd.f32 %v6163, %v6309
        %v6356 = vadd.f32 %v6164, %v6311
        %v6357 = vadd.f32 %v6165, %v6314
        %v6358 = vadd.f32 %v6166, %v6316
        %v6359 = vadd.f32 %v6167, %v6319
        %v6360 = vadd.f32 %v6168, %v6321
        %v6361 = vadd.f32 %v6169, %v6324
        %v6362 = vadd.f32 %v6170, %v6326
        %v6363 = vadd.f32 %v6171, %v6329
        %v6364 = vadd.f32 %v6172, %v6331
        %v6366 = vshrl.u32 %v4874, 16
        %v6368 = vrot.slane %v6366, 4
        %v6369 = vshll.u32 %v4874, 16
        %v6371 = vrot.slane %v6369, 5
        %v6372 = vor.u32 %v6368, %v6371
        %v6373 = vrot.slane %v6372, 4
        %v6375 = vshll.u32 %v4875, 16
        %v6377 = vrot.slane %v6375, 5
        %v6378 = vsel %vm369, %v6373, %v6377
        %v6379 = vshrl.u32 %v4875, 16
        %v6381 = vrot.slane %v6379, 4
        %v6382 = vor.u32 %v6381, %v6377
        %v6383 = vrot.slane %v6382, 4
        %v6385 = vshll.u32 %v4876, 16
        %v6387 = vrot.slane %v6385, 5
        %v6388 = vsel %vm369, %v6383, %v6387
        %s6389 = scalar_lea.vmem [#allocation3], 256
        %v6390 = vld [vmem:[%s6389] sm:$0xf]
        %v6391 = vld [vmem:[%s6389 + $0x4] sm:$0xf]
        %v6392 = vld [vmem:[%s6389 + $0x8] sm:$0xf]
        %v6393 = vld [vmem:[%s6389 + $0xc] sm:$0xf]
        %v6394 = vld [vmem:[%s6389 + $0x10] sm:$0xf]
        %v6395 = vld [vmem:[%s6389 + $0x14] sm:$0xf]
        %v6396 = vld [vmem:[%s6389 + $0x18] sm:$0xf]
        %v6397 = vld [vmem:[%s6389 + $0x1c] sm:$0xf]
        %v6398 = vld [vmem:[%s6389 + $0x20] sm:$0xf]
        %v6399 = vld [vmem:[%s6389 + $0x24] sm:$0xf]
        %v6400 = vld [vmem:[%s6389 + $0x28] sm:$0xf]
        %v6401 = vld [vmem:[%s6389 + $0x2c] sm:$0xf]
        %v6402 = vld [vmem:[%s6389 + $0x30] sm:$0xf]
        %v6403 = vld [vmem:[%s6389 + $0x34] sm:$0xf]
        %v6404 = vld [vmem:[%s6389 + $0x38] sm:$0xf]
        %v6405 = vld [vmem:[%s6389 + $0x3c] sm:$0xf]
        %v6406 = vunpack.c.l.b16 %v6378
        %v6407 = vunpack.c.l.b16 %v6388
        %v6408 = vpack.c.b16 %v6407, %v6406
        %v6426 = vunpack.c.l.b16 %v6390
        %v6427 = vunpack.c.l.b16 %v6391
        %v6428 = vunpack.c.l.b16 %v6392
        %v6429 = vunpack.c.l.b16 %v6393
        %v6430 = vunpack.c.l.b16 %v6394
        %v6431 = vunpack.c.l.b16 %v6395
        %v6432 = vunpack.c.l.b16 %v6396
        %v6433 = vunpack.c.l.b16 %v6397
        %v6434 = vunpack.c.l.b16 %v6398
        %v6435 = vunpack.c.l.b16 %v6399
        %v6436 = vunpack.c.l.b16 %v6400
        %v6437 = vunpack.c.l.b16 %v6401
        %v6438 = vunpack.c.l.b16 %v6402
        %v6439 = vunpack.c.l.b16 %v6403
        %v6440 = vunpack.c.l.b16 %v6404
        %v6441 = vunpack.c.l.b16 %v6405
        %v6442 = vpack.c.b16 %v6427, %v6426
        %v6443 = vpack.c.b16 %v6429, %v6428
        %v6444 = vpack.c.b16 %v6431, %v6430
        %v6445 = vpack.c.b16 %v6433, %v6432
        %v6446 = vpack.c.b16 %v6435, %v6434
        %v6447 = vpack.c.b16 %v6437, %v6436
        %v6448 = vpack.c.b16 %v6439, %v6438
        %v6449 = vpack.c.b16 %v6441, %v6440
        %6458 = vmatpush.bf16.msra.mxu0 %v6449
        %6459 = vmatpush.bf16.msra.mxu0 %v6448
        %6460 = vmatpush.bf16.msra.mxu0 %v6447
        %6461 = vmatpush.bf16.msra.mxu0 %v6446
        %6462 = vmatpush.bf16.msra.mxu0 %v6445
        %6463 = vmatpush.bf16.msra.mxu0 %v6444
        %6464 = vmatpush.bf16.msra.mxu0 %v6443
        %6465 = vmatpush.bf16.msra.mxu0 %v6442
        %6466 = vmatmul.bf16.gmra.mxu0 %v5595
        %v6467 = vpop.f32.mrf.mxu0
        %v6468 = vadd.f32 0.0, %v6467
        %v6469 = vpop.f32.mrf.mxu0
        %v6470 = vadd.f32 0.0, %v6469
        %6471 = vmatmul.bf16.gmra.mxu0 %v5596
        %v6472 = vpop.f32.mrf.mxu0
        %v6473 = vadd.f32 0.0, %v6472
        %v6474 = vpop.f32.mrf.mxu0
        %v6475 = vadd.f32 0.0, %v6474
        %6476 = vmatmul.bf16.gmra.mxu0 %v5597
        %v6477 = vpop.f32.mrf.mxu0
        %v6478 = vadd.f32 0.0, %v6477
        %v6479 = vpop.f32.mrf.mxu0
        %v6480 = vadd.f32 0.0, %v6479
        %6481 = vmatmul.bf16.gmra.mxu0 %v5598
        %v6482 = vpop.f32.mrf.mxu0
        %v6483 = vadd.f32 0.0, %v6482
        %v6484 = vpop.f32.mrf.mxu0
        %v6485 = vadd.f32 0.0, %v6484
        %6486 = vmatmul.bf16.gmra.mxu0 %v5599
        %v6487 = vpop.f32.mrf.mxu0
        %v6488 = vadd.f32 0.0, %v6487
        %v6489 = vpop.f32.mrf.mxu0
        %v6490 = vadd.f32 0.0, %v6489
        %6491 = vmatmul.bf16.gmra.mxu0 %v5600
        %v6492 = vpop.f32.mrf.mxu0
        %v6493 = vadd.f32 0.0, %v6492
        %v6494 = vpop.f32.mrf.mxu0
        %v6495 = vadd.f32 0.0, %v6494
        %6496 = vmatmul.bf16.gmra.mxu0 %v5601
        %v6497 = vpop.f32.mrf.mxu0
        %v6498 = vadd.f32 0.0, %v6497
        %v6499 = vpop.f32.mrf.mxu0
        %v6500 = vadd.f32 0.0, %v6499
        %6501 = vmatmul.bf16.gmra.mxu0 %v5602
        %v6502 = vpop.f32.mrf.mxu0
        %v6503 = vadd.f32 0.0, %v6502
        %v6504 = vpop.f32.mrf.mxu0
        %v6505 = vadd.f32 0.0, %v6504
        %6506 = vmatmul.bf16.gmra.mxu0 %v5603
        %v6507 = vpop.f32.mrf.mxu0
        %v6508 = vadd.f32 0.0, %v6507
        %v6509 = vpop.f32.mrf.mxu0
        %v6510 = vadd.f32 0.0, %v6509
        %6511 = vmatmul.bf16.gmra.mxu0 %v5604
        %v6512 = vpop.f32.mrf.mxu0
        %v6513 = vadd.f32 0.0, %v6512
        %v6514 = vpop.f32.mrf.mxu0
        %v6515 = vadd.f32 0.0, %v6514
        %6516 = vmatmul.bf16.gmra.mxu0 %v5605
        %v6517 = vpop.f32.mrf.mxu0
        %v6518 = vadd.f32 0.0, %v6517
        %v6519 = vpop.f32.mrf.mxu0
        %v6520 = vadd.f32 0.0, %v6519
        %6521 = vmatmul.bf16.gmra.mxu0 %v5606
        %v6522 = vpop.f32.mrf.mxu0
        %v6523 = vadd.f32 0.0, %v6522
        %v6524 = vpop.f32.mrf.mxu0
        %v6525 = vadd.f32 0.0, %v6524
        %6526 = vmatmul.bf16.gmra.mxu0 %v5607
        %v6527 = vpop.f32.mrf.mxu0
        %v6528 = vadd.f32 0.0, %v6527
        %v6529 = vpop.f32.mrf.mxu0
        %v6530 = vadd.f32 0.0, %v6529
        %6531 = vmatmul.bf16.gmra.mxu0 %v5608
        %v6532 = vpop.f32.mrf.mxu0
        %v6533 = vadd.f32 0.0, %v6532
        %v6534 = vpop.f32.mrf.mxu0
        %v6535 = vadd.f32 0.0, %v6534
        %6536 = vmatmul.bf16.gmra.mxu0 %v5609
        %v6537 = vpop.f32.mrf.mxu0
        %v6538 = vadd.f32 0.0, %v6537
        %v6539 = vpop.f32.mrf.mxu0
        %v6540 = vadd.f32 0.0, %v6539
        %6541 = vmatmul.bf16.gmra.mxu0 %v6408
        %v6542 = vpop.f32.mrf.mxu0
        %v6543 = vadd.f32 0.0, %v6542
        %v6544 = vpop.f32.mrf.mxu0
        %v6545 = vadd.f32 0.0, %v6544
        %6546 = vdwg.mxu0
        %v6547 = vadd.f32 %v6333, %v6468
        %v6548 = vadd.f32 %v6334, %v6470
        %v6549 = vadd.f32 %v6335, %v6473
        %v6550 = vadd.f32 %v6336, %v6475
        %v6551 = vadd.f32 %v6337, %v6478
        %v6552 = vadd.f32 %v6338, %v6480
        %v6553 = vadd.f32 %v6339, %v6483
        %v6554 = vadd.f32 %v6340, %v6485
        %v6555 = vadd.f32 %v6341, %v6488
        %v6556 = vadd.f32 %v6342, %v6490
        %v6557 = vadd.f32 %v6343, %v6493
        %v6558 = vadd.f32 %v6344, %v6495
        %v6559 = vadd.f32 %v6345, %v6498
        %v6560 = vadd.f32 %v6346, %v6500
        %v6561 = vadd.f32 %v6347, %v6503
        %v6562 = vadd.f32 %v6348, %v6505
        %v6563 = vadd.f32 %v6349, %v6508
        %v6564 = vadd.f32 %v6350, %v6510
        %v6565 = vadd.f32 %v6351, %v6513
        %v6566 = vadd.f32 %v6352, %v6515
        %v6567 = vadd.f32 %v6353, %v6518
        %v6568 = vadd.f32 %v6354, %v6520
        %v6569 = vadd.f32 %v6355, %v6523
        %v6570 = vadd.f32 %v6356, %v6525
        %v6571 = vadd.f32 %v6357, %v6528
        %v6572 = vadd.f32 %v6358, %v6530
        %v6573 = vadd.f32 %v6359, %v6533
        %v6574 = vadd.f32 %v6360, %v6535
        %v6575 = vadd.f32 %v6361, %v6538
        %v6576 = vadd.f32 %v6362, %v6540
        %v6577 = vadd.f32 %v6363, %v6543
        %v6578 = vadd.f32 %v6364, %v6545
        %v6580 = vrot.slane %v4874, 5
        %v6581 = vrot.slane %v6580, 4
        %v6582 = vrot.slane %v4875, 5
        %v6583 = vsel %vm1465, %v6581, %v6582
        %v6584 = vrot.slane %v6582, 4
        %v6585 = vrot.slane %v4876, 5
        %v6586 = vsel %vm1465, %v6584, %v6585
        %s6587 = scalar_lea.vmem [#allocation3], 320
        %v6588 = vld [vmem:[%s6587] sm:$0xf]
        %v6589 = vld [vmem:[%s6587 + $0x4] sm:$0xf]
        %v6590 = vld [vmem:[%s6587 + $0x8] sm:$0xf]
        %v6591 = vld [vmem:[%s6587 + $0xc] sm:$0xf]
        %v6592 = vld [vmem:[%s6587 + $0x10] sm:$0xf]
        %v6593 = vld [vmem:[%s6587 + $0x14] sm:$0xf]
        %v6594 = vld [vmem:[%s6587 + $0x18] sm:$0xf]
        %v6595 = vld [vmem:[%s6587 + $0x1c] sm:$0xf]
        %v6596 = vld [vmem:[%s6587 + $0x20] sm:$0xf]
        %v6597 = vld [vmem:[%s6587 + $0x24] sm:$0xf]
        %v6598 = vld [vmem:[%s6587 + $0x28] sm:$0xf]
        %v6599 = vld [vmem:[%s6587 + $0x2c] sm:$0xf]
        %v6600 = vld [vmem:[%s6587 + $0x30] sm:$0xf]
        %v6601 = vld [vmem:[%s6587 + $0x34] sm:$0xf]
        %v6602 = vld [vmem:[%s6587 + $0x38] sm:$0xf]
        %v6603 = vld [vmem:[%s6587 + $0x3c] sm:$0xf]
        %v6604 = vunpack.c.l.b16 %v6583
        %v6605 = vunpack.c.l.b16 %v6586
        %v6606 = vpack.c.b16 %v6605, %v6604
        %v6624 = vunpack.c.l.b16 %v6588
        %v6625 = vunpack.c.l.b16 %v6589
        %v6626 = vunpack.c.l.b16 %v6590
        %v6627 = vunpack.c.l.b16 %v6591
        %v6628 = vunpack.c.l.b16 %v6592
        %v6629 = vunpack.c.l.b16 %v6593
        %v6630 = vunpack.c.l.b16 %v6594
        %v6631 = vunpack.c.l.b16 %v6595
        %v6632 = vunpack.c.l.b16 %v6596
        %v6633 = vunpack.c.l.b16 %v6597
        %v6634 = vunpack.c.l.b16 %v6598
        %v6635 = vunpack.c.l.b16 %v6599
        %v6636 = vunpack.c.l.b16 %v6600
        %v6637 = vunpack.c.l.b16 %v6601
        %v6638 = vunpack.c.l.b16 %v6602
        %v6639 = vunpack.c.l.b16 %v6603
        %v6640 = vpack.c.b16 %v6625, %v6624
        %v6641 = vpack.c.b16 %v6627, %v6626
        %v6642 = vpack.c.b16 %v6629, %v6628
        %v6643 = vpack.c.b16 %v6631, %v6630
        %v6644 = vpack.c.b16 %v6633, %v6632
        %v6645 = vpack.c.b16 %v6635, %v6634
        %v6646 = vpack.c.b16 %v6637, %v6636
        %v6647 = vpack.c.b16 %v6639, %v6638
        %6656 = vmatpush.bf16.msra.mxu0 %v6647
        %6657 = vmatpush.bf16.msra.mxu0 %v6646
        %6658 = vmatpush.bf16.msra.mxu0 %v6645
        %6659 = vmatpush.bf16.msra.mxu0 %v6644
        %6660 = vmatpush.bf16.msra.mxu0 %v6643
        %6661 = vmatpush.bf16.msra.mxu0 %v6642
        %6662 = vmatpush.bf16.msra.mxu0 %v6641
        %6663 = vmatpush.bf16.msra.mxu0 %v6640
        %6664 = vmatmul.bf16.gmra.mxu0 %v5973
        %v6665 = vpop.f32.mrf.mxu0
        %v6666 = vadd.f32 0.0, %v6665
        %v6667 = vpop.f32.mrf.mxu0
        %v6668 = vadd.f32 0.0, %v6667
        %6669 = vmatmul.bf16.gmra.mxu0 %v5974
        %v6670 = vpop.f32.mrf.mxu0
        %v6671 = vadd.f32 0.0, %v6670
        %v6672 = vpop.f32.mrf.mxu0
        %v6673 = vadd.f32 0.0, %v6672
        %6674 = vmatmul.bf16.gmra.mxu0 %v5975
        %v6675 = vpop.f32.mrf.mxu0
        %v6676 = vadd.f32 0.0, %v6675
        %v6677 = vpop.f32.mrf.mxu0
        %v6678 = vadd.f32 0.0, %v6677
        %6679 = vmatmul.bf16.gmra.mxu0 %v5976
        %v6680 = vpop.f32.mrf.mxu0
        %v6681 = vadd.f32 0.0, %v6680
        %v6682 = vpop.f32.mrf.mxu0
        %v6683 = vadd.f32 0.0, %v6682
        %6684 = vmatmul.bf16.gmra.mxu0 %v5977
        %v6685 = vpop.f32.mrf.mxu0
        %v6686 = vadd.f32 0.0, %v6685
        %v6687 = vpop.f32.mrf.mxu0
        %v6688 = vadd.f32 0.0, %v6687
        %6689 = vmatmul.bf16.gmra.mxu0 %v5978
        %v6690 = vpop.f32.mrf.mxu0
        %v6691 = vadd.f32 0.0, %v6690
        %v6692 = vpop.f32.mrf.mxu0
        %v6693 = vadd.f32 0.0, %v6692
        %6694 = vmatmul.bf16.gmra.mxu0 %v5979
        %v6695 = vpop.f32.mrf.mxu0
        %v6696 = vadd.f32 0.0, %v6695
        %v6697 = vpop.f32.mrf.mxu0
        %v6698 = vadd.f32 0.0, %v6697
        %6699 = vmatmul.bf16.gmra.mxu0 %v5980
        %v6700 = vpop.f32.mrf.mxu0
        %v6701 = vadd.f32 0.0, %v6700
        %v6702 = vpop.f32.mrf.mxu0
        %v6703 = vadd.f32 0.0, %v6702
        %6704 = vmatmul.bf16.gmra.mxu0 %v5981
        %v6705 = vpop.f32.mrf.mxu0
        %v6706 = vadd.f32 0.0, %v6705
        %v6707 = vpop.f32.mrf.mxu0
        %v6708 = vadd.f32 0.0, %v6707
        %6709 = vmatmul.bf16.gmra.mxu0 %v5982
        %v6710 = vpop.f32.mrf.mxu0
        %v6711 = vadd.f32 0.0, %v6710
        %v6712 = vpop.f32.mrf.mxu0
        %v6713 = vadd.f32 0.0, %v6712
        %6714 = vmatmul.bf16.gmra.mxu0 %v5983
        %v6715 = vpop.f32.mrf.mxu0
        %v6716 = vadd.f32 0.0, %v6715
        %v6717 = vpop.f32.mrf.mxu0
        %v6718 = vadd.f32 0.0, %v6717
        %6719 = vmatmul.bf16.gmra.mxu0 %v5984
        %v6720 = vpop.f32.mrf.mxu0
        %v6721 = vadd.f32 0.0, %v6720
        %v6722 = vpop.f32.mrf.mxu0
        %v6723 = vadd.f32 0.0, %v6722
        %6724 = vmatmul.bf16.gmra.mxu0 %v5985
        %v6725 = vpop.f32.mrf.mxu0
        %v6726 = vadd.f32 0.0, %v6725
        %v6727 = vpop.f32.mrf.mxu0
        %v6728 = vadd.f32 0.0, %v6727
        %6729 = vmatmul.bf16.gmra.mxu0 %v5986
        %v6730 = vpop.f32.mrf.mxu0
        %v6731 = vadd.f32 0.0, %v6730
        %v6732 = vpop.f32.mrf.mxu0
        %v6733 = vadd.f32 0.0, %v6732
        %6734 = vmatmul.bf16.gmra.mxu0 %v5987
        %v6735 = vpop.f32.mrf.mxu0
        %v6736 = vadd.f32 0.0, %v6735
        %v6737 = vpop.f32.mrf.mxu0
        %v6738 = vadd.f32 0.0, %v6737
        %6739 = vmatmul.bf16.gmra.mxu0 %v6606
        %v6740 = vpop.f32.mrf.mxu0
        %v6741 = vadd.f32 0.0, %v6740
        %v6742 = vpop.f32.mrf.mxu0
        %v6743 = vadd.f32 0.0, %v6742
        %6744 = vdwg.mxu0
        %v6745 = vadd.f32 %v6547, %v6666
        %v6746 = vadd.f32 %v6548, %v6668
        %v6747 = vadd.f32 %v6549, %v6671
        %v6748 = vadd.f32 %v6550, %v6673
        %v6749 = vadd.f32 %v6551, %v6676
        %v6750 = vadd.f32 %v6552, %v6678
        %v6751 = vadd.f32 %v6553, %v6681
        %v6752 = vadd.f32 %v6554, %v6683
        %v6753 = vadd.f32 %v6555, %v6686
        %v6754 = vadd.f32 %v6556, %v6688
        %v6755 = vadd.f32 %v6557, %v6691
        %v6756 = vadd.f32 %v6558, %v6693
        %v6757 = vadd.f32 %v6559, %v6696
        %v6758 = vadd.f32 %v6560, %v6698
        %v6759 = vadd.f32 %v6561, %v6701
        %v6760 = vadd.f32 %v6562, %v6703
        %v6761 = vadd.f32 %v6563, %v6706
        %v6762 = vadd.f32 %v6564, %v6708
        %v6763 = vadd.f32 %v6565, %v6711
        %v6764 = vadd.f32 %v6566, %v6713
        %v6765 = vadd.f32 %v6567, %v6716
        %v6766 = vadd.f32 %v6568, %v6718
        %v6767 = vadd.f32 %v6569, %v6721
        %v6768 = vadd.f32 %v6570, %v6723
        %v6769 = vadd.f32 %v6571, %v6726
        %v6770 = vadd.f32 %v6572, %v6728
        %v6771 = vadd.f32 %v6573, %v6731
        %v6772 = vadd.f32 %v6574, %v6733
        %v6773 = vadd.f32 %v6575, %v6736
        %v6774 = vadd.f32 %v6576, %v6738
        %v6775 = vadd.f32 %v6577, %v6741
        %v6776 = vadd.f32 %v6578, %v6743
        %s6777 = scalar_lea.vmem [#allocation3], 384
        %v6778 = vld [vmem:[%s6777] sm:$0xf]
        %v6779 = vld [vmem:[%s6777 + $0x4] sm:$0xf]
        %v6780 = vld [vmem:[%s6777 + $0x8] sm:$0xf]
        %v6781 = vld [vmem:[%s6777 + $0xc] sm:$0xf]
        %v6782 = vld [vmem:[%s6777 + $0x10] sm:$0xf]
        %v6783 = vld [vmem:[%s6777 + $0x14] sm:$0xf]
        %v6784 = vld [vmem:[%s6777 + $0x18] sm:$0xf]
        %v6785 = vld [vmem:[%s6777 + $0x1c] sm:$0xf]
        %v6786 = vld [vmem:[%s6777 + $0x20] sm:$0xf]
        %v6787 = vld [vmem:[%s6777 + $0x24] sm:$0xf]
        %v6788 = vld [vmem:[%s6777 + $0x28] sm:$0xf]
        %v6789 = vld [vmem:[%s6777 + $0x2c] sm:$0xf]
        %v6790 = vld [vmem:[%s6777 + $0x30] sm:$0xf]
        %v6791 = vld [vmem:[%s6777 + $0x34] sm:$0xf]
        %v6792 = vld [vmem:[%s6777 + $0x38] sm:$0xf]
        %v6793 = vld [vmem:[%s6777 + $0x3c] sm:$0xf]
        %v6796 = vunpack.c.l.b16 %v4877
        %v6797 = vunpack.c.l.b16 %v4878
        %v6798 = vpack.c.b16 %v6797, %v6796
        %v6816 = vunpack.c.l.b16 %v6778
        %v6817 = vunpack.c.l.b16 %v6779
        %v6818 = vunpack.c.l.b16 %v6780
        %v6819 = vunpack.c.l.b16 %v6781
        %v6820 = vunpack.c.l.b16 %v6782
        %v6821 = vunpack.c.l.b16 %v6783
        %v6822 = vunpack.c.l.b16 %v6784
        %v6823 = vunpack.c.l.b16 %v6785
        %v6824 = vunpack.c.l.b16 %v6786
        %v6825 = vunpack.c.l.b16 %v6787
        %v6826 = vunpack.c.l.b16 %v6788
        %v6827 = vunpack.c.l.b16 %v6789
        %v6828 = vunpack.c.l.b16 %v6790
        %v6829 = vunpack.c.l.b16 %v6791
        %v6830 = vunpack.c.l.b16 %v6792
        %v6831 = vunpack.c.l.b16 %v6793
        %v6832 = vpack.c.b16 %v6817, %v6816
        %v6833 = vpack.c.b16 %v6819, %v6818
        %v6834 = vpack.c.b16 %v6821, %v6820
        %v6835 = vpack.c.b16 %v6823, %v6822
        %v6836 = vpack.c.b16 %v6825, %v6824
        %v6837 = vpack.c.b16 %v6827, %v6826
        %v6838 = vpack.c.b16 %v6829, %v6828
        %v6839 = vpack.c.b16 %v6831, %v6830
        %6848 = vmatpush.bf16.msra.mxu0 %v6839
        %6849 = vmatpush.bf16.msra.mxu0 %v6838
        %6850 = vmatpush.bf16.msra.mxu0 %v6837
        %6851 = vmatpush.bf16.msra.mxu0 %v6836
        %6852 = vmatpush.bf16.msra.mxu0 %v6835
        %6853 = vmatpush.bf16.msra.mxu0 %v6834
        %6854 = vmatpush.bf16.msra.mxu0 %v6833
        %6855 = vmatpush.bf16.msra.mxu0 %v6832
        %6856 = vmatmul.bf16.gmra.mxu0 %v4962
        %v6857 = vpop.f32.mrf.mxu0
        %v6858 = vadd.f32 0.0, %v6857
        %v6859 = vpop.f32.mrf.mxu0
        %v6860 = vadd.f32 0.0, %v6859
        %6861 = vmatmul.bf16.gmra.mxu0 %v4963
        %v6862 = vpop.f32.mrf.mxu0
        %v6863 = vadd.f32 0.0, %v6862
        %v6864 = vpop.f32.mrf.mxu0
        %v6865 = vadd.f32 0.0, %v6864
        %6866 = vmatmul.bf16.gmra.mxu0 %v4964
        %v6867 = vpop.f32.mrf.mxu0
        %v6868 = vadd.f32 0.0, %v6867
        %v6869 = vpop.f32.mrf.mxu0
        %v6870 = vadd.f32 0.0, %v6869
        %6871 = vmatmul.bf16.gmra.mxu0 %v4965
        %v6872 = vpop.f32.mrf.mxu0
        %v6873 = vadd.f32 0.0, %v6872
        %v6874 = vpop.f32.mrf.mxu0
        %v6875 = vadd.f32 0.0, %v6874
        %6876 = vmatmul.bf16.gmra.mxu0 %v4966
        %v6877 = vpop.f32.mrf.mxu0
        %v6878 = vadd.f32 0.0, %v6877
        %v6879 = vpop.f32.mrf.mxu0
        %v6880 = vadd.f32 0.0, %v6879
        %6881 = vmatmul.bf16.gmra.mxu0 %v4967
        %v6882 = vpop.f32.mrf.mxu0
        %v6883 = vadd.f32 0.0, %v6882
        %v6884 = vpop.f32.mrf.mxu0
        %v6885 = vadd.f32 0.0, %v6884
        %6886 = vmatmul.bf16.gmra.mxu0 %v4968
        %v6887 = vpop.f32.mrf.mxu0
        %v6888 = vadd.f32 0.0, %v6887
        %v6889 = vpop.f32.mrf.mxu0
        %v6890 = vadd.f32 0.0, %v6889
        %6891 = vmatmul.bf16.gmra.mxu0 %v4969
        %v6892 = vpop.f32.mrf.mxu0
        %v6893 = vadd.f32 0.0, %v6892
        %v6894 = vpop.f32.mrf.mxu0
        %v6895 = vadd.f32 0.0, %v6894
        %6896 = vmatmul.bf16.gmra.mxu0 %v4970
        %v6897 = vpop.f32.mrf.mxu0
        %v6898 = vadd.f32 0.0, %v6897
        %v6899 = vpop.f32.mrf.mxu0
        %v6900 = vadd.f32 0.0, %v6899
        %6901 = vmatmul.bf16.gmra.mxu0 %v4971
        %v6902 = vpop.f32.mrf.mxu0
        %v6903 = vadd.f32 0.0, %v6902
        %v6904 = vpop.f32.mrf.mxu0
        %v6905 = vadd.f32 0.0, %v6904
        %6906 = vmatmul.bf16.gmra.mxu0 %v4972
        %v6907 = vpop.f32.mrf.mxu0
        %v6908 = vadd.f32 0.0, %v6907
        %v6909 = vpop.f32.mrf.mxu0
        %v6910 = vadd.f32 0.0, %v6909
        %6911 = vmatmul.bf16.gmra.mxu0 %v4973
        %v6912 = vpop.f32.mrf.mxu0
        %v6913 = vadd.f32 0.0, %v6912
        %v6914 = vpop.f32.mrf.mxu0
        %v6915 = vadd.f32 0.0, %v6914
        %6916 = vmatmul.bf16.gmra.mxu0 %v4974
        %v6917 = vpop.f32.mrf.mxu0
        %v6918 = vadd.f32 0.0, %v6917
        %v6919 = vpop.f32.mrf.mxu0
        %v6920 = vadd.f32 0.0, %v6919
        %6921 = vmatmul.bf16.gmra.mxu0 %v4975
        %v6922 = vpop.f32.mrf.mxu0
        %v6923 = vadd.f32 0.0, %v6922
        %v6924 = vpop.f32.mrf.mxu0
        %v6925 = vadd.f32 0.0, %v6924
        %6926 = vmatmul.bf16.gmra.mxu0 %v6194
        %v6927 = vpop.f32.mrf.mxu0
        %v6928 = vadd.f32 0.0, %v6927
        %v6929 = vpop.f32.mrf.mxu0
        %v6930 = vadd.f32 0.0, %v6929
        %6931 = vmatmul.bf16.gmra.mxu0 %v6798
        %v6932 = vpop.f32.mrf.mxu0
        %v6933 = vadd.f32 0.0, %v6932
        %v6934 = vpop.f32.mrf.mxu0
        %v6935 = vadd.f32 0.0, %v6934
        %6936 = vdwg.mxu0
        %v6937 = vadd.f32 %v6745, %v6858
        %v6938 = vadd.f32 %v6746, %v6860
        %v6939 = vadd.f32 %v6747, %v6863
        %v6940 = vadd.f32 %v6748, %v6865
        %v6941 = vadd.f32 %v6749, %v6868
        %v6942 = vadd.f32 %v6750, %v6870
        %v6943 = vadd.f32 %v6751, %v6873
        %v6944 = vadd.f32 %v6752, %v6875
        %v6945 = vadd.f32 %v6753, %v6878
        %v6946 = vadd.f32 %v6754, %v6880
        %v6947 = vadd.f32 %v6755, %v6883
        %v6948 = vadd.f32 %v6756, %v6885
        %v6949 = vadd.f32 %v6757, %v6888
        %v6950 = vadd.f32 %v6758, %v6890
        %v6951 = vadd.f32 %v6759, %v6893
        %v6952 = vadd.f32 %v6760, %v6895
        %v6953 = vadd.f32 %v6761, %v6898
        %v6954 = vadd.f32 %v6762, %v6900
        %v6955 = vadd.f32 %v6763, %v6903
        %v6956 = vadd.f32 %v6764, %v6905
        %v6957 = vadd.f32 %v6765, %v6908
        %v6958 = vadd.f32 %v6766, %v6910
        %v6959 = vadd.f32 %v6767, %v6913
        %v6960 = vadd.f32 %v6768, %v6915
        %v6961 = vadd.f32 %v6769, %v6918
        %v6962 = vadd.f32 %v6770, %v6920
        %v6963 = vadd.f32 %v6771, %v6923
        %v6964 = vadd.f32 %v6772, %v6925
        %v6965 = vadd.f32 %v6773, %v6928
        %v6966 = vadd.f32 %v6774, %v6930
        %v6967 = vadd.f32 %v6775, %v6933
        %v6968 = vadd.f32 %v6776, %v6935
        %v6970 = vshrl.u32 %v4877, 16
        %v6972 = vrot.slane %v6970, 4
        %v6973 = vshll.u32 %v4877, 16
        %v6975 = vrot.slane %v6973, 5
        %v6976 = vor.u32 %v6972, %v6975
        %v6977 = vrot.slane %v6976, 4
        %v6979 = vshll.u32 %v4878, 16
        %v6981 = vrot.slane %v6979, 5
        %v6982 = vsel %vm369, %v6977, %v6981
        %v6983 = vshrl.u32 %v4878, 16
        %v6985 = vrot.slane %v6983, 4
        %v6986 = vor.u32 %v6985, %v6981
        %v6987 = vrot.slane %v6986, 4
        %v6989 = vshll.u32 %v4879, 16
        %v6991 = vrot.slane %v6989, 5
        %v6992 = vsel %vm369, %v6987, %v6991
        %s6993 = scalar_lea.vmem [#allocation3], 448
        %v6994 = vld [vmem:[%s6993] sm:$0xf]
        %v6995 = vld [vmem:[%s6993 + $0x4] sm:$0xf]
        %v6996 = vld [vmem:[%s6993 + $0x8] sm:$0xf]
        %v6997 = vld [vmem:[%s6993 + $0xc] sm:$0xf]
        %v6998 = vld [vmem:[%s6993 + $0x10] sm:$0xf]
        %v6999 = vld [vmem:[%s6993 + $0x14] sm:$0xf]
        %v7000 = vld [vmem:[%s6993 + $0x18] sm:$0xf]
        %v7001 = vld [vmem:[%s6993 + $0x1c] sm:$0xf]
        %v7002 = vld [vmem:[%s6993 + $0x20] sm:$0xf]
        %v7003 = vld [vmem:[%s6993 + $0x24] sm:$0xf]
        %v7004 = vld [vmem:[%s6993 + $0x28] sm:$0xf]
        %v7005 = vld [vmem:[%s6993 + $0x2c] sm:$0xf]
        %v7006 = vld [vmem:[%s6993 + $0x30] sm:$0xf]
        %v7007 = vld [vmem:[%s6993 + $0x34] sm:$0xf]
        %v7008 = vld [vmem:[%s6993 + $0x38] sm:$0xf]
        %v7009 = vld [vmem:[%s6993 + $0x3c] sm:$0xf]
        %v7010 = vunpack.c.l.b16 %v6982
        %v7011 = vunpack.c.l.b16 %v6992
        %v7012 = vpack.c.b16 %v7011, %v7010
        %v7030 = vunpack.c.l.b16 %v6994
        %v7031 = vunpack.c.l.b16 %v6995
        %v7032 = vunpack.c.l.b16 %v6996
        %v7033 = vunpack.c.l.b16 %v6997
        %v7034 = vunpack.c.l.b16 %v6998
        %v7035 = vunpack.c.l.b16 %v6999
        %v7036 = vunpack.c.l.b16 %v7000
        %v7037 = vunpack.c.l.b16 %v7001
        %v7038 = vunpack.c.l.b16 %v7002
        %v7039 = vunpack.c.l.b16 %v7003
        %v7040 = vunpack.c.l.b16 %v7004
        %v7041 = vunpack.c.l.b16 %v7005
        %v7042 = vunpack.c.l.b16 %v7006
        %v7043 = vunpack.c.l.b16 %v7007
        %v7044 = vunpack.c.l.b16 %v7008
        %v7045 = vunpack.c.l.b16 %v7009
        %v7046 = vpack.c.b16 %v7031, %v7030
        %v7047 = vpack.c.b16 %v7033, %v7032
        %v7048 = vpack.c.b16 %v7035, %v7034
        %v7049 = vpack.c.b16 %v7037, %v7036
        %v7050 = vpack.c.b16 %v7039, %v7038
        %v7051 = vpack.c.b16 %v7041, %v7040
        %v7052 = vpack.c.b16 %v7043, %v7042
        %v7053 = vpack.c.b16 %v7045, %v7044
        %7062 = vmatpush.bf16.msra.mxu0 %v7053
        %7063 = vmatpush.bf16.msra.mxu0 %v7052
        %7064 = vmatpush.bf16.msra.mxu0 %v7051
        %7065 = vmatpush.bf16.msra.mxu0 %v7050
        %7066 = vmatpush.bf16.msra.mxu0 %v7049
        %7067 = vmatpush.bf16.msra.mxu0 %v7048
        %7068 = vmatpush.bf16.msra.mxu0 %v7047
        %7069 = vmatpush.bf16.msra.mxu0 %v7046
        %7070 = vmatmul.bf16.gmra.mxu0 %v5596
        %v7071 = vpop.f32.mrf.mxu0
        %v7072 = vadd.f32 0.0, %v7071
        %v7073 = vpop.f32.mrf.mxu0
        %v7074 = vadd.f32 0.0, %v7073
        %7075 = vmatmul.bf16.gmra.mxu0 %v5597
        %v7076 = vpop.f32.mrf.mxu0
        %v7077 = vadd.f32 0.0, %v7076
        %v7078 = vpop.f32.mrf.mxu0
        %v7079 = vadd.f32 0.0, %v7078
        %7080 = vmatmul.bf16.gmra.mxu0 %v5598
        %v7081 = vpop.f32.mrf.mxu0
        %v7082 = vadd.f32 0.0, %v7081
        %v7083 = vpop.f32.mrf.mxu0
        %v7084 = vadd.f32 0.0, %v7083
        %7085 = vmatmul.bf16.gmra.mxu0 %v5599
        %v7086 = vpop.f32.mrf.mxu0
        %v7087 = vadd.f32 0.0, %v7086
        %v7088 = vpop.f32.mrf.mxu0
        %v7089 = vadd.f32 0.0, %v7088
        %7090 = vmatmul.bf16.gmra.mxu0 %v5600
        %v7091 = vpop.f32.mrf.mxu0
        %v7092 = vadd.f32 0.0, %v7091
        %v7093 = vpop.f32.mrf.mxu0
        %v7094 = vadd.f32 0.0, %v7093
        %7095 = vmatmul.bf16.gmra.mxu0 %v5601
        %v7096 = vpop.f32.mrf.mxu0
        %v7097 = vadd.f32 0.0, %v7096
        %v7098 = vpop.f32.mrf.mxu0
        %v7099 = vadd.f32 0.0, %v7098
        %7100 = vmatmul.bf16.gmra.mxu0 %v5602
        %v7101 = vpop.f32.mrf.mxu0
        %v7102 = vadd.f32 0.0, %v7101
        %v7103 = vpop.f32.mrf.mxu0
        %v7104 = vadd.f32 0.0, %v7103
        %7105 = vmatmul.bf16.gmra.mxu0 %v5603
        %v7106 = vpop.f32.mrf.mxu0
        %v7107 = vadd.f32 0.0, %v7106
        %v7108 = vpop.f32.mrf.mxu0
        %v7109 = vadd.f32 0.0, %v7108
        %7110 = vmatmul.bf16.gmra.mxu0 %v5604
        %v7111 = vpop.f32.mrf.mxu0
        %v7112 = vadd.f32 0.0, %v7111
        %v7113 = vpop.f32.mrf.mxu0
        %v7114 = vadd.f32 0.0, %v7113
        %7115 = vmatmul.bf16.gmra.mxu0 %v5605
        %v7116 = vpop.f32.mrf.mxu0
        %v7117 = vadd.f32 0.0, %v7116
        %v7118 = vpop.f32.mrf.mxu0
        %v7119 = vadd.f32 0.0, %v7118
        %7120 = vmatmul.bf16.gmra.mxu0 %v5606
        %v7121 = vpop.f32.mrf.mxu0
        %v7122 = vadd.f32 0.0, %v7121
        %v7123 = vpop.f32.mrf.mxu0
        %v7124 = vadd.f32 0.0, %v7123
        %7125 = vmatmul.bf16.gmra.mxu0 %v5607
        %v7126 = vpop.f32.mrf.mxu0
        %v7127 = vadd.f32 0.0, %v7126
        %v7128 = vpop.f32.mrf.mxu0
        %v7129 = vadd.f32 0.0, %v7128
        %7130 = vmatmul.bf16.gmra.mxu0 %v5608
        %v7131 = vpop.f32.mrf.mxu0
        %v7132 = vadd.f32 0.0, %v7131
        %v7133 = vpop.f32.mrf.mxu0
        %v7134 = vadd.f32 0.0, %v7133
        %7135 = vmatmul.bf16.gmra.mxu0 %v5609
        %v7136 = vpop.f32.mrf.mxu0
        %v7137 = vadd.f32 0.0, %v7136
        %v7138 = vpop.f32.mrf.mxu0
        %v7139 = vadd.f32 0.0, %v7138
        %7140 = vmatmul.bf16.gmra.mxu0 %v6408
        %v7141 = vpop.f32.mrf.mxu0
        %v7142 = vadd.f32 0.0, %v7141
        %v7143 = vpop.f32.mrf.mxu0
        %v7144 = vadd.f32 0.0, %v7143
        %7145 = vmatmul.bf16.gmra.mxu0 %v7012
        %v7146 = vpop.f32.mrf.mxu0
        %v7147 = vadd.f32 0.0, %v7146
        %v7148 = vpop.f32.mrf.mxu0
        %v7149 = vadd.f32 0.0, %v7148
        %7150 = vdwg.mxu0
        %v7151 = vadd.f32 %v6937, %v7072
        %v7152 = vadd.f32 %v6938, %v7074
        %v7153 = vadd.f32 %v6939, %v7077
        %v7154 = vadd.f32 %v6940, %v7079
        %v7155 = vadd.f32 %v6941, %v7082
        %v7156 = vadd.f32 %v6942, %v7084
        %v7157 = vadd.f32 %v6943, %v7087
        %v7158 = vadd.f32 %v6944, %v7089
        %v7159 = vadd.f32 %v6945, %v7092
        %v7160 = vadd.f32 %v6946, %v7094
        %v7161 = vadd.f32 %v6947, %v7097
        %v7162 = vadd.f32 %v6948, %v7099
        %v7163 = vadd.f32 %v6949, %v7102
        %v7164 = vadd.f32 %v6950, %v7104
        %v7165 = vadd.f32 %v6951, %v7107
        %v7166 = vadd.f32 %v6952, %v7109
        %v7167 = vadd.f32 %v6953, %v7112
        %v7168 = vadd.f32 %v6954, %v7114
        %v7169 = vadd.f32 %v6955, %v7117
        %v7170 = vadd.f32 %v6956, %v7119
        %v7171 = vadd.f32 %v6957, %v7122
        %v7172 = vadd.f32 %v6958, %v7124
        %v7173 = vadd.f32 %v6959, %v7127
        %v7174 = vadd.f32 %v6960, %v7129
        %v7175 = vadd.f32 %v6961, %v7132
        %v7176 = vadd.f32 %v6962, %v7134
        %v7177 = vadd.f32 %v6963, %v7137
        %v7178 = vadd.f32 %v6964, %v7139
        %v7179 = vadd.f32 %v6965, %v7142
        %v7180 = vadd.f32 %v6966, %v7144
        %v7181 = vadd.f32 %v6967, %v7147
        %v7182 = vadd.f32 %v6968, %v7149
        %v7184 = vrot.slane %v4877, 5
        %v7185 = vrot.slane %v7184, 4
        %v7186 = vrot.slane %v4878, 5
        %v7187 = vsel %vm1465, %v7185, %v7186
        %v7188 = vrot.slane %v7186, 4
        %v7189 = vrot.slane %v4879, 5
        %v7190 = vsel %vm1465, %v7188, %v7189
        %s7191 = scalar_lea.vmem [#allocation3], 512
        %v7192 = vld [vmem:[%s7191] sm:$0xf]
        %v7193 = vld [vmem:[%s7191 + $0x4] sm:$0xf]
        %v7194 = vld [vmem:[%s7191 + $0x8] sm:$0xf]
        %v7195 = vld [vmem:[%s7191 + $0xc] sm:$0xf]
        %v7196 = vld [vmem:[%s7191 + $0x10] sm:$0xf]
        %v7197 = vld [vmem:[%s7191 + $0x14] sm:$0xf]
        %v7198 = vld [vmem:[%s7191 + $0x18] sm:$0xf]
        %v7199 = vld [vmem:[%s7191 + $0x1c] sm:$0xf]
        %v7200 = vld [vmem:[%s7191 + $0x20] sm:$0xf]
        %v7201 = vld [vmem:[%s7191 + $0x24] sm:$0xf]
        %v7202 = vld [vmem:[%s7191 + $0x28] sm:$0xf]
        %v7203 = vld [vmem:[%s7191 + $0x2c] sm:$0xf]
        %v7204 = vld [vmem:[%s7191 + $0x30] sm:$0xf]
        %v7205 = vld [vmem:[%s7191 + $0x34] sm:$0xf]
        %v7206 = vld [vmem:[%s7191 + $0x38] sm:$0xf]
        %v7207 = vld [vmem:[%s7191 + $0x3c] sm:$0xf]
        %v7208 = vunpack.c.l.b16 %v7187
        %v7209 = vunpack.c.l.b16 %v7190
        %v7210 = vpack.c.b16 %v7209, %v7208
        %v7228 = vunpack.c.l.b16 %v7192
        %v7229 = vunpack.c.l.b16 %v7193
        %v7230 = vunpack.c.l.b16 %v7194
        %v7231 = vunpack.c.l.b16 %v7195
        %v7232 = vunpack.c.l.b16 %v7196
        %v7233 = vunpack.c.l.b16 %v7197
        %v7234 = vunpack.c.l.b16 %v7198
        %v7235 = vunpack.c.l.b16 %v7199
        %v7236 = vunpack.c.l.b16 %v7200
        %v7237 = vunpack.c.l.b16 %v7201
        %v7238 = vunpack.c.l.b16 %v7202
        %v7239 = vunpack.c.l.b16 %v7203
        %v7240 = vunpack.c.l.b16 %v7204
        %v7241 = vunpack.c.l.b16 %v7205
        %v7242 = vunpack.c.l.b16 %v7206
        %v7243 = vunpack.c.l.b16 %v7207
        %v7244 = vpack.c.b16 %v7229, %v7228
        %v7245 = vpack.c.b16 %v7231, %v7230
        %v7246 = vpack.c.b16 %v7233, %v7232
        %v7247 = vpack.c.b16 %v7235, %v7234
        %v7248 = vpack.c.b16 %v7237, %v7236
        %v7249 = vpack.c.b16 %v7239, %v7238
        %v7250 = vpack.c.b16 %v7241, %v7240
        %v7251 = vpack.c.b16 %v7243, %v7242
        %7260 = vmatpush.bf16.msra.mxu0 %v7251
        %7261 = vmatpush.bf16.msra.mxu0 %v7250
        %7262 = vmatpush.bf16.msra.mxu0 %v7249
        %7263 = vmatpush.bf16.msra.mxu0 %v7248
        %7264 = vmatpush.bf16.msra.mxu0 %v7247
        %7265 = vmatpush.bf16.msra.mxu0 %v7246
        %7266 = vmatpush.bf16.msra.mxu0 %v7245
        %7267 = vmatpush.bf16.msra.mxu0 %v7244
        %7268 = vmatmul.bf16.gmra.mxu0 %v5974
        %v7269 = vpop.f32.mrf.mxu0
        %v7270 = vadd.f32 0.0, %v7269
        %v7271 = vpop.f32.mrf.mxu0
        %v7272 = vadd.f32 0.0, %v7271
        %7273 = vmatmul.bf16.gmra.mxu0 %v5975
        %v7274 = vpop.f32.mrf.mxu0
        %v7275 = vadd.f32 0.0, %v7274
        %v7276 = vpop.f32.mrf.mxu0
        %v7277 = vadd.f32 0.0, %v7276
        %7278 = vmatmul.bf16.gmra.mxu0 %v5976
        %v7279 = vpop.f32.mrf.mxu0
        %v7280 = vadd.f32 0.0, %v7279
        %v7281 = vpop.f32.mrf.mxu0
        %v7282 = vadd.f32 0.0, %v7281
        %7283 = vmatmul.bf16.gmra.mxu0 %v5977
        %v7284 = vpop.f32.mrf.mxu0
        %v7285 = vadd.f32 0.0, %v7284
        %v7286 = vpop.f32.mrf.mxu0
        %v7287 = vadd.f32 0.0, %v7286
        %7288 = vmatmul.bf16.gmra.mxu0 %v5978
        %v7289 = vpop.f32.mrf.mxu0
        %v7290 = vadd.f32 0.0, %v7289
        %v7291 = vpop.f32.mrf.mxu0
        %v7292 = vadd.f32 0.0, %v7291
        %7293 = vmatmul.bf16.gmra.mxu0 %v5979
        %v7294 = vpop.f32.mrf.mxu0
        %v7295 = vadd.f32 0.0, %v7294
        %v7296 = vpop.f32.mrf.mxu0
        %v7297 = vadd.f32 0.0, %v7296
        %7298 = vmatmul.bf16.gmra.mxu0 %v5980
        %v7299 = vpop.f32.mrf.mxu0
        %v7300 = vadd.f32 0.0, %v7299
        %v7301 = vpop.f32.mrf.mxu0
        %v7302 = vadd.f32 0.0, %v7301
        %7303 = vmatmul.bf16.gmra.mxu0 %v5981
        %v7304 = vpop.f32.mrf.mxu0
        %v7305 = vadd.f32 0.0, %v7304
        %v7306 = vpop.f32.mrf.mxu0
        %v7307 = vadd.f32 0.0, %v7306
        %7308 = vmatmul.bf16.gmra.mxu0 %v5982
        %v7309 = vpop.f32.mrf.mxu0
        %v7310 = vadd.f32 0.0, %v7309
        %v7311 = vpop.f32.mrf.mxu0
        %v7312 = vadd.f32 0.0, %v7311
        %7313 = vmatmul.bf16.gmra.mxu0 %v5983
        %v7314 = vpop.f32.mrf.mxu0
        %v7315 = vadd.f32 0.0, %v7314
        %v7316 = vpop.f32.mrf.mxu0
        %v7317 = vadd.f32 0.0, %v7316
        %7318 = vmatmul.bf16.gmra.mxu0 %v5984
        %v7319 = vpop.f32.mrf.mxu0
        %v7320 = vadd.f32 0.0, %v7319
        %v7321 = vpop.f32.mrf.mxu0
        %v7322 = vadd.f32 0.0, %v7321
        %7323 = vmatmul.bf16.gmra.mxu0 %v5985
        %v7324 = vpop.f32.mrf.mxu0
        %v7325 = vadd.f32 0.0, %v7324
        %v7326 = vpop.f32.mrf.mxu0
        %v7327 = vadd.f32 0.0, %v7326
        %7328 = vmatmul.bf16.gmra.mxu0 %v5986
        %v7329 = vpop.f32.mrf.mxu0
        %v7330 = vadd.f32 0.0, %v7329
        %v7331 = vpop.f32.mrf.mxu0
        %v7332 = vadd.f32 0.0, %v7331
        %7333 = vmatmul.bf16.gmra.mxu0 %v5987
        %v7334 = vpop.f32.mrf.mxu0
        %v7335 = vadd.f32 0.0, %v7334
        %v7336 = vpop.f32.mrf.mxu0
        %v7337 = vadd.f32 0.0, %v7336
        %7338 = vmatmul.bf16.gmra.mxu0 %v6606
        %v7339 = vpop.f32.mrf.mxu0
        %v7340 = vadd.f32 0.0, %v7339
        %v7341 = vpop.f32.mrf.mxu0
        %v7342 = vadd.f32 0.0, %v7341
        %7343 = vmatmul.bf16.gmra.mxu0 %v7210
        %v7344 = vpop.f32.mrf.mxu0
        %v7345 = vadd.f32 0.0, %v7344
        %v7346 = vpop.f32.mrf.mxu0
        %v7347 = vadd.f32 0.0, %v7346
        %7348 = vdwg.mxu0
        %v7349 = vadd.f32 %v7151, %v7270
        %v7350 = vadd.f32 %v7152, %v7272
        %v7351 = vadd.f32 %v7153, %v7275
        %v7352 = vadd.f32 %v7154, %v7277
        %v7353 = vadd.f32 %v7155, %v7280
        %v7354 = vadd.f32 %v7156, %v7282
        %v7355 = vadd.f32 %v7157, %v7285
        %v7356 = vadd.f32 %v7158, %v7287
        %v7357 = vadd.f32 %v7159, %v7290
        %v7358 = vadd.f32 %v7160, %v7292
        %v7359 = vadd.f32 %v7161, %v7295
        %v7360 = vadd.f32 %v7162, %v7297
        %v7361 = vadd.f32 %v7163, %v7300
        %v7362 = vadd.f32 %v7164, %v7302
        %v7363 = vadd.f32 %v7165, %v7305
        %v7364 = vadd.f32 %v7166, %v7307
        %v7365 = vadd.f32 %v7167, %v7310
        %v7366 = vadd.f32 %v7168, %v7312
        %v7367 = vadd.f32 %v7169, %v7315
        %v7368 = vadd.f32 %v7170, %v7317
        %v7369 = vadd.f32 %v7171, %v7320
        %v7370 = vadd.f32 %v7172, %v7322
        %v7371 = vadd.f32 %v7173, %v7325
        %v7372 = vadd.f32 %v7174, %v7327
        %v7373 = vadd.f32 %v7175, %v7330
        %v7374 = vadd.f32 %v7176, %v7332
        %v7375 = vadd.f32 %v7177, %v7335
        %v7376 = vadd.f32 %v7178, %v7337
        %v7377 = vadd.f32 %v7179, %v7340
        %v7378 = vadd.f32 %v7180, %v7342
        %v7379 = vadd.f32 %v7181, %v7345
        %v7380 = vadd.f32 %v7182, %v7347
        %v7381 = vadd.f32 %v7349, %v7350
        %v7382 = vadd.f32 %v7381, %v7351
        %v7383 = vadd.f32 %v7382, %v7352
        %v7384 = vadd.f32 %v7383, %v7353
        %v7385 = vadd.f32 %v7384, %v7354
        %v7386 = vadd.f32 %v7385, %v7355
        %v7387 = vadd.f32 %v7386, %v7356
        %v7388 = vadd.f32 %v7387, %v7357
        %v7389 = vadd.f32 %v7388, %v7358
        %v7390 = vadd.f32 %v7389, %v7359
        %v7391 = vadd.f32 %v7390, %v7360
        %v7392 = vadd.f32 %v7391, %v7361
        %v7393 = vadd.f32 %v7392, %v7362
        %v7394 = vadd.f32 %v7393, %v7363
        %v7395 = vadd.f32 %v7394, %v7364
        %v7396 = vadd.f32 %v7395, %v7365
        %v7397 = vadd.f32 %v7396, %v7366
        %v7398 = vadd.f32 %v7397, %v7367
        %v7399 = vadd.f32 %v7398, %v7368
        %v7400 = vadd.f32 %v7399, %v7369
        %v7401 = vadd.f32 %v7400, %v7370
        %v7402 = vadd.f32 %v7401, %v7371
        %v7403 = vadd.f32 %v7402, %v7372
        %v7404 = vadd.f32 %v7403, %v7373
        %v7405 = vadd.f32 %v7404, %v7374
        %v7406 = vadd.f32 %v7405, %v7375
        %v7407 = vadd.f32 %v7406, %v7376
        %v7408 = vadd.f32 %v7407, %v7377
        %v7409 = vadd.f32 %v7408, %v7378
        %v7410 = vadd.f32 %v7409, %v7379
        %v7411 = vadd.f32 %v7410, %v7380
        %v7412 = vrot.slane %v7411, 4
        %v7413 = vadd.f32 %v7411, %v7412
        %v7414 = vrot.slane %v7413, 2
        %v7415 = vadd.f32 %v7413, %v7414
        %v7416 = vrot.slane %v7415, 1
        %v7417 = vadd.f32 %v7415, %v7416
        %v7418 = vmul.f32 %v7417, 0.00390625
        %v7419 = vld [vmem:[%s3] sm:$0xff]
        %v7420 = vld [vmem:[%s3 + $0x8] sm:$0xff]
        %v7421 = vld [vmem:[%s3 + $0x10] sm:$0xff]
        %v7422 = vld [vmem:[%s3 + $0x18] sm:$0xff]
        %v7423 = vld [vmem:[%s3 + $0x20] sm:$0xff]
        %v7424 = vld [vmem:[%s3 + $0x28] sm:$0xff]
        %v7425 = vld [vmem:[%s3 + $0x30] sm:$0xff]
        %v7426 = vld [vmem:[%s3 + $0x38] sm:$0xff]
        %v7427 = vld [vmem:[%s3 + $0x40] sm:$0xff]
        %v7428 = vld [vmem:[%s3 + $0x48] sm:$0xff]
        %v7429 = vld [vmem:[%s3 + $0x50] sm:$0xff]
        %v7430 = vld [vmem:[%s3 + $0x58] sm:$0xff]
        %v7431 = vld [vmem:[%s3 + $0x60] sm:$0xff]
        %v7432 = vld [vmem:[%s3 + $0x68] sm:$0xff]
        %v7433 = vld [vmem:[%s3 + $0x70] sm:$0xff]
        %v7434 = vld [vmem:[%s3 + $0x78] sm:$0xff]
        %v7435 = vld [vmem:[%s4] sm:$0x1]
        %v7437 = vperm.slane %v7435, 0
        %7439 = vmatpush.msra.mxu0 %v7434
        %7440 = vmatpush.msra.mxu0 %v7433
        %7441 = vmatpush.msra.mxu0 %v7432
        %7442 = vmatpush.msra.mxu0 %v7431
        %7443 = vmatpush.msra.mxu0 %v7430
        %7444 = vmatpush.msra.mxu0 %v7429
        %7445 = vmatpush.msra.mxu0 %v7428
        %7446 = vmatpush.msra.mxu0 %v7427
        %7447 = vmatpush.msra.mxu0 %v7426
        %7448 = vmatpush.msra.mxu0 %v7425
        %7449 = vmatpush.msra.mxu0 %v7424
        %7450 = vmatpush.msra.mxu0 %v7423
        %7451 = vmatpush.msra.mxu0 %v7422
        %7452 = vmatpush.msra.mxu0 %v7421
        %7453 = vmatpush.msra.mxu0 %v7420
        %7454 = vmatpush.msra.mxu0 %v7419
        %7455 = vmatmul.f32.gmra.mxu0 %v7418
        %v7456 = vpop.f32.mrf.mxu0
        %v7457 = vadd.f32 %v7437, %v7456
        %7458 = vdwg.mxu0
        %v7459 = vmax.f32 %v7457, 0.0
        %v7460 = vld [vmem:[%s5] sm:$0xff]
        %v7461 = vld [vmem:[%s5 + $0x8] sm:$0xff]
        %v7462 = vld [vmem:[%s5 + $0x10] sm:$0xff]
        %v7463 = vld [vmem:[%s5 + $0x18] sm:$0xff]
        %v7464 = vld [vmem:[%s5 + $0x20] sm:$0xff]
        %v7465 = vld [vmem:[%s5 + $0x28] sm:$0xff]
        %v7466 = vld [vmem:[%s5 + $0x30] sm:$0xff]
        %v7467 = vld [vmem:[%s5 + $0x38] sm:$0xff]
        %v7468 = vld [vmem:[%s5 + $0x40] sm:$0xff]
        %v7469 = vld [vmem:[%s5 + $0x48] sm:$0xff]
        %v7470 = vld [vmem:[%s5 + $0x50] sm:$0xff]
        %v7471 = vld [vmem:[%s5 + $0x58] sm:$0xff]
        %v7472 = vld [vmem:[%s5 + $0x60] sm:$0xff]
        %v7473 = vld [vmem:[%s5 + $0x68] sm:$0xff]
        %v7474 = vld [vmem:[%s5 + $0x70] sm:$0xff]
        %v7475 = vld [vmem:[%s5 + $0x78] sm:$0xff]
        %v7476 = vld [vmem:[%s6] sm:$0x1]
        %v7478 = vperm.slane %v7476, 0
        %7480 = vmatpush.msra.mxu0 %v7475
        %7481 = vmatpush.msra.mxu0 %v7474
        %7482 = vmatpush.msra.mxu0 %v7473
        %7483 = vmatpush.msra.mxu0 %v7472
        %7484 = vmatpush.msra.mxu0 %v7471
        %7485 = vmatpush.msra.mxu0 %v7470
        %7486 = vmatpush.msra.mxu0 %v7469
        %7487 = vmatpush.msra.mxu0 %v7468
        %7488 = vmatpush.msra.mxu0 %v7467
        %7489 = vmatpush.msra.mxu0 %v7466
        %7490 = vmatpush.msra.mxu0 %v7465
        %7491 = vmatpush.msra.mxu0 %v7464
        %7492 = vmatpush.msra.mxu0 %v7463
        %7493 = vmatpush.msra.mxu0 %v7462
        %7494 = vmatpush.msra.mxu0 %v7461
        %7495 = vmatpush.msra.mxu0 %v7460
        %7496 = vmatmul.f32.gmra.mxu0 %v7459
        %v7497 = vpop.f32.mrf.mxu0
        %v7498 = vadd.f32 %v7478, %v7497
        %7499 = vdwg.mxu0
        %v7500 = vxor.u32 %v7498, 2147483648
        %v7501 = vmul.f32 %v7500, 1.442695
        %v7502 = vpow.pop %v7501
        %v7503 = vadd.f32 %v7502, 1.0
        %v7504 = vrcp.pop %v7503
        %v7505 = vmul.f32 %v7503, %v7504
        %v7506 = vsub.f32 1.0, %v7505
        %v7507 = vmul.f32 %v7504, %v7506
        %v7508 = vadd.f32 %v7504, %v7507
        %vm7509 = vweird.f32 %v7503
        %vm7510 = vweird.f32 %v7504
        %vm7511 = vmor %vm7509, %vm7510
        %v7512 = vsel %vm7511, %v7504, %v7508
        %v7513 = vand.u32 2147483647, %v7503
        %vm7514 = vcmp.eq.f32.partialorder %v7513, 8.507059e+37
        %v7515 = vand.u32 %v7503, 2147483648
        %v7516 = vor.u32 1.1754944e-38, %v7515
        %v7517 = vsel %vm7514, %v7516, %v7512
        %v7518 = vmul.f32 1.0, %v7517
        %v7519 = vunpack.c.l.bf16 %v407
        %v7520 = vunpack.c.l.bf16 %v417
        %v7521 = vunpack.c.l.bf16 %v431
        %v7522 = vunpack.c.l.bf16 %v441
        %v7523 = vunpack.c.l.bf16 %v455
        %v7524 = vunpack.c.l.bf16 %v465
        %v7525 = vunpack.c.l.bf16 %v479
        %v7526 = vunpack.c.l.bf16 %v489
        %v7527 = vunpack.c.l.bf16 %v503
        %v7528 = vunpack.c.l.bf16 %v513
        %v7529 = vunpack.c.l.bf16 %v527
        %v7530 = vunpack.c.l.bf16 %v537
        %v7531 = vunpack.c.l.bf16 %v551
        %v7532 = vunpack.c.l.bf16 %v561
        %v7533 = vunpack.c.l.bf16 %v575
        %v7534 = vunpack.c.l.bf16 %v585
        %v7535 = vunpack.c.l.bf16 %v599
        %v7536 = vunpack.c.l.bf16 %v609
        %v7537 = vunpack.c.l.bf16 %v623
        %v7538 = vunpack.c.l.bf16 %v633
        %v7539 = vunpack.c.l.bf16 %v647
        %v7540 = vunpack.c.l.bf16 %v657
        %v7541 = vunpack.c.l.bf16 %v671
        %v7542 = vunpack.c.l.bf16 %v681
        %v7543 = vunpack.c.l.bf16 %v695
        %v7544 = vunpack.c.l.bf16 %v705
        %v7545 = vunpack.c.l.bf16 %v719
        %v7546 = vunpack.c.l.bf16 %v729
        %v7547 = vunpack.c.l.bf16 %v743
        %v7548 = vunpack.c.l.bf16 %v753
        %v7549 = vunpack.c.l.bf16 %v2339
        %v7550 = vunpack.c.l.bf16 %v2349
        %v7551 = vperm.slane %v7518, 0
        %v7552 = vmul.f32 %v7349, %v7551
        %v7553 = vmul.f32 %v7350, %v7551
        %v7554 = vmul.f32 %v7351, %v7551
        %v7555 = vmul.f32 %v7352, %v7551
        %v7556 = vmul.f32 %v7353, %v7551
        %v7557 = vmul.f32 %v7354, %v7551
        %v7558 = vmul.f32 %v7355, %v7551
        %v7559 = vmul.f32 %v7356, %v7551
        %v7560 = vmul.f32 %v7357, %v7551
        %v7561 = vmul.f32 %v7358, %v7551
        %v7562 = vmul.f32 %v7359, %v7551
        %v7563 = vmul.f32 %v7360, %v7551
        %v7564 = vmul.f32 %v7361, %v7551
        %v7565 = vmul.f32 %v7362, %v7551
        %v7566 = vmul.f32 %v7363, %v7551
        %v7567 = vmul.f32 %v7364, %v7551
        %v7568 = vmul.f32 %v7365, %v7551
        %v7569 = vmul.f32 %v7366, %v7551
        %v7570 = vmul.f32 %v7367, %v7551
        %v7571 = vmul.f32 %v7368, %v7551
        %v7572 = vmul.f32 %v7369, %v7551
        %v7573 = vmul.f32 %v7370, %v7551
        %v7574 = vmul.f32 %v7371, %v7551
        %v7575 = vmul.f32 %v7372, %v7551
        %v7576 = vmul.f32 %v7373, %v7551
        %v7577 = vmul.f32 %v7374, %v7551
        %v7578 = vmul.f32 %v7375, %v7551
        %v7579 = vmul.f32 %v7376, %v7551
        %v7580 = vmul.f32 %v7377, %v7551
        %v7581 = vmul.f32 %v7378, %v7551
        %v7582 = vmul.f32 %v7379, %v7551
        %v7583 = vmul.f32 %v7380, %v7551
        %v7584 = vadd.f32 %v7552, %v7519
        %v7585 = vadd.f32 %v7553, %v7520
        %v7586 = vadd.f32 %v7554, %v7521
        %v7587 = vadd.f32 %v7555, %v7522
        %v7588 = vadd.f32 %v7556, %v7523
        %v7589 = vadd.f32 %v7557, %v7524
        %v7590 = vadd.f32 %v7558, %v7525
        %v7591 = vadd.f32 %v7559, %v7526
        %v7592 = vadd.f32 %v7560, %v7527
        %v7593 = vadd.f32 %v7561, %v7528
        %v7594 = vadd.f32 %v7562, %v7529
        %v7595 = vadd.f32 %v7563, %v7530
        %v7596 = vadd.f32 %v7564, %v7531
        %v7597 = vadd.f32 %v7565, %v7532
        %v7598 = vadd.f32 %v7566, %v7533
        %v7599 = vadd.f32 %v7567, %v7534
        %v7600 = vadd.f32 %v7568, %v7535
        %v7601 = vadd.f32 %v7569, %v7536
        %v7602 = vadd.f32 %v7570, %v7537
        %v7603 = vadd.f32 %v7571, %v7538
        %v7604 = vadd.f32 %v7572, %v7539
        %v7605 = vadd.f32 %v7573, %v7540
        %v7606 = vadd.f32 %v7574, %v7541
        %v7607 = vadd.f32 %v7575, %v7542
        %v7608 = vadd.f32 %v7576, %v7543
        %v7609 = vadd.f32 %v7577, %v7544
        %v7610 = vadd.f32 %v7578, %v7545
        %v7611 = vadd.f32 %v7579, %v7546
        %v7612 = vadd.f32 %v7580, %v7547
        %v7613 = vadd.f32 %v7581, %v7548
        %v7614 = vadd.f32 %v7582, %v7549
        %v7615 = vadd.f32 %v7583, %v7550
        %v7616 = vadd.f32 %v7584, 3.0
        %v7617 = vadd.f32 %v7585, 3.0
        %v7618 = vadd.f32 %v7586, 3.0
        %v7619 = vadd.f32 %v7587, 3.0
        %v7620 = vadd.f32 %v7588, 3.0
        %v7621 = vadd.f32 %v7589, 3.0
        %v7622 = vadd.f32 %v7590, 3.0
        %v7623 = vadd.f32 %v7591, 3.0
        %v7624 = vadd.f32 %v7592, 3.0
        %v7625 = vadd.f32 %v7593, 3.0
        %v7626 = vadd.f32 %v7594, 3.0
        %v7627 = vadd.f32 %v7595, 3.0
        %v7628 = vadd.f32 %v7596, 3.0
        %v7629 = vadd.f32 %v7597, 3.0
        %v7630 = vadd.f32 %v7598, 3.0
        %v7631 = vadd.f32 %v7599, 3.0
        %v7632 = vadd.f32 %v7600, 3.0
        %v7633 = vadd.f32 %v7601, 3.0
        %v7634 = vadd.f32 %v7602, 3.0
        %v7635 = vadd.f32 %v7603, 3.0
        %v7636 = vadd.f32 %v7604, 3.0
        %v7637 = vadd.f32 %v7605, 3.0
        %v7638 = vadd.f32 %v7606, 3.0
        %v7639 = vadd.f32 %v7607, 3.0
        %v7640 = vadd.f32 %v7608, 3.0
        %v7641 = vadd.f32 %v7609, 3.0
        %v7642 = vadd.f32 %v7610, 3.0
        %v7643 = vadd.f32 %v7611, 3.0
        %v7644 = vadd.f32 %v7612, 3.0
        %v7645 = vadd.f32 %v7613, 3.0
        %v7646 = vadd.f32 %v7614, 3.0
        %v7647 = vadd.f32 %v7615, 3.0
        %v7648 = vmax.f32 %v7616, 0.0
        %v7649 = vmax.f32 %v7617, 0.0
        %v7650 = vmax.f32 %v7618, 0.0
        %v7651 = vmax.f32 %v7619, 0.0
        %v7652 = vmax.f32 %v7620, 0.0
        %v7653 = vmax.f32 %v7621, 0.0
        %v7654 = vmax.f32 %v7622, 0.0
        %v7655 = vmax.f32 %v7623, 0.0
        %v7656 = vmax.f32 %v7624, 0.0
        %v7657 = vmax.f32 %v7625, 0.0
        %v7658 = vmax.f32 %v7626, 0.0
        %v7659 = vmax.f32 %v7627, 0.0
        %v7660 = vmax.f32 %v7628, 0.0
        %v7661 = vmax.f32 %v7629, 0.0
        %v7662 = vmax.f32 %v7630, 0.0
        %v7663 = vmax.f32 %v7631, 0.0
        %v7664 = vmax.f32 %v7632, 0.0
        %v7665 = vmax.f32 %v7633, 0.0
        %v7666 = vmax.f32 %v7634, 0.0
        %v7667 = vmax.f32 %v7635, 0.0
        %v7668 = vmax.f32 %v7636, 0.0
        %v7669 = vmax.f32 %v7637, 0.0
        %v7670 = vmax.f32 %v7638, 0.0
        %v7671 = vmax.f32 %v7639, 0.0
        %v7672 = vmax.f32 %v7640, 0.0
        %v7673 = vmax.f32 %v7641, 0.0
        %v7674 = vmax.f32 %v7642, 0.0
        %v7675 = vmax.f32 %v7643, 0.0
        %v7676 = vmax.f32 %v7644, 0.0
        %v7677 = vmax.f32 %v7645, 0.0
        %v7678 = vmax.f32 %v7646, 0.0
        %v7679 = vmax.f32 %v7647, 0.0
        %v7680 = vmin.f32 %v7648, 6.0
        %v7681 = vmin.f32 %v7649, 6.0
        %v7682 = vmin.f32 %v7650, 6.0
        %v7683 = vmin.f32 %v7651, 6.0
        %v7684 = vmin.f32 %v7652, 6.0
        %v7685 = vmin.f32 %v7653, 6.0
        %v7686 = vmin.f32 %v7654, 6.0
        %v7687 = vmin.f32 %v7655, 6.0
        %v7688 = vmin.f32 %v7656, 6.0
        %v7689 = vmin.f32 %v7657, 6.0
        %v7690 = vmin.f32 %v7658, 6.0
        %v7691 = vmin.f32 %v7659, 6.0
        %v7692 = vmin.f32 %v7660, 6.0
        %v7693 = vmin.f32 %v7661, 6.0
        %v7694 = vmin.f32 %v7662, 6.0
        %v7695 = vmin.f32 %v7663, 6.0
        %v7696 = vmin.f32 %v7664, 6.0
        %v7697 = vmin.f32 %v7665, 6.0
        %v7698 = vmin.f32 %v7666, 6.0
        %v7699 = vmin.f32 %v7667, 6.0
        %v7700 = vmin.f32 %v7668, 6.0
        %v7701 = vmin.f32 %v7669, 6.0
        %v7702 = vmin.f32 %v7670, 6.0
        %v7703 = vmin.f32 %v7671, 6.0
        %v7704 = vmin.f32 %v7672, 6.0
        %v7705 = vmin.f32 %v7673, 6.0
        %v7706 = vmin.f32 %v7674, 6.0
        %v7707 = vmin.f32 %v7675, 6.0
        %v7708 = vmin.f32 %v7676, 6.0
        %v7709 = vmin.f32 %v7677, 6.0
        %v7710 = vmin.f32 %v7678, 6.0
        %v7711 = vmin.f32 %v7679, 6.0
        %v7712 = vmul.f32 %v7584, %v7680
        %v7713 = vmul.f32 %v7585, %v7681
        %v7714 = vmul.f32 %v7586, %v7682
        %v7715 = vmul.f32 %v7587, %v7683
        %v7716 = vmul.f32 %v7588, %v7684
        %v7717 = vmul.f32 %v7589, %v7685
        %v7718 = vmul.f32 %v7590, %v7686
        %v7719 = vmul.f32 %v7591, %v7687
        %v7720 = vmul.f32 %v7592, %v7688
        %v7721 = vmul.f32 %v7593, %v7689
        %v7722 = vmul.f32 %v7594, %v7690
        %v7723 = vmul.f32 %v7595, %v7691
        %v7724 = vmul.f32 %v7596, %v7692
        %v7725 = vmul.f32 %v7597, %v7693
        %v7726 = vmul.f32 %v7598, %v7694
        %v7727 = vmul.f32 %v7599, %v7695
        %v7728 = vmul.f32 %v7600, %v7696
        %v7729 = vmul.f32 %v7601, %v7697
        %v7730 = vmul.f32 %v7602, %v7698
        %v7731 = vmul.f32 %v7603, %v7699
        %v7732 = vmul.f32 %v7604, %v7700
        %v7733 = vmul.f32 %v7605, %v7701
        %v7734 = vmul.f32 %v7606, %v7702
        %v7735 = vmul.f32 %v7607, %v7703
        %v7736 = vmul.f32 %v7608, %v7704
        %v7737 = vmul.f32 %v7609, %v7705
        %v7738 = vmul.f32 %v7610, %v7706
        %v7739 = vmul.f32 %v7611, %v7707
        %v7740 = vmul.f32 %v7612, %v7708
        %v7741 = vmul.f32 %v7613, %v7709
        %v7742 = vmul.f32 %v7614, %v7710
        %v7743 = vmul.f32 %v7615, %v7711
        %v7744 = vmul.f32 %v7712, 0.16666667
        %v7745 = vmul.f32 %v7713, 0.16666667
        %v7746 = vmul.f32 %v7714, 0.16666667
        %v7747 = vmul.f32 %v7715, 0.16666667
        %v7748 = vmul.f32 %v7716, 0.16666667
        %v7749 = vmul.f32 %v7717, 0.16666667
        %v7750 = vmul.f32 %v7718, 0.16666667
        %v7751 = vmul.f32 %v7719, 0.16666667
        %v7752 = vmul.f32 %v7720, 0.16666667
        %v7753 = vmul.f32 %v7721, 0.16666667
        %v7754 = vmul.f32 %v7722, 0.16666667
        %v7755 = vmul.f32 %v7723, 0.16666667
        %v7756 = vmul.f32 %v7724, 0.16666667
        %v7757 = vmul.f32 %v7725, 0.16666667
        %v7758 = vmul.f32 %v7726, 0.16666667
        %v7759 = vmul.f32 %v7727, 0.16666667
        %v7760 = vmul.f32 %v7728, 0.16666667
        %v7761 = vmul.f32 %v7729, 0.16666667
        %v7762 = vmul.f32 %v7730, 0.16666667
        %v7763 = vmul.f32 %v7731, 0.16666667
        %v7764 = vmul.f32 %v7732, 0.16666667
        %v7765 = vmul.f32 %v7733, 0.16666667
        %v7766 = vmul.f32 %v7734, 0.16666667
        %v7767 = vmul.f32 %v7735, 0.16666667
        %v7768 = vmul.f32 %v7736, 0.16666667
        %v7769 = vmul.f32 %v7737, 0.16666667
        %v7770 = vmul.f32 %v7738, 0.16666667
        %v7771 = vmul.f32 %v7739, 0.16666667
        %v7772 = vmul.f32 %v7740, 0.16666667
        %v7773 = vmul.f32 %v7741, 0.16666667
        %v7774 = vmul.f32 %v7742, 0.16666667
        %v7775 = vmul.f32 %v7743, 0.16666667
        %7776 = vst [vmem:[%s295] sm:$0xff] %v7744
        %7777 = vst [vmem:[%s295 + $0x8] sm:$0xff] %v7745
        %7778 = vst [vmem:[%s295 + $0x10] sm:$0xff] %v7746
        %7779 = vst [vmem:[%s295 + $0x18] sm:$0xff] %v7747
        %7780 = vst [vmem:[%s295 + $0x20] sm:$0xff] %v7748
        %7781 = vst [vmem:[%s295 + $0x28] sm:$0xff] %v7749
        %7782 = vst [vmem:[%s295 + $0x30] sm:$0xff] %v7750
        %7783 = vst [vmem:[%s295 + $0x38] sm:$0xff] %v7751
        %7784 = vst [vmem:[%s295 + $0x40] sm:$0xff] %v7752
        %7785 = vst [vmem:[%s295 + $0x48] sm:$0xff] %v7753
        %7786 = vst [vmem:[%s295 + $0x50] sm:$0xff] %v7754
        %7787 = vst [vmem:[%s295 + $0x58] sm:$0xff] %v7755
        %7788 = vst [vmem:[%s295 + $0x60] sm:$0xff] %v7756
        %7789 = vst [vmem:[%s295 + $0x68] sm:$0xff] %v7757
        %7790 = vst [vmem:[%s295 + $0x70] sm:$0xff] %v7758
        %7791 = vst [vmem:[%s295 + $0x78] sm:$0xff] %v7759
        %7792 = vst [vmem:[%s295 + $0x80] sm:$0xff] %v7760
        %7793 = vst [vmem:[%s295 + $0x88] sm:$0xff] %v7761
        %7794 = vst [vmem:[%s295 + $0x90] sm:$0xff] %v7762
        %7795 = vst [vmem:[%s295 + $0x98] sm:$0xff] %v7763
        %7796 = vst [vmem:[%s295 + $0xa0] sm:$0xff] %v7764
        %7797 = vst [vmem:[%s295 + $0xa8] sm:$0xff] %v7765
        %7798 = vst [vmem:[%s295 + $0xb0] sm:$0xff] %v7766
        %7799 = vst [vmem:[%s295 + $0xb8] sm:$0xff] %v7767
        %7800 = vst [vmem:[%s295 + $0xc0] sm:$0xff] %v7768
        %7801 = vst [vmem:[%s295 + $0xc8] sm:$0xff] %v7769
        %7802 = vst [vmem:[%s295 + $0xd0] sm:$0xff] %v7770
        %7803 = vst [vmem:[%s295 + $0xd8] sm:$0xff] %v7771
        %7804 = vst [vmem:[%s295 + $0xe0] sm:$0xff] %v7772
        %7805 = vst [vmem:[%s295 + $0xe8] sm:$0xff] %v7773
        %7806 = vst [vmem:[%s295 + $0xf0] sm:$0xff] %v7774
        %7807 = vst [vmem:[%s295 + $0xf8] sm:$0xff] %v7775
        %p7808 = scmp.lt.s32.totalorder %s19, 1
        %s7809 = scalar_select %p7808, %s19, 1
        %s7810 = smul.addr %s7809, 32
        %s7811 = smul.addr %s7810, 8
        %s7812 = scalar_lea.vmem %s7, %s7811
        // Predicated region
        $region53: #{rescab_forward.1} parent=47 // pred_check
          %p7813 = pneg %p189
        $region54: #{rescab_forward.1} parent=47 // pred_check_branch
          %7815 = sbr.rel (%p7813) target = $region56
        $region55: #{rescab_forward.1} parent=47 // pred_region
          _
        $region56: #{rescab_forward.1} parent=47 // pred_fallthru
          _
      $region48: #{rescab_forward.1} parent=5 // pred_fallthru
        _
      %p7816 = scmp.le.s32.totalorder 2, %s14
      // Predicated region
      $region57: #{rescab_forward.1} parent=5 // pred_check
        %p7817 = pneg %p7816
      $region58: #{rescab_forward.1} parent=5 // pred_check_branch
        %7819 = sbr.rel (%p7817) target = $region60
      $region59: #{rescab_forward.1} parent=5 // pred_region
        %s7820 = ssub.s32 %s14, 2
        // Predicated region
        $region61: #{rescab_forward.1} parent=59 // pred_check
          %p7821 = pneg %p195
        $region62: #{rescab_forward.1} parent=59 // pred_check_branch
          %7823 = sbr.rel (%p7821) target = $region64
        $region63: #{rescab_forward.1} parent=59 // pred_region
          %p7824 = scmp.lt.s32.totalorder %s20, 1
          %s7825 = scalar_select %p7824, %s20, 1
          %s7826 = smul.addr %s7825, 32
          %s7827 = smul.addr %s7826, 8
          %s7828 = scalar_lea.vmem %s7, %s7827
        $region64: #{rescab_forward.1} parent=59 // pred_fallthru
          _
      $region60: #{rescab_forward.1} parent=5 // pred_fallthru
        _
    $region6: #{rescab_forward.1} parent=1 // loop_footer
      %s18 = sadd.s32 1, %s14
    $region7: #{rescab_forward.1} parent=1 // loop_footer_branch
      %13 = sbr.rel target = $region3
    $region8: #{rescab_forward.1} parent=1 // loop_exit
      _
    %7829 = vsyncpa [#allocation4], 1
    %s7830 = scalar_lea.sflag [#allocation4], 1
    %7831 = vsyncpa %s7830, 1

</llo_original>
